<compile_context>
chip_gen: v7x
topology: tpu7x:2x2x1
jax: 0.10.0
libtpu: 0.0.40
codegen_flags: <defaults>
</compile_context>

<pallas_src>
import functools
import math

import jax
import jax.numpy as jnp
from jax.experimental import pallas as pl
from jax.experimental.pallas import tpu as pltpu


# ----------------------------- small config ---------------------------------
class GPTConfig:
    block_size = 128
    vocab_size = 256
    n_layer = 2
    n_head = 4
    n_embed = 128


# --------------------------- in-kernel helpers -------------------------------
def _layernorm(x, w, b, eps=1e-5):
    # two-pass stats (mean, then E[(x-mean)^2]) like PyTorch LayerNorm
    m = jnp.mean(x, axis=-1, keepdims=True)
    d = x - m
    var = jnp.mean(d * d, axis=-1, keepdims=True)
    return d * jax.lax.rsqrt(var + eps) * w + b


def _gelu_tanh(x):
    # GELU(approximate='tanh') exactly as in PyTorch
    return 0.5 * x * (1.0 + jnp.tanh(0.7978845608028654 * (x + 0.044715 * x * x * x)))


# ----------------------------- fused kernel ----------------------------------
def gpt_fused_kernel(x_ref, bias_ref,
                     ln1w_ref, ln1b_ref, wqkv_ref, bqkv_ref, wpr_ref, bpr_ref,
                     ln2w_ref, ln2b_ref, wfc_ref, bfc_ref, wpj_ref, bpj_ref,
                     lnfw_ref, lnfb_ref, whead_ref,
                     logits_ref, y_scr,
                     *, n_layer, n_head, n_batch):
    x = x_ref[...]                       # (M, C) f32 residual stream, M = B*T
    bias = bias_ref[...]                 # (T, T) additive causal mask (0 / -1e30)
    M, C = x.shape
    T = M // n_batch
    hd = C // n_head

    for l in range(n_layer):             # static loop; weights are VMEM-resident
        # ---- ln_1 + causal self-attention ----
        h = _layernorm(x, ln1w_ref[l], ln1b_ref[l]).astype(jnp.bfloat16)
        qkv = jnp.dot(h, wqkv_ref[l], preferred_element_type=jnp.float32) + bqkv_ref[l]
        q = qkv[:, 0 * C:1 * C].astype(jnp.bfloat16)   # 1/sqrt(hd) pre-folded into W_qkv
        k = qkv[:, 1 * C:2 * C].astype(jnp.bfloat16)
        v = qkv[:, 2 * C:3 * C].astype(jnp.bfloat16)

        for b in range(n_batch):                        # static, tiny (B=2)
            rows = slice(b * T, (b + 1) * T)
            for hh in range(n_head):                    # static, tiny (H=4)
                cols = slice(hh * hd, (hh + 1) * hd)
                qh, kh, vh = q[rows, cols], k[rows, cols], v[rows, cols]
                # contract on hd of both operands -> no explicit kh.T transpose
                att = jax.lax.dot_general(
                    qh, kh, (((1,), (1,)), ((), ())),
                    preferred_element_type=jnp.float32)            # (T, T)
                att = att + bias
                att = att - jnp.max(att, axis=-1, keepdims=True)
                p = jnp.exp(att)
                p = p * pl.reciprocal(jnp.sum(p, axis=-1, keepdims=True), approx=True)
                # write this head's output straight into the (M, C) scratch slab
                y_scr[rows, cols] = jnp.dot(p.astype(jnp.bfloat16), vh,
                                            preferred_element_type=jnp.float32)

        y = jnp.dot(y_scr[...].astype(jnp.bfloat16), wpr_ref[l],
                    preferred_element_type=jnp.float32) + bpr_ref[l]
        x = x + y                                       # residual

        # ---- ln_2 + MLP ----
        h2 = _layernorm(x, ln2w_ref[l], ln2b_ref[l]).astype(jnp.bfloat16)
        ff = jnp.dot(h2, wfc_ref[l], preferred_element_type=jnp.float32) + bfc_ref[l]
        ff = _gelu_tanh(ff).astype(jnp.bfloat16)
        ff = jnp.dot(ff, wpj_ref[l], preferred_element_type=jnp.float32) + bpj_ref[l]
        x = x + ff                                      # residual

    # ---- final LayerNorm + tied LM head ----
    hf = _layernorm(x, lnfw_ref[...], lnfb_ref[...]).astype(jnp.bfloat16)
    logits_ref[...] = jnp.dot(hf, whead_ref[...], preferred_element_type=jnp.float32)


def run_gpt_fused(x_flat, bias, params, cfg, n_batch):
    M, C = x_flat.shape
    V = cfg.vocab_size
    kernel = functools.partial(gpt_fused_kernel, n_layer=cfg.n_layer,
                               n_head=cfg.n_head, n_batch=n_batch)
    # Single grid-less invocation: activations + all stacked weights (~1 MiB
    # bf16) are VMEM-resident, so there is no grid-step overhead and no
    # per-layer HBM weight streaming.
    # TODO(synk): for GPT-2-scale configs (C=768, V=50257, L=12) re-introduce a
    # streamed layer grid axis and tile the (C, V) LM head over V, setting
    # vmem_limit_bytes explicitly for v7x's 64 MiB VMEM.
    return pl.pallas_call(
        kernel,
        out_shape=jax.ShapeDtypeStruct((M, V), jnp.float32),
        scratch_shapes=[pltpu.VMEM((M, C), jnp.float32)],   # per-head attn output slab
    )(x_flat, bias,
      params["ln1_w"], params["ln1_b"], params["w_qkv"], params["b_qkv"],
      params["w_attn_proj"], params["b_attn_proj"],
      params["ln2_w"], params["ln2_b"], params["w_fc"], params["b_fc"],
      params["w_mlp_proj"], params["b_mlp_proj"],
      params["lnf_w"], params["lnf_b"], params["wte_t"])


# ------------------------------ parameter init --------------------------------
def init_params(cfg, key):
    C, V, L, P = cfg.n_embed, cfg.vocab_size, cfg.n_layer, cfg.block_size
    hd = C // cfg.n_head
    std = 0.02
    std_proj = 0.02 * (2 * L) ** -0.5   # NANOGPT_SCALE_INIT layers
    k_wte, k_wpe, k_qkv, k_apr, k_fc, k_mpj = jax.random.split(key, 6)

    wte = std * jax.random.normal(k_wte, (V, C), jnp.float32)
    bf16 = lambda a: a.astype(jnp.bfloat16)

    # Fold the 1/sqrt(head_dim) attention scale into the Q columns of W_qkv
    # (b_qkv is zeros, so no fold needed there) -> no in-kernel score scaling.
    qkv_colscale = jnp.concatenate(
        [jnp.full((C,), 1.0 / math.sqrt(hd), jnp.float32),
         jnp.ones((2 * C,), jnp.float32)])
    w_qkv = std * jax.random.normal(k_qkv, (L, C, 3 * C), jnp.float32) * qkv_colscale

    params = {
        "wte": wte,                              # (V, C) f32 for embedding gather
        "wte_t": bf16(wte.T),                    # (C, V) tied LM head, pre-transposed once
        "wpe": std * jax.random.normal(k_wpe, (P, C), jnp.float32),
        "lnf_w": jnp.ones((1, C), jnp.float32),
        "lnf_b": jnp.zeros((1, C), jnp.float32),
        # per-layer params stacked along a leading L axis (indexed statically in-kernel)
        "ln1_w": jnp.ones((L, 1, C), jnp.float32),
        "ln1_b": jnp.zeros((L, 1, C), jnp.float32),
        "ln2_w": jnp.ones((L, 1, C), jnp.float32),
        "ln2_b": jnp.zeros((L, 1, C), jnp.float32),
        "w_qkv": bf16(w_qkv),                    # bf16 weights -> MXU bf16 path (intentional)
        "b_qkv": jnp.zeros((L, 1, 3 * C), jnp.float32),
        "w_attn_proj": bf16(std_proj * jax.random.normal(k_apr, (L, C, C), jnp.float32)),
        "b_attn_proj": jnp.zeros((L, 1, C), jnp.float32),
        "w_fc": bf16(std * jax.random.normal(k_fc, (L, C, 4 * C), jnp.float32)),
        "b_fc": jnp.zeros((L, 1, 4 * C), jnp.float32),
        "w_mlp_proj": bf16(std_proj * jax.random.normal(k_mpj, (L, 4 * C, C), jnp.float32)),
        "b_mlp_proj": jnp.zeros((L, 1, C), jnp.float32),
    }
    return params


# --------------------------------- forward ------------------------------------
def gpt_forward(params, idx, cfg, targets=None):
    B, T = idx.shape
    assert T <= cfg.block_size
    C, V = cfg.n_embed, cfg.vocab_size

    # Embedding gathers are glue (plain JAX); tok_emb + pos_emb, flattened rows.
    tok_emb = jnp.take(params["wte"], idx, axis=0)          # (B, T, C)
    pos_emb = params["wpe"][:T]                             # (T, C)
    x = (tok_emb + pos_emb[None, :, :]).astype(jnp.float32).reshape(B * T, C)

    # Additive causal bias (0 / -1e30), built once per forward (glue).
    row = jax.lax.broadcasted_iota(jnp.int32, (T, T), 0)
    col = jax.lax.broadcasted_iota(jnp.int32, (T, T), 1)
    bias = jnp.where(col <= row, 0.0, -1e30).astype(jnp.float32)

    logits = run_gpt_fused(x, bias, params, cfg, B).reshape(B, T, V)

    loss = None
    if targets is not None:
        # cross-entropy over flattened (B*T, V) — glue in plain JAX
        logp = jax.nn.log_softmax(logits.reshape(-1, V), axis=-1)
        nll = -jnp.take_along_axis(logp, targets.reshape(-1, 1), axis=-1)
        loss = jnp.mean(nll)
    return logits, loss


# ----------------------------------- main --------------------------------------
if __name__ == "__main__":
    cfg = GPTConfig()
    key = jax.random.PRNGKey(0)
    pkey, ikey, tkey = jax.random.split(key, 3)

    params = init_params(cfg, pkey)

    B, T = 2, 64
    idx = jax.random.randint(ikey, (B, T), 0, cfg.vocab_size, dtype=jnp.int32)
    targets = jax.random.randint(tkey, (B, T), 0, cfg.vocab_size, dtype=jnp.int32)

    fwd = jax.jit(lambda p, i, t: gpt_forward(p, i, cfg, targets=t))
    logits, loss = fwd(params, idx, targets)
    logits = jax.block_until_ready(logits)
    loss = jax.block_until_ready(loss)

    assert logits.shape == (B, T, cfg.vocab_size)
    assert bool(jnp.all(jnp.isfinite(logits))) and bool(jnp.isfinite(loss))
    print("KERNEL_OK")
</pallas_src>

<mosaic_0001>
module attributes {stable_mosaic.version = 11 : i64} {
  func.func @gpt_fused_kernel(%arg0: memref<128x128xf32, #tpu.memory_space<vmem>>, %arg1: memref<64x64xf32, #tpu.memory_space<vmem>>, %arg2: memref<2x1x128xf32, #tpu.memory_space<vmem>>, %arg3: memref<2x1x128xf32, #tpu.memory_space<vmem>>, %arg4: memref<2x128x384xbf16, #tpu.memory_space<vmem>>, %arg5: memref<2x1x384xf32, #tpu.memory_space<vmem>>, %arg6: memref<2x128x128xbf16, #tpu.memory_space<vmem>>, %arg7: memref<2x1x128xf32, #tpu.memory_space<vmem>>, %arg8: memref<2x1x128xf32, #tpu.memory_space<vmem>>, %arg9: memref<2x1x128xf32, #tpu.memory_space<vmem>>, %arg10: memref<2x128x512xbf16, #tpu.memory_space<vmem>>, %arg11: memref<2x1x512xf32, #tpu.memory_space<vmem>>, %arg12: memref<2x512x128xbf16, #tpu.memory_space<vmem>>, %arg13: memref<2x1x128xf32, #tpu.memory_space<vmem>>, %arg14: memref<1x128xf32, #tpu.memory_space<vmem>>, %arg15: memref<1x128xf32, #tpu.memory_space<vmem>>, %arg16: memref<128x256xbf16, #tpu.memory_space<vmem>>, %arg17: memref<128x256xf32, #tpu.memory_space<vmem>>, %arg18: memref<128x128xf32, #tpu.memory_space<vmem>>) attributes {dimension_semantics = [], scalar_prefetch = 0 : i64, scratch_operands = 1 : i64, tpu.core_type = #tpu.core_type<tc>} {
    %c0 = arith.constant 0 : index
    %c0_0 = arith.constant 0 : index
    %0 = vector.load %arg0[%c0, %c0_0] : memref<128x128xf32, #tpu.memory_space<vmem>>, vector<128x128xf32>
    %c0_1 = arith.constant 0 : index
    %c0_2 = arith.constant 0 : index
    %1 = vector.load %arg1[%c0_1, %c0_2] : memref<64x64xf32, #tpu.memory_space<vmem>>, vector<64x64xf32>
    %c0_3 = arith.constant 0 : index
    %c0_4 = arith.constant 0 : index
    %c0_5 = arith.constant 0 : index
    %2 = vector.load %arg2[%c0_3, %c0_4, %c0_5] : memref<2x1x128xf32, #tpu.memory_space<vmem>>, vector<1x1x128xf32>
    %3 = vector.shape_cast %2 : vector<1x1x128xf32> to vector<1x128xf32>
    %c0_6 = arith.constant 0 : index
    %c0_7 = arith.constant 0 : index
    %c0_8 = arith.constant 0 : index
    %4 = vector.load %arg3[%c0_6, %c0_7, %c0_8] : memref<2x1x128xf32, #tpu.memory_space<vmem>>, vector<1x1x128xf32>
    %5 = vector.shape_cast %4 : vector<1x1x128xf32> to vector<1x128xf32>
    %cst = arith.constant dense<0.000000e+00> : vector<128xf32>
    %6 = vector.multi_reduction <add>, %0, %cst [1] : vector<128x128xf32> to vector<128xf32>
    %7 = vector.shape_cast %6 : vector<128xf32> to vector<128x1xf32>
    %cst_9 = arith.constant 1.280000e+02 : f32
    %8 = vector.broadcast %cst_9 : f32 to vector<128x1xf32>
    %9 = arith.divf %7, %8 : vector<128x1xf32>
    %10 = vector.broadcast %9 : vector<128x1xf32> to vector<128x128xf32>
    %11 = arith.subf %0, %10 : vector<128x128xf32>
    %12 = arith.mulf %11, %11 : vector<128x128xf32>
    %cst_10 = arith.constant dense<0.000000e+00> : vector<128xf32>
    %13 = vector.multi_reduction <add>, %12, %cst_10 [1] : vector<128x128xf32> to vector<128xf32>
    %14 = vector.shape_cast %13 : vector<128xf32> to vector<128x1xf32>
    %cst_11 = arith.constant 1.280000e+02 : f32
    %15 = vector.broadcast %cst_11 : f32 to vector<128x1xf32>
    %16 = arith.divf %14, %15 : vector<128x1xf32>
    %cst_12 = arith.constant 9.99999974E-6 : f32
    %17 = vector.broadcast %cst_12 : f32 to vector<128x1xf32>
    %18 = arith.addf %16, %17 : vector<128x1xf32>
    %19 = math.rsqrt %18 : vector<128x1xf32>
    %20 = vector.broadcast %19 : vector<128x1xf32> to vector<128x128xf32>
    %21 = arith.mulf %11, %20 : vector<128x128xf32>
    %22 = vector.broadcast %3 : vector<1x128xf32> to vector<128x128xf32>
    %23 = arith.mulf %21, %22 : vector<128x128xf32>
    %24 = vector.broadcast %5 : vector<1x128xf32> to vector<128x128xf32>
    %25 = arith.addf %23, %24 : vector<128x128xf32>
    %26 = arith.truncf %25 : vector<128x128xf32> to vector<128x128xbf16>
    %c0_13 = arith.constant 0 : index
    %c0_14 = arith.constant 0 : index
    %c0_15 = arith.constant 0 : index
    %27 = vector.load %arg4[%c0_13, %c0_14, %c0_15] : memref<2x128x384xbf16, #tpu.memory_space<vmem>>, vector<1x128x384xbf16>
    %28 = vector.shape_cast %27 : vector<1x128x384xbf16> to vector<128x384xbf16>
    %cst_16 = arith.constant dense<0.000000e+00> : vector<128x384xf32>
    %29 = tpu.matmul %26, %28, %cst_16 {dimension_numbers = #tpu.dot_dimension_numbers<[1], [0], [0], [1], [0, 0, 1, 1], [], []>} : vector<128x128xbf16>, vector<128x384xbf16>, vector<128x384xf32> -> vector<128x384xf32>
    %c0_17 = arith.constant 0 : index
    %c0_18 = arith.constant 0 : index
    %c0_19 = arith.constant 0 : index
    %30 = vector.load %arg5[%c0_17, %c0_18, %c0_19] : memref<2x1x384xf32, #tpu.memory_space<vmem>>, vector<1x1x384xf32>
    %31 = vector.shape_cast %30 : vector<1x1x384xf32> to vector<1x384xf32>
    %32 = vector.broadcast %31 : vector<1x384xf32> to vector<128x384xf32>
    %33 = arith.addf %29, %32 : vector<128x384xf32>
    %34 = vector.extract_strided_slice %33 {offsets = [0, 0], sizes = [128, 128], strides = [1, 1]} : vector<128x384xf32> to vector<128x128xf32>
    %35 = arith.truncf %34 : vector<128x128xf32> to vector<128x128xbf16>
    %36 = vector.extract_strided_slice %33 {offsets = [0, 128], sizes = [128, 128], strides = [1, 1]} : vector<128x384xf32> to vector<128x128xf32>
    %37 = arith.truncf %36 : vector<128x128xf32> to vector<128x128xbf16>
    %38 = vector.extract_strided_slice %33 {offsets = [0, 256], sizes = [128, 128], strides = [1, 1]} : vector<128x384xf32> to vector<128x128xf32>
    %39 = arith.truncf %38 : vector<128x128xf32> to vector<128x128xbf16>
    %40 = vector.extract_strided_slice %35 {offsets = [0, 0], sizes = [64, 32], strides = [1, 1]} : vector<128x128xbf16> to vector<64x32xbf16>
    %41 = vector.extract_strided_slice %37 {offsets = [0, 0], sizes = [64, 32], strides = [1, 1]} : vector<128x128xbf16> to vector<64x32xbf16>
    %42 = vector.extract_strided_slice %39 {offsets = [0, 0], sizes = [64, 32], strides = [1, 1]} : vector<128x128xbf16> to vector<64x32xbf16>
    %cst_20 = arith.constant dense<0.000000e+00> : vector<64x64xf32>
    %43 = tpu.matmul %40, %41, %cst_20 {dimension_numbers = #tpu.dot_dimension_numbers<[1], [1], [0], [0], [0, 0, 1, 0], [], []>} : vector<64x32xbf16>, vector<64x32xbf16>, vector<64x64xf32> -> vector<64x64xf32>
    %44 = arith.addf %43, %1 : vector<64x64xf32>
    %cst_21 = arith.constant dense<0xFF800000> : vector<64xf32>
    %45 = vector.multi_reduction <maximumf>, %44, %cst_21 [1] : vector<64x64xf32> to vector<64xf32>
    %46 = vector.shape_cast %45 : vector<64xf32> to vector<64x1xf32>
    %47 = vector.broadcast %46 : vector<64x1xf32> to vector<64x64xf32>
    %48 = arith.subf %44, %47 : vector<64x64xf32>
    %49 = math.exp %48 : vector<64x64xf32>
    %cst_22 = arith.constant dense<0.000000e+00> : vector<64xf32>
    %50 = vector.multi_reduction <add>, %49, %cst_22 [1] : vector<64x64xf32> to vector<64xf32>
    %51 = vector.shape_cast %50 : vector<64xf32> to vector<64x1xf32>
    %52 = tpu.reciprocal %51 {approx = true} : vector<64x1xf32> -> vector<64x1xf32>
    %53 = vector.broadcast %52 : vector<64x1xf32> to vector<64x64xf32>
    %54 = arith.mulf %49, %53 : vector<64x64xf32>
    %55 = arith.truncf %54 : vector<64x64xf32> to vector<64x64xbf16>
    %cst_23 = arith.constant dense<0.000000e+00> : vector<64x32xf32>
    %56 = tpu.matmul %55, %42, %cst_23 {dimension_numbers = #tpu.dot_dimension_numbers<[1], [0], [0], [1], [0, 0, 1, 1], [], []>} : vector<64x64xbf16>, vector<64x32xbf16>, vector<64x32xf32> -> vector<64x32xf32>
    %c0_24 = arith.constant 0 : index
    %c0_25 = arith.constant 0 : index
    %57 = vector.load %arg18[%c0_24, %c0_25] : memref<128x128xf32, #tpu.memory_space<vmem>>, vector<64x32xf32>
    tpu.vector_store %arg18[%c0_24, %c0_25], %56 {strides = array<i32>} : memref<128x128xf32, #tpu.memory_space<vmem>>, vector<64x32xf32>,
    %58 = vector.extract_strided_slice %35 {offsets = [0, 32], sizes = [64, 32], strides = [1, 1]} : vector<128x128xbf16> to vector<64x32xbf16>
    %59 = vector.extract_strided_slice %37 {offsets = [0, 32], sizes = [64, 32], strides = [1, 1]} : vector<128x128xbf16> to vector<64x32xbf16>
    %60 = vector.extract_strided_slice %39 {offsets = [0, 32], sizes = [64, 32], strides = [1, 1]} : vector<128x128xbf16> to vector<64x32xbf16>
    %cst_26 = arith.constant dense<0.000000e+00> : vector<64x64xf32>
    %61 = tpu.matmul %58, %59, %cst_26 {dimension_numbers = #tpu.dot_dimension_numbers<[1], [1], [0], [0], [0, 0, 1, 0], [], []>} : vector<64x32xbf16>, vector<64x32xbf16>, vector<64x64xf32> -> vector<64x64xf32>
    %62 = arith.addf %61, %1 : vector<64x64xf32>
    %cst_27 = arith.constant dense<0xFF800000> : vector<64xf32>
    %63 = vector.multi_reduction <maximumf>, %62, %cst_27 [1] : vector<64x64xf32> to vector<64xf32>
    %64 = vector.shape_cast %63 : vector<64xf32> to vector<64x1xf32>
    %65 = vector.broadcast %64 : vector<64x1xf32> to vector<64x64xf32>
    %66 = arith.subf %62, %65 : vector<64x64xf32>
    %67 = math.exp %66 : vector<64x64xf32>
    %cst_28 = arith.constant dense<0.000000e+00> : vector<64xf32>
    %68 = vector.multi_reduction <add>, %67, %cst_28 [1] : vector<64x64xf32> to vector<64xf32>
    %69 = vector.shape_cast %68 : vector<64xf32> to vector<64x1xf32>
    %70 = tpu.reciprocal %69 {approx = true} : vector<64x1xf32> -> vector<64x1xf32>
    %71 = vector.broadcast %70 : vector<64x1xf32> to vector<64x64xf32>
    %72 = arith.mulf %67, %71 : vector<64x64xf32>
    %73 = arith.truncf %72 : vector<64x64xf32> to vector<64x64xbf16>
    %cst_29 = arith.constant dense<0.000000e+00> : vector<64x32xf32>
    %74 = tpu.matmul %73, %60, %cst_29 {dimension_numbers = #tpu.dot_dimension_numbers<[1], [0], [0], [1], [0, 0, 1, 1], [], []>} : vector<64x64xbf16>, vector<64x32xbf16>, vector<64x32xf32> -> vector<64x32xf32>
    %c0_30 = arith.constant 0 : index
    %c32 = arith.constant 32 : index
    %75 = vector.load %arg18[%c0_30, %c32] : memref<128x128xf32, #tpu.memory_space<vmem>>, vector<64x32xf32>
    tpu.vector_store %arg18[%c0_30, %c32], %74 {strides = array<i32>} : memref<128x128xf32, #tpu.memory_space<vmem>>, vector<64x32xf32>,
    %76 = vector.extract_strided_slice %35 {offsets = [0, 64], sizes = [64, 32], strides = [1, 1]} : vector<128x128xbf16> to vector<64x32xbf16>
    %77 = vector.extract_strided_slice %37 {offsets = [0, 64], sizes = [64, 32], strides = [1, 1]} : vector<128x128xbf16> to vector<64x32xbf16>
    %78 = vector.extract_strided_slice %39 {offsets = [0, 64], sizes = [64, 32], strides = [1, 1]} : vector<128x128xbf16> to vector<64x32xbf16>
    %cst_31 = arith.constant dense<0.000000e+00> : vector<64x64xf32>
    %79 = tpu.matmul %76, %77, %cst_31 {dimension_numbers = #tpu.dot_dimension_numbers<[1], [1], [0], [0], [0, 0, 1, 0], [], []>} : vector<64x32xbf16>, vector<64x32xbf16>, vector<64x64xf32> -> vector<64x64xf32>
    %80 = arith.addf %79, %1 : vector<64x64xf32>
    %cst_32 = arith.constant dense<0xFF800000> : vector<64xf32>
    %81 = vector.multi_reduction <maximumf>, %80, %cst_32 [1] : vector<64x64xf32> to vector<64xf32>
    %82 = vector.shape_cast %81 : vector<64xf32> to vector<64x1xf32>
    %83 = vector.broadcast %82 : vector<64x1xf32> to vector<64x64xf32>
    %84 = arith.subf %80, %83 : vector<64x64xf32>
    %85 = math.exp %84 : vector<64x64xf32>
    %cst_33 = arith.constant dense<0.000000e+00> : vector<64xf32>
    %86 = vector.multi_reduction <add>, %85, %cst_33 [1] : vector<64x64xf32> to vector<64xf32>
    %87 = vector.shape_cast %86 : vector<64xf32> to vector<64x1xf32>
    %88 = tpu.reciprocal %87 {approx = true} : vector<64x1xf32> -> vector<64x1xf32>
    %89 = vector.broadcast %88 : vector<64x1xf32> to vector<64x64xf32>
    %90 = arith.mulf %85, %89 : vector<64x64xf32>
    %91 = arith.truncf %90 : vector<64x64xf32> to vector<64x64xbf16>
    %cst_34 = arith.constant dense<0.000000e+00> : vector<64x32xf32>
    %92 = tpu.matmul %91, %78, %cst_34 {dimension_numbers = #tpu.dot_dimension_numbers<[1], [0], [0], [1], [0, 0, 1, 1], [], []>} : vector<64x64xbf16>, vector<64x32xbf16>, vector<64x32xf32> -> vector<64x32xf32>
    %c0_35 = arith.constant 0 : index
    %c64 = arith.constant 64 : index
    %93 = vector.load %arg18[%c0_35, %c64] : memref<128x128xf32, #tpu.memory_space<vmem>>, vector<64x32xf32>
    tpu.vector_store %arg18[%c0_35, %c64], %92 {strides = array<i32>} : memref<128x128xf32, #tpu.memory_space<vmem>>, vector<64x32xf32>,
    %94 = vector.extract_strided_slice %35 {offsets = [0, 96], sizes = [64, 32], strides = [1, 1]} : vector<128x128xbf16> to vector<64x32xbf16>
    %95 = vector.extract_strided_slice %37 {offsets = [0, 96], sizes = [64, 32], strides = [1, 1]} : vector<128x128xbf16> to vector<64x32xbf16>
    %96 = vector.extract_strided_slice %39 {offsets = [0, 96], sizes = [64, 32], strides = [1, 1]} : vector<128x128xbf16> to vector<64x32xbf16>
    %cst_36 = arith.constant dense<0.000000e+00> : vector<64x64xf32>
    %97 = tpu.matmul %94, %95, %cst_36 {dimension_numbers = #tpu.dot_dimension_numbers<[1], [1], [0], [0], [0, 0, 1, 0], [], []>} : vector<64x32xbf16>, vector<64x32xbf16>, vector<64x64xf32> -> vector<64x64xf32>
    %98 = arith.addf %97, %1 : vector<64x64xf32>
    %cst_37 = arith.constant dense<0xFF800000> : vector<64xf32>
    %99 = vector.multi_reduction <maximumf>, %98, %cst_37 [1] : vector<64x64xf32> to vector<64xf32>
    %100 = vector.shape_cast %99 : vector<64xf32> to vector<64x1xf32>
    %101 = vector.broadcast %100 : vector<64x1xf32> to vector<64x64xf32>
    %102 = arith.subf %98, %101 : vector<64x64xf32>
    %103 = math.exp %102 : vector<64x64xf32>
    %cst_38 = arith.constant dense<0.000000e+00> : vector<64xf32>
    %104 = vector.multi_reduction <add>, %103, %cst_38 [1] : vector<64x64xf32> to vector<64xf32>
    %105 = vector.shape_cast %104 : vector<64xf32> to vector<64x1xf32>
    %106 = tpu.reciprocal %105 {approx = true} : vector<64x1xf32> -> vector<64x1xf32>
    %107 = vector.broadcast %106 : vector<64x1xf32> to vector<64x64xf32>
    %108 = arith.mulf %103, %107 : vector<64x64xf32>
    %109 = arith.truncf %108 : vector<64x64xf32> to vector<64x64xbf16>
    %cst_39 = arith.constant dense<0.000000e+00> : vector<64x32xf32>
    %110 = tpu.matmul %109, %96, %cst_39 {dimension_numbers = #tpu.dot_dimension_numbers<[1], [0], [0], [1], [0, 0, 1, 1], [], []>} : vector<64x64xbf16>, vector<64x32xbf16>, vector<64x32xf32> -> vector<64x32xf32>
    %c0_40 = arith.constant 0 : index
    %c96 = arith.constant 96 : index
    %111 = vector.load %arg18[%c0_40, %c96] : memref<128x128xf32, #tpu.memory_space<vmem>>, vector<64x32xf32>
    tpu.vector_store %arg18[%c0_40, %c96], %110 {strides = array<i32>} : memref<128x128xf32, #tpu.memory_space<vmem>>, vector<64x32xf32>,
    %112 = vector.extract_strided_slice %35 {offsets = [64, 0], sizes = [64, 32], strides = [1, 1]} : vector<128x128xbf16> to vector<64x32xbf16>
    %113 = vector.extract_strided_slice %37 {offsets = [64, 0], sizes = [64, 32], strides = [1, 1]} : vector<128x128xbf16> to vector<64x32xbf16>
    %114 = vector.extract_strided_slice %39 {offsets = [64, 0], sizes = [64, 32], strides = [1, 1]} : vector<128x128xbf16> to vector<64x32xbf16>
    %cst_41 = arith.constant dense<0.000000e+00> : vector<64x64xf32>
    %115 = tpu.matmul %112, %113, %cst_41 {dimension_numbers = #tpu.dot_dimension_numbers<[1], [1], [0], [0], [0, 0, 1, 0], [], []>} : vector<64x32xbf16>, vector<64x32xbf16>, vector<64x64xf32> -> vector<64x64xf32>
    %116 = arith.addf %115, %1 : vector<64x64xf32>
    %cst_42 = arith.constant dense<0xFF800000> : vector<64xf32>
    %117 = vector.multi_reduction <maximumf>, %116, %cst_42 [1] : vector<64x64xf32> to vector<64xf32>
    %118 = vector.shape_cast %117 : vector<64xf32> to vector<64x1xf32>
    %119 = vector.broadcast %118 : vector<64x1xf32> to vector<64x64xf32>
    %120 = arith.subf %116, %119 : vector<64x64xf32>
    %121 = math.exp %120 : vector<64x64xf32>
    %cst_43 = arith.constant dense<0.000000e+00> : vector<64xf32>
    %122 = vector.multi_reduction <add>, %121, %cst_43 [1] : vector<64x64xf32> to vector<64xf32>
    %123 = vector.shape_cast %122 : vector<64xf32> to vector<64x1xf32>
    %124 = tpu.reciprocal %123 {approx = true} : vector<64x1xf32> -> vector<64x1xf32>
    %125 = vector.broadcast %124 : vector<64x1xf32> to vector<64x64xf32>
    %126 = arith.mulf %121, %125 : vector<64x64xf32>
    %127 = arith.truncf %126 : vector<64x64xf32> to vector<64x64xbf16>
    %cst_44 = arith.constant dense<0.000000e+00> : vector<64x32xf32>
    %128 = tpu.matmul %127, %114, %cst_44 {dimension_numbers = #tpu.dot_dimension_numbers<[1], [0], [0], [1], [0, 0, 1, 1], [], []>} : vector<64x64xbf16>, vector<64x32xbf16>, vector<64x32xf32> -> vector<64x32xf32>
    %c64_45 = arith.constant 64 : index
    %c0_46 = arith.constant 0 : index
    %129 = vector.load %arg18[%c64_45, %c0_46] : memref<128x128xf32, #tpu.memory_space<vmem>>, vector<64x32xf32>
    tpu.vector_store %arg18[%c64_45, %c0_46], %128 {strides = array<i32>} : memref<128x128xf32, #tpu.memory_space<vmem>>, vector<64x32xf32>,
    %130 = vector.extract_strided_slice %35 {offsets = [64, 32], sizes = [64, 32], strides = [1, 1]} : vector<128x128xbf16> to vector<64x32xbf16>
    %131 = vector.extract_strided_slice %37 {offsets = [64, 32], sizes = [64, 32], strides = [1, 1]} : vector<128x128xbf16> to vector<64x32xbf16>
    %132 = vector.extract_strided_slice %39 {offsets = [64, 32], sizes = [64, 32], strides = [1, 1]} : vector<128x128xbf16> to vector<64x32xbf16>
    %cst_47 = arith.constant dense<0.000000e+00> : vector<64x64xf32>
    %133 = tpu.matmul %130, %131, %cst_47 {dimension_numbers = #tpu.dot_dimension_numbers<[1], [1], [0], [0], [0, 0, 1, 0], [], []>} : vector<64x32xbf16>, vector<64x32xbf16>, vector<64x64xf32> -> vector<64x64xf32>
    %134 = arith.addf %133, %1 : vector<64x64xf32>
    %cst_48 = arith.constant dense<0xFF800000> : vector<64xf32>
    %135 = vector.multi_reduction <maximumf>, %134, %cst_48 [1] : vector<64x64xf32> to vector<64xf32>
    %136 = vector.shape_cast %135 : vector<64xf32> to vector<64x1xf32>
    %137 = vector.broadcast %136 : vector<64x1xf32> to vector<64x64xf32>
    %138 = arith.subf %134, %137 : vector<64x64xf32>
    %139 = math.exp %138 : vector<64x64xf32>
    %cst_49 = arith.constant dense<0.000000e+00> : vector<64xf32>
    %140 = vector.multi_reduction <add>, %139, %cst_49 [1] : vector<64x64xf32> to vector<64xf32>
    %141 = vector.shape_cast %140 : vector<64xf32> to vector<64x1xf32>
    %142 = tpu.reciprocal %141 {approx = true} : vector<64x1xf32> -> vector<64x1xf32>
    %143 = vector.broadcast %142 : vector<64x1xf32> to vector<64x64xf32>
    %144 = arith.mulf %139, %143 : vector<64x64xf32>
    %145 = arith.truncf %144 : vector<64x64xf32> to vector<64x64xbf16>
    %cst_50 = arith.constant dense<0.000000e+00> : vector<64x32xf32>
    %146 = tpu.matmul %145, %132, %cst_50 {dimension_numbers = #tpu.dot_dimension_numbers<[1], [0], [0], [1], [0, 0, 1, 1], [], []>} : vector<64x64xbf16>, vector<64x32xbf16>, vector<64x32xf32> -> vector<64x32xf32>
    %c64_51 = arith.constant 64 : index
    %c32_52 = arith.constant 32 : index
    %147 = vector.load %arg18[%c64_51, %c32_52] : memref<128x128xf32, #tpu.memory_space<vmem>>, vector<64x32xf32>
    tpu.vector_store %arg18[%c64_51, %c32_52], %146 {strides = array<i32>} : memref<128x128xf32, #tpu.memory_space<vmem>>, vector<64x32xf32>,
    %148 = vector.extract_strided_slice %35 {offsets = [64, 64], sizes = [64, 32], strides = [1, 1]} : vector<128x128xbf16> to vector<64x32xbf16>
    %149 = vector.extract_strided_slice %37 {offsets = [64, 64], sizes = [64, 32], strides = [1, 1]} : vector<128x128xbf16> to vector<64x32xbf16>
    %150 = vector.extract_strided_slice %39 {offsets = [64, 64], sizes = [64, 32], strides = [1, 1]} : vector<128x128xbf16> to vector<64x32xbf16>
    %cst_53 = arith.constant dense<0.000000e+00> : vector<64x64xf32>
    %151 = tpu.matmul %148, %149, %cst_53 {dimension_numbers = #tpu.dot_dimension_numbers<[1], [1], [0], [0], [0, 0, 1, 0], [], []>} : vector<64x32xbf16>, vector<64x32xbf16>, vector<64x64xf32> -> vector<64x64xf32>
    %152 = arith.addf %151, %1 : vector<64x64xf32>
    %cst_54 = arith.constant dense<0xFF800000> : vector<64xf32>
    %153 = vector.multi_reduction <maximumf>, %152, %cst_54 [1] : vector<64x64xf32> to vector<64xf32>
    %154 = vector.shape_cast %153 : vector<64xf32> to vector<64x1xf32>
    %155 = vector.broadcast %154 : vector<64x1xf32> to vector<64x64xf32>
    %156 = arith.subf %152, %155 : vector<64x64xf32>
    %157 = math.exp %156 : vector<64x64xf32>
    %cst_55 = arith.constant dense<0.000000e+00> : vector<64xf32>
    %158 = vector.multi_reduction <add>, %157, %cst_55 [1] : vector<64x64xf32> to vector<64xf32>
    %159 = vector.shape_cast %158 : vector<64xf32> to vector<64x1xf32>
    %160 = tpu.reciprocal %159 {approx = true} : vector<64x1xf32> -> vector<64x1xf32>
    %161 = vector.broadcast %160 : vector<64x1xf32> to vector<64x64xf32>
    %162 = arith.mulf %157, %161 : vector<64x64xf32>
    %163 = arith.truncf %162 : vector<64x64xf32> to vector<64x64xbf16>
    %cst_56 = arith.constant dense<0.000000e+00> : vector<64x32xf32>
    %164 = tpu.matmul %163, %150, %cst_56 {dimension_numbers = #tpu.dot_dimension_numbers<[1], [0], [0], [1], [0, 0, 1, 1], [], []>} : vector<64x64xbf16>, vector<64x32xbf16>, vector<64x32xf32> -> vector<64x32xf32>
    %c64_57 = arith.constant 64 : index
    %c64_58 = arith.constant 64 : index
    %165 = vector.load %arg18[%c64_57, %c64_58] : memref<128x128xf32, #tpu.memory_space<vmem>>, vector<64x32xf32>
    tpu.vector_store %arg18[%c64_57, %c64_58], %164 {strides = array<i32>} : memref<128x128xf32, #tpu.memory_space<vmem>>, vector<64x32xf32>,
    %166 = vector.extract_strided_slice %35 {offsets = [64, 96], sizes = [64, 32], strides = [1, 1]} : vector<128x128xbf16> to vector<64x32xbf16>
    %167 = vector.extract_strided_slice %37 {offsets = [64, 96], sizes = [64, 32], strides = [1, 1]} : vector<128x128xbf16> to vector<64x32xbf16>
    %168 = vector.extract_strided_slice %39 {offsets = [64, 96], sizes = [64, 32], strides = [1, 1]} : vector<128x128xbf16> to vector<64x32xbf16>
    %cst_59 = arith.constant dense<0.000000e+00> : vector<64x64xf32>
    %169 = tpu.matmul %166, %167, %cst_59 {dimension_numbers = #tpu.dot_dimension_numbers<[1], [1], [0], [0], [0, 0, 1, 0], [], []>} : vector<64x32xbf16>, vector<64x32xbf16>, vector<64x64xf32> -> vector<64x64xf32>
    %170 = arith.addf %169, %1 : vector<64x64xf32>
    %cst_60 = arith.constant dense<0xFF800000> : vector<64xf32>
    %171 = vector.multi_reduction <maximumf>, %170, %cst_60 [1] : vector<64x64xf32> to vector<64xf32>
    %172 = vector.shape_cast %171 : vector<64xf32> to vector<64x1xf32>
    %173 = vector.broadcast %172 : vector<64x1xf32> to vector<64x64xf32>
    %174 = arith.subf %170, %173 : vector<64x64xf32>
    %175 = math.exp %174 : vector<64x64xf32>
    %cst_61 = arith.constant dense<0.000000e+00> : vector<64xf32>
    %176 = vector.multi_reduction <add>, %175, %cst_61 [1] : vector<64x64xf32> to vector<64xf32>
    %177 = vector.shape_cast %176 : vector<64xf32> to vector<64x1xf32>
    %178 = tpu.reciprocal %177 {approx = true} : vector<64x1xf32> -> vector<64x1xf32>
    %179 = vector.broadcast %178 : vector<64x1xf32> to vector<64x64xf32>
    %180 = arith.mulf %175, %179 : vector<64x64xf32>
    %181 = arith.truncf %180 : vector<64x64xf32> to vector<64x64xbf16>
    %cst_62 = arith.constant dense<0.000000e+00> : vector<64x32xf32>
    %182 = tpu.matmul %181, %168, %cst_62 {dimension_numbers = #tpu.dot_dimension_numbers<[1], [0], [0], [1], [0, 0, 1, 1], [], []>} : vector<64x64xbf16>, vector<64x32xbf16>, vector<64x32xf32> -> vector<64x32xf32>
    %c64_63 = arith.constant 64 : index
    %c96_64 = arith.constant 96 : index
    %183 = vector.load %arg18[%c64_63, %c96_64] : memref<128x128xf32, #tpu.memory_space<vmem>>, vector<64x32xf32>
    tpu.vector_store %arg18[%c64_63, %c96_64], %182 {strides = array<i32>} : memref<128x128xf32, #tpu.memory_space<vmem>>, vector<64x32xf32>,
    %c0_65 = arith.constant 0 : index
    %c0_66 = arith.constant 0 : index
    %184 = vector.load %arg18[%c0_65, %c0_66] : memref<128x128xf32, #tpu.memory_space<vmem>>, vector<128x128xf32>
    %185 = arith.truncf %184 : vector<128x128xf32> to vector<128x128xbf16>
    %c0_67 = arith.constant 0 : index
    %c0_68 = arith.constant 0 : index
    %c0_69 = arith.constant 0 : index
    %186 = vector.load %arg6[%c0_67, %c0_68, %c0_69] : memref<2x128x128xbf16, #tpu.memory_space<vmem>>, vector<1x128x128xbf16>
    %187 = vector.shape_cast %186 : vector<1x128x128xbf16> to vector<128x128xbf16>
    %cst_70 = arith.constant dense<0.000000e+00> : vector<128x128xf32>
    %188 = tpu.matmul %185, %187, %cst_70 {dimension_numbers = #tpu.dot_dimension_numbers<[1], [0], [0], [1], [0, 0, 1, 1], [], []>} : vector<128x128xbf16>, vector<128x128xbf16>, vector<128x128xf32> -> vector<128x128xf32>
    %c0_71 = arith.constant 0 : index
    %c0_72 = arith.constant 0 : index
    %c0_73 = arith.constant 0 : index
    %189 = vector.load %arg7[%c0_71, %c0_72, %c0_73] : memref<2x1x128xf32, #tpu.memory_space<vmem>>, vector<1x1x128xf32>
    %190 = vector.shape_cast %189 : vector<1x1x128xf32> to vector<1x128xf32>
    %191 = vector.broadcast %190 : vector<1x128xf32> to vector<128x128xf32>
    %192 = arith.addf %188, %191 : vector<128x128xf32>
    %193 = arith.addf %0, %192 : vector<128x128xf32>
    %c0_74 = arith.constant 0 : index
    %c0_75 = arith.constant 0 : index
    %c0_76 = arith.constant 0 : index
    %194 = vector.load %arg8[%c0_74, %c0_75, %c0_76] : memref<2x1x128xf32, #tpu.memory_space<vmem>>, vector<1x1x128xf32>
    %195 = vector.shape_cast %194 : vector<1x1x128xf32> to vector<1x128xf32>
    %c0_77 = arith.constant 0 : index
    %c0_78 = arith.constant 0 : index
    %c0_79 = arith.constant 0 : index
    %196 = vector.load %arg9[%c0_77, %c0_78, %c0_79] : memref<2x1x128xf32, #tpu.memory_space<vmem>>, vector<1x1x128xf32>
    %197 = vector.shape_cast %196 : vector<1x1x128xf32> to vector<1x128xf32>
    %cst_80 = arith.constant dense<0.000000e+00> : vector<128xf32>
    %198 = vector.multi_reduction <add>, %193, %cst_80 [1] : vector<128x128xf32> to vector<128xf32>
    %199 = vector.shape_cast %198 : vector<128xf32> to vector<128x1xf32>
    %cst_81 = arith.constant 1.280000e+02 : f32
    %200 = vector.broadcast %cst_81 : f32 to vector<128x1xf32>
    %201 = arith.divf %199, %200 : vector<128x1xf32>
    %202 = vector.broadcast %201 : vector<128x1xf32> to vector<128x128xf32>
    %203 = arith.subf %193, %202 : vector<128x128xf32>
    %204 = arith.mulf %203, %203 : vector<128x128xf32>
    %cst_82 = arith.constant dense<0.000000e+00> : vector<128xf32>
    %205 = vector.multi_reduction <add>, %204, %cst_82 [1] : vector<128x128xf32> to vector<128xf32>
    %206 = vector.shape_cast %205 : vector<128xf32> to vector<128x1xf32>
    %cst_83 = arith.constant 1.280000e+02 : f32
    %207 = vector.broadcast %cst_83 : f32 to vector<128x1xf32>
    %208 = arith.divf %206, %207 : vector<128x1xf32>
    %cst_84 = arith.constant 9.99999974E-6 : f32
    %209 = vector.broadcast %cst_84 : f32 to vector<128x1xf32>
    %210 = arith.addf %208, %209 : vector<128x1xf32>
    %211 = math.rsqrt %210 : vector<128x1xf32>
    %212 = vector.broadcast %211 : vector<128x1xf32> to vector<128x128xf32>
    %213 = arith.mulf %203, %212 : vector<128x128xf32>
    %214 = vector.broadcast %195 : vector<1x128xf32> to vector<128x128xf32>
    %215 = arith.mulf %213, %214 : vector<128x128xf32>
    %216 = vector.broadcast %197 : vector<1x128xf32> to vector<128x128xf32>
    %217 = arith.addf %215, %216 : vector<128x128xf32>
    %218 = arith.truncf %217 : vector<128x128xf32> to vector<128x128xbf16>
    %c0_85 = arith.constant 0 : index
    %c0_86 = arith.constant 0 : index
    %c0_87 = arith.constant 0 : index
    %219 = vector.load %arg10[%c0_85, %c0_86, %c0_87] : memref<2x128x512xbf16, #tpu.memory_space<vmem>>, vector<1x128x512xbf16>
    %220 = vector.shape_cast %219 : vector<1x128x512xbf16> to vector<128x512xbf16>
    %cst_88 = arith.constant dense<0.000000e+00> : vector<128x512xf32>
    %221 = tpu.matmul %218, %220, %cst_88 {dimension_numbers = #tpu.dot_dimension_numbers<[1], [0], [0], [1], [0, 0, 1, 1], [], []>} : vector<128x128xbf16>, vector<128x512xbf16>, vector<128x512xf32> -> vector<128x512xf32>
    %c0_89 = arith.constant 0 : index
    %c0_90 = arith.constant 0 : index
    %c0_91 = arith.constant 0 : index
    %222 = vector.load %arg11[%c0_89, %c0_90, %c0_91] : memref<2x1x512xf32, #tpu.memory_space<vmem>>, vector<1x1x512xf32>
    %223 = vector.shape_cast %222 : vector<1x1x512xf32> to vector<1x512xf32>
    %224 = vector.broadcast %223 : vector<1x512xf32> to vector<128x512xf32>
    %225 = arith.addf %221, %224 : vector<128x512xf32>
    %cst_92 = arith.constant 5.000000e-01 : f32
    %226 = vector.broadcast %cst_92 : f32 to vector<128x512xf32>
    %227 = arith.mulf %226, %225 : vector<128x512xf32>
    %cst_93 = arith.constant 4.471500e-02 : f32
    %228 = vector.broadcast %cst_93 : f32 to vector<128x512xf32>
    %229 = arith.mulf %228, %225 : vector<128x512xf32>
    %230 = arith.mulf %229, %225 : vector<128x512xf32>
    %231 = arith.mulf %230, %225 : vector<128x512xf32>
    %232 = arith.addf %225, %231 : vector<128x512xf32>
    %cst_94 = arith.constant 0.797884583 : f32
    %233 = vector.broadcast %cst_94 : f32 to vector<128x512xf32>
    %234 = arith.mulf %233, %232 : vector<128x512xf32>
    %235 = math.tanh %234 : vector<128x512xf32>
    %cst_95 = arith.constant 1.000000e+00 : f32
    %236 = vector.broadcast %cst_95 : f32 to vector<128x512xf32>
    %237 = arith.addf %236, %235 : vector<128x512xf32>
    %238 = arith.mulf %227, %237 : vector<128x512xf32>
    %239 = arith.truncf %238 : vector<128x512xf32> to vector<128x512xbf16>
    %c0_96 = arith.constant 0 : index
    %c0_97 = arith.constant 0 : index
    %c0_98 = arith.constant 0 : index
    %240 = vector.load %arg12[%c0_96, %c0_97, %c0_98] : memref<2x512x128xbf16, #tpu.memory_space<vmem>>, vector<1x512x128xbf16>
    %241 = vector.shape_cast %240 : vector<1x512x128xbf16> to vector<512x128xbf16>
    %cst_99 = arith.constant dense<0.000000e+00> : vector<128x128xf32>
    %242 = tpu.matmul %239, %241, %cst_99 {dimension_numbers = #tpu.dot_dimension_numbers<[1], [0], [0], [1], [0, 0, 1, 1], [], []>} : vector<128x512xbf16>, vector<512x128xbf16>, vector<128x128xf32> -> vector<128x128xf32>
    %c0_100 = arith.constant 0 : index
    %c0_101 = arith.constant 0 : index
    %c0_102 = arith.constant 0 : index
    %243 = vector.load %arg13[%c0_100, %c0_101, %c0_102] : memref<2x1x128xf32, #tpu.memory_space<vmem>>, vector<1x1x128xf32>
    %244 = vector.shape_cast %243 : vector<1x1x128xf32> to vector<1x128xf32>
    %245 = vector.broadcast %244 : vector<1x128xf32> to vector<128x128xf32>
    %246 = arith.addf %242, %245 : vector<128x128xf32>
    %247 = arith.addf %193, %246 : vector<128x128xf32>
    %c1 = arith.constant 1 : index
    %c0_103 = arith.constant 0 : index
    %c0_104 = arith.constant 0 : index
    %248 = vector.load %arg2[%c1, %c0_103, %c0_104] : memref<2x1x128xf32, #tpu.memory_space<vmem>>, vector<1x1x128xf32>
    %249 = vector.shape_cast %248 : vector<1x1x128xf32> to vector<1x128xf32>
    %c1_105 = arith.constant 1 : index
    %c0_106 = arith.constant 0 : index
    %c0_107 = arith.constant 0 : index
    %250 = vector.load %arg3[%c1_105, %c0_106, %c0_107] : memref<2x1x128xf32, #tpu.memory_space<vmem>>, vector<1x1x128xf32>
    %251 = vector.shape_cast %250 : vector<1x1x128xf32> to vector<1x128xf32>
    %cst_108 = arith.constant dense<0.000000e+00> : vector<128xf32>
    %252 = vector.multi_reduction <add>, %247, %cst_108 [1] : vector<128x128xf32> to vector<128xf32>
    %253 = vector.shape_cast %252 : vector<128xf32> to vector<128x1xf32>
    %cst_109 = arith.constant 1.280000e+02 : f32
    %254 = vector.broadcast %cst_109 : f32 to vector<128x1xf32>
    %255 = arith.divf %253, %254 : vector<128x1xf32>
    %256 = vector.broadcast %255 : vector<128x1xf32> to vector<128x128xf32>
    %257 = arith.subf %247, %256 : vector<128x128xf32>
    %258 = arith.mulf %257, %257 : vector<128x128xf32>
    %cst_110 = arith.constant dense<0.000000e+00> : vector<128xf32>
    %259 = vector.multi_reduction <add>, %258, %cst_110 [1] : vector<128x128xf32> to vector<128xf32>
    %260 = vector.shape_cast %259 : vector<128xf32> to vector<128x1xf32>
    %cst_111 = arith.constant 1.280000e+02 : f32
    %261 = vector.broadcast %cst_111 : f32 to vector<128x1xf32>
    %262 = arith.divf %260, %261 : vector<128x1xf32>
    %cst_112 = arith.constant 9.99999974E-6 : f32
    %263 = vector.broadcast %cst_112 : f32 to vector<128x1xf32>
    %264 = arith.addf %262, %263 : vector<128x1xf32>
    %265 = math.rsqrt %264 : vector<128x1xf32>
    %266 = vector.broadcast %265 : vector<128x1xf32> to vector<128x128xf32>
    %267 = arith.mulf %257, %266 : vector<128x128xf32>
    %268 = vector.broadcast %249 : vector<1x128xf32> to vector<128x128xf32>
    %269 = arith.mulf %267, %268 : vector<128x128xf32>
    %270 = vector.broadcast %251 : vector<1x128xf32> to vector<128x128xf32>
    %271 = arith.addf %269, %270 : vector<128x128xf32>
    %272 = arith.truncf %271 : vector<128x128xf32> to vector<128x128xbf16>
    %c1_113 = arith.constant 1 : index
    %c0_114 = arith.constant 0 : index
    %c0_115 = arith.constant 0 : index
    %273 = vector.load %arg4[%c1_113, %c0_114, %c0_115] : memref<2x128x384xbf16, #tpu.memory_space<vmem>>, vector<1x128x384xbf16>
    %274 = vector.shape_cast %273 : vector<1x128x384xbf16> to vector<128x384xbf16>
    %cst_116 = arith.constant dense<0.000000e+00> : vector<128x384xf32>
    %275 = tpu.matmul %272, %274, %cst_116 {dimension_numbers = #tpu.dot_dimension_numbers<[1], [0], [0], [1], [0, 0, 1, 1], [], []>} : vector<128x128xbf16>, vector<128x384xbf16>, vector<128x384xf32> -> vector<128x384xf32>
    %c1_117 = arith.constant 1 : index
    %c0_118 = arith.constant 0 : index
    %c0_119 = arith.constant 0 : index
    %276 = vector.load %arg5[%c1_117, %c0_118, %c0_119] : memref<2x1x384xf32, #tpu.memory_space<vmem>>, vector<1x1x384xf32>
    %277 = vector.shape_cast %276 : vector<1x1x384xf32> to vector<1x384xf32>
    %278 = vector.broadcast %277 : vector<1x384xf32> to vector<128x384xf32>
    %279 = arith.addf %275, %278 : vector<128x384xf32>
    %280 = vector.extract_strided_slice %279 {offsets = [0, 0], sizes = [128, 128], strides = [1, 1]} : vector<128x384xf32> to vector<128x128xf32>
    %281 = arith.truncf %280 : vector<128x128xf32> to vector<128x128xbf16>
    %282 = vector.extract_strided_slice %279 {offsets = [0, 128], sizes = [128, 128], strides = [1, 1]} : vector<128x384xf32> to vector<128x128xf32>
    %283 = arith.truncf %282 : vector<128x128xf32> to vector<128x128xbf16>
    %284 = vector.extract_strided_slice %279 {offsets = [0, 256], sizes = [128, 128], strides = [1, 1]} : vector<128x384xf32> to vector<128x128xf32>
    %285 = arith.truncf %284 : vector<128x128xf32> to vector<128x128xbf16>
    %286 = vector.extract_strided_slice %281 {offsets = [0, 0], sizes = [64, 32], strides = [1, 1]} : vector<128x128xbf16> to vector<64x32xbf16>
    %287 = vector.extract_strided_slice %283 {offsets = [0, 0], sizes = [64, 32], strides = [1, 1]} : vector<128x128xbf16> to vector<64x32xbf16>
    %288 = vector.extract_strided_slice %285 {offsets = [0, 0], sizes = [64, 32], strides = [1, 1]} : vector<128x128xbf16> to vector<64x32xbf16>
    %cst_120 = arith.constant dense<0.000000e+00> : vector<64x64xf32>
    %289 = tpu.matmul %286, %287, %cst_120 {dimension_numbers = #tpu.dot_dimension_numbers<[1], [1], [0], [0], [0, 0, 1, 0], [], []>} : vector<64x32xbf16>, vector<64x32xbf16>, vector<64x64xf32> -> vector<64x64xf32>
    %290 = arith.addf %289, %1 : vector<64x64xf32>
    %cst_121 = arith.constant dense<0xFF800000> : vector<64xf32>
    %291 = vector.multi_reduction <maximumf>, %290, %cst_121 [1] : vector<64x64xf32> to vector<64xf32>
    %292 = vector.shape_cast %291 : vector<64xf32> to vector<64x1xf32>
    %293 = vector.broadcast %292 : vector<64x1xf32> to vector<64x64xf32>
    %294 = arith.subf %290, %293 : vector<64x64xf32>
    %295 = math.exp %294 : vector<64x64xf32>
    %cst_122 = arith.constant dense<0.000000e+00> : vector<64xf32>
    %296 = vector.multi_reduction <add>, %295, %cst_122 [1] : vector<64x64xf32> to vector<64xf32>
    %297 = vector.shape_cast %296 : vector<64xf32> to vector<64x1xf32>
    %298 = tpu.reciprocal %297 {approx = true} : vector<64x1xf32> -> vector<64x1xf32>
    %299 = vector.broadcast %298 : vector<64x1xf32> to vector<64x64xf32>
    %300 = arith.mulf %295, %299 : vector<64x64xf32>
    %301 = arith.truncf %300 : vector<64x64xf32> to vector<64x64xbf16>
    %cst_123 = arith.constant dense<0.000000e+00> : vector<64x32xf32>
    %302 = tpu.matmul %301, %288, %cst_123 {dimension_numbers = #tpu.dot_dimension_numbers<[1], [0], [0], [1], [0, 0, 1, 1], [], []>} : vector<64x64xbf16>, vector<64x32xbf16>, vector<64x32xf32> -> vector<64x32xf32>
    %c0_124 = arith.constant 0 : index
    %c0_125 = arith.constant 0 : index
    %303 = vector.load %arg18[%c0_124, %c0_125] : memref<128x128xf32, #tpu.memory_space<vmem>>, vector<64x32xf32>
    tpu.vector_store %arg18[%c0_124, %c0_125], %302 {strides = array<i32>} : memref<128x128xf32, #tpu.memory_space<vmem>>, vector<64x32xf32>,
    %304 = vector.extract_strided_slice %281 {offsets = [0, 32], sizes = [64, 32], strides = [1, 1]} : vector<128x128xbf16> to vector<64x32xbf16>
    %305 = vector.extract_strided_slice %283 {offsets = [0, 32], sizes = [64, 32], strides = [1, 1]} : vector<128x128xbf16> to vector<64x32xbf16>
    %306 = vector.extract_strided_slice %285 {offsets = [0, 32], sizes = [64, 32], strides = [1, 1]} : vector<128x128xbf16> to vector<64x32xbf16>
    %cst_126 = arith.constant dense<0.000000e+00> : vector<64x64xf32>
    %307 = tpu.matmul %304, %305, %cst_126 {dimension_numbers = #tpu.dot_dimension_numbers<[1], [1], [0], [0], [0, 0, 1, 0], [], []>} : vector<64x32xbf16>, vector<64x32xbf16>, vector<64x64xf32> -> vector<64x64xf32>
    %308 = arith.addf %307, %1 : vector<64x64xf32>
    %cst_127 = arith.constant dense<0xFF800000> : vector<64xf32>
    %309 = vector.multi_reduction <maximumf>, %308, %cst_127 [1] : vector<64x64xf32> to vector<64xf32>
    %310 = vector.shape_cast %309 : vector<64xf32> to vector<64x1xf32>
    %311 = vector.broadcast %310 : vector<64x1xf32> to vector<64x64xf32>
    %312 = arith.subf %308, %311 : vector<64x64xf32>
    %313 = math.exp %312 : vector<64x64xf32>
    %cst_128 = arith.constant dense<0.000000e+00> : vector<64xf32>
    %314 = vector.multi_reduction <add>, %313, %cst_128 [1] : vector<64x64xf32> to vector<64xf32>
    %315 = vector.shape_cast %314 : vector<64xf32> to vector<64x1xf32>
    %316 = tpu.reciprocal %315 {approx = true} : vector<64x1xf32> -> vector<64x1xf32>
    %317 = vector.broadcast %316 : vector<64x1xf32> to vector<64x64xf32>
    %318 = arith.mulf %313, %317 : vector<64x64xf32>
    %319 = arith.truncf %318 : vector<64x64xf32> to vector<64x64xbf16>
    %cst_129 = arith.constant dense<0.000000e+00> : vector<64x32xf32>
    %320 = tpu.matmul %319, %306, %cst_129 {dimension_numbers = #tpu.dot_dimension_numbers<[1], [0], [0], [1], [0, 0, 1, 1], [], []>} : vector<64x64xbf16>, vector<64x32xbf16>, vector<64x32xf32> -> vector<64x32xf32>
    %c0_130 = arith.constant 0 : index
    %c32_131 = arith.constant 32 : index
    %321 = vector.load %arg18[%c0_130, %c32_131] : memref<128x128xf32, #tpu.memory_space<vmem>>, vector<64x32xf32>
    tpu.vector_store %arg18[%c0_130, %c32_131], %320 {strides = array<i32>} : memref<128x128xf32, #tpu.memory_space<vmem>>, vector<64x32xf32>,
    %322 = vector.extract_strided_slice %281 {offsets = [0, 64], sizes = [64, 32], strides = [1, 1]} : vector<128x128xbf16> to vector<64x32xbf16>
    %323 = vector.extract_strided_slice %283 {offsets = [0, 64], sizes = [64, 32], strides = [1, 1]} : vector<128x128xbf16> to vector<64x32xbf16>
    %324 = vector.extract_strided_slice %285 {offsets = [0, 64], sizes = [64, 32], strides = [1, 1]} : vector<128x128xbf16> to vector<64x32xbf16>
    %cst_132 = arith.constant dense<0.000000e+00> : vector<64x64xf32>
    %325 = tpu.matmul %322, %323, %cst_132 {dimension_numbers = #tpu.dot_dimension_numbers<[1], [1], [0], [0], [0, 0, 1, 0], [], []>} : vector<64x32xbf16>, vector<64x32xbf16>, vector<64x64xf32> -> vector<64x64xf32>
    %326 = arith.addf %325, %1 : vector<64x64xf32>
    %cst_133 = arith.constant dense<0xFF800000> : vector<64xf32>
    %327 = vector.multi_reduction <maximumf>, %326, %cst_133 [1] : vector<64x64xf32> to vector<64xf32>
    %328 = vector.shape_cast %327 : vector<64xf32> to vector<64x1xf32>
    %329 = vector.broadcast %328 : vector<64x1xf32> to vector<64x64xf32>
    %330 = arith.subf %326, %329 : vector<64x64xf32>
    %331 = math.exp %330 : vector<64x64xf32>
    %cst_134 = arith.constant dense<0.000000e+00> : vector<64xf32>
    %332 = vector.multi_reduction <add>, %331, %cst_134 [1] : vector<64x64xf32> to vector<64xf32>
    %333 = vector.shape_cast %332 : vector<64xf32> to vector<64x1xf32>
    %334 = tpu.reciprocal %333 {approx = true} : vector<64x1xf32> -> vector<64x1xf32>
    %335 = vector.broadcast %334 : vector<64x1xf32> to vector<64x64xf32>
    %336 = arith.mulf %331, %335 : vector<64x64xf32>
    %337 = arith.truncf %336 : vector<64x64xf32> to vector<64x64xbf16>
    %cst_135 = arith.constant dense<0.000000e+00> : vector<64x32xf32>
    %338 = tpu.matmul %337, %324, %cst_135 {dimension_numbers = #tpu.dot_dimension_numbers<[1], [0], [0], [1], [0, 0, 1, 1], [], []>} : vector<64x64xbf16>, vector<64x32xbf16>, vector<64x32xf32> -> vector<64x32xf32>
    %c0_136 = arith.constant 0 : index
    %c64_137 = arith.constant 64 : index
    %339 = vector.load %arg18[%c0_136, %c64_137] : memref<128x128xf32, #tpu.memory_space<vmem>>, vector<64x32xf32>
    tpu.vector_store %arg18[%c0_136, %c64_137], %338 {strides = array<i32>} : memref<128x128xf32, #tpu.memory_space<vmem>>, vector<64x32xf32>,
    %340 = vector.extract_strided_slice %281 {offsets = [0, 96], sizes = [64, 32], strides = [1, 1]} : vector<128x128xbf16> to vector<64x32xbf16>
    %341 = vector.extract_strided_slice %283 {offsets = [0, 96], sizes = [64, 32], strides = [1, 1]} : vector<128x128xbf16> to vector<64x32xbf16>
    %342 = vector.extract_strided_slice %285 {offsets = [0, 96], sizes = [64, 32], strides = [1, 1]} : vector<128x128xbf16> to vector<64x32xbf16>
    %cst_138 = arith.constant dense<0.000000e+00> : vector<64x64xf32>
    %343 = tpu.matmul %340, %341, %cst_138 {dimension_numbers = #tpu.dot_dimension_numbers<[1], [1], [0], [0], [0, 0, 1, 0], [], []>} : vector<64x32xbf16>, vector<64x32xbf16>, vector<64x64xf32> -> vector<64x64xf32>
    %344 = arith.addf %343, %1 : vector<64x64xf32>
    %cst_139 = arith.constant dense<0xFF800000> : vector<64xf32>
    %345 = vector.multi_reduction <maximumf>, %344, %cst_139 [1] : vector<64x64xf32> to vector<64xf32>
    %346 = vector.shape_cast %345 : vector<64xf32> to vector<64x1xf32>
    %347 = vector.broadcast %346 : vector<64x1xf32> to vector<64x64xf32>
    %348 = arith.subf %344, %347 : vector<64x64xf32>
    %349 = math.exp %348 : vector<64x64xf32>
    %cst_140 = arith.constant dense<0.000000e+00> : vector<64xf32>
    %350 = vector.multi_reduction <add>, %349, %cst_140 [1] : vector<64x64xf32> to vector<64xf32>
    %351 = vector.shape_cast %350 : vector<64xf32> to vector<64x1xf32>
    %352 = tpu.reciprocal %351 {approx = true} : vector<64x1xf32> -> vector<64x1xf32>
    %353 = vector.broadcast %352 : vector<64x1xf32> to vector<64x64xf32>
    %354 = arith.mulf %349, %353 : vector<64x64xf32>
    %355 = arith.truncf %354 : vector<64x64xf32> to vector<64x64xbf16>
    %cst_141 = arith.constant dense<0.000000e+00> : vector<64x32xf32>
    %356 = tpu.matmul %355, %342, %cst_141 {dimension_numbers = #tpu.dot_dimension_numbers<[1], [0], [0], [1], [0, 0, 1, 1], [], []>} : vector<64x64xbf16>, vector<64x32xbf16>, vector<64x32xf32> -> vector<64x32xf32>
    %c0_142 = arith.constant 0 : index
    %c96_143 = arith.constant 96 : index
    %357 = vector.load %arg18[%c0_142, %c96_143] : memref<128x128xf32, #tpu.memory_space<vmem>>, vector<64x32xf32>
    tpu.vector_store %arg18[%c0_142, %c96_143], %356 {strides = array<i32>} : memref<128x128xf32, #tpu.memory_space<vmem>>, vector<64x32xf32>,
    %358 = vector.extract_strided_slice %281 {offsets = [64, 0], sizes = [64, 32], strides = [1, 1]} : vector<128x128xbf16> to vector<64x32xbf16>
    %359 = vector.extract_strided_slice %283 {offsets = [64, 0], sizes = [64, 32], strides = [1, 1]} : vector<128x128xbf16> to vector<64x32xbf16>
    %360 = vector.extract_strided_slice %285 {offsets = [64, 0], sizes = [64, 32], strides = [1, 1]} : vector<128x128xbf16> to vector<64x32xbf16>
    %cst_144 = arith.constant dense<0.000000e+00> : vector<64x64xf32>
    %361 = tpu.matmul %358, %359, %cst_144 {dimension_numbers = #tpu.dot_dimension_numbers<[1], [1], [0], [0], [0, 0, 1, 0], [], []>} : vector<64x32xbf16>, vector<64x32xbf16>, vector<64x64xf32> -> vector<64x64xf32>
    %362 = arith.addf %361, %1 : vector<64x64xf32>
    %cst_145 = arith.constant dense<0xFF800000> : vector<64xf32>
    %363 = vector.multi_reduction <maximumf>, %362, %cst_145 [1] : vector<64x64xf32> to vector<64xf32>
    %364 = vector.shape_cast %363 : vector<64xf32> to vector<64x1xf32>
    %365 = vector.broadcast %364 : vector<64x1xf32> to vector<64x64xf32>
    %366 = arith.subf %362, %365 : vector<64x64xf32>
    %367 = math.exp %366 : vector<64x64xf32>
    %cst_146 = arith.constant dense<0.000000e+00> : vector<64xf32>
    %368 = vector.multi_reduction <add>, %367, %cst_146 [1] : vector<64x64xf32> to vector<64xf32>
    %369 = vector.shape_cast %368 : vector<64xf32> to vector<64x1xf32>
    %370 = tpu.reciprocal %369 {approx = true} : vector<64x1xf32> -> vector<64x1xf32>
    %371 = vector.broadcast %370 : vector<64x1xf32> to vector<64x64xf32>
    %372 = arith.mulf %367, %371 : vector<64x64xf32>
    %373 = arith.truncf %372 : vector<64x64xf32> to vector<64x64xbf16>
    %cst_147 = arith.constant dense<0.000000e+00> : vector<64x32xf32>
    %374 = tpu.matmul %373, %360, %cst_147 {dimension_numbers = #tpu.dot_dimension_numbers<[1], [0], [0], [1], [0, 0, 1, 1], [], []>} : vector<64x64xbf16>, vector<64x32xbf16>, vector<64x32xf32> -> vector<64x32xf32>
    %c64_148 = arith.constant 64 : index
    %c0_149 = arith.constant 0 : index
    %375 = vector.load %arg18[%c64_148, %c0_149] : memref<128x128xf32, #tpu.memory_space<vmem>>, vector<64x32xf32>
    tpu.vector_store %arg18[%c64_148, %c0_149], %374 {strides = array<i32>} : memref<128x128xf32, #tpu.memory_space<vmem>>, vector<64x32xf32>,
    %376 = vector.extract_strided_slice %281 {offsets = [64, 32], sizes = [64, 32], strides = [1, 1]} : vector<128x128xbf16> to vector<64x32xbf16>
    %377 = vector.extract_strided_slice %283 {offsets = [64, 32], sizes = [64, 32], strides = [1, 1]} : vector<128x128xbf16> to vector<64x32xbf16>
    %378 = vector.extract_strided_slice %285 {offsets = [64, 32], sizes = [64, 32], strides = [1, 1]} : vector<128x128xbf16> to vector<64x32xbf16>
    %cst_150 = arith.constant dense<0.000000e+00> : vector<64x64xf32>
    %379 = tpu.matmul %376, %377, %cst_150 {dimension_numbers = #tpu.dot_dimension_numbers<[1], [1], [0], [0], [0, 0, 1, 0], [], []>} : vector<64x32xbf16>, vector<64x32xbf16>, vector<64x64xf32> -> vector<64x64xf32>
    %380 = arith.addf %379, %1 : vector<64x64xf32>
    %cst_151 = arith.constant dense<0xFF800000> : vector<64xf32>
    %381 = vector.multi_reduction <maximumf>, %380, %cst_151 [1] : vector<64x64xf32> to vector<64xf32>
    %382 = vector.shape_cast %381 : vector<64xf32> to vector<64x1xf32>
    %383 = vector.broadcast %382 : vector<64x1xf32> to vector<64x64xf32>
    %384 = arith.subf %380, %383 : vector<64x64xf32>
    %385 = math.exp %384 : vector<64x64xf32>
    %cst_152 = arith.constant dense<0.000000e+00> : vector<64xf32>
    %386 = vector.multi_reduction <add>, %385, %cst_152 [1] : vector<64x64xf32> to vector<64xf32>
    %387 = vector.shape_cast %386 : vector<64xf32> to vector<64x1xf32>
    %388 = tpu.reciprocal %387 {approx = true} : vector<64x1xf32> -> vector<64x1xf32>
    %389 = vector.broadcast %388 : vector<64x1xf32> to vector<64x64xf32>
    %390 = arith.mulf %385, %389 : vector<64x64xf32>
    %391 = arith.truncf %390 : vector<64x64xf32> to vector<64x64xbf16>
    %cst_153 = arith.constant dense<0.000000e+00> : vector<64x32xf32>
    %392 = tpu.matmul %391, %378, %cst_153 {dimension_numbers = #tpu.dot_dimension_numbers<[1], [0], [0], [1], [0, 0, 1, 1], [], []>} : vector<64x64xbf16>, vector<64x32xbf16>, vector<64x32xf32> -> vector<64x32xf32>
    %c64_154 = arith.constant 64 : index
    %c32_155 = arith.constant 32 : index
    %393 = vector.load %arg18[%c64_154, %c32_155] : memref<128x128xf32, #tpu.memory_space<vmem>>, vector<64x32xf32>
    tpu.vector_store %arg18[%c64_154, %c32_155], %392 {strides = array<i32>} : memref<128x128xf32, #tpu.memory_space<vmem>>, vector<64x32xf32>,
    %394 = vector.extract_strided_slice %281 {offsets = [64, 64], sizes = [64, 32], strides = [1, 1]} : vector<128x128xbf16> to vector<64x32xbf16>
    %395 = vector.extract_strided_slice %283 {offsets = [64, 64], sizes = [64, 32], strides = [1, 1]} : vector<128x128xbf16> to vector<64x32xbf16>
    %396 = vector.extract_strided_slice %285 {offsets = [64, 64], sizes = [64, 32], strides = [1, 1]} : vector<128x128xbf16> to vector<64x32xbf16>
    %cst_156 = arith.constant dense<0.000000e+00> : vector<64x64xf32>
    %397 = tpu.matmul %394, %395, %cst_156 {dimension_numbers = #tpu.dot_dimension_numbers<[1], [1], [0], [0], [0, 0, 1, 0], [], []>} : vector<64x32xbf16>, vector<64x32xbf16>, vector<64x64xf32> -> vector<64x64xf32>
    %398 = arith.addf %397, %1 : vector<64x64xf32>
    %cst_157 = arith.constant dense<0xFF800000> : vector<64xf32>
    %399 = vector.multi_reduction <maximumf>, %398, %cst_157 [1] : vector<64x64xf32> to vector<64xf32>
    %400 = vector.shape_cast %399 : vector<64xf32> to vector<64x1xf32>
    %401 = vector.broadcast %400 : vector<64x1xf32> to vector<64x64xf32>
    %402 = arith.subf %398, %401 : vector<64x64xf32>
    %403 = math.exp %402 : vector<64x64xf32>
    %cst_158 = arith.constant dense<0.000000e+00> : vector<64xf32>
    %404 = vector.multi_reduction <add>, %403, %cst_158 [1] : vector<64x64xf32> to vector<64xf32>
    %405 = vector.shape_cast %404 : vector<64xf32> to vector<64x1xf32>
    %406 = tpu.reciprocal %405 {approx = true} : vector<64x1xf32> -> vector<64x1xf32>
    %407 = vector.broadcast %406 : vector<64x1xf32> to vector<64x64xf32>
    %408 = arith.mulf %403, %407 : vector<64x64xf32>
    %409 = arith.truncf %408 : vector<64x64xf32> to vector<64x64xbf16>
    %cst_159 = arith.constant dense<0.000000e+00> : vector<64x32xf32>
    %410 = tpu.matmul %409, %396, %cst_159 {dimension_numbers = #tpu.dot_dimension_numbers<[1], [0], [0], [1], [0, 0, 1, 1], [], []>} : vector<64x64xbf16>, vector<64x32xbf16>, vector<64x32xf32> -> vector<64x32xf32>
    %c64_160 = arith.constant 64 : index
    %c64_161 = arith.constant 64 : index
    %411 = vector.load %arg18[%c64_160, %c64_161] : memref<128x128xf32, #tpu.memory_space<vmem>>, vector<64x32xf32>
    tpu.vector_store %arg18[%c64_160, %c64_161], %410 {strides = array<i32>} : memref<128x128xf32, #tpu.memory_space<vmem>>, vector<64x32xf32>,
    %412 = vector.extract_strided_slice %281 {offsets = [64, 96], sizes = [64, 32], strides = [1, 1]} : vector<128x128xbf16> to vector<64x32xbf16>
    %413 = vector.extract_strided_slice %283 {offsets = [64, 96], sizes = [64, 32], strides = [1, 1]} : vector<128x128xbf16> to vector<64x32xbf16>
    %414 = vector.extract_strided_slice %285 {offsets = [64, 96], sizes = [64, 32], strides = [1, 1]} : vector<128x128xbf16> to vector<64x32xbf16>
    %cst_162 = arith.constant dense<0.000000e+00> : vector<64x64xf32>
    %415 = tpu.matmul %412, %413, %cst_162 {dimension_numbers = #tpu.dot_dimension_numbers<[1], [1], [0], [0], [0, 0, 1, 0], [], []>} : vector<64x32xbf16>, vector<64x32xbf16>, vector<64x64xf32> -> vector<64x64xf32>
    %416 = arith.addf %415, %1 : vector<64x64xf32>
    %cst_163 = arith.constant dense<0xFF800000> : vector<64xf32>
    %417 = vector.multi_reduction <maximumf>, %416, %cst_163 [1] : vector<64x64xf32> to vector<64xf32>
    %418 = vector.shape_cast %417 : vector<64xf32> to vector<64x1xf32>
    %419 = vector.broadcast %418 : vector<64x1xf32> to vector<64x64xf32>
    %420 = arith.subf %416, %419 : vector<64x64xf32>
    %421 = math.exp %420 : vector<64x64xf32>
    %cst_164 = arith.constant dense<0.000000e+00> : vector<64xf32>
    %422 = vector.multi_reduction <add>, %421, %cst_164 [1] : vector<64x64xf32> to vector<64xf32>
    %423 = vector.shape_cast %422 : vector<64xf32> to vector<64x1xf32>
    %424 = tpu.reciprocal %423 {approx = true} : vector<64x1xf32> -> vector<64x1xf32>
    %425 = vector.broadcast %424 : vector<64x1xf32> to vector<64x64xf32>
    %426 = arith.mulf %421, %425 : vector<64x64xf32>
    %427 = arith.truncf %426 : vector<64x64xf32> to vector<64x64xbf16>
    %cst_165 = arith.constant dense<0.000000e+00> : vector<64x32xf32>
    %428 = tpu.matmul %427, %414, %cst_165 {dimension_numbers = #tpu.dot_dimension_numbers<[1], [0], [0], [1], [0, 0, 1, 1], [], []>} : vector<64x64xbf16>, vector<64x32xbf16>, vector<64x32xf32> -> vector<64x32xf32>
    %c64_166 = arith.constant 64 : index
    %c96_167 = arith.constant 96 : index
    %429 = vector.load %arg18[%c64_166, %c96_167] : memref<128x128xf32, #tpu.memory_space<vmem>>, vector<64x32xf32>
    tpu.vector_store %arg18[%c64_166, %c96_167], %428 {strides = array<i32>} : memref<128x128xf32, #tpu.memory_space<vmem>>, vector<64x32xf32>,
    %c0_168 = arith.constant 0 : index
    %c0_169 = arith.constant 0 : index
    %430 = vector.load %arg18[%c0_168, %c0_169] : memref<128x128xf32, #tpu.memory_space<vmem>>, vector<128x128xf32>
    %431 = arith.truncf %430 : vector<128x128xf32> to vector<128x128xbf16>
    %c1_170 = arith.constant 1 : index
    %c0_171 = arith.constant 0 : index
    %c0_172 = arith.constant 0 : index
    %432 = vector.load %arg6[%c1_170, %c0_171, %c0_172] : memref<2x128x128xbf16, #tpu.memory_space<vmem>>, vector<1x128x128xbf16>
    %433 = vector.shape_cast %432 : vector<1x128x128xbf16> to vector<128x128xbf16>
    %cst_173 = arith.constant dense<0.000000e+00> : vector<128x128xf32>
    %434 = tpu.matmul %431, %433, %cst_173 {dimension_numbers = #tpu.dot_dimension_numbers<[1], [0], [0], [1], [0, 0, 1, 1], [], []>} : vector<128x128xbf16>, vector<128x128xbf16>, vector<128x128xf32> -> vector<128x128xf32>
    %c1_174 = arith.constant 1 : index
    %c0_175 = arith.constant 0 : index
    %c0_176 = arith.constant 0 : index
    %435 = vector.load %arg7[%c1_174, %c0_175, %c0_176] : memref<2x1x128xf32, #tpu.memory_space<vmem>>, vector<1x1x128xf32>
    %436 = vector.shape_cast %435 : vector<1x1x128xf32> to vector<1x128xf32>
    %437 = vector.broadcast %436 : vector<1x128xf32> to vector<128x128xf32>
    %438 = arith.addf %434, %437 : vector<128x128xf32>
    %439 = arith.addf %247, %438 : vector<128x128xf32>
    %c1_177 = arith.constant 1 : index
    %c0_178 = arith.constant 0 : index
    %c0_179 = arith.constant 0 : index
    %440 = vector.load %arg8[%c1_177, %c0_178, %c0_179] : memref<2x1x128xf32, #tpu.memory_space<vmem>>, vector<1x1x128xf32>
    %441 = vector.shape_cast %440 : vector<1x1x128xf32> to vector<1x128xf32>
    %c1_180 = arith.constant 1 : index
    %c0_181 = arith.constant 0 : index
    %c0_182 = arith.constant 0 : index
    %442 = vector.load %arg9[%c1_180, %c0_181, %c0_182] : memref<2x1x128xf32, #tpu.memory_space<vmem>>, vector<1x1x128xf32>
    %443 = vector.shape_cast %442 : vector<1x1x128xf32> to vector<1x128xf32>
    %cst_183 = arith.constant dense<0.000000e+00> : vector<128xf32>
    %444 = vector.multi_reduction <add>, %439, %cst_183 [1] : vector<128x128xf32> to vector<128xf32>
    %445 = vector.shape_cast %444 : vector<128xf32> to vector<128x1xf32>
    %cst_184 = arith.constant 1.280000e+02 : f32
    %446 = vector.broadcast %cst_184 : f32 to vector<128x1xf32>
    %447 = arith.divf %445, %446 : vector<128x1xf32>
    %448 = vector.broadcast %447 : vector<128x1xf32> to vector<128x128xf32>
    %449 = arith.subf %439, %448 : vector<128x128xf32>
    %450 = arith.mulf %449, %449 : vector<128x128xf32>
    %cst_185 = arith.constant dense<0.000000e+00> : vector<128xf32>
    %451 = vector.multi_reduction <add>, %450, %cst_185 [1] : vector<128x128xf32> to vector<128xf32>
    %452 = vector.shape_cast %451 : vector<128xf32> to vector<128x1xf32>
    %cst_186 = arith.constant 1.280000e+02 : f32
    %453 = vector.broadcast %cst_186 : f32 to vector<128x1xf32>
    %454 = arith.divf %452, %453 : vector<128x1xf32>
    %cst_187 = arith.constant 9.99999974E-6 : f32
    %455 = vector.broadcast %cst_187 : f32 to vector<128x1xf32>
    %456 = arith.addf %454, %455 : vector<128x1xf32>
    %457 = math.rsqrt %456 : vector<128x1xf32>
    %458 = vector.broadcast %457 : vector<128x1xf32> to vector<128x128xf32>
    %459 = arith.mulf %449, %458 : vector<128x128xf32>
    %460 = vector.broadcast %441 : vector<1x128xf32> to vector<128x128xf32>
    %461 = arith.mulf %459, %460 : vector<128x128xf32>
    %462 = vector.broadcast %443 : vector<1x128xf32> to vector<128x128xf32>
    %463 = arith.addf %461, %462 : vector<128x128xf32>
    %464 = arith.truncf %463 : vector<128x128xf32> to vector<128x128xbf16>
    %c1_188 = arith.constant 1 : index
    %c0_189 = arith.constant 0 : index
    %c0_190 = arith.constant 0 : index
    %465 = vector.load %arg10[%c1_188, %c0_189, %c0_190] : memref<2x128x512xbf16, #tpu.memory_space<vmem>>, vector<1x128x512xbf16>
    %466 = vector.shape_cast %465 : vector<1x128x512xbf16> to vector<128x512xbf16>
    %cst_191 = arith.constant dense<0.000000e+00> : vector<128x512xf32>
    %467 = tpu.matmul %464, %466, %cst_191 {dimension_numbers = #tpu.dot_dimension_numbers<[1], [0], [0], [1], [0, 0, 1, 1], [], []>} : vector<128x128xbf16>, vector<128x512xbf16>, vector<128x512xf32> -> vector<128x512xf32>
    %c1_192 = arith.constant 1 : index
    %c0_193 = arith.constant 0 : index
    %c0_194 = arith.constant 0 : index
    %468 = vector.load %arg11[%c1_192, %c0_193, %c0_194] : memref<2x1x512xf32, #tpu.memory_space<vmem>>, vector<1x1x512xf32>
    %469 = vector.shape_cast %468 : vector<1x1x512xf32> to vector<1x512xf32>
    %470 = vector.broadcast %469 : vector<1x512xf32> to vector<128x512xf32>
    %471 = arith.addf %467, %470 : vector<128x512xf32>
    %cst_195 = arith.constant 5.000000e-01 : f32
    %472 = vector.broadcast %cst_195 : f32 to vector<128x512xf32>
    %473 = arith.mulf %472, %471 : vector<128x512xf32>
    %cst_196 = arith.constant 4.471500e-02 : f32
    %474 = vector.broadcast %cst_196 : f32 to vector<128x512xf32>
    %475 = arith.mulf %474, %471 : vector<128x512xf32>
    %476 = arith.mulf %475, %471 : vector<128x512xf32>
    %477 = arith.mulf %476, %471 : vector<128x512xf32>
    %478 = arith.addf %471, %477 : vector<128x512xf32>
    %cst_197 = arith.constant 0.797884583 : f32
    %479 = vector.broadcast %cst_197 : f32 to vector<128x512xf32>
    %480 = arith.mulf %479, %478 : vector<128x512xf32>
    %481 = math.tanh %480 : vector<128x512xf32>
    %cst_198 = arith.constant 1.000000e+00 : f32
    %482 = vector.broadcast %cst_198 : f32 to vector<128x512xf32>
    %483 = arith.addf %482, %481 : vector<128x512xf32>
    %484 = arith.mulf %473, %483 : vector<128x512xf32>
    %485 = arith.truncf %484 : vector<128x512xf32> to vector<128x512xbf16>
    %c1_199 = arith.constant 1 : index
    %c0_200 = arith.constant 0 : index
    %c0_201 = arith.constant 0 : index
    %486 = vector.load %arg12[%c1_199, %c0_200, %c0_201] : memref<2x512x128xbf16, #tpu.memory_space<vmem>>, vector<1x512x128xbf16>
    %487 = vector.shape_cast %486 : vector<1x512x128xbf16> to vector<512x128xbf16>
    %cst_202 = arith.constant dense<0.000000e+00> : vector<128x128xf32>
    %488 = tpu.matmul %485, %487, %cst_202 {dimension_numbers = #tpu.dot_dimension_numbers<[1], [0], [0], [1], [0, 0, 1, 1], [], []>} : vector<128x512xbf16>, vector<512x128xbf16>, vector<128x128xf32> -> vector<128x128xf32>
    %c1_203 = arith.constant 1 : index
    %c0_204 = arith.constant 0 : index
    %c0_205 = arith.constant 0 : index
    %489 = vector.load %arg13[%c1_203, %c0_204, %c0_205] : memref<2x1x128xf32, #tpu.memory_space<vmem>>, vector<1x1x128xf32>
    %490 = vector.shape_cast %489 : vector<1x1x128xf32> to vector<1x128xf32>
    %491 = vector.broadcast %490 : vector<1x128xf32> to vector<128x128xf32>
    %492 = arith.addf %488, %491 : vector<128x128xf32>
    %493 = arith.addf %439, %492 : vector<128x128xf32>
    %c0_206 = arith.constant 0 : index
    %c0_207 = arith.constant 0 : index
    %494 = vector.load %arg14[%c0_206, %c0_207] : memref<1x128xf32, #tpu.memory_space<vmem>>, vector<1x128xf32>
    %c0_208 = arith.constant 0 : index
    %c0_209 = arith.constant 0 : index
    %495 = vector.load %arg15[%c0_208, %c0_209] : memref<1x128xf32, #tpu.memory_space<vmem>>, vector<1x128xf32>
    %cst_210 = arith.constant dense<0.000000e+00> : vector<128xf32>
    %496 = vector.multi_reduction <add>, %493, %cst_210 [1] : vector<128x128xf32> to vector<128xf32>
    %497 = vector.shape_cast %496 : vector<128xf32> to vector<128x1xf32>
    %cst_211 = arith.constant 1.280000e+02 : f32
    %498 = vector.broadcast %cst_211 : f32 to vector<128x1xf32>
    %499 = arith.divf %497, %498 : vector<128x1xf32>
    %500 = vector.broadcast %499 : vector<128x1xf32> to vector<128x128xf32>
    %501 = arith.subf %493, %500 : vector<128x128xf32>
    %502 = arith.mulf %501, %501 : vector<128x128xf32>
    %cst_212 = arith.constant dense<0.000000e+00> : vector<128xf32>
    %503 = vector.multi_reduction <add>, %502, %cst_212 [1] : vector<128x128xf32> to vector<128xf32>
    %504 = vector.shape_cast %503 : vector<128xf32> to vector<128x1xf32>
    %cst_213 = arith.constant 1.280000e+02 : f32
    %505 = vector.broadcast %cst_213 : f32 to vector<128x1xf32>
    %506 = arith.divf %504, %505 : vector<128x1xf32>
    %cst_214 = arith.constant 9.99999974E-6 : f32
    %507 = vector.broadcast %cst_214 : f32 to vector<128x1xf32>
    %508 = arith.addf %506, %507 : vector<128x1xf32>
    %509 = math.rsqrt %508 : vector<128x1xf32>
    %510 = vector.broadcast %509 : vector<128x1xf32> to vector<128x128xf32>
    %511 = arith.mulf %501, %510 : vector<128x128xf32>
    %512 = vector.broadcast %494 : vector<1x128xf32> to vector<128x128xf32>
    %513 = arith.mulf %511, %512 : vector<128x128xf32>
    %514 = vector.broadcast %495 : vector<1x128xf32> to vector<128x128xf32>
    %515 = arith.addf %513, %514 : vector<128x128xf32>
    %516 = arith.truncf %515 : vector<128x128xf32> to vector<128x128xbf16>
    %c0_215 = arith.constant 0 : index
    %c0_216 = arith.constant 0 : index
    %517 = vector.load %arg16[%c0_215, %c0_216] : memref<128x256xbf16, #tpu.memory_space<vmem>>, vector<128x256xbf16>
    %cst_217 = arith.constant dense<0.000000e+00> : vector<128x256xf32>
    %518 = tpu.matmul %516, %517, %cst_217 {dimension_numbers = #tpu.dot_dimension_numbers<[1], [0], [0], [1], [0, 0, 1, 1], [], []>} : vector<128x128xbf16>, vector<128x256xbf16>, vector<128x256xf32> -> vector<128x256xf32>
    %c0_218 = arith.constant 0 : index
    %c0_219 = arith.constant 0 : index
    %519 = vector.load %arg17[%c0_218, %c0_219] : memref<128x256xf32, #tpu.memory_space<vmem>>, vector<128x256xf32>
    tpu.vector_store %arg17[%c0_218, %c0_219], %518 {strides = array<i32>} : memref<128x256xf32, #tpu.memory_space<vmem>>, vector<128x256xf32>,
    return
  }
}

</mosaic_0001>

<llo_original>
// kernel: _lambda_.1
$region0: #{_lambda_.1}
  #allocation0 [shape = 'u32[]', space=smem, size = 0x4, offset = 0x4, fixed_abs, tag = 'smem constant byte address 0x4 - core index']
  #allocation1 [shape = 'u32[144,128]{1,0:T(1,128)}', space=vmem, size = 0x12000, scoped, tag = 'internal scratch']
  #allocation2 [shape = 'f32[128,128]{1,0:T(8,128)}', space=vmem, size = 0x10000, scoped, tag = 'scratch operand']
  %s0 = inlined_call_operand.vmem [shape: f32[128,128], index: 0, kind: input, shape index: {}]
  %s1 = inlined_call_operand.vmem [shape: f32[64,64], index: 1, kind: input, shape index: {}]
  %s2 = inlined_call_operand.vmem [shape: f32[2,1,128], index: 2, kind: input, shape index: {}]
  %s3 = inlined_call_operand.vmem [shape: f32[2,1,128], index: 3, kind: input, shape index: {}]
  %s4 = inlined_call_operand.vmem [shape: bf16[2,128,384], index: 4, kind: input, shape index: {}]
  %s5 = inlined_call_operand.vmem [shape: f32[2,1,384], index: 5, kind: input, shape index: {}]
  %s6 = inlined_call_operand.vmem [shape: bf16[2,128,128], index: 6, kind: input, shape index: {}]
  %s7 = inlined_call_operand.vmem [shape: f32[2,1,128], index: 7, kind: input, shape index: {}]
  %s8 = inlined_call_operand.vmem [shape: f32[2,1,128], index: 8, kind: input, shape index: {}]
  %s9 = inlined_call_operand.vmem [shape: f32[2,1,128], index: 9, kind: input, shape index: {}]
  %s10 = inlined_call_operand.vmem [shape: bf16[2,128,512], index: 10, kind: input, shape index: {}]
  %s11 = inlined_call_operand.vmem [shape: f32[2,1,512], index: 11, kind: input, shape index: {}]
  %s12 = inlined_call_operand.vmem [shape: bf16[2,512,128], index: 12, kind: input, shape index: {}]
  %s13 = inlined_call_operand.vmem [shape: f32[2,1,128], index: 13, kind: input, shape index: {}]
  %s14 = inlined_call_operand.vmem [shape: f32[1,128], index: 14, kind: input, shape index: {}]
  %s15 = inlined_call_operand.vmem [shape: f32[1,128], index: 15, kind: input, shape index: {}]
  %s16 = inlined_call_operand.vmem [shape: bf16[128,256], index: 16, kind: input, shape index: {}]
  %s17 = inlined_call_operand.vmem [shape: f32[128,256], index: 17, kind: output, shape index: {}]
  %s18 = sld [smem:[#allocation0]]
  $region78: #{_lambda_.1} parent=0
    _
  %s20 = ssub.s32 1, %s18
  %s21 = scalar_select 0, %s20, %s18
  // Predicated region
  $region2: #{_lambda_.1} parent=0 // pred_check
    _
  $region3: #{_lambda_.1} parent=0 // pred_check_branch
    %23 = sbr.rel (0) target = $region5
  $region4: #{_lambda_.1} parent=0 // pred_region
    _
  $region5: #{_lambda_.1} parent=0 // pred_fallthru
    _
  // Predicated region
  $region6: #{_lambda_.1} parent=0 // pred_check
    _
  $region7: #{_lambda_.1} parent=0 // pred_check_branch
    %25 = sbr.rel (0) target = $region9
  $region8: #{_lambda_.1} parent=0 // pred_region
    _
  $region9: #{_lambda_.1} parent=0 // pred_fallthru
    _
  // Predicated region
  $region10: #{_lambda_.1} parent=0 // pred_check
    _
  $region11: #{_lambda_.1} parent=0 // pred_check_branch
    %27 = sbr.rel (0) target = $region13
  $region12: #{_lambda_.1} parent=0 // pred_region
    _
  $region13: #{_lambda_.1} parent=0 // pred_fallthru
    _
  // Predicated region
  $region14: #{_lambda_.1} parent=0 // pred_check
    _
  $region15: #{_lambda_.1} parent=0 // pred_check_branch
    %29 = sbr.rel (0) target = $region17
  $region16: #{_lambda_.1} parent=0 // pred_region
    _
  $region17: #{_lambda_.1} parent=0 // pred_fallthru
    _
  // Predicated region
  $region18: #{_lambda_.1} parent=0 // pred_check
    _
  $region19: #{_lambda_.1} parent=0 // pred_check_branch
    %31 = sbr.rel (0) target = $region21
  $region20: #{_lambda_.1} parent=0 // pred_region
    _
  $region21: #{_lambda_.1} parent=0 // pred_fallthru
    _
  // Predicated region
  $region22: #{_lambda_.1} parent=0 // pred_check
    _
  $region23: #{_lambda_.1} parent=0 // pred_check_branch
    %33 = sbr.rel (0) target = $region25
  $region24: #{_lambda_.1} parent=0 // pred_region
    _
  $region25: #{_lambda_.1} parent=0 // pred_fallthru
    _
  // Predicated region
  $region26: #{_lambda_.1} parent=0 // pred_check
    _
  $region27: #{_lambda_.1} parent=0 // pred_check_branch
    %35 = sbr.rel (0) target = $region29
  $region28: #{_lambda_.1} parent=0 // pred_region
    _
  $region29: #{_lambda_.1} parent=0 // pred_fallthru
    _
  // Predicated region
  $region30: #{_lambda_.1} parent=0 // pred_check
    _
  $region31: #{_lambda_.1} parent=0 // pred_check_branch
    %37 = sbr.rel (0) target = $region33
  $region32: #{_lambda_.1} parent=0 // pred_region
    _
  $region33: #{_lambda_.1} parent=0 // pred_fallthru
    _
  // Predicated region
  $region34: #{_lambda_.1} parent=0 // pred_check
    _
  $region35: #{_lambda_.1} parent=0 // pred_check_branch
    %39 = sbr.rel (0) target = $region37
  $region36: #{_lambda_.1} parent=0 // pred_region
    _
  $region37: #{_lambda_.1} parent=0 // pred_fallthru
    _
  // Predicated region
  $region38: #{_lambda_.1} parent=0 // pred_check
    _
  $region39: #{_lambda_.1} parent=0 // pred_check_branch
    %41 = sbr.rel (0) target = $region41
  $region40: #{_lambda_.1} parent=0 // pred_region
    _
  $region41: #{_lambda_.1} parent=0 // pred_fallthru
    _
  // Predicated region
  $region42: #{_lambda_.1} parent=0 // pred_check
    _
  $region43: #{_lambda_.1} parent=0 // pred_check_branch
    %43 = sbr.rel (0) target = $region45
  $region44: #{_lambda_.1} parent=0 // pred_region
    _
  $region45: #{_lambda_.1} parent=0 // pred_fallthru
    _
  // Predicated region
  $region46: #{_lambda_.1} parent=0 // pred_check
    _
  $region47: #{_lambda_.1} parent=0 // pred_check_branch
    %45 = sbr.rel (0) target = $region49
  $region48: #{_lambda_.1} parent=0 // pred_region
    _
  $region49: #{_lambda_.1} parent=0 // pred_fallthru
    _
  // Predicated region
  $region50: #{_lambda_.1} parent=0 // pred_check
    _
  $region51: #{_lambda_.1} parent=0 // pred_check_branch
    %47 = sbr.rel (0) target = $region53
  $region52: #{_lambda_.1} parent=0 // pred_region
    _
  $region53: #{_lambda_.1} parent=0 // pred_fallthru
    _
  // Predicated region
  $region54: #{_lambda_.1} parent=0 // pred_check
    _
  $region55: #{_lambda_.1} parent=0 // pred_check_branch
    %49 = sbr.rel (0) target = $region57
  $region56: #{_lambda_.1} parent=0 // pred_region
    _
  $region57: #{_lambda_.1} parent=0 // pred_fallthru
    _
  // Predicated region
  $region58: #{_lambda_.1} parent=0 // pred_check
    _
  $region59: #{_lambda_.1} parent=0 // pred_check_branch
    %51 = sbr.rel (0) target = $region61
  $region60: #{_lambda_.1} parent=0 // pred_region
    _
  $region61: #{_lambda_.1} parent=0 // pred_fallthru
    _
  // Predicated region
  $region62: #{_lambda_.1} parent=0 // pred_check
    _
  $region63: #{_lambda_.1} parent=0 // pred_check_branch
    %53 = sbr.rel (0) target = $region65
  $region64: #{_lambda_.1} parent=0 // pred_region
    _
  $region65: #{_lambda_.1} parent=0 // pred_fallthru
    _
  // Predicated region
  $region66: #{_lambda_.1} parent=0 // pred_check
    _
  $region67: #{_lambda_.1} parent=0 // pred_check_branch
    %55 = sbr.rel (0) target = $region69
  $region68: #{_lambda_.1} parent=0 // pred_region
    _
  $region69: #{_lambda_.1} parent=0 // pred_fallthru
    _
  %v57 = vld [vmem:[%s0] sm:$0xff]
  %v58 = vld [vmem:[%s0 + $0x8] sm:$0xff]
  %v59 = vld [vmem:[%s0 + $0x10] sm:$0xff]
  %v60 = vld [vmem:[%s0 + $0x18] sm:$0xff]
  %v61 = vld [vmem:[%s0 + $0x20] sm:$0xff]
  %v62 = vld [vmem:[%s0 + $0x28] sm:$0xff]
  %v63 = vld [vmem:[%s0 + $0x30] sm:$0xff]
  %v64 = vld [vmem:[%s0 + $0x38] sm:$0xff]
  %v65 = vld [vmem:[%s0 + $0x40] sm:$0xff]
  %v66 = vld [vmem:[%s0 + $0x48] sm:$0xff]
  %v67 = vld [vmem:[%s0 + $0x50] sm:$0xff]
  %v68 = vld [vmem:[%s0 + $0x58] sm:$0xff]
  %v69 = vld [vmem:[%s0 + $0x60] sm:$0xff]
  %v70 = vld [vmem:[%s0 + $0x68] sm:$0xff]
  %v71 = vld [vmem:[%s0 + $0x70] sm:$0xff]
  %v72 = vld [vmem:[%s0 + $0x78] sm:$0xff]
  %v73 = vld [vmem:[%s1] sm:$0xff]
  %v74 = vld [vmem:[%s1 + $0x8] sm:$0xff]
  %v75 = vld [vmem:[%s1 + $0x10] sm:$0xff]
  %v76 = vld [vmem:[%s1 + $0x18] sm:$0xff]
  %v77 = vld [vmem:[%s1 + $0x20] sm:$0xff]
  %v78 = vld [vmem:[%s1 + $0x28] sm:$0xff]
  %v79 = vld [vmem:[%s1 + $0x30] sm:$0xff]
  %v80 = vld [vmem:[%s1 + $0x38] sm:$0xff]
  %v81 = vld [vmem:[%s2] sm:$0x1]
  %v82 = vld [vmem:[%s3] sm:$0x1]
  %83 = vadd.xlane.f32.xlu0 %v57
  %v84 = vpop.xlane.xlu0 %83
  %85 = vadd.xlane.f32.xlu0 %v58
  %v86 = vpop.xlane.xlu0 %85
  %87 = vadd.xlane.f32.xlu0 %v59
  %v88 = vpop.xlane.xlu0 %87
  %89 = vadd.xlane.f32.xlu0 %v60
  %v90 = vpop.xlane.xlu0 %89
  %91 = vadd.xlane.f32.xlu0 %v61
  %v92 = vpop.xlane.xlu0 %91
  %93 = vadd.xlane.f32.xlu0 %v62
  %v94 = vpop.xlane.xlu0 %93
  %95 = vadd.xlane.f32.xlu0 %v63
  %v96 = vpop.xlane.xlu0 %95
  %97 = vadd.xlane.f32.xlu0 %v64
  %v98 = vpop.xlane.xlu0 %97
  %99 = vadd.xlane.f32.xlu0 %v65
  %v100 = vpop.xlane.xlu0 %99
  %101 = vadd.xlane.f32.xlu0 %v66
  %v102 = vpop.xlane.xlu0 %101
  %103 = vadd.xlane.f32.xlu0 %v67
  %v104 = vpop.xlane.xlu0 %103
  %105 = vadd.xlane.f32.xlu0 %v68
  %v106 = vpop.xlane.xlu0 %105
  %107 = vadd.xlane.f32.xlu0 %v69
  %v108 = vpop.xlane.xlu0 %107
  %109 = vadd.xlane.f32.xlu0 %v70
  %v110 = vpop.xlane.xlu0 %109
  %111 = vadd.xlane.f32.xlu0 %v71
  %v112 = vpop.xlane.xlu0 %111
  %113 = vadd.xlane.f32.xlu0 %v72
  %v114 = vpop.xlane.xlu0 %113
  %v115 = vrcp.pop 128.0
  %v116 = vmul.f32 %v84, %v115
  %v117 = vmul.f32 %v86, %v115
  %v118 = vmul.f32 %v88, %v115
  %v119 = vmul.f32 %v90, %v115
  %v120 = vmul.f32 %v92, %v115
  %v121 = vmul.f32 %v94, %v115
  %v122 = vmul.f32 %v96, %v115
  %v123 = vmul.f32 %v98, %v115
  %v124 = vmul.f32 %v100, %v115
  %v125 = vmul.f32 %v102, %v115
  %v126 = vmul.f32 %v104, %v115
  %v127 = vmul.f32 %v106, %v115
  %v128 = vmul.f32 %v108, %v115
  %v129 = vmul.f32 %v110, %v115
  %v130 = vmul.f32 %v112, %v115
  %v131 = vmul.f32 %v114, %v115
  %v132 = vsub.f32 %v57, %v116
  %v133 = vsub.f32 %v58, %v117
  %v134 = vsub.f32 %v59, %v118
  %v135 = vsub.f32 %v60, %v119
  %v136 = vsub.f32 %v61, %v120
  %v137 = vsub.f32 %v62, %v121
  %v138 = vsub.f32 %v63, %v122
  %v139 = vsub.f32 %v64, %v123
  %v140 = vsub.f32 %v65, %v124
  %v141 = vsub.f32 %v66, %v125
  %v142 = vsub.f32 %v67, %v126
  %v143 = vsub.f32 %v68, %v127
  %v144 = vsub.f32 %v69, %v128
  %v145 = vsub.f32 %v70, %v129
  %v146 = vsub.f32 %v71, %v130
  %v147 = vsub.f32 %v72, %v131
  %v148 = vmul.f32 %v132, %v132
  %v149 = vmul.f32 %v133, %v133
  %v150 = vmul.f32 %v134, %v134
  %v151 = vmul.f32 %v135, %v135
  %v152 = vmul.f32 %v136, %v136
  %v153 = vmul.f32 %v137, %v137
  %v154 = vmul.f32 %v138, %v138
  %v155 = vmul.f32 %v139, %v139
  %v156 = vmul.f32 %v140, %v140
  %v157 = vmul.f32 %v141, %v141
  %v158 = vmul.f32 %v142, %v142
  %v159 = vmul.f32 %v143, %v143
  %v160 = vmul.f32 %v144, %v144
  %v161 = vmul.f32 %v145, %v145
  %v162 = vmul.f32 %v146, %v146
  %v163 = vmul.f32 %v147, %v147
  %164 = vadd.xlane.f32.xlu0 %v148
  %v165 = vpop.xlane.xlu0 %164
  %166 = vadd.xlane.f32.xlu0 %v149
  %v167 = vpop.xlane.xlu0 %166
  %168 = vadd.xlane.f32.xlu0 %v150
  %v169 = vpop.xlane.xlu0 %168
  %170 = vadd.xlane.f32.xlu0 %v151
  %v171 = vpop.xlane.xlu0 %170
  %172 = vadd.xlane.f32.xlu0 %v152
  %v173 = vpop.xlane.xlu0 %172
  %174 = vadd.xlane.f32.xlu0 %v153
  %v175 = vpop.xlane.xlu0 %174
  %176 = vadd.xlane.f32.xlu0 %v154
  %v177 = vpop.xlane.xlu0 %176
  %178 = vadd.xlane.f32.xlu0 %v155
  %v179 = vpop.xlane.xlu0 %178
  %180 = vadd.xlane.f32.xlu0 %v156
  %v181 = vpop.xlane.xlu0 %180
  %182 = vadd.xlane.f32.xlu0 %v157
  %v183 = vpop.xlane.xlu0 %182
  %184 = vadd.xlane.f32.xlu0 %v158
  %v185 = vpop.xlane.xlu0 %184
  %186 = vadd.xlane.f32.xlu0 %v159
  %v187 = vpop.xlane.xlu0 %186
  %188 = vadd.xlane.f32.xlu0 %v160
  %v189 = vpop.xlane.xlu0 %188
  %190 = vadd.xlane.f32.xlu0 %v161
  %v191 = vpop.xlane.xlu0 %190
  %192 = vadd.xlane.f32.xlu0 %v162
  %v193 = vpop.xlane.xlu0 %192
  %194 = vadd.xlane.f32.xlu0 %v163
  %v195 = vpop.xlane.xlu0 %194
  %v196 = vmul.f32 %v165, %v115
  %v197 = vmul.f32 %v167, %v115
  %v198 = vmul.f32 %v169, %v115
  %v199 = vmul.f32 %v171, %v115
  %v200 = vmul.f32 %v173, %v115
  %v201 = vmul.f32 %v175, %v115
  %v202 = vmul.f32 %v177, %v115
  %v203 = vmul.f32 %v179, %v115
  %v204 = vmul.f32 %v181, %v115
  %v205 = vmul.f32 %v183, %v115
  %v206 = vmul.f32 %v185, %v115
  %v207 = vmul.f32 %v187, %v115
  %v208 = vmul.f32 %v189, %v115
  %v209 = vmul.f32 %v191, %v115
  %v210 = vmul.f32 %v193, %v115
  %v211 = vmul.f32 %v195, %v115
  %v212 = vadd.f32 %v196, 1e-05
  %v213 = vadd.f32 %v197, 1e-05
  %v214 = vadd.f32 %v198, 1e-05
  %v215 = vadd.f32 %v199, 1e-05
  %v216 = vadd.f32 %v200, 1e-05
  %v217 = vadd.f32 %v201, 1e-05
  %v218 = vadd.f32 %v202, 1e-05
  %v219 = vadd.f32 %v203, 1e-05
  %v220 = vadd.f32 %v204, 1e-05
  %v221 = vadd.f32 %v205, 1e-05
  %v222 = vadd.f32 %v206, 1e-05
  %v223 = vadd.f32 %v207, 1e-05
  %v224 = vadd.f32 %v208, 1e-05
  %v225 = vadd.f32 %v209, 1e-05
  %v226 = vadd.f32 %v210, 1e-05
  %v227 = vadd.f32 %v211, 1e-05
  %v228 = vrsqrt.pop %v212
  %v229 = vrsqrt.pop %v213
  %v230 = vrsqrt.pop %v214
  %v231 = vrsqrt.pop %v215
  %v232 = vrsqrt.pop %v216
  %v233 = vrsqrt.pop %v217
  %v234 = vrsqrt.pop %v218
  %v235 = vrsqrt.pop %v219
  %v236 = vrsqrt.pop %v220
  %v237 = vrsqrt.pop %v221
  %v238 = vrsqrt.pop %v222
  %v239 = vrsqrt.pop %v223
  %v240 = vrsqrt.pop %v224
  %v241 = vrsqrt.pop %v225
  %v242 = vrsqrt.pop %v226
  %v243 = vrsqrt.pop %v227
  %v244 = vmul.f32 %v132, %v228
  %v245 = vmul.f32 %v133, %v229
  %v246 = vmul.f32 %v134, %v230
  %v247 = vmul.f32 %v135, %v231
  %v248 = vmul.f32 %v136, %v232
  %v249 = vmul.f32 %v137, %v233
  %v250 = vmul.f32 %v138, %v234
  %v251 = vmul.f32 %v139, %v235
  %v252 = vmul.f32 %v140, %v236
  %v253 = vmul.f32 %v141, %v237
  %v254 = vmul.f32 %v142, %v238
  %v255 = vmul.f32 %v143, %v239
  %v256 = vmul.f32 %v144, %v240
  %v257 = vmul.f32 %v145, %v241
  %v258 = vmul.f32 %v146, %v242
  %v259 = vmul.f32 %v147, %v243
  %v261 = vlaneseq
  %v262 = vshrl.u32 %v261, 7
  %v263 = vsub.s32 0, %v262
  %v264 = vrot.slane %v81, %v263
  %v266 = vmul.f32 %v244, %v264
  %v267 = vmul.f32 %v245, %v264
  %v268 = vmul.f32 %v246, %v264
  %v269 = vmul.f32 %v247, %v264
  %v270 = vmul.f32 %v248, %v264
  %v271 = vmul.f32 %v249, %v264
  %v272 = vmul.f32 %v250, %v264
  %v273 = vmul.f32 %v251, %v264
  %v274 = vmul.f32 %v252, %v264
  %v275 = vmul.f32 %v253, %v264
  %v276 = vmul.f32 %v254, %v264
  %v277 = vmul.f32 %v255, %v264
  %v278 = vmul.f32 %v256, %v264
  %v279 = vmul.f32 %v257, %v264
  %v280 = vmul.f32 %v258, %v264
  %v281 = vmul.f32 %v259, %v264
  %v283 = vlaneseq
  %v284 = vshrl.u32 %v283, 7
  %v285 = vsub.s32 0, %v284
  %v286 = vrot.slane %v82, %v285
  %v288 = vadd.f32 %v266, %v286
  %v289 = vadd.f32 %v267, %v286
  %v290 = vadd.f32 %v268, %v286
  %v291 = vadd.f32 %v269, %v286
  %v292 = vadd.f32 %v270, %v286
  %v293 = vadd.f32 %v271, %v286
  %v294 = vadd.f32 %v272, %v286
  %v295 = vadd.f32 %v273, %v286
  %v296 = vadd.f32 %v274, %v286
  %v297 = vadd.f32 %v275, %v286
  %v298 = vadd.f32 %v276, %v286
  %v299 = vadd.f32 %v277, %v286
  %v300 = vadd.f32 %v278, %v286
  %v301 = vadd.f32 %v279, %v286
  %v302 = vadd.f32 %v280, %v286
  %v303 = vadd.f32 %v281, %v286
  %v304 = vpack.c.bf16 %v289, %v288
  %v305 = vpack.c.bf16 %v291, %v290
  %v306 = vpack.c.bf16 %v293, %v292
  %v307 = vpack.c.bf16 %v295, %v294
  %v308 = vpack.c.bf16 %v297, %v296
  %v309 = vpack.c.bf16 %v299, %v298
  %v310 = vpack.c.bf16 %v301, %v300
  %v311 = vpack.c.bf16 %v303, %v302
  %v312 = vld [vmem:[%s4] sm:$0xff]
  %v313 = vld [vmem:[%s4 + $0x8] sm:$0xf]
  %v314 = vld [vmem:[%s4 + $0xc] sm:$0xff]
  %v315 = vld [vmem:[%s4 + $0x14] sm:$0xf]
  %v316 = vld [vmem:[%s4 + $0x18] sm:$0xff]
  %v317 = vld [vmem:[%s4 + $0x20] sm:$0xf]
  %v318 = vld [vmem:[%s4 + $0x24] sm:$0xff]
  %v319 = vld [vmem:[%s4 + $0x2c] sm:$0xf]
  %v320 = vld [vmem:[%s4 + $0x30] sm:$0xff]
  %v321 = vld [vmem:[%s4 + $0x38] sm:$0xf]
  %v322 = vld [vmem:[%s4 + $0x3c] sm:$0xff]
  %v323 = vld [vmem:[%s4 + $0x44] sm:$0xf]
  %v324 = vld [vmem:[%s4 + $0x48] sm:$0xff]
  %v325 = vld [vmem:[%s4 + $0x50] sm:$0xf]
  %v326 = vld [vmem:[%s4 + $0x54] sm:$0xff]
  %v327 = vld [vmem:[%s4 + $0x5c] sm:$0xf]
  %v328 = vld [vmem:[%s4 + $0x60] sm:$0xff]
  %v329 = vld [vmem:[%s4 + $0x68] sm:$0xf]
  %v330 = vld [vmem:[%s4 + $0x6c] sm:$0xff]
  %v331 = vld [vmem:[%s4 + $0x74] sm:$0xf]
  %v332 = vld [vmem:[%s4 + $0x78] sm:$0xff]
  %v333 = vld [vmem:[%s4 + $0x80] sm:$0xf]
  %v334 = vld [vmem:[%s4 + $0x84] sm:$0xff]
  %v335 = vld [vmem:[%s4 + $0x8c] sm:$0xf]
  %v336 = vld [vmem:[%s4 + $0x90] sm:$0xff]
  %v337 = vld [vmem:[%s4 + $0x98] sm:$0xf]
  %v338 = vld [vmem:[%s4 + $0x9c] sm:$0xff]
  %v339 = vld [vmem:[%s4 + $0xa4] sm:$0xf]
  %v340 = vld [vmem:[%s4 + $0xa8] sm:$0xff]
  %v341 = vld [vmem:[%s4 + $0xb0] sm:$0xf]
  %v342 = vld [vmem:[%s4 + $0xb4] sm:$0xff]
  %v343 = vld [vmem:[%s4 + $0xbc] sm:$0xf]
  %v344 = vld [vmem:[%s5] sm:$0x7]
  %v346 = vlaneseq
  %v347 = vshrl.u32 %v346, 7
  %v348 = vsub.s32 0, %v347
  %v349 = vrot.slane %v344, %v348
  %v350 = vlaneseq
  %v351 = vshrl.u32 %v350, 7
  %v352 = vsub.s32 1, %v351
  %v353 = vrot.slane %v344, %v352
  %v354 = vlaneseq
  %v355 = vshrl.u32 %v354, 7
  %v356 = vsub.s32 2, %v355
  %v357 = vrot.slane %v344, %v356
  %v393 = vunpack.c.l.b16 %v312
  %v394 = vunpack.c.h.b16 %v312
  %v395 = vunpack.c.l.b16 %v313
  %v396 = vunpack.c.l.b16 %v314
  %v397 = vunpack.c.h.b16 %v314
  %v398 = vunpack.c.l.b16 %v315
  %v399 = vunpack.c.l.b16 %v316
  %v400 = vunpack.c.h.b16 %v316
  %v401 = vunpack.c.l.b16 %v317
  %v402 = vunpack.c.l.b16 %v318
  %v403 = vunpack.c.h.b16 %v318
  %v404 = vunpack.c.l.b16 %v319
  %v405 = vunpack.c.l.b16 %v320
  %v406 = vunpack.c.h.b16 %v320
  %v407 = vunpack.c.l.b16 %v321
  %v408 = vunpack.c.l.b16 %v322
  %v409 = vunpack.c.h.b16 %v322
  %v410 = vunpack.c.l.b16 %v323
  %v411 = vunpack.c.l.b16 %v324
  %v412 = vunpack.c.h.b16 %v324
  %v413 = vunpack.c.l.b16 %v325
  %v414 = vunpack.c.l.b16 %v326
  %v415 = vunpack.c.h.b16 %v326
  %v416 = vunpack.c.l.b16 %v327
  %v417 = vunpack.c.l.b16 %v328
  %v418 = vunpack.c.h.b16 %v328
  %v419 = vunpack.c.l.b16 %v329
  %v420 = vunpack.c.l.b16 %v330
  %v421 = vunpack.c.h.b16 %v330
  %v422 = vunpack.c.l.b16 %v331
  %v423 = vunpack.c.l.b16 %v332
  %v424 = vunpack.c.h.b16 %v332
  %v425 = vunpack.c.l.b16 %v333
  %v426 = vunpack.c.l.b16 %v334
  %v427 = vunpack.c.h.b16 %v334
  %v428 = vunpack.c.l.b16 %v335
  %v429 = vunpack.c.l.b16 %v336
  %v430 = vunpack.c.h.b16 %v336
  %v431 = vunpack.c.l.b16 %v337
  %v432 = vunpack.c.l.b16 %v338
  %v433 = vunpack.c.h.b16 %v338
  %v434 = vunpack.c.l.b16 %v339
  %v435 = vunpack.c.l.b16 %v340
  %v436 = vunpack.c.h.b16 %v340
  %v437 = vunpack.c.l.b16 %v341
  %v438 = vunpack.c.l.b16 %v342
  %v439 = vunpack.c.h.b16 %v342
  %v440 = vunpack.c.l.b16 %v343
  %v441 = vpack.c.b16 %v396, %v393
  %v442 = vpack.c.b16 %v397, %v394
  %v443 = vpack.c.b16 %v398, %v395
  %v444 = vpack.c.b16 %v402, %v399
  %v445 = vpack.c.b16 %v403, %v400
  %v446 = vpack.c.b16 %v404, %v401
  %v447 = vpack.c.b16 %v408, %v405
  %v448 = vpack.c.b16 %v409, %v406
  %v449 = vpack.c.b16 %v410, %v407
  %v450 = vpack.c.b16 %v414, %v411
  %v451 = vpack.c.b16 %v415, %v412
  %v452 = vpack.c.b16 %v416, %v413
  %v453 = vpack.c.b16 %v420, %v417
  %v454 = vpack.c.b16 %v421, %v418
  %v455 = vpack.c.b16 %v422, %v419
  %v456 = vpack.c.b16 %v426, %v423
  %v457 = vpack.c.b16 %v427, %v424
  %v458 = vpack.c.b16 %v428, %v425
  %v459 = vpack.c.b16 %v432, %v429
  %v460 = vpack.c.b16 %v433, %v430
  %v461 = vpack.c.b16 %v434, %v431
  %v462 = vpack.c.b16 %v438, %v435
  %v463 = vpack.c.b16 %v439, %v436
  %v464 = vpack.c.b16 %v440, %v437
  %489 = vmatprep.subr.bf16.mxu0 %v442
  %490 = vmatpush1.bf16.msra.mxu0 %v441
  %491 = vmatprep.subr.bf16.mxu0 %v445
  %492 = vmatpush1.bf16.msra.mxu0 %v444
  %493 = vmatprep.subr.bf16.mxu0 %v448
  %494 = vmatpush1.bf16.msra.mxu0 %v447
  %495 = vmatprep.subr.bf16.mxu0 %v451
  %496 = vmatpush1.bf16.msra.mxu0 %v450
  %497 = vmatprep.subr.bf16.mxu0 %v454
  %498 = vmatpush1.bf16.msra.mxu0 %v453
  %499 = vmatprep.subr.bf16.mxu0 %v457
  %500 = vmatpush1.bf16.msra.mxu0 %v456
  %501 = vmatprep.subr.bf16.mxu0 %v460
  %502 = vmatpush1.bf16.msra.mxu0 %v459
  %503 = vmatprep.subr.bf16.mxu0 %v463
  %504 = vmatpush1.bf16.msra.mxu0 %v462
  %505 = vmatprep.subr.bf16.mxu0 0
  %506 = vmatpush1.bf16.msra.mxu0 0
  %507 = vmatprep.subr.bf16.mxu0 0
  %508 = vmatpush1.bf16.msra.mxu0 0
  %509 = vmatprep.subr.bf16.mxu0 0
  %510 = vmatpush1.bf16.msra.mxu0 0
  %511 = vmatprep.subr.bf16.mxu0 0
  %512 = vmatpush1.bf16.msra.mxu0 0
  %513 = vmatprep.subr.bf16.mxu0 0
  %514 = vmatpush1.bf16.msra.mxu0 0
  %515 = vmatprep.subr.bf16.mxu0 0
  %516 = vmatpush1.bf16.msra.mxu0 0
  %517 = vmatprep.subr.bf16.mxu0 0
  %518 = vmatpush1.bf16.msra.mxu0 0
  %519 = vmatprep.subr.bf16.mxu0 0
  %520 = vmatpush1.bf16.msra.mxu0 0
  %521 = vmatprep.mubr.bf16.mxu0 0
  %522 = vmatmul.mubr.bf16.gmra.mrb[0].mxu0 %v304
  %v523 = vpop.f32.mrb[0].mxu0
  %v524 = vadd.f32 %v349, %v523
  %v525 = vpop.f32.mrb[0].mxu0
  %v526 = vadd.f32 %v353, %v525
  %v527 = vpop.f32.mrb[0].mxu0
  %v528 = vadd.f32 %v349, %v527
  %v529 = vpop.f32.mrb[0].mxu0
  %v530 = vadd.f32 %v353, %v529
  %531 = vmatprep.mubr.bf16.mxu0 0
  %532 = vmatmul.mubr.bf16.gmra.mrb[0].mxu0 %v305
  %v533 = vpop.f32.mrb[0].mxu0
  %v534 = vadd.f32 %v349, %v533
  %v535 = vpop.f32.mrb[0].mxu0
  %v536 = vadd.f32 %v353, %v535
  %v537 = vpop.f32.mrb[0].mxu0
  %v538 = vadd.f32 %v349, %v537
  %v539 = vpop.f32.mrb[0].mxu0
  %v540 = vadd.f32 %v353, %v539
  %541 = vmatprep.mubr.bf16.mxu0 0
  %542 = vmatmul.mubr.bf16.gmra.mrb[0].mxu0 %v306
  %v543 = vpop.f32.mrb[0].mxu0
  %v544 = vadd.f32 %v349, %v543
  %v545 = vpop.f32.mrb[0].mxu0
  %v546 = vadd.f32 %v353, %v545
  %v547 = vpop.f32.mrb[0].mxu0
  %v548 = vadd.f32 %v349, %v547
  %v549 = vpop.f32.mrb[0].mxu0
  %v550 = vadd.f32 %v353, %v549
  %551 = vmatprep.mubr.bf16.mxu0 0
  %552 = vmatmul.mubr.bf16.gmra.mrb[0].mxu0 %v307
  %v553 = vpop.f32.mrb[0].mxu0
  %v554 = vadd.f32 %v349, %v553
  %v555 = vpop.f32.mrb[0].mxu0
  %v556 = vadd.f32 %v353, %v555
  %v557 = vpop.f32.mrb[0].mxu0
  %v558 = vadd.f32 %v349, %v557
  %v559 = vpop.f32.mrb[0].mxu0
  %v560 = vadd.f32 %v353, %v559
  %561 = vmatprep.mubr.bf16.mxu0 0
  %562 = vmatmul.mubr.bf16.gmra.mrb[0].mxu0 %v308
  %v563 = vpop.f32.mrb[0].mxu0
  %v564 = vadd.f32 %v349, %v563
  %v565 = vpop.f32.mrb[0].mxu0
  %v566 = vadd.f32 %v353, %v565
  %v567 = vpop.f32.mrb[0].mxu0
  %v568 = vadd.f32 %v349, %v567
  %v569 = vpop.f32.mrb[0].mxu0
  %v570 = vadd.f32 %v353, %v569
  %571 = vmatprep.mubr.bf16.mxu0 0
  %572 = vmatmul.mubr.bf16.gmra.mrb[0].mxu0 %v309
  %v573 = vpop.f32.mrb[0].mxu0
  %v574 = vadd.f32 %v349, %v573
  %v575 = vpop.f32.mrb[0].mxu0
  %v576 = vadd.f32 %v353, %v575
  %v577 = vpop.f32.mrb[0].mxu0
  %v578 = vadd.f32 %v349, %v577
  %v579 = vpop.f32.mrb[0].mxu0
  %v580 = vadd.f32 %v353, %v579
  %581 = vmatprep.mubr.bf16.mxu0 0
  %582 = vmatmul.mubr.bf16.gmra.mrb[0].mxu0 %v310
  %v583 = vpop.f32.mrb[0].mxu0
  %v584 = vadd.f32 %v349, %v583
  %v585 = vpop.f32.mrb[0].mxu0
  %v586 = vadd.f32 %v353, %v585
  %v587 = vpop.f32.mrb[0].mxu0
  %v588 = vadd.f32 %v349, %v587
  %v589 = vpop.f32.mrb[0].mxu0
  %v590 = vadd.f32 %v353, %v589
  %591 = vmatprep.mubr.bf16.mxu0 0
  %592 = vmatmul.mubr.bf16.gmra.mrb[0].mxu0 %v311
  %v593 = vpop.f32.mrb[0].mxu0
  %v594 = vadd.f32 %v349, %v593
  %v595 = vpop.f32.mrb[0].mxu0
  %v596 = vadd.f32 %v353, %v595
  %v597 = vpop.f32.mrb[0].mxu0
  %v598 = vadd.f32 %v349, %v597
  %v599 = vpop.f32.mrb[0].mxu0
  %v600 = vadd.f32 %v353, %v599
  %601 = vdwg.mxu0
  %602 = vmatprep.subr.bf16.mxu0 0
  %603 = vmatpush1.bf16.msra.mxu0 %v443
  %604 = vmatprep.subr.bf16.mxu0 0
  %605 = vmatpush1.bf16.msra.mxu0 %v446
  %606 = vmatprep.subr.bf16.mxu0 0
  %607 = vmatpush1.bf16.msra.mxu0 %v449
  %608 = vmatprep.subr.bf16.mxu0 0
  %609 = vmatpush1.bf16.msra.mxu0 %v452
  %610 = vmatprep.subr.bf16.mxu0 0
  %611 = vmatpush1.bf16.msra.mxu0 %v455
  %612 = vmatprep.subr.bf16.mxu0 0
  %613 = vmatpush1.bf16.msra.mxu0 %v458
  %614 = vmatprep.subr.bf16.mxu0 0
  %615 = vmatpush1.bf16.msra.mxu0 %v461
  %616 = vmatprep.subr.bf16.mxu0 0
  %617 = vmatpush1.bf16.msra.mxu0 %v464
  %618 = vmatprep.subr.bf16.mxu0 0
  %619 = vmatpush1.bf16.msra.mxu0 0
  %620 = vmatprep.subr.bf16.mxu0 0
  %621 = vmatpush1.bf16.msra.mxu0 0
  %622 = vmatprep.subr.bf16.mxu0 0
  %623 = vmatpush1.bf16.msra.mxu0 0
  %624 = vmatprep.subr.bf16.mxu0 0
  %625 = vmatpush1.bf16.msra.mxu0 0
  %626 = vmatprep.subr.bf16.mxu0 0
  %627 = vmatpush1.bf16.msra.mxu0 0
  %628 = vmatprep.subr.bf16.mxu0 0
  %629 = vmatpush1.bf16.msra.mxu0 0
  %630 = vmatprep.subr.bf16.mxu0 0
  %631 = vmatpush1.bf16.msra.mxu0 0
  %632 = vmatprep.subr.bf16.mxu0 0
  %633 = vmatpush1.bf16.msra.mxu0 0
  %634 = vmatprep.mubr.bf16.mxu0 0
  %635 = vmatmul.mubr.bf16.gmra.mrb[0].mxu0 %v304
  %v636 = vpop.f32.mrb[0].mxu0
  %v637 = vadd.f32 %v357, %v636
  %v638 = vpop.f32.mrb[0].mxu0
  %v639 = vpop.f32.mrb[0].mxu0
  %v640 = vadd.f32 %v357, %v639
  %v641 = vpop.f32.mrb[0].mxu0
  %642 = vmatprep.mubr.bf16.mxu0 0
  %643 = vmatmul.mubr.bf16.gmra.mrb[0].mxu0 %v305
  %v644 = vpop.f32.mrb[0].mxu0
  %v645 = vadd.f32 %v357, %v644
  %v646 = vpop.f32.mrb[0].mxu0
  %v647 = vpop.f32.mrb[0].mxu0
  %v648 = vadd.f32 %v357, %v647
  %v649 = vpop.f32.mrb[0].mxu0
  %650 = vmatprep.mubr.bf16.mxu0 0
  %651 = vmatmul.mubr.bf16.gmra.mrb[0].mxu0 %v306
  %v652 = vpop.f32.mrb[0].mxu0
  %v653 = vadd.f32 %v357, %v652
  %v654 = vpop.f32.mrb[0].mxu0
  %v655 = vpop.f32.mrb[0].mxu0
  %v656 = vadd.f32 %v357, %v655
  %v657 = vpop.f32.mrb[0].mxu0
  %658 = vmatprep.mubr.bf16.mxu0 0
  %659 = vmatmul.mubr.bf16.gmra.mrb[0].mxu0 %v307
  %v660 = vpop.f32.mrb[0].mxu0
  %v661 = vadd.f32 %v357, %v660
  %v662 = vpop.f32.mrb[0].mxu0
  %v663 = vpop.f32.mrb[0].mxu0
  %v664 = vadd.f32 %v357, %v663
  %v665 = vpop.f32.mrb[0].mxu0
  %666 = vmatprep.mubr.bf16.mxu0 0
  %667 = vmatmul.mubr.bf16.gmra.mrb[0].mxu0 %v308
  %v668 = vpop.f32.mrb[0].mxu0
  %v669 = vadd.f32 %v357, %v668
  %v670 = vpop.f32.mrb[0].mxu0
  %v671 = vpop.f32.mrb[0].mxu0
  %v672 = vadd.f32 %v357, %v671
  %v673 = vpop.f32.mrb[0].mxu0
  %674 = vmatprep.mubr.bf16.mxu0 0
  %675 = vmatmul.mubr.bf16.gmra.mrb[0].mxu0 %v309
  %v676 = vpop.f32.mrb[0].mxu0
  %v677 = vadd.f32 %v357, %v676
  %v678 = vpop.f32.mrb[0].mxu0
  %v679 = vpop.f32.mrb[0].mxu0
  %v680 = vadd.f32 %v357, %v679
  %v681 = vpop.f32.mrb[0].mxu0
  %682 = vmatprep.mubr.bf16.mxu0 0
  %683 = vmatmul.mubr.bf16.gmra.mrb[0].mxu0 %v310
  %v684 = vpop.f32.mrb[0].mxu0
  %v685 = vadd.f32 %v357, %v684
  %v686 = vpop.f32.mrb[0].mxu0
  %v687 = vpop.f32.mrb[0].mxu0
  %v688 = vadd.f32 %v357, %v687
  %v689 = vpop.f32.mrb[0].mxu0
  %690 = vmatprep.mubr.bf16.mxu0 0
  %691 = vmatmul.mubr.bf16.gmra.mrb[0].mxu0 %v311
  %v692 = vpop.f32.mrb[0].mxu0
  %v693 = vadd.f32 %v357, %v692
  %v694 = vpop.f32.mrb[0].mxu0
  %v695 = vpop.f32.mrb[0].mxu0
  %v696 = vadd.f32 %v357, %v695
  %v697 = vpop.f32.mrb[0].mxu0
  %698 = vdwg.mxu0
  %v699 = vpack.c.bf16 %v528, %v524
  %v700 = vpack.c.bf16 %v538, %v534
  %v701 = vpack.c.bf16 %v548, %v544
  %v702 = vpack.c.bf16 %v558, %v554
  %v703 = vpack.c.bf16 %v568, %v564
  %v704 = vpack.c.bf16 %v578, %v574
  %v705 = vpack.c.bf16 %v588, %v584
  %v706 = vpack.c.bf16 %v598, %v594
  %v707 = vpack.c.bf16 %v530, %v526
  %v708 = vpack.c.bf16 %v540, %v536
  %v709 = vpack.c.bf16 %v550, %v546
  %v710 = vpack.c.bf16 %v560, %v556
  %v711 = vpack.c.bf16 %v570, %v566
  %v712 = vpack.c.bf16 %v580, %v576
  %v713 = vpack.c.bf16 %v590, %v586
  %v714 = vpack.c.bf16 %v600, %v596
  %v715 = vpack.c.bf16 %v640, %v637
  %v716 = vpack.c.bf16 %v648, %v645
  %v717 = vpack.c.bf16 %v656, %v653
  %v718 = vpack.c.bf16 %v664, %v661
  %v719 = vpack.c.bf16 %v672, %v669
  %v720 = vpack.c.bf16 %v680, %v677
  %v721 = vpack.c.bf16 %v688, %v685
  %v722 = vpack.c.bf16 %v696, %v693
  %vm723 = vcmask 261120
  %v725 = vsel %vm723, %v699, 0
  %v728 = vsel %vm723, %v700, 0
  %v731 = vsel %vm723, %v701, 0
  %v734 = vsel %vm723, %v702, 0
  %v737 = vsel %vm723, %v707, 0
  %v740 = vsel %vm723, %v708, 0
  %v743 = vsel %vm723, %v709, 0
  %v746 = vsel %vm723, %v710, 0
  %748 = vmatprep.subr.bf16.mxu0 0
  %749 = vmatpush1.bf16.xpose.msra.mxu0 %v737
  %750 = vmatprep.subr.bf16.mxu0 0
  %751 = vmatpush1.bf16.xpose.msra.mxu0 %v740
  %752 = vmatprep.subr.bf16.mxu0 0
  %753 = vmatpush1.bf16.xpose.msra.mxu0 %v743
  %754 = vmatprep.subr.bf16.mxu0 0
  %755 = vmatpush1.bf16.xpose.msra.mxu0 %v746
  %756 = vmatprep.subr.bf16.mxu0 0
  %757 = vmatpush1.bf16.xpose.msra.mxu0 0
  %758 = vmatprep.subr.bf16.mxu0 0
  %759 = vmatpush1.bf16.xpose.msra.mxu0 0
  %760 = vmatprep.subr.bf16.mxu0 0
  %761 = vmatpush1.bf16.xpose.msra.mxu0 0
  %762 = vmatprep.subr.bf16.mxu0 0
  %763 = vmatpush1.bf16.xpose.msra.mxu0 0
  %764 = vmatprep.subr.bf16.mxu0 0
  %765 = vmatpush1.bf16.xpose.msra.mxu0 0
  %766 = vmatprep.subr.bf16.mxu0 0
  %767 = vmatpush1.bf16.xpose.msra.mxu0 0
  %768 = vmatprep.subr.bf16.mxu0 0
  %769 = vmatpush1.bf16.xpose.msra.mxu0 0
  %770 = vmatprep.subr.bf16.mxu0 0
  %771 = vmatpush1.bf16.xpose.msra.mxu0 0
  %772 = vmatprep.subr.bf16.mxu0 0
  %773 = vmatpush1.bf16.xpose.msra.mxu0 0
  %774 = vmatprep.subr.bf16.mxu0 0
  %775 = vmatpush1.bf16.xpose.msra.mxu0 0
  %776 = vmatprep.subr.bf16.mxu0 0
  %777 = vmatpush1.bf16.xpose.msra.mxu0 0
  %778 = vmatprep.subr.bf16.mxu0 0
  %779 = vmatpush1.bf16.xpose.msra.mxu0 0
  %780 = vmatprep.mubr.bf16.mxu0 0
  %781 = vmatmul.mubr.bf16.gmra.mrb[0].mxu0 %v725
  %v782 = vpop.f32.mrb[0].mxu0
  %v783 = vadd.f32 %v73, %v782
  %v784 = vpop.f32.mrb[0].mxu0
  %v785 = vpop.f32.mrb[0].mxu0
  %v786 = vadd.f32 %v74, %v785
  %v787 = vpop.f32.mrb[0].mxu0
  %788 = vmatprep.mubr.bf16.mxu0 0
  %789 = vmatmul.mubr.bf16.gmra.mrb[0].mxu0 %v728
  %v790 = vpop.f32.mrb[0].mxu0
  %v791 = vadd.f32 %v75, %v790
  %v792 = vpop.f32.mrb[0].mxu0
  %v793 = vpop.f32.mrb[0].mxu0
  %v794 = vadd.f32 %v76, %v793
  %v795 = vpop.f32.mrb[0].mxu0
  %796 = vmatprep.mubr.bf16.mxu0 0
  %797 = vmatmul.mubr.bf16.gmra.mrb[0].mxu0 %v731
  %v798 = vpop.f32.mrb[0].mxu0
  %v799 = vadd.f32 %v77, %v798
  %v800 = vpop.f32.mrb[0].mxu0
  %v801 = vpop.f32.mrb[0].mxu0
  %v802 = vadd.f32 %v78, %v801
  %v803 = vpop.f32.mrb[0].mxu0
  %804 = vmatprep.mubr.bf16.mxu0 0
  %805 = vmatmul.mubr.bf16.gmra.mrb[0].mxu0 %v734
  %v806 = vpop.f32.mrb[0].mxu0
  %v807 = vadd.f32 %v79, %v806
  %v808 = vpop.f32.mrb[0].mxu0
  %v809 = vpop.f32.mrb[0].mxu0
  %v810 = vadd.f32 %v80, %v809
  %v811 = vpop.f32.mrb[0].mxu0
  %812 = vdwg.mxu0
  %vm813 = vcmask 523264
  %v814 = vsel %vm813, %v783, -inf
  %815 = vmax.xlane.f32.xlu0 %v814
  %v816 = vpop.xlane.xlu0 %815
  %v817 = vsel %vm813, %v786, -inf
  %818 = vmax.xlane.f32.xlu0 %v817
  %v819 = vpop.xlane.xlu0 %818
  %v820 = vsel %vm813, %v791, -inf
  %821 = vmax.xlane.f32.xlu0 %v820
  %v822 = vpop.xlane.xlu0 %821
  %v823 = vsel %vm813, %v794, -inf
  %824 = vmax.xlane.f32.xlu0 %v823
  %v825 = vpop.xlane.xlu0 %824
  %v826 = vsel %vm813, %v799, -inf
  %827 = vmax.xlane.f32.xlu0 %v826
  %v828 = vpop.xlane.xlu0 %827
  %v829 = vsel %vm813, %v802, -inf
  %830 = vmax.xlane.f32.xlu0 %v829
  %v831 = vpop.xlane.xlu0 %830
  %v832 = vsel %vm813, %v807, -inf
  %833 = vmax.xlane.f32.xlu0 %v832
  %v834 = vpop.xlane.xlu0 %833
  %v835 = vsel %vm813, %v810, -inf
  %836 = vmax.xlane.f32.xlu0 %v835
  %v837 = vpop.xlane.xlu0 %836
  %v838 = vsub.f32 %v783, %v816
  %v839 = vsub.f32 %v786, %v819
  %v840 = vsub.f32 %v791, %v822
  %v841 = vsub.f32 %v794, %v825
  %v842 = vsub.f32 %v799, %v828
  %v843 = vsub.f32 %v802, %v831
  %v844 = vsub.f32 %v807, %v834
  %v845 = vsub.f32 %v810, %v837
  %v846 = vmul.f32 %v838, 1.442695
  %v847 = vpow.pop %v846
  %v848 = vmul.f32 %v839, 1.442695
  %v849 = vpow.pop %v848
  %v850 = vmul.f32 %v840, 1.442695
  %v851 = vpow.pop %v850
  %v852 = vmul.f32 %v841, 1.442695
  %v853 = vpow.pop %v852
  %v854 = vmul.f32 %v842, 1.442695
  %v855 = vpow.pop %v854
  %v856 = vmul.f32 %v843, 1.442695
  %v857 = vpow.pop %v856
  %v858 = vmul.f32 %v844, 1.442695
  %v859 = vpow.pop %v858
  %v860 = vmul.f32 %v845, 1.442695
  %v861 = vpow.pop %v860
  %v862 = vsel %vm813, %v847, 0.0
  %863 = vadd.xlane.f32.xlu0 %v862
  %v864 = vpop.xlane.xlu0 %863
  %v865 = vsel %vm813, %v849, 0.0
  %866 = vadd.xlane.f32.xlu0 %v865
  %v867 = vpop.xlane.xlu0 %866
  %v868 = vsel %vm813, %v851, 0.0
  %869 = vadd.xlane.f32.xlu0 %v868
  %v870 = vpop.xlane.xlu0 %869
  %v871 = vsel %vm813, %v853, 0.0
  %872 = vadd.xlane.f32.xlu0 %v871
  %v873 = vpop.xlane.xlu0 %872
  %v874 = vsel %vm813, %v855, 0.0
  %875 = vadd.xlane.f32.xlu0 %v874
  %v876 = vpop.xlane.xlu0 %875
  %v877 = vsel %vm813, %v857, 0.0
  %878 = vadd.xlane.f32.xlu0 %v877
  %v879 = vpop.xlane.xlu0 %878
  %v880 = vsel %vm813, %v859, 0.0
  %881 = vadd.xlane.f32.xlu0 %v880
  %v882 = vpop.xlane.xlu0 %881
  %v883 = vsel %vm813, %v861, 0.0
  %884 = vadd.xlane.f32.xlu0 %v883
  %v885 = vpop.xlane.xlu0 %884
  %v886 = vrcp.pop %v864
  %v887 = vrcp.pop %v867
  %v888 = vrcp.pop %v870
  %v889 = vrcp.pop %v873
  %v890 = vrcp.pop %v876
  %v891 = vrcp.pop %v879
  %v892 = vrcp.pop %v882
  %v893 = vrcp.pop %v885
  %v894 = vmul.f32 %v847, %v886
  %v895 = vmul.f32 %v849, %v887
  %v896 = vmul.f32 %v851, %v888
  %v897 = vmul.f32 %v853, %v889
  %v898 = vmul.f32 %v855, %v890
  %v899 = vmul.f32 %v857, %v891
  %v900 = vmul.f32 %v859, %v892
  %v901 = vmul.f32 %v861, %v893
  %v902 = vpack.c.bf16 %v895, %v894
  %v903 = vpack.c.bf16 %v897, %v896
  %v904 = vpack.c.bf16 %v899, %v898
  %v905 = vpack.c.bf16 %v901, %v900
  %v907 = vsel %vm813, %v902, 0
  %v910 = vsel %vm813, %v903, 0
  %v913 = vsel %vm813, %v904, 0
  %v916 = vsel %vm813, %v905, 0
  %918 = vmatprep.subr.bf16.mxu0 0
  %919 = vmatpush1.bf16.msra.mxu0 %v715
  %920 = vmatprep.subr.bf16.mxu0 0
  %921 = vmatpush1.bf16.msra.mxu0 %v716
  %922 = vmatprep.subr.bf16.mxu0 0
  %923 = vmatpush1.bf16.msra.mxu0 %v717
  %924 = vmatprep.subr.bf16.mxu0 0
  %925 = vmatpush1.bf16.msra.mxu0 %v718
  %926 = vmatprep.subr.bf16.mxu0 0
  %927 = vmatpush1.bf16.msra.mxu0 0
  %928 = vmatprep.subr.bf16.mxu0 0
  %929 = vmatpush1.bf16.msra.mxu0 0
  %930 = vmatprep.subr.bf16.mxu0 0
  %931 = vmatpush1.bf16.msra.mxu0 0
  %932 = vmatprep.subr.bf16.mxu0 0
  %933 = vmatpush1.bf16.msra.mxu0 0
  %934 = vmatprep.subr.bf16.mxu0 0
  %935 = vmatpush1.bf16.msra.mxu0 0
  %936 = vmatprep.subr.bf16.mxu0 0
  %937 = vmatpush1.bf16.msra.mxu0 0
  %938 = vmatprep.subr.bf16.mxu0 0
  %939 = vmatpush1.bf16.msra.mxu0 0
  %940 = vmatprep.subr.bf16.mxu0 0
  %941 = vmatpush1.bf16.msra.mxu0 0
  %942 = vmatprep.subr.bf16.mxu0 0
  %943 = vmatpush1.bf16.msra.mxu0 0
  %944 = vmatprep.subr.bf16.mxu0 0
  %945 = vmatpush1.bf16.msra.mxu0 0
  %946 = vmatprep.subr.bf16.mxu0 0
  %947 = vmatpush1.bf16.msra.mxu0 0
  %948 = vmatprep.subr.bf16.mxu0 0
  %949 = vmatpush1.bf16.msra.mxu0 0
  %950 = vmatprep.mubr.bf16.mxu0 0
  %951 = vmatmul.mubr.bf16.gmra.mrb[0].mxu0 %v907
  %v952 = vpop.f32.mrb[0].mxu0
  %v953 = vadd.f32 0.0, %v952
  %v954 = vpop.f32.mrb[0].mxu0
  %v955 = vpop.f32.mrb[0].mxu0
  %v956 = vadd.f32 0.0, %v955
  %v957 = vpop.f32.mrb[0].mxu0
  %958 = vmatprep.mubr.bf16.mxu0 0
  %959 = vmatmul.mubr.bf16.gmra.mrb[0].mxu0 %v910
  %v960 = vpop.f32.mrb[0].mxu0
  %v961 = vadd.f32 0.0, %v960
  %v962 = vpop.f32.mrb[0].mxu0
  %v963 = vpop.f32.mrb[0].mxu0
  %v964 = vadd.f32 0.0, %v963
  %v965 = vpop.f32.mrb[0].mxu0
  %966 = vmatprep.mubr.bf16.mxu0 0
  %967 = vmatmul.mubr.bf16.gmra.mrb[0].mxu0 %v913
  %v968 = vpop.f32.mrb[0].mxu0
  %v969 = vadd.f32 0.0, %v968
  %v970 = vpop.f32.mrb[0].mxu0
  %v971 = vpop.f32.mrb[0].mxu0
  %v972 = vadd.f32 0.0, %v971
  %v973 = vpop.f32.mrb[0].mxu0
  %974 = vmatprep.mubr.bf16.mxu0 0
  %975 = vmatmul.mubr.bf16.gmra.mrb[0].mxu0 %v916
  %v976 = vpop.f32.mrb[0].mxu0
  %v977 = vadd.f32 0.0, %v976
  %v978 = vpop.f32.mrb[0].mxu0
  %v979 = vpop.f32.mrb[0].mxu0
  %v980 = vadd.f32 0.0, %v979
  %v981 = vpop.f32.mrb[0].mxu0
  %982 = vdwg.mxu0
  %983 = vst.msk [vmem:[#allocation2] sm:$0xff] %vm723, %v953
  %984 = vst.msk [vmem:[#allocation2 + $0x8] sm:$0xff] %vm723, %v956
  %985 = vst.msk [vmem:[#allocation2 + $0x10] sm:$0xff] %vm723, %v961
  %986 = vst.msk [vmem:[#allocation2 + $0x18] sm:$0xff] %vm723, %v964
  %987 = vst.msk [vmem:[#allocation2 + $0x20] sm:$0xff] %vm723, %v969
  %988 = vst.msk [vmem:[#allocation2 + $0x28] sm:$0xff] %vm723, %v972
  %989 = vst.msk [vmem:[#allocation2 + $0x30] sm:$0xff] %vm723, %v977
  %990 = vst.msk [vmem:[#allocation2 + $0x38] sm:$0xff] %vm723, %v980
  %995 = vrot.lane.b32.xlu0 %v699, 96
  %v996 = vpop.permute.xlu0 %995
  %997 = vrot.lane.b32.xlu0 %v700, 96
  %v998 = vpop.permute.xlu0 %997
  %999 = vrot.lane.b32.xlu0 %v701, 96
  %v1000 = vpop.permute.xlu0 %999
  %1001 = vrot.lane.b32.xlu0 %v702, 96
  %v1002 = vpop.permute.xlu0 %1001
  %1007 = vrot.lane.b32.xlu0 %v707, 96
  %v1008 = vpop.permute.xlu0 %1007
  %1009 = vrot.lane.b32.xlu0 %v708, 96
  %v1010 = vpop.permute.xlu0 %1009
  %1011 = vrot.lane.b32.xlu0 %v709, 96
  %v1012 = vpop.permute.xlu0 %1011
  %1013 = vrot.lane.b32.xlu0 %v710, 96
  %v1014 = vpop.permute.xlu0 %1013
  %v1016 = vsel %vm723, %v996, 0
  %v1019 = vsel %vm723, %v998, 0
  %v1022 = vsel %vm723, %v1000, 0
  %v1025 = vsel %vm723, %v1002, 0
  %v1028 = vsel %vm723, %v1008, 0
  %v1031 = vsel %vm723, %v1010, 0
  %v1034 = vsel %vm723, %v1012, 0
  %v1037 = vsel %vm723, %v1014, 0
  %1039 = vmatprep.subr.bf16.mxu0 0
  %1040 = vmatpush1.bf16.xpose.msra.mxu0 %v1028
  %1041 = vmatprep.subr.bf16.mxu0 0
  %1042 = vmatpush1.bf16.xpose.msra.mxu0 %v1031
  %1043 = vmatprep.subr.bf16.mxu0 0
  %1044 = vmatpush1.bf16.xpose.msra.mxu0 %v1034
  %1045 = vmatprep.subr.bf16.mxu0 0
  %1046 = vmatpush1.bf16.xpose.msra.mxu0 %v1037
  %1047 = vmatprep.subr.bf16.mxu0 0
  %1048 = vmatpush1.bf16.xpose.msra.mxu0 0
  %1049 = vmatprep.subr.bf16.mxu0 0
  %1050 = vmatpush1.bf16.xpose.msra.mxu0 0
  %1051 = vmatprep.subr.bf16.mxu0 0
  %1052 = vmatpush1.bf16.xpose.msra.mxu0 0
  %1053 = vmatprep.subr.bf16.mxu0 0
  %1054 = vmatpush1.bf16.xpose.msra.mxu0 0
  %1055 = vmatprep.subr.bf16.mxu0 0
  %1056 = vmatpush1.bf16.xpose.msra.mxu0 0
  %1057 = vmatprep.subr.bf16.mxu0 0
  %1058 = vmatpush1.bf16.xpose.msra.mxu0 0
  %1059 = vmatprep.subr.bf16.mxu0 0
  %1060 = vmatpush1.bf16.xpose.msra.mxu0 0
  %1061 = vmatprep.subr.bf16.mxu0 0
  %1062 = vmatpush1.bf16.xpose.msra.mxu0 0
  %1063 = vmatprep.subr.bf16.mxu0 0
  %1064 = vmatpush1.bf16.xpose.msra.mxu0 0
  %1065 = vmatprep.subr.bf16.mxu0 0
  %1066 = vmatpush1.bf16.xpose.msra.mxu0 0
  %1067 = vmatprep.subr.bf16.mxu0 0
  %1068 = vmatpush1.bf16.xpose.msra.mxu0 0
  %1069 = vmatprep.subr.bf16.mxu0 0
  %1070 = vmatpush1.bf16.xpose.msra.mxu0 0
  %1071 = vmatprep.mubr.bf16.mxu0 0
  %1072 = vmatmul.mubr.bf16.gmra.mrb[0].mxu0 %v1016
  %v1073 = vpop.f32.mrb[0].mxu0
  %v1074 = vadd.f32 %v73, %v1073
  %v1075 = vpop.f32.mrb[0].mxu0
  %v1076 = vpop.f32.mrb[0].mxu0
  %v1077 = vadd.f32 %v74, %v1076
  %v1078 = vpop.f32.mrb[0].mxu0
  %1079 = vmatprep.mubr.bf16.mxu0 0
  %1080 = vmatmul.mubr.bf16.gmra.mrb[0].mxu0 %v1019
  %v1081 = vpop.f32.mrb[0].mxu0
  %v1082 = vadd.f32 %v75, %v1081
  %v1083 = vpop.f32.mrb[0].mxu0
  %v1084 = vpop.f32.mrb[0].mxu0
  %v1085 = vadd.f32 %v76, %v1084
  %v1086 = vpop.f32.mrb[0].mxu0
  %1087 = vmatprep.mubr.bf16.mxu0 0
  %1088 = vmatmul.mubr.bf16.gmra.mrb[0].mxu0 %v1022
  %v1089 = vpop.f32.mrb[0].mxu0
  %v1090 = vadd.f32 %v77, %v1089
  %v1091 = vpop.f32.mrb[0].mxu0
  %v1092 = vpop.f32.mrb[0].mxu0
  %v1093 = vadd.f32 %v78, %v1092
  %v1094 = vpop.f32.mrb[0].mxu0
  %1095 = vmatprep.mubr.bf16.mxu0 0
  %1096 = vmatmul.mubr.bf16.gmra.mrb[0].mxu0 %v1025
  %v1097 = vpop.f32.mrb[0].mxu0
  %v1098 = vadd.f32 %v79, %v1097
  %v1099 = vpop.f32.mrb[0].mxu0
  %v1100 = vpop.f32.mrb[0].mxu0
  %v1101 = vadd.f32 %v80, %v1100
  %v1102 = vpop.f32.mrb[0].mxu0
  %1103 = vdwg.mxu0
  %v1104 = vsel %vm813, %v1074, -inf
  %1105 = vmax.xlane.f32.xlu0 %v1104
  %v1106 = vpop.xlane.xlu0 %1105
  %v1107 = vsel %vm813, %v1077, -inf
  %1108 = vmax.xlane.f32.xlu0 %v1107
  %v1109 = vpop.xlane.xlu0 %1108
  %v1110 = vsel %vm813, %v1082, -inf
  %1111 = vmax.xlane.f32.xlu0 %v1110
  %v1112 = vpop.xlane.xlu0 %1111
  %v1113 = vsel %vm813, %v1085, -inf
  %1114 = vmax.xlane.f32.xlu0 %v1113
  %v1115 = vpop.xlane.xlu0 %1114
  %v1116 = vsel %vm813, %v1090, -inf
  %1117 = vmax.xlane.f32.xlu0 %v1116
  %v1118 = vpop.xlane.xlu0 %1117
  %v1119 = vsel %vm813, %v1093, -inf
  %1120 = vmax.xlane.f32.xlu0 %v1119
  %v1121 = vpop.xlane.xlu0 %1120
  %v1122 = vsel %vm813, %v1098, -inf
  %1123 = vmax.xlane.f32.xlu0 %v1122
  %v1124 = vpop.xlane.xlu0 %1123
  %v1125 = vsel %vm813, %v1101, -inf
  %1126 = vmax.xlane.f32.xlu0 %v1125
  %v1127 = vpop.xlane.xlu0 %1126
  %v1128 = vsub.f32 %v1074, %v1106
  %v1129 = vsub.f32 %v1077, %v1109
  %v1130 = vsub.f32 %v1082, %v1112
  %v1131 = vsub.f32 %v1085, %v1115
  %v1132 = vsub.f32 %v1090, %v1118
  %v1133 = vsub.f32 %v1093, %v1121
  %v1134 = vsub.f32 %v1098, %v1124
  %v1135 = vsub.f32 %v1101, %v1127
  %v1136 = vmul.f32 %v1128, 1.442695
  %v1137 = vpow.pop %v1136
  %v1138 = vmul.f32 %v1129, 1.442695
  %v1139 = vpow.pop %v1138
  %v1140 = vmul.f32 %v1130, 1.442695
  %v1141 = vpow.pop %v1140
  %v1142 = vmul.f32 %v1131, 1.442695
  %v1143 = vpow.pop %v1142
  %v1144 = vmul.f32 %v1132, 1.442695
  %v1145 = vpow.pop %v1144
  %v1146 = vmul.f32 %v1133, 1.442695
  %v1147 = vpow.pop %v1146
  %v1148 = vmul.f32 %v1134, 1.442695
  %v1149 = vpow.pop %v1148
  %v1150 = vmul.f32 %v1135, 1.442695
  %v1151 = vpow.pop %v1150
  %v1152 = vsel %vm813, %v1137, 0.0
  %1153 = vadd.xlane.f32.xlu0 %v1152
  %v1154 = vpop.xlane.xlu0 %1153
  %v1155 = vsel %vm813, %v1139, 0.0
  %1156 = vadd.xlane.f32.xlu0 %v1155
  %v1157 = vpop.xlane.xlu0 %1156
  %v1158 = vsel %vm813, %v1141, 0.0
  %1159 = vadd.xlane.f32.xlu0 %v1158
  %v1160 = vpop.xlane.xlu0 %1159
  %v1161 = vsel %vm813, %v1143, 0.0
  %1162 = vadd.xlane.f32.xlu0 %v1161
  %v1163 = vpop.xlane.xlu0 %1162
  %v1164 = vsel %vm813, %v1145, 0.0
  %1165 = vadd.xlane.f32.xlu0 %v1164
  %v1166 = vpop.xlane.xlu0 %1165
  %v1167 = vsel %vm813, %v1147, 0.0
  %1168 = vadd.xlane.f32.xlu0 %v1167
  %v1169 = vpop.xlane.xlu0 %1168
  %v1170 = vsel %vm813, %v1149, 0.0
  %1171 = vadd.xlane.f32.xlu0 %v1170
  %v1172 = vpop.xlane.xlu0 %1171
  %v1173 = vsel %vm813, %v1151, 0.0
  %1174 = vadd.xlane.f32.xlu0 %v1173
  %v1175 = vpop.xlane.xlu0 %1174
  %v1176 = vrcp.pop %v1154
  %v1177 = vrcp.pop %v1157
  %v1178 = vrcp.pop %v1160
  %v1179 = vrcp.pop %v1163
  %v1180 = vrcp.pop %v1166
  %v1181 = vrcp.pop %v1169
  %v1182 = vrcp.pop %v1172
  %v1183 = vrcp.pop %v1175
  %v1184 = vmul.f32 %v1137, %v1176
  %v1185 = vmul.f32 %v1139, %v1177
  %v1186 = vmul.f32 %v1141, %v1178
  %v1187 = vmul.f32 %v1143, %v1179
  %v1188 = vmul.f32 %v1145, %v1180
  %v1189 = vmul.f32 %v1147, %v1181
  %v1190 = vmul.f32 %v1149, %v1182
  %v1191 = vmul.f32 %v1151, %v1183
  %v1192 = vpack.c.bf16 %v1185, %v1184
  %v1193 = vpack.c.bf16 %v1187, %v1186
  %v1194 = vpack.c.bf16 %v1189, %v1188
  %v1195 = vpack.c.bf16 %v1191, %v1190
  %1200 = vrot.lane.b32.xlu0 %v715, 96
  %v1201 = vpop.permute.xlu0 %1200
  %1202 = vrot.lane.b32.xlu0 %v716, 96
  %v1203 = vpop.permute.xlu0 %1202
  %1204 = vrot.lane.b32.xlu0 %v717, 96
  %v1205 = vpop.permute.xlu0 %1204
  %1206 = vrot.lane.b32.xlu0 %v718, 96
  %v1207 = vpop.permute.xlu0 %1206
  %v1213 = vsel %vm813, %v1192, 0
  %v1216 = vsel %vm813, %v1193, 0
  %v1219 = vsel %vm813, %v1194, 0
  %v1222 = vsel %vm813, %v1195, 0
  %1224 = vmatprep.subr.bf16.mxu0 0
  %1225 = vmatpush1.bf16.msra.mxu0 %v1201
  %1226 = vmatprep.subr.bf16.mxu0 0
  %1227 = vmatpush1.bf16.msra.mxu0 %v1203
  %1228 = vmatprep.subr.bf16.mxu0 0
  %1229 = vmatpush1.bf16.msra.mxu0 %v1205
  %1230 = vmatprep.subr.bf16.mxu0 0
  %1231 = vmatpush1.bf16.msra.mxu0 %v1207
  %1232 = vmatprep.subr.bf16.mxu0 0
  %1233 = vmatpush1.bf16.msra.mxu0 0
  %1234 = vmatprep.subr.bf16.mxu0 0
  %1235 = vmatpush1.bf16.msra.mxu0 0
  %1236 = vmatprep.subr.bf16.mxu0 0
  %1237 = vmatpush1.bf16.msra.mxu0 0
  %1238 = vmatprep.subr.bf16.mxu0 0
  %1239 = vmatpush1.bf16.msra.mxu0 0
  %1240 = vmatprep.subr.bf16.mxu0 0
  %1241 = vmatpush1.bf16.msra.mxu0 0
  %1242 = vmatprep.subr.bf16.mxu0 0
  %1243 = vmatpush1.bf16.msra.mxu0 0
  %1244 = vmatprep.subr.bf16.mxu0 0
  %1245 = vmatpush1.bf16.msra.mxu0 0
  %1246 = vmatprep.subr.bf16.mxu0 0
  %1247 = vmatpush1.bf16.msra.mxu0 0
  %1248 = vmatprep.subr.bf16.mxu0 0
  %1249 = vmatpush1.bf16.msra.mxu0 0
  %1250 = vmatprep.subr.bf16.mxu0 0
  %1251 = vmatpush1.bf16.msra.mxu0 0
  %1252 = vmatprep.subr.bf16.mxu0 0
  %1253 = vmatpush1.bf16.msra.mxu0 0
  %1254 = vmatprep.subr.bf16.mxu0 0
  %1255 = vmatpush1.bf16.msra.mxu0 0
  %1256 = vmatprep.mubr.bf16.mxu0 0
  %1257 = vmatmul.mubr.bf16.gmra.mrb[0].mxu0 %v1213
  %v1258 = vpop.f32.mrb[0].mxu0
  %v1259 = vadd.f32 0.0, %v1258
  %v1260 = vpop.f32.mrb[0].mxu0
  %v1261 = vpop.f32.mrb[0].mxu0
  %v1262 = vadd.f32 0.0, %v1261
  %v1263 = vpop.f32.mrb[0].mxu0
  %1264 = vmatprep.mubr.bf16.mxu0 0
  %1265 = vmatmul.mubr.bf16.gmra.mrb[0].mxu0 %v1216
  %v1266 = vpop.f32.mrb[0].mxu0
  %v1267 = vadd.f32 0.0, %v1266
  %v1268 = vpop.f32.mrb[0].mxu0
  %v1269 = vpop.f32.mrb[0].mxu0
  %v1270 = vadd.f32 0.0, %v1269
  %v1271 = vpop.f32.mrb[0].mxu0
  %1272 = vmatprep.mubr.bf16.mxu0 0
  %1273 = vmatmul.mubr.bf16.gmra.mrb[0].mxu0 %v1219
  %v1274 = vpop.f32.mrb[0].mxu0
  %v1275 = vadd.f32 0.0, %v1274
  %v1276 = vpop.f32.mrb[0].mxu0
  %v1277 = vpop.f32.mrb[0].mxu0
  %v1278 = vadd.f32 0.0, %v1277
  %v1279 = vpop.f32.mrb[0].mxu0
  %1280 = vmatprep.mubr.bf16.mxu0 0
  %1281 = vmatmul.mubr.bf16.gmra.mrb[0].mxu0 %v1222
  %v1282 = vpop.f32.mrb[0].mxu0
  %v1283 = vadd.f32 0.0, %v1282
  %v1284 = vpop.f32.mrb[0].mxu0
  %v1285 = vpop.f32.mrb[0].mxu0
  %v1286 = vadd.f32 0.0, %v1285
  %v1287 = vpop.f32.mrb[0].mxu0
  %1288 = vdwg.mxu0
  %1297 = vrot.lane.b32.xlu0 %v1259, 32
  %v1298 = vpop.permute.xlu0 %1297
  %1299 = vrot.lane.b32.xlu0 %v1262, 32
  %v1300 = vpop.permute.xlu0 %1299
  %1301 = vrot.lane.b32.xlu0 %v1267, 32
  %v1302 = vpop.permute.xlu0 %1301
  %1303 = vrot.lane.b32.xlu0 %v1270, 32
  %v1304 = vpop.permute.xlu0 %1303
  %1305 = vrot.lane.b32.xlu0 %v1275, 32
  %v1306 = vpop.permute.xlu0 %1305
  %1307 = vrot.lane.b32.xlu0 %v1278, 32
  %v1308 = vpop.permute.xlu0 %1307
  %1309 = vrot.lane.b32.xlu0 %v1283, 32
  %v1310 = vpop.permute.xlu0 %1309
  %1311 = vrot.lane.b32.xlu0 %v1286, 32
  %v1312 = vpop.permute.xlu0 %1311
  %vm1321 = vcmask 523520
  %1322 = vst.msk [vmem:[#allocation2] sm:$0xff] %vm1321, %v1298
  %1323 = vst.msk [vmem:[#allocation2 + $0x8] sm:$0xff] %vm1321, %v1300
  %1324 = vst.msk [vmem:[#allocation2 + $0x10] sm:$0xff] %vm1321, %v1302
  %1325 = vst.msk [vmem:[#allocation2 + $0x18] sm:$0xff] %vm1321, %v1304
  %1326 = vst.msk [vmem:[#allocation2 + $0x20] sm:$0xff] %vm1321, %v1306
  %1327 = vst.msk [vmem:[#allocation2 + $0x28] sm:$0xff] %vm1321, %v1308
  %1328 = vst.msk [vmem:[#allocation2 + $0x30] sm:$0xff] %vm1321, %v1310
  %1329 = vst.msk [vmem:[#allocation2 + $0x38] sm:$0xff] %vm1321, %v1312
  %1330 = vrot.lane.b32.xlu0 %v699, 64
  %v1331 = vpop.permute.xlu0 %1330
  %1332 = vrot.lane.b32.xlu0 %v700, 64
  %v1333 = vpop.permute.xlu0 %1332
  %1334 = vrot.lane.b32.xlu0 %v701, 64
  %v1335 = vpop.permute.xlu0 %1334
  %1336 = vrot.lane.b32.xlu0 %v702, 64
  %v1337 = vpop.permute.xlu0 %1336
  %1338 = vrot.lane.b32.xlu0 %v707, 64
  %v1339 = vpop.permute.xlu0 %1338
  %1340 = vrot.lane.b32.xlu0 %v708, 64
  %v1341 = vpop.permute.xlu0 %1340
  %1342 = vrot.lane.b32.xlu0 %v709, 64
  %v1343 = vpop.permute.xlu0 %1342
  %1344 = vrot.lane.b32.xlu0 %v710, 64
  %v1345 = vpop.permute.xlu0 %1344
  %v1347 = vsel %vm723, %v1331, 0
  %v1350 = vsel %vm723, %v1333, 0
  %v1353 = vsel %vm723, %v1335, 0
  %v1356 = vsel %vm723, %v1337, 0
  %v1359 = vsel %vm723, %v1339, 0
  %v1362 = vsel %vm723, %v1341, 0
  %v1365 = vsel %vm723, %v1343, 0
  %v1368 = vsel %vm723, %v1345, 0
  %1370 = vmatprep.subr.bf16.mxu0 0
  %1371 = vmatpush1.bf16.xpose.msra.mxu0 %v1359
  %1372 = vmatprep.subr.bf16.mxu0 0
  %1373 = vmatpush1.bf16.xpose.msra.mxu0 %v1362
  %1374 = vmatprep.subr.bf16.mxu0 0
  %1375 = vmatpush1.bf16.xpose.msra.mxu0 %v1365
  %1376 = vmatprep.subr.bf16.mxu0 0
  %1377 = vmatpush1.bf16.xpose.msra.mxu0 %v1368
  %1378 = vmatprep.subr.bf16.mxu0 0
  %1379 = vmatpush1.bf16.xpose.msra.mxu0 0
  %1380 = vmatprep.subr.bf16.mxu0 0
  %1381 = vmatpush1.bf16.xpose.msra.mxu0 0
  %1382 = vmatprep.subr.bf16.mxu0 0
  %1383 = vmatpush1.bf16.xpose.msra.mxu0 0
  %1384 = vmatprep.subr.bf16.mxu0 0
  %1385 = vmatpush1.bf16.xpose.msra.mxu0 0
  %1386 = vmatprep.subr.bf16.mxu0 0
  %1387 = vmatpush1.bf16.xpose.msra.mxu0 0
  %1388 = vmatprep.subr.bf16.mxu0 0
  %1389 = vmatpush1.bf16.xpose.msra.mxu0 0
  %1390 = vmatprep.subr.bf16.mxu0 0
  %1391 = vmatpush1.bf16.xpose.msra.mxu0 0
  %1392 = vmatprep.subr.bf16.mxu0 0
  %1393 = vmatpush1.bf16.xpose.msra.mxu0 0
  %1394 = vmatprep.subr.bf16.mxu0 0
  %1395 = vmatpush1.bf16.xpose.msra.mxu0 0
  %1396 = vmatprep.subr.bf16.mxu0 0
  %1397 = vmatpush1.bf16.xpose.msra.mxu0 0
  %1398 = vmatprep.subr.bf16.mxu0 0
  %1399 = vmatpush1.bf16.xpose.msra.mxu0 0
  %1400 = vmatprep.subr.bf16.mxu0 0
  %1401 = vmatpush1.bf16.xpose.msra.mxu0 0
  %1402 = vmatprep.mubr.bf16.mxu0 0
  %1403 = vmatmul.mubr.bf16.gmra.mrb[0].mxu0 %v1347
  %v1404 = vpop.f32.mrb[0].mxu0
  %v1405 = vadd.f32 %v73, %v1404
  %v1406 = vpop.f32.mrb[0].mxu0
  %v1407 = vpop.f32.mrb[0].mxu0
  %v1408 = vadd.f32 %v74, %v1407
  %v1409 = vpop.f32.mrb[0].mxu0
  %1410 = vmatprep.mubr.bf16.mxu0 0
  %1411 = vmatmul.mubr.bf16.gmra.mrb[0].mxu0 %v1350
  %v1412 = vpop.f32.mrb[0].mxu0
  %v1413 = vadd.f32 %v75, %v1412
  %v1414 = vpop.f32.mrb[0].mxu0
  %v1415 = vpop.f32.mrb[0].mxu0
  %v1416 = vadd.f32 %v76, %v1415
  %v1417 = vpop.f32.mrb[0].mxu0
  %1418 = vmatprep.mubr.bf16.mxu0 0
  %1419 = vmatmul.mubr.bf16.gmra.mrb[0].mxu0 %v1353
  %v1420 = vpop.f32.mrb[0].mxu0
  %v1421 = vadd.f32 %v77, %v1420
  %v1422 = vpop.f32.mrb[0].mxu0
  %v1423 = vpop.f32.mrb[0].mxu0
  %v1424 = vadd.f32 %v78, %v1423
  %v1425 = vpop.f32.mrb[0].mxu0
  %1426 = vmatprep.mubr.bf16.mxu0 0
  %1427 = vmatmul.mubr.bf16.gmra.mrb[0].mxu0 %v1356
  %v1428 = vpop.f32.mrb[0].mxu0
  %v1429 = vadd.f32 %v79, %v1428
  %v1430 = vpop.f32.mrb[0].mxu0
  %v1431 = vpop.f32.mrb[0].mxu0
  %v1432 = vadd.f32 %v80, %v1431
  %v1433 = vpop.f32.mrb[0].mxu0
  %1434 = vdwg.mxu0
  %v1435 = vsel %vm813, %v1405, -inf
  %1436 = vmax.xlane.f32.xlu0 %v1435
  %v1437 = vpop.xlane.xlu0 %1436
  %v1438 = vsel %vm813, %v1408, -inf
  %1439 = vmax.xlane.f32.xlu0 %v1438
  %v1440 = vpop.xlane.xlu0 %1439
  %v1441 = vsel %vm813, %v1413, -inf
  %1442 = vmax.xlane.f32.xlu0 %v1441
  %v1443 = vpop.xlane.xlu0 %1442
  %v1444 = vsel %vm813, %v1416, -inf
  %1445 = vmax.xlane.f32.xlu0 %v1444
  %v1446 = vpop.xlane.xlu0 %1445
  %v1447 = vsel %vm813, %v1421, -inf
  %1448 = vmax.xlane.f32.xlu0 %v1447
  %v1449 = vpop.xlane.xlu0 %1448
  %v1450 = vsel %vm813, %v1424, -inf
  %1451 = vmax.xlane.f32.xlu0 %v1450
  %v1452 = vpop.xlane.xlu0 %1451
  %v1453 = vsel %vm813, %v1429, -inf
  %1454 = vmax.xlane.f32.xlu0 %v1453
  %v1455 = vpop.xlane.xlu0 %1454
  %v1456 = vsel %vm813, %v1432, -inf
  %1457 = vmax.xlane.f32.xlu0 %v1456
  %v1458 = vpop.xlane.xlu0 %1457
  %v1459 = vsub.f32 %v1405, %v1437
  %v1460 = vsub.f32 %v1408, %v1440
  %v1461 = vsub.f32 %v1413, %v1443
  %v1462 = vsub.f32 %v1416, %v1446
  %v1463 = vsub.f32 %v1421, %v1449
  %v1464 = vsub.f32 %v1424, %v1452
  %v1465 = vsub.f32 %v1429, %v1455
  %v1466 = vsub.f32 %v1432, %v1458
  %v1467 = vmul.f32 %v1459, 1.442695
  %v1468 = vpow.pop %v1467
  %v1469 = vmul.f32 %v1460, 1.442695
  %v1470 = vpow.pop %v1469
  %v1471 = vmul.f32 %v1461, 1.442695
  %v1472 = vpow.pop %v1471
  %v1473 = vmul.f32 %v1462, 1.442695
  %v1474 = vpow.pop %v1473
  %v1475 = vmul.f32 %v1463, 1.442695
  %v1476 = vpow.pop %v1475
  %v1477 = vmul.f32 %v1464, 1.442695
  %v1478 = vpow.pop %v1477
  %v1479 = vmul.f32 %v1465, 1.442695
  %v1480 = vpow.pop %v1479
  %v1481 = vmul.f32 %v1466, 1.442695
  %v1482 = vpow.pop %v1481
  %v1483 = vsel %vm813, %v1468, 0.0
  %1484 = vadd.xlane.f32.xlu0 %v1483
  %v1485 = vpop.xlane.xlu0 %1484
  %v1486 = vsel %vm813, %v1470, 0.0
  %1487 = vadd.xlane.f32.xlu0 %v1486
  %v1488 = vpop.xlane.xlu0 %1487
  %v1489 = vsel %vm813, %v1472, 0.0
  %1490 = vadd.xlane.f32.xlu0 %v1489
  %v1491 = vpop.xlane.xlu0 %1490
  %v1492 = vsel %vm813, %v1474, 0.0
  %1493 = vadd.xlane.f32.xlu0 %v1492
  %v1494 = vpop.xlane.xlu0 %1493
  %v1495 = vsel %vm813, %v1476, 0.0
  %1496 = vadd.xlane.f32.xlu0 %v1495
  %v1497 = vpop.xlane.xlu0 %1496
  %v1498 = vsel %vm813, %v1478, 0.0
  %1499 = vadd.xlane.f32.xlu0 %v1498
  %v1500 = vpop.xlane.xlu0 %1499
  %v1501 = vsel %vm813, %v1480, 0.0
  %1502 = vadd.xlane.f32.xlu0 %v1501
  %v1503 = vpop.xlane.xlu0 %1502
  %v1504 = vsel %vm813, %v1482, 0.0
  %1505 = vadd.xlane.f32.xlu0 %v1504
  %v1506 = vpop.xlane.xlu0 %1505
  %v1507 = vrcp.pop %v1485
  %v1508 = vrcp.pop %v1488
  %v1509 = vrcp.pop %v1491
  %v1510 = vrcp.pop %v1494
  %v1511 = vrcp.pop %v1497
  %v1512 = vrcp.pop %v1500
  %v1513 = vrcp.pop %v1503
  %v1514 = vrcp.pop %v1506
  %v1515 = vmul.f32 %v1468, %v1507
  %v1516 = vmul.f32 %v1470, %v1508
  %v1517 = vmul.f32 %v1472, %v1509
  %v1518 = vmul.f32 %v1474, %v1510
  %v1519 = vmul.f32 %v1476, %v1511
  %v1520 = vmul.f32 %v1478, %v1512
  %v1521 = vmul.f32 %v1480, %v1513
  %v1522 = vmul.f32 %v1482, %v1514
  %v1523 = vpack.c.bf16 %v1516, %v1515
  %v1524 = vpack.c.bf16 %v1518, %v1517
  %v1525 = vpack.c.bf16 %v1520, %v1519
  %v1526 = vpack.c.bf16 %v1522, %v1521
  %1527 = vrot.lane.b32.xlu0 %v715, 64
  %v1528 = vpop.permute.xlu0 %1527
  %1529 = vrot.lane.b32.xlu0 %v716, 64
  %v1530 = vpop.permute.xlu0 %1529
  %1531 = vrot.lane.b32.xlu0 %v717, 64
  %v1532 = vpop.permute.xlu0 %1531
  %1533 = vrot.lane.b32.xlu0 %v718, 64
  %v1534 = vpop.permute.xlu0 %1533
  %v1540 = vsel %vm813, %v1523, 0
  %v1543 = vsel %vm813, %v1524, 0
  %v1546 = vsel %vm813, %v1525, 0
  %v1549 = vsel %vm813, %v1526, 0
  %1551 = vmatprep.subr.bf16.mxu0 0
  %1552 = vmatpush1.bf16.msra.mxu0 %v1528
  %1553 = vmatprep.subr.bf16.mxu0 0
  %1554 = vmatpush1.bf16.msra.mxu0 %v1530
  %1555 = vmatprep.subr.bf16.mxu0 0
  %1556 = vmatpush1.bf16.msra.mxu0 %v1532
  %1557 = vmatprep.subr.bf16.mxu0 0
  %1558 = vmatpush1.bf16.msra.mxu0 %v1534
  %1559 = vmatprep.subr.bf16.mxu0 0
  %1560 = vmatpush1.bf16.msra.mxu0 0
  %1561 = vmatprep.subr.bf16.mxu0 0
  %1562 = vmatpush1.bf16.msra.mxu0 0
  %1563 = vmatprep.subr.bf16.mxu0 0
  %1564 = vmatpush1.bf16.msra.mxu0 0
  %1565 = vmatprep.subr.bf16.mxu0 0
  %1566 = vmatpush1.bf16.msra.mxu0 0
  %1567 = vmatprep.subr.bf16.mxu0 0
  %1568 = vmatpush1.bf16.msra.mxu0 0
  %1569 = vmatprep.subr.bf16.mxu0 0
  %1570 = vmatpush1.bf16.msra.mxu0 0
  %1571 = vmatprep.subr.bf16.mxu0 0
  %1572 = vmatpush1.bf16.msra.mxu0 0
  %1573 = vmatprep.subr.bf16.mxu0 0
  %1574 = vmatpush1.bf16.msra.mxu0 0
  %1575 = vmatprep.subr.bf16.mxu0 0
  %1576 = vmatpush1.bf16.msra.mxu0 0
  %1577 = vmatprep.subr.bf16.mxu0 0
  %1578 = vmatpush1.bf16.msra.mxu0 0
  %1579 = vmatprep.subr.bf16.mxu0 0
  %1580 = vmatpush1.bf16.msra.mxu0 0
  %1581 = vmatprep.subr.bf16.mxu0 0
  %1582 = vmatpush1.bf16.msra.mxu0 0
  %1583 = vmatprep.mubr.bf16.mxu0 0
  %1584 = vmatmul.mubr.bf16.gmra.mrb[0].mxu0 %v1540
  %v1585 = vpop.f32.mrb[0].mxu0
  %v1586 = vadd.f32 0.0, %v1585
  %v1587 = vpop.f32.mrb[0].mxu0
  %v1588 = vpop.f32.mrb[0].mxu0
  %v1589 = vadd.f32 0.0, %v1588
  %v1590 = vpop.f32.mrb[0].mxu0
  %1591 = vmatprep.mubr.bf16.mxu0 0
  %1592 = vmatmul.mubr.bf16.gmra.mrb[0].mxu0 %v1543
  %v1593 = vpop.f32.mrb[0].mxu0
  %v1594 = vadd.f32 0.0, %v1593
  %v1595 = vpop.f32.mrb[0].mxu0
  %v1596 = vpop.f32.mrb[0].mxu0
  %v1597 = vadd.f32 0.0, %v1596
  %v1598 = vpop.f32.mrb[0].mxu0
  %1599 = vmatprep.mubr.bf16.mxu0 0
  %1600 = vmatmul.mubr.bf16.gmra.mrb[0].mxu0 %v1546
  %v1601 = vpop.f32.mrb[0].mxu0
  %v1602 = vadd.f32 0.0, %v1601
  %v1603 = vpop.f32.mrb[0].mxu0
  %v1604 = vpop.f32.mrb[0].mxu0
  %v1605 = vadd.f32 0.0, %v1604
  %v1606 = vpop.f32.mrb[0].mxu0
  %1607 = vmatprep.mubr.bf16.mxu0 0
  %1608 = vmatmul.mubr.bf16.gmra.mrb[0].mxu0 %v1549
  %v1609 = vpop.f32.mrb[0].mxu0
  %v1610 = vadd.f32 0.0, %v1609
  %v1611 = vpop.f32.mrb[0].mxu0
  %v1612 = vpop.f32.mrb[0].mxu0
  %v1613 = vadd.f32 0.0, %v1612
  %v1614 = vpop.f32.mrb[0].mxu0
  %1615 = vdwg.mxu0
  %1624 = vrot.lane.b32.xlu0 %v1586, 64
  %v1625 = vpop.permute.xlu0 %1624
  %1626 = vrot.lane.b32.xlu0 %v1589, 64
  %v1627 = vpop.permute.xlu0 %1626
  %1628 = vrot.lane.b32.xlu0 %v1594, 64
  %v1629 = vpop.permute.xlu0 %1628
  %1630 = vrot.lane.b32.xlu0 %v1597, 64
  %v1631 = vpop.permute.xlu0 %1630
  %1632 = vrot.lane.b32.xlu0 %v1602, 64
  %v1633 = vpop.permute.xlu0 %1632
  %1634 = vrot.lane.b32.xlu0 %v1605, 64
  %v1635 = vpop.permute.xlu0 %1634
  %1636 = vrot.lane.b32.xlu0 %v1610, 64
  %v1637 = vpop.permute.xlu0 %1636
  %1638 = vrot.lane.b32.xlu0 %v1613, 64
  %v1639 = vpop.permute.xlu0 %1638
  %vm1648 = vcmask 785920
  %1649 = vst.msk [vmem:[#allocation2] sm:$0xff] %vm1648, %v1625
  %1650 = vst.msk [vmem:[#allocation2 + $0x8] sm:$0xff] %vm1648, %v1627
  %1651 = vst.msk [vmem:[#allocation2 + $0x10] sm:$0xff] %vm1648, %v1629
  %1652 = vst.msk [vmem:[#allocation2 + $0x18] sm:$0xff] %vm1648, %v1631
  %1653 = vst.msk [vmem:[#allocation2 + $0x20] sm:$0xff] %vm1648, %v1633
  %1654 = vst.msk [vmem:[#allocation2 + $0x28] sm:$0xff] %vm1648, %v1635
  %1655 = vst.msk [vmem:[#allocation2 + $0x30] sm:$0xff] %vm1648, %v1637
  %1656 = vst.msk [vmem:[#allocation2 + $0x38] sm:$0xff] %vm1648, %v1639
  %1657 = vrot.lane.b32.xlu0 %v699, 32
  %v1658 = vpop.permute.xlu0 %1657
  %1659 = vrot.lane.b32.xlu0 %v700, 32
  %v1660 = vpop.permute.xlu0 %1659
  %1661 = vrot.lane.b32.xlu0 %v701, 32
  %v1662 = vpop.permute.xlu0 %1661
  %1663 = vrot.lane.b32.xlu0 %v702, 32
  %v1664 = vpop.permute.xlu0 %1663
  %1665 = vrot.lane.b32.xlu0 %v707, 32
  %v1666 = vpop.permute.xlu0 %1665
  %1667 = vrot.lane.b32.xlu0 %v708, 32
  %v1668 = vpop.permute.xlu0 %1667
  %1669 = vrot.lane.b32.xlu0 %v709, 32
  %v1670 = vpop.permute.xlu0 %1669
  %1671 = vrot.lane.b32.xlu0 %v710, 32
  %v1672 = vpop.permute.xlu0 %1671
  %v1674 = vsel %vm723, %v1658, 0
  %v1677 = vsel %vm723, %v1660, 0
  %v1680 = vsel %vm723, %v1662, 0
  %v1683 = vsel %vm723, %v1664, 0
  %v1686 = vsel %vm723, %v1666, 0
  %v1689 = vsel %vm723, %v1668, 0
  %v1692 = vsel %vm723, %v1670, 0
  %v1695 = vsel %vm723, %v1672, 0
  %1697 = vmatprep.subr.bf16.mxu0 0
  %1698 = vmatpush1.bf16.xpose.msra.mxu0 %v1686
  %1699 = vmatprep.subr.bf16.mxu0 0
  %1700 = vmatpush1.bf16.xpose.msra.mxu0 %v1689
  %1701 = vmatprep.subr.bf16.mxu0 0
  %1702 = vmatpush1.bf16.xpose.msra.mxu0 %v1692
  %1703 = vmatprep.subr.bf16.mxu0 0
  %1704 = vmatpush1.bf16.xpose.msra.mxu0 %v1695
  %1705 = vmatprep.subr.bf16.mxu0 0
  %1706 = vmatpush1.bf16.xpose.msra.mxu0 0
  %1707 = vmatprep.subr.bf16.mxu0 0
  %1708 = vmatpush1.bf16.xpose.msra.mxu0 0
  %1709 = vmatprep.subr.bf16.mxu0 0
  %1710 = vmatpush1.bf16.xpose.msra.mxu0 0
  %1711 = vmatprep.subr.bf16.mxu0 0
  %1712 = vmatpush1.bf16.xpose.msra.mxu0 0
  %1713 = vmatprep.subr.bf16.mxu0 0
  %1714 = vmatpush1.bf16.xpose.msra.mxu0 0
  %1715 = vmatprep.subr.bf16.mxu0 0
  %1716 = vmatpush1.bf16.xpose.msra.mxu0 0
  %1717 = vmatprep.subr.bf16.mxu0 0
  %1718 = vmatpush1.bf16.xpose.msra.mxu0 0
  %1719 = vmatprep.subr.bf16.mxu0 0
  %1720 = vmatpush1.bf16.xpose.msra.mxu0 0
  %1721 = vmatprep.subr.bf16.mxu0 0
  %1722 = vmatpush1.bf16.xpose.msra.mxu0 0
  %1723 = vmatprep.subr.bf16.mxu0 0
  %1724 = vmatpush1.bf16.xpose.msra.mxu0 0
  %1725 = vmatprep.subr.bf16.mxu0 0
  %1726 = vmatpush1.bf16.xpose.msra.mxu0 0
  %1727 = vmatprep.subr.bf16.mxu0 0
  %1728 = vmatpush1.bf16.xpose.msra.mxu0 0
  %1729 = vmatprep.mubr.bf16.mxu0 0
  %1730 = vmatmul.mubr.bf16.gmra.mrb[0].mxu0 %v1674
  %v1731 = vpop.f32.mrb[0].mxu0
  %v1732 = vadd.f32 %v73, %v1731
  %v1733 = vpop.f32.mrb[0].mxu0
  %v1734 = vpop.f32.mrb[0].mxu0
  %v1735 = vadd.f32 %v74, %v1734
  %v1736 = vpop.f32.mrb[0].mxu0
  %1737 = vmatprep.mubr.bf16.mxu0 0
  %1738 = vmatmul.mubr.bf16.gmra.mrb[0].mxu0 %v1677
  %v1739 = vpop.f32.mrb[0].mxu0
  %v1740 = vadd.f32 %v75, %v1739
  %v1741 = vpop.f32.mrb[0].mxu0
  %v1742 = vpop.f32.mrb[0].mxu0
  %v1743 = vadd.f32 %v76, %v1742
  %v1744 = vpop.f32.mrb[0].mxu0
  %1745 = vmatprep.mubr.bf16.mxu0 0
  %1746 = vmatmul.mubr.bf16.gmra.mrb[0].mxu0 %v1680
  %v1747 = vpop.f32.mrb[0].mxu0
  %v1748 = vadd.f32 %v77, %v1747
  %v1749 = vpop.f32.mrb[0].mxu0
  %v1750 = vpop.f32.mrb[0].mxu0
  %v1751 = vadd.f32 %v78, %v1750
  %v1752 = vpop.f32.mrb[0].mxu0
  %1753 = vmatprep.mubr.bf16.mxu0 0
  %1754 = vmatmul.mubr.bf16.gmra.mrb[0].mxu0 %v1683
  %v1755 = vpop.f32.mrb[0].mxu0
  %v1756 = vadd.f32 %v79, %v1755
  %v1757 = vpop.f32.mrb[0].mxu0
  %v1758 = vpop.f32.mrb[0].mxu0
  %v1759 = vadd.f32 %v80, %v1758
  %v1760 = vpop.f32.mrb[0].mxu0
  %1761 = vdwg.mxu0
  %v1762 = vsel %vm813, %v1732, -inf
  %1763 = vmax.xlane.f32.xlu0 %v1762
  %v1764 = vpop.xlane.xlu0 %1763
  %v1765 = vsel %vm813, %v1735, -inf
  %1766 = vmax.xlane.f32.xlu0 %v1765
  %v1767 = vpop.xlane.xlu0 %1766
  %v1768 = vsel %vm813, %v1740, -inf
  %1769 = vmax.xlane.f32.xlu0 %v1768
  %v1770 = vpop.xlane.xlu0 %1769
  %v1771 = vsel %vm813, %v1743, -inf
  %1772 = vmax.xlane.f32.xlu0 %v1771
  %v1773 = vpop.xlane.xlu0 %1772
  %v1774 = vsel %vm813, %v1748, -inf
  %1775 = vmax.xlane.f32.xlu0 %v1774
  %v1776 = vpop.xlane.xlu0 %1775
  %v1777 = vsel %vm813, %v1751, -inf
  %1778 = vmax.xlane.f32.xlu0 %v1777
  %v1779 = vpop.xlane.xlu0 %1778
  %v1780 = vsel %vm813, %v1756, -inf
  %1781 = vmax.xlane.f32.xlu0 %v1780
  %v1782 = vpop.xlane.xlu0 %1781
  %v1783 = vsel %vm813, %v1759, -inf
  %1784 = vmax.xlane.f32.xlu0 %v1783
  %v1785 = vpop.xlane.xlu0 %1784
  %v1786 = vsub.f32 %v1732, %v1764
  %v1787 = vsub.f32 %v1735, %v1767
  %v1788 = vsub.f32 %v1740, %v1770
  %v1789 = vsub.f32 %v1743, %v1773
  %v1790 = vsub.f32 %v1748, %v1776
  %v1791 = vsub.f32 %v1751, %v1779
  %v1792 = vsub.f32 %v1756, %v1782
  %v1793 = vsub.f32 %v1759, %v1785
  %v1794 = vmul.f32 %v1786, 1.442695
  %v1795 = vpow.pop %v1794
  %v1796 = vmul.f32 %v1787, 1.442695
  %v1797 = vpow.pop %v1796
  %v1798 = vmul.f32 %v1788, 1.442695
  %v1799 = vpow.pop %v1798
  %v1800 = vmul.f32 %v1789, 1.442695
  %v1801 = vpow.pop %v1800
  %v1802 = vmul.f32 %v1790, 1.442695
  %v1803 = vpow.pop %v1802
  %v1804 = vmul.f32 %v1791, 1.442695
  %v1805 = vpow.pop %v1804
  %v1806 = vmul.f32 %v1792, 1.442695
  %v1807 = vpow.pop %v1806
  %v1808 = vmul.f32 %v1793, 1.442695
  %v1809 = vpow.pop %v1808
  %v1810 = vsel %vm813, %v1795, 0.0
  %1811 = vadd.xlane.f32.xlu0 %v1810
  %v1812 = vpop.xlane.xlu0 %1811
  %v1813 = vsel %vm813, %v1797, 0.0
  %1814 = vadd.xlane.f32.xlu0 %v1813
  %v1815 = vpop.xlane.xlu0 %1814
  %v1816 = vsel %vm813, %v1799, 0.0
  %1817 = vadd.xlane.f32.xlu0 %v1816
  %v1818 = vpop.xlane.xlu0 %1817
  %v1819 = vsel %vm813, %v1801, 0.0
  %1820 = vadd.xlane.f32.xlu0 %v1819
  %v1821 = vpop.xlane.xlu0 %1820
  %v1822 = vsel %vm813, %v1803, 0.0
  %1823 = vadd.xlane.f32.xlu0 %v1822
  %v1824 = vpop.xlane.xlu0 %1823
  %v1825 = vsel %vm813, %v1805, 0.0
  %1826 = vadd.xlane.f32.xlu0 %v1825
  %v1827 = vpop.xlane.xlu0 %1826
  %v1828 = vsel %vm813, %v1807, 0.0
  %1829 = vadd.xlane.f32.xlu0 %v1828
  %v1830 = vpop.xlane.xlu0 %1829
  %v1831 = vsel %vm813, %v1809, 0.0
  %1832 = vadd.xlane.f32.xlu0 %v1831
  %v1833 = vpop.xlane.xlu0 %1832
  %v1834 = vrcp.pop %v1812
  %v1835 = vrcp.pop %v1815
  %v1836 = vrcp.pop %v1818
  %v1837 = vrcp.pop %v1821
  %v1838 = vrcp.pop %v1824
  %v1839 = vrcp.pop %v1827
  %v1840 = vrcp.pop %v1830
  %v1841 = vrcp.pop %v1833
  %v1842 = vmul.f32 %v1795, %v1834
  %v1843 = vmul.f32 %v1797, %v1835
  %v1844 = vmul.f32 %v1799, %v1836
  %v1845 = vmul.f32 %v1801, %v1837
  %v1846 = vmul.f32 %v1803, %v1838
  %v1847 = vmul.f32 %v1805, %v1839
  %v1848 = vmul.f32 %v1807, %v1840
  %v1849 = vmul.f32 %v1809, %v1841
  %v1850 = vpack.c.bf16 %v1843, %v1842
  %v1851 = vpack.c.bf16 %v1845, %v1844
  %v1852 = vpack.c.bf16 %v1847, %v1846
  %v1853 = vpack.c.bf16 %v1849, %v1848
  %1854 = vrot.lane.b32.xlu0 %v715, 32
  %v1855 = vpop.permute.xlu0 %1854
  %1856 = vrot.lane.b32.xlu0 %v716, 32
  %v1857 = vpop.permute.xlu0 %1856
  %1858 = vrot.lane.b32.xlu0 %v717, 32
  %v1859 = vpop.permute.xlu0 %1858
  %1860 = vrot.lane.b32.xlu0 %v718, 32
  %v1861 = vpop.permute.xlu0 %1860
  %v1867 = vsel %vm813, %v1850, 0
  %v1870 = vsel %vm813, %v1851, 0
  %v1873 = vsel %vm813, %v1852, 0
  %v1876 = vsel %vm813, %v1853, 0
  %1878 = vmatprep.subr.bf16.mxu0 0
  %1879 = vmatpush1.bf16.msra.mxu0 %v1855
  %1880 = vmatprep.subr.bf16.mxu0 0
  %1881 = vmatpush1.bf16.msra.mxu0 %v1857
  %1882 = vmatprep.subr.bf16.mxu0 0
  %1883 = vmatpush1.bf16.msra.mxu0 %v1859
  %1884 = vmatprep.subr.bf16.mxu0 0
  %1885 = vmatpush1.bf16.msra.mxu0 %v1861
  %1886 = vmatprep.subr.bf16.mxu0 0
  %1887 = vmatpush1.bf16.msra.mxu0 0
  %1888 = vmatprep.subr.bf16.mxu0 0
  %1889 = vmatpush1.bf16.msra.mxu0 0
  %1890 = vmatprep.subr.bf16.mxu0 0
  %1891 = vmatpush1.bf16.msra.mxu0 0
  %1892 = vmatprep.subr.bf16.mxu0 0
  %1893 = vmatpush1.bf16.msra.mxu0 0
  %1894 = vmatprep.subr.bf16.mxu0 0
  %1895 = vmatpush1.bf16.msra.mxu0 0
  %1896 = vmatprep.subr.bf16.mxu0 0
  %1897 = vmatpush1.bf16.msra.mxu0 0
  %1898 = vmatprep.subr.bf16.mxu0 0
  %1899 = vmatpush1.bf16.msra.mxu0 0
  %1900 = vmatprep.subr.bf16.mxu0 0
  %1901 = vmatpush1.bf16.msra.mxu0 0
  %1902 = vmatprep.subr.bf16.mxu0 0
  %1903 = vmatpush1.bf16.msra.mxu0 0
  %1904 = vmatprep.subr.bf16.mxu0 0
  %1905 = vmatpush1.bf16.msra.mxu0 0
  %1906 = vmatprep.subr.bf16.mxu0 0
  %1907 = vmatpush1.bf16.msra.mxu0 0
  %1908 = vmatprep.subr.bf16.mxu0 0
  %1909 = vmatpush1.bf16.msra.mxu0 0
  %1910 = vmatprep.mubr.bf16.mxu0 0
  %1911 = vmatmul.mubr.bf16.gmra.mrb[0].mxu0 %v1867
  %v1912 = vpop.f32.mrb[0].mxu0
  %v1913 = vadd.f32 0.0, %v1912
  %v1914 = vpop.f32.mrb[0].mxu0
  %v1915 = vpop.f32.mrb[0].mxu0
  %v1916 = vadd.f32 0.0, %v1915
  %v1917 = vpop.f32.mrb[0].mxu0
  %1918 = vmatprep.mubr.bf16.mxu0 0
  %1919 = vmatmul.mubr.bf16.gmra.mrb[0].mxu0 %v1870
  %v1920 = vpop.f32.mrb[0].mxu0
  %v1921 = vadd.f32 0.0, %v1920
  %v1922 = vpop.f32.mrb[0].mxu0
  %v1923 = vpop.f32.mrb[0].mxu0
  %v1924 = vadd.f32 0.0, %v1923
  %v1925 = vpop.f32.mrb[0].mxu0
  %1926 = vmatprep.mubr.bf16.mxu0 0
  %1927 = vmatmul.mubr.bf16.gmra.mrb[0].mxu0 %v1873
  %v1928 = vpop.f32.mrb[0].mxu0
  %v1929 = vadd.f32 0.0, %v1928
  %v1930 = vpop.f32.mrb[0].mxu0
  %v1931 = vpop.f32.mrb[0].mxu0
  %v1932 = vadd.f32 0.0, %v1931
  %v1933 = vpop.f32.mrb[0].mxu0
  %1934 = vmatprep.mubr.bf16.mxu0 0
  %1935 = vmatmul.mubr.bf16.gmra.mrb[0].mxu0 %v1876
  %v1936 = vpop.f32.mrb[0].mxu0
  %v1937 = vadd.f32 0.0, %v1936
  %v1938 = vpop.f32.mrb[0].mxu0
  %v1939 = vpop.f32.mrb[0].mxu0
  %v1940 = vadd.f32 0.0, %v1939
  %v1941 = vpop.f32.mrb[0].mxu0
  %1942 = vdwg.mxu0
  %1951 = vrot.lane.b32.xlu0 %v1913, 96
  %v1952 = vpop.permute.xlu0 %1951
  %1953 = vrot.lane.b32.xlu0 %v1916, 96
  %v1954 = vpop.permute.xlu0 %1953
  %1955 = vrot.lane.b32.xlu0 %v1921, 96
  %v1956 = vpop.permute.xlu0 %1955
  %1957 = vrot.lane.b32.xlu0 %v1924, 96
  %v1958 = vpop.permute.xlu0 %1957
  %1959 = vrot.lane.b32.xlu0 %v1929, 96
  %v1960 = vpop.permute.xlu0 %1959
  %1961 = vrot.lane.b32.xlu0 %v1932, 96
  %v1962 = vpop.permute.xlu0 %1961
  %1963 = vrot.lane.b32.xlu0 %v1937, 96
  %v1964 = vpop.permute.xlu0 %1963
  %1965 = vrot.lane.b32.xlu0 %v1940, 96
  %v1966 = vpop.permute.xlu0 %1965
  %vm1975 = vcmask 1048320
  %1976 = vst.msk [vmem:[#allocation2] sm:$0xff] %vm1975, %v1952
  %1977 = vst.msk [vmem:[#allocation2 + $0x8] sm:$0xff] %vm1975, %v1954
  %1978 = vst.msk [vmem:[#allocation2 + $0x10] sm:$0xff] %vm1975, %v1956
  %1979 = vst.msk [vmem:[#allocation2 + $0x18] sm:$0xff] %vm1975, %v1958
  %1980 = vst.msk [vmem:[#allocation2 + $0x20] sm:$0xff] %vm1975, %v1960
  %1981 = vst.msk [vmem:[#allocation2 + $0x28] sm:$0xff] %vm1975, %v1962
  %1982 = vst.msk [vmem:[#allocation2 + $0x30] sm:$0xff] %vm1975, %v1964
  %1983 = vst.msk [vmem:[#allocation2 + $0x38] sm:$0xff] %vm1975, %v1966
  %v1985 = vsel %vm723, %v703, 0
  %v1988 = vsel %vm723, %v704, 0
  %v1991 = vsel %vm723, %v705, 0
  %v1994 = vsel %vm723, %v706, 0
  %v1997 = vsel %vm723, %v711, 0
  %v2000 = vsel %vm723, %v712, 0
  %v2003 = vsel %vm723, %v713, 0
  %v2006 = vsel %vm723, %v714, 0
  %2008 = vmatprep.subr.bf16.mxu0 0
  %2009 = vmatpush1.bf16.xpose.msra.mxu0 %v1997
  %2010 = vmatprep.subr.bf16.mxu0 0
  %2011 = vmatpush1.bf16.xpose.msra.mxu0 %v2000
  %2012 = vmatprep.subr.bf16.mxu0 0
  %2013 = vmatpush1.bf16.xpose.msra.mxu0 %v2003
  %2014 = vmatprep.subr.bf16.mxu0 0
  %2015 = vmatpush1.bf16.xpose.msra.mxu0 %v2006
  %2016 = vmatprep.subr.bf16.mxu0 0
  %2017 = vmatpush1.bf16.xpose.msra.mxu0 0
  %2018 = vmatprep.subr.bf16.mxu0 0
  %2019 = vmatpush1.bf16.xpose.msra.mxu0 0
  %2020 = vmatprep.subr.bf16.mxu0 0
  %2021 = vmatpush1.bf16.xpose.msra.mxu0 0
  %2022 = vmatprep.subr.bf16.mxu0 0
  %2023 = vmatpush1.bf16.xpose.msra.mxu0 0
  %2024 = vmatprep.subr.bf16.mxu0 0
  %2025 = vmatpush1.bf16.xpose.msra.mxu0 0
  %2026 = vmatprep.subr.bf16.mxu0 0
  %2027 = vmatpush1.bf16.xpose.msra.mxu0 0
  %2028 = vmatprep.subr.bf16.mxu0 0
  %2029 = vmatpush1.bf16.xpose.msra.mxu0 0
  %2030 = vmatprep.subr.bf16.mxu0 0
  %2031 = vmatpush1.bf16.xpose.msra.mxu0 0
  %2032 = vmatprep.subr.bf16.mxu0 0
  %2033 = vmatpush1.bf16.xpose.msra.mxu0 0
  %2034 = vmatprep.subr.bf16.mxu0 0
  %2035 = vmatpush1.bf16.xpose.msra.mxu0 0
  %2036 = vmatprep.subr.bf16.mxu0 0
  %2037 = vmatpush1.bf16.xpose.msra.mxu0 0
  %2038 = vmatprep.subr.bf16.mxu0 0
  %2039 = vmatpush1.bf16.xpose.msra.mxu0 0
  %2040 = vmatprep.mubr.bf16.mxu0 0
  %2041 = vmatmul.mubr.bf16.gmra.mrb[0].mxu0 %v1985
  %v2042 = vpop.f32.mrb[0].mxu0
  %v2043 = vadd.f32 %v73, %v2042
  %v2044 = vpop.f32.mrb[0].mxu0
  %v2045 = vpop.f32.mrb[0].mxu0
  %v2046 = vadd.f32 %v74, %v2045
  %v2047 = vpop.f32.mrb[0].mxu0
  %2048 = vmatprep.mubr.bf16.mxu0 0
  %2049 = vmatmul.mubr.bf16.gmra.mrb[0].mxu0 %v1988
  %v2050 = vpop.f32.mrb[0].mxu0
  %v2051 = vadd.f32 %v75, %v2050
  %v2052 = vpop.f32.mrb[0].mxu0
  %v2053 = vpop.f32.mrb[0].mxu0
  %v2054 = vadd.f32 %v76, %v2053
  %v2055 = vpop.f32.mrb[0].mxu0
  %2056 = vmatprep.mubr.bf16.mxu0 0
  %2057 = vmatmul.mubr.bf16.gmra.mrb[0].mxu0 %v1991
  %v2058 = vpop.f32.mrb[0].mxu0
  %v2059 = vadd.f32 %v77, %v2058
  %v2060 = vpop.f32.mrb[0].mxu0
  %v2061 = vpop.f32.mrb[0].mxu0
  %v2062 = vadd.f32 %v78, %v2061
  %v2063 = vpop.f32.mrb[0].mxu0
  %2064 = vmatprep.mubr.bf16.mxu0 0
  %2065 = vmatmul.mubr.bf16.gmra.mrb[0].mxu0 %v1994
  %v2066 = vpop.f32.mrb[0].mxu0
  %v2067 = vadd.f32 %v79, %v2066
  %v2068 = vpop.f32.mrb[0].mxu0
  %v2069 = vpop.f32.mrb[0].mxu0
  %v2070 = vadd.f32 %v80, %v2069
  %v2071 = vpop.f32.mrb[0].mxu0
  %2072 = vdwg.mxu0
  %v2073 = vsel %vm813, %v2043, -inf
  %2074 = vmax.xlane.f32.xlu0 %v2073
  %v2075 = vpop.xlane.xlu0 %2074
  %v2076 = vsel %vm813, %v2046, -inf
  %2077 = vmax.xlane.f32.xlu0 %v2076
  %v2078 = vpop.xlane.xlu0 %2077
  %v2079 = vsel %vm813, %v2051, -inf
  %2080 = vmax.xlane.f32.xlu0 %v2079
  %v2081 = vpop.xlane.xlu0 %2080
  %v2082 = vsel %vm813, %v2054, -inf
  %2083 = vmax.xlane.f32.xlu0 %v2082
  %v2084 = vpop.xlane.xlu0 %2083
  %v2085 = vsel %vm813, %v2059, -inf
  %2086 = vmax.xlane.f32.xlu0 %v2085
  %v2087 = vpop.xlane.xlu0 %2086
  %v2088 = vsel %vm813, %v2062, -inf
  %2089 = vmax.xlane.f32.xlu0 %v2088
  %v2090 = vpop.xlane.xlu0 %2089
  %v2091 = vsel %vm813, %v2067, -inf
  %2092 = vmax.xlane.f32.xlu0 %v2091
  %v2093 = vpop.xlane.xlu0 %2092
  %v2094 = vsel %vm813, %v2070, -inf
  %2095 = vmax.xlane.f32.xlu0 %v2094
  %v2096 = vpop.xlane.xlu0 %2095
  %v2097 = vsub.f32 %v2043, %v2075
  %v2098 = vsub.f32 %v2046, %v2078
  %v2099 = vsub.f32 %v2051, %v2081
  %v2100 = vsub.f32 %v2054, %v2084
  %v2101 = vsub.f32 %v2059, %v2087
  %v2102 = vsub.f32 %v2062, %v2090
  %v2103 = vsub.f32 %v2067, %v2093
  %v2104 = vsub.f32 %v2070, %v2096
  %v2105 = vmul.f32 %v2097, 1.442695
  %v2106 = vpow.pop %v2105
  %v2107 = vmul.f32 %v2098, 1.442695
  %v2108 = vpow.pop %v2107
  %v2109 = vmul.f32 %v2099, 1.442695
  %v2110 = vpow.pop %v2109
  %v2111 = vmul.f32 %v2100, 1.442695
  %v2112 = vpow.pop %v2111
  %v2113 = vmul.f32 %v2101, 1.442695
  %v2114 = vpow.pop %v2113
  %v2115 = vmul.f32 %v2102, 1.442695
  %v2116 = vpow.pop %v2115
  %v2117 = vmul.f32 %v2103, 1.442695
  %v2118 = vpow.pop %v2117
  %v2119 = vmul.f32 %v2104, 1.442695
  %v2120 = vpow.pop %v2119
  %v2121 = vsel %vm813, %v2106, 0.0
  %2122 = vadd.xlane.f32.xlu0 %v2121
  %v2123 = vpop.xlane.xlu0 %2122
  %v2124 = vsel %vm813, %v2108, 0.0
  %2125 = vadd.xlane.f32.xlu0 %v2124
  %v2126 = vpop.xlane.xlu0 %2125
  %v2127 = vsel %vm813, %v2110, 0.0
  %2128 = vadd.xlane.f32.xlu0 %v2127
  %v2129 = vpop.xlane.xlu0 %2128
  %v2130 = vsel %vm813, %v2112, 0.0
  %2131 = vadd.xlane.f32.xlu0 %v2130
  %v2132 = vpop.xlane.xlu0 %2131
  %v2133 = vsel %vm813, %v2114, 0.0
  %2134 = vadd.xlane.f32.xlu0 %v2133
  %v2135 = vpop.xlane.xlu0 %2134
  %v2136 = vsel %vm813, %v2116, 0.0
  %2137 = vadd.xlane.f32.xlu0 %v2136
  %v2138 = vpop.xlane.xlu0 %2137
  %v2139 = vsel %vm813, %v2118, 0.0
  %2140 = vadd.xlane.f32.xlu0 %v2139
  %v2141 = vpop.xlane.xlu0 %2140
  %v2142 = vsel %vm813, %v2120, 0.0
  %2143 = vadd.xlane.f32.xlu0 %v2142
  %v2144 = vpop.xlane.xlu0 %2143
  %v2145 = vrcp.pop %v2123
  %v2146 = vrcp.pop %v2126
  %v2147 = vrcp.pop %v2129
  %v2148 = vrcp.pop %v2132
  %v2149 = vrcp.pop %v2135
  %v2150 = vrcp.pop %v2138
  %v2151 = vrcp.pop %v2141
  %v2152 = vrcp.pop %v2144
  %v2153 = vmul.f32 %v2106, %v2145
  %v2154 = vmul.f32 %v2108, %v2146
  %v2155 = vmul.f32 %v2110, %v2147
  %v2156 = vmul.f32 %v2112, %v2148
  %v2157 = vmul.f32 %v2114, %v2149
  %v2158 = vmul.f32 %v2116, %v2150
  %v2159 = vmul.f32 %v2118, %v2151
  %v2160 = vmul.f32 %v2120, %v2152
  %v2161 = vpack.c.bf16 %v2154, %v2153
  %v2162 = vpack.c.bf16 %v2156, %v2155
  %v2163 = vpack.c.bf16 %v2158, %v2157
  %v2164 = vpack.c.bf16 %v2160, %v2159
  %v2166 = vsel %vm813, %v2161, 0
  %v2169 = vsel %vm813, %v2162, 0
  %v2172 = vsel %vm813, %v2163, 0
  %v2175 = vsel %vm813, %v2164, 0
  %2177 = vmatprep.subr.bf16.mxu0 0
  %2178 = vmatpush1.bf16.msra.mxu0 %v719
  %2179 = vmatprep.subr.bf16.mxu0 0
  %2180 = vmatpush1.bf16.msra.mxu0 %v720
  %2181 = vmatprep.subr.bf16.mxu0 0
  %2182 = vmatpush1.bf16.msra.mxu0 %v721
  %2183 = vmatprep.subr.bf16.mxu0 0
  %2184 = vmatpush1.bf16.msra.mxu0 %v722
  %2185 = vmatprep.subr.bf16.mxu0 0
  %2186 = vmatpush1.bf16.msra.mxu0 0
  %2187 = vmatprep.subr.bf16.mxu0 0
  %2188 = vmatpush1.bf16.msra.mxu0 0
  %2189 = vmatprep.subr.bf16.mxu0 0
  %2190 = vmatpush1.bf16.msra.mxu0 0
  %2191 = vmatprep.subr.bf16.mxu0 0
  %2192 = vmatpush1.bf16.msra.mxu0 0
  %2193 = vmatprep.subr.bf16.mxu0 0
  %2194 = vmatpush1.bf16.msra.mxu0 0
  %2195 = vmatprep.subr.bf16.mxu0 0
  %2196 = vmatpush1.bf16.msra.mxu0 0
  %2197 = vmatprep.subr.bf16.mxu0 0
  %2198 = vmatpush1.bf16.msra.mxu0 0
  %2199 = vmatprep.subr.bf16.mxu0 0
  %2200 = vmatpush1.bf16.msra.mxu0 0
  %2201 = vmatprep.subr.bf16.mxu0 0
  %2202 = vmatpush1.bf16.msra.mxu0 0
  %2203 = vmatprep.subr.bf16.mxu0 0
  %2204 = vmatpush1.bf16.msra.mxu0 0
  %2205 = vmatprep.subr.bf16.mxu0 0
  %2206 = vmatpush1.bf16.msra.mxu0 0
  %2207 = vmatprep.subr.bf16.mxu0 0
  %2208 = vmatpush1.bf16.msra.mxu0 0
  %2209 = vmatprep.mubr.bf16.mxu0 0
  %2210 = vmatmul.mubr.bf16.gmra.mrb[0].mxu0 %v2166
  %v2211 = vpop.f32.mrb[0].mxu0
  %v2212 = vadd.f32 0.0, %v2211
  %v2213 = vpop.f32.mrb[0].mxu0
  %v2214 = vpop.f32.mrb[0].mxu0
  %v2215 = vadd.f32 0.0, %v2214
  %v2216 = vpop.f32.mrb[0].mxu0
  %2217 = vmatprep.mubr.bf16.mxu0 0
  %2218 = vmatmul.mubr.bf16.gmra.mrb[0].mxu0 %v2169
  %v2219 = vpop.f32.mrb[0].mxu0
  %v2220 = vadd.f32 0.0, %v2219
  %v2221 = vpop.f32.mrb[0].mxu0
  %v2222 = vpop.f32.mrb[0].mxu0
  %v2223 = vadd.f32 0.0, %v2222
  %v2224 = vpop.f32.mrb[0].mxu0
  %2225 = vmatprep.mubr.bf16.mxu0 0
  %2226 = vmatmul.mubr.bf16.gmra.mrb[0].mxu0 %v2172
  %v2227 = vpop.f32.mrb[0].mxu0
  %v2228 = vadd.f32 0.0, %v2227
  %v2229 = vpop.f32.mrb[0].mxu0
  %v2230 = vpop.f32.mrb[0].mxu0
  %v2231 = vadd.f32 0.0, %v2230
  %v2232 = vpop.f32.mrb[0].mxu0
  %2233 = vmatprep.mubr.bf16.mxu0 0
  %2234 = vmatmul.mubr.bf16.gmra.mrb[0].mxu0 %v2175
  %v2235 = vpop.f32.mrb[0].mxu0
  %v2236 = vadd.f32 0.0, %v2235
  %v2237 = vpop.f32.mrb[0].mxu0
  %v2238 = vpop.f32.mrb[0].mxu0
  %v2239 = vadd.f32 0.0, %v2238
  %v2240 = vpop.f32.mrb[0].mxu0
  %2241 = vdwg.mxu0
  %2242 = vst.msk [vmem:[#allocation2 + $0x40] sm:$0xff] %vm723, %v2212
  %2243 = vst.msk [vmem:[#allocation2 + $0x48] sm:$0xff] %vm723, %v2215
  %2244 = vst.msk [vmem:[#allocation2 + $0x50] sm:$0xff] %vm723, %v2220
  %2245 = vst.msk [vmem:[#allocation2 + $0x58] sm:$0xff] %vm723, %v2223
  %2246 = vst.msk [vmem:[#allocation2 + $0x60] sm:$0xff] %vm723, %v2228
  %2247 = vst.msk [vmem:[#allocation2 + $0x68] sm:$0xff] %vm723, %v2231
  %2248 = vst.msk [vmem:[#allocation2 + $0x70] sm:$0xff] %vm723, %v2236
  %2249 = vst.msk [vmem:[#allocation2 + $0x78] sm:$0xff] %vm723, %v2239
  %2254 = vrot.lane.b32.xlu0 %v703, 96
  %v2255 = vpop.permute.xlu0 %2254
  %2256 = vrot.lane.b32.xlu0 %v704, 96
  %v2257 = vpop.permute.xlu0 %2256
  %2258 = vrot.lane.b32.xlu0 %v705, 96
  %v2259 = vpop.permute.xlu0 %2258
  %2260 = vrot.lane.b32.xlu0 %v706, 96
  %v2261 = vpop.permute.xlu0 %2260
  %2266 = vrot.lane.b32.xlu0 %v711, 96
  %v2267 = vpop.permute.xlu0 %2266
  %2268 = vrot.lane.b32.xlu0 %v712, 96
  %v2269 = vpop.permute.xlu0 %2268
  %2270 = vrot.lane.b32.xlu0 %v713, 96
  %v2271 = vpop.permute.xlu0 %2270
  %2272 = vrot.lane.b32.xlu0 %v714, 96
  %v2273 = vpop.permute.xlu0 %2272
  %v2275 = vsel %vm723, %v2255, 0
  %v2278 = vsel %vm723, %v2257, 0
  %v2281 = vsel %vm723, %v2259, 0
  %v2284 = vsel %vm723, %v2261, 0
  %v2287 = vsel %vm723, %v2267, 0
  %v2290 = vsel %vm723, %v2269, 0
  %v2293 = vsel %vm723, %v2271, 0
  %v2296 = vsel %vm723, %v2273, 0
  %2298 = vmatprep.subr.bf16.mxu0 0
  %2299 = vmatpush1.bf16.xpose.msra.mxu0 %v2287
  %2300 = vmatprep.subr.bf16.mxu0 0
  %2301 = vmatpush1.bf16.xpose.msra.mxu0 %v2290
  %2302 = vmatprep.subr.bf16.mxu0 0
  %2303 = vmatpush1.bf16.xpose.msra.mxu0 %v2293
  %2304 = vmatprep.subr.bf16.mxu0 0
  %2305 = vmatpush1.bf16.xpose.msra.mxu0 %v2296
  %2306 = vmatprep.subr.bf16.mxu0 0
  %2307 = vmatpush1.bf16.xpose.msra.mxu0 0
  %2308 = vmatprep.subr.bf16.mxu0 0
  %2309 = vmatpush1.bf16.xpose.msra.mxu0 0
  %2310 = vmatprep.subr.bf16.mxu0 0
  %2311 = vmatpush1.bf16.xpose.msra.mxu0 0
  %2312 = vmatprep.subr.bf16.mxu0 0
  %2313 = vmatpush1.bf16.xpose.msra.mxu0 0
  %2314 = vmatprep.subr.bf16.mxu0 0
  %2315 = vmatpush1.bf16.xpose.msra.mxu0 0
  %2316 = vmatprep.subr.bf16.mxu0 0
  %2317 = vmatpush1.bf16.xpose.msra.mxu0 0
  %2318 = vmatprep.subr.bf16.mxu0 0
  %2319 = vmatpush1.bf16.xpose.msra.mxu0 0
  %2320 = vmatprep.subr.bf16.mxu0 0
  %2321 = vmatpush1.bf16.xpose.msra.mxu0 0
  %2322 = vmatprep.subr.bf16.mxu0 0
  %2323 = vmatpush1.bf16.xpose.msra.mxu0 0
  %2324 = vmatprep.subr.bf16.mxu0 0
  %2325 = vmatpush1.bf16.xpose.msra.mxu0 0
  %2326 = vmatprep.subr.bf16.mxu0 0
  %2327 = vmatpush1.bf16.xpose.msra.mxu0 0
  %2328 = vmatprep.subr.bf16.mxu0 0
  %2329 = vmatpush1.bf16.xpose.msra.mxu0 0
  %2330 = vmatprep.mubr.bf16.mxu0 0
  %2331 = vmatmul.mubr.bf16.gmra.mrb[0].mxu0 %v2275
  %v2332 = vpop.f32.mrb[0].mxu0
  %v2333 = vadd.f32 %v73, %v2332
  %v2334 = vpop.f32.mrb[0].mxu0
  %v2335 = vpop.f32.mrb[0].mxu0
  %v2336 = vadd.f32 %v74, %v2335
  %v2337 = vpop.f32.mrb[0].mxu0
  %2338 = vmatprep.mubr.bf16.mxu0 0
  %2339 = vmatmul.mubr.bf16.gmra.mrb[0].mxu0 %v2278
  %v2340 = vpop.f32.mrb[0].mxu0
  %v2341 = vadd.f32 %v75, %v2340
  %v2342 = vpop.f32.mrb[0].mxu0
  %v2343 = vpop.f32.mrb[0].mxu0
  %v2344 = vadd.f32 %v76, %v2343
  %v2345 = vpop.f32.mrb[0].mxu0
  %2346 = vmatprep.mubr.bf16.mxu0 0
  %2347 = vmatmul.mubr.bf16.gmra.mrb[0].mxu0 %v2281
  %v2348 = vpop.f32.mrb[0].mxu0
  %v2349 = vadd.f32 %v77, %v2348
  %v2350 = vpop.f32.mrb[0].mxu0
  %v2351 = vpop.f32.mrb[0].mxu0
  %v2352 = vadd.f32 %v78, %v2351
  %v2353 = vpop.f32.mrb[0].mxu0
  %2354 = vmatprep.mubr.bf16.mxu0 0
  %2355 = vmatmul.mubr.bf16.gmra.mrb[0].mxu0 %v2284
  %v2356 = vpop.f32.mrb[0].mxu0
  %v2357 = vadd.f32 %v79, %v2356
  %v2358 = vpop.f32.mrb[0].mxu0
  %v2359 = vpop.f32.mrb[0].mxu0
  %v2360 = vadd.f32 %v80, %v2359
  %v2361 = vpop.f32.mrb[0].mxu0
  %2362 = vdwg.mxu0
  %v2363 = vsel %vm813, %v2333, -inf
  %2364 = vmax.xlane.f32.xlu0 %v2363
  %v2365 = vpop.xlane.xlu0 %2364
  %v2366 = vsel %vm813, %v2336, -inf
  %2367 = vmax.xlane.f32.xlu0 %v2366
  %v2368 = vpop.xlane.xlu0 %2367
  %v2369 = vsel %vm813, %v2341, -inf
  %2370 = vmax.xlane.f32.xlu0 %v2369
  %v2371 = vpop.xlane.xlu0 %2370
  %v2372 = vsel %vm813, %v2344, -inf
  %2373 = vmax.xlane.f32.xlu0 %v2372
  %v2374 = vpop.xlane.xlu0 %2373
  %v2375 = vsel %vm813, %v2349, -inf
  %2376 = vmax.xlane.f32.xlu0 %v2375
  %v2377 = vpop.xlane.xlu0 %2376
  %v2378 = vsel %vm813, %v2352, -inf
  %2379 = vmax.xlane.f32.xlu0 %v2378
  %v2380 = vpop.xlane.xlu0 %2379
  %v2381 = vsel %vm813, %v2357, -inf
  %2382 = vmax.xlane.f32.xlu0 %v2381
  %v2383 = vpop.xlane.xlu0 %2382
  %v2384 = vsel %vm813, %v2360, -inf
  %2385 = vmax.xlane.f32.xlu0 %v2384
  %v2386 = vpop.xlane.xlu0 %2385
  %v2387 = vsub.f32 %v2333, %v2365
  %v2388 = vsub.f32 %v2336, %v2368
  %v2389 = vsub.f32 %v2341, %v2371
  %v2390 = vsub.f32 %v2344, %v2374
  %v2391 = vsub.f32 %v2349, %v2377
  %v2392 = vsub.f32 %v2352, %v2380
  %v2393 = vsub.f32 %v2357, %v2383
  %v2394 = vsub.f32 %v2360, %v2386
  %v2395 = vmul.f32 %v2387, 1.442695
  %v2396 = vpow.pop %v2395
  %v2397 = vmul.f32 %v2388, 1.442695
  %v2398 = vpow.pop %v2397
  %v2399 = vmul.f32 %v2389, 1.442695
  %v2400 = vpow.pop %v2399
  %v2401 = vmul.f32 %v2390, 1.442695
  %v2402 = vpow.pop %v2401
  %v2403 = vmul.f32 %v2391, 1.442695
  %v2404 = vpow.pop %v2403
  %v2405 = vmul.f32 %v2392, 1.442695
  %v2406 = vpow.pop %v2405
  %v2407 = vmul.f32 %v2393, 1.442695
  %v2408 = vpow.pop %v2407
  %v2409 = vmul.f32 %v2394, 1.442695
  %v2410 = vpow.pop %v2409
  %v2411 = vsel %vm813, %v2396, 0.0
  %2412 = vadd.xlane.f32.xlu0 %v2411
  %v2413 = vpop.xlane.xlu0 %2412
  %v2414 = vsel %vm813, %v2398, 0.0
  %2415 = vadd.xlane.f32.xlu0 %v2414
  %v2416 = vpop.xlane.xlu0 %2415
  %v2417 = vsel %vm813, %v2400, 0.0
  %2418 = vadd.xlane.f32.xlu0 %v2417
  %v2419 = vpop.xlane.xlu0 %2418
  %v2420 = vsel %vm813, %v2402, 0.0
  %2421 = vadd.xlane.f32.xlu0 %v2420
  %v2422 = vpop.xlane.xlu0 %2421
  %v2423 = vsel %vm813, %v2404, 0.0
  %2424 = vadd.xlane.f32.xlu0 %v2423
  %v2425 = vpop.xlane.xlu0 %2424
  %v2426 = vsel %vm813, %v2406, 0.0
  %2427 = vadd.xlane.f32.xlu0 %v2426
  %v2428 = vpop.xlane.xlu0 %2427
  %v2429 = vsel %vm813, %v2408, 0.0
  %2430 = vadd.xlane.f32.xlu0 %v2429
  %v2431 = vpop.xlane.xlu0 %2430
  %v2432 = vsel %vm813, %v2410, 0.0
  %2433 = vadd.xlane.f32.xlu0 %v2432
  %v2434 = vpop.xlane.xlu0 %2433
  %v2435 = vrcp.pop %v2413
  %v2436 = vrcp.pop %v2416
  %v2437 = vrcp.pop %v2419
  %v2438 = vrcp.pop %v2422
  %v2439 = vrcp.pop %v2425
  %v2440 = vrcp.pop %v2428
  %v2441 = vrcp.pop %v2431
  %v2442 = vrcp.pop %v2434
  %v2443 = vmul.f32 %v2396, %v2435
  %v2444 = vmul.f32 %v2398, %v2436
  %v2445 = vmul.f32 %v2400, %v2437
  %v2446 = vmul.f32 %v2402, %v2438
  %v2447 = vmul.f32 %v2404, %v2439
  %v2448 = vmul.f32 %v2406, %v2440
  %v2449 = vmul.f32 %v2408, %v2441
  %v2450 = vmul.f32 %v2410, %v2442
  %v2451 = vpack.c.bf16 %v2444, %v2443
  %v2452 = vpack.c.bf16 %v2446, %v2445
  %v2453 = vpack.c.bf16 %v2448, %v2447
  %v2454 = vpack.c.bf16 %v2450, %v2449
  %2459 = vrot.lane.b32.xlu0 %v719, 96
  %v2460 = vpop.permute.xlu0 %2459
  %2461 = vrot.lane.b32.xlu0 %v720, 96
  %v2462 = vpop.permute.xlu0 %2461
  %2463 = vrot.lane.b32.xlu0 %v721, 96
  %v2464 = vpop.permute.xlu0 %2463
  %2465 = vrot.lane.b32.xlu0 %v722, 96
  %v2466 = vpop.permute.xlu0 %2465
  %v2472 = vsel %vm813, %v2451, 0
  %v2475 = vsel %vm813, %v2452, 0
  %v2478 = vsel %vm813, %v2453, 0
  %v2481 = vsel %vm813, %v2454, 0
  %2483 = vmatprep.subr.bf16.mxu0 0
  %2484 = vmatpush1.bf16.msra.mxu0 %v2460
  %2485 = vmatprep.subr.bf16.mxu0 0
  %2486 = vmatpush1.bf16.msra.mxu0 %v2462
  %2487 = vmatprep.subr.bf16.mxu0 0
  %2488 = vmatpush1.bf16.msra.mxu0 %v2464
  %2489 = vmatprep.subr.bf16.mxu0 0
  %2490 = vmatpush1.bf16.msra.mxu0 %v2466
  %2491 = vmatprep.subr.bf16.mxu0 0
  %2492 = vmatpush1.bf16.msra.mxu0 0
  %2493 = vmatprep.subr.bf16.mxu0 0
  %2494 = vmatpush1.bf16.msra.mxu0 0
  %2495 = vmatprep.subr.bf16.mxu0 0
  %2496 = vmatpush1.bf16.msra.mxu0 0
  %2497 = vmatprep.subr.bf16.mxu0 0
  %2498 = vmatpush1.bf16.msra.mxu0 0
  %2499 = vmatprep.subr.bf16.mxu0 0
  %2500 = vmatpush1.bf16.msra.mxu0 0
  %2501 = vmatprep.subr.bf16.mxu0 0
  %2502 = vmatpush1.bf16.msra.mxu0 0
  %2503 = vmatprep.subr.bf16.mxu0 0
  %2504 = vmatpush1.bf16.msra.mxu0 0
  %2505 = vmatprep.subr.bf16.mxu0 0
  %2506 = vmatpush1.bf16.msra.mxu0 0
  %2507 = vmatprep.subr.bf16.mxu0 0
  %2508 = vmatpush1.bf16.msra.mxu0 0
  %2509 = vmatprep.subr.bf16.mxu0 0
  %2510 = vmatpush1.bf16.msra.mxu0 0
  %2511 = vmatprep.subr.bf16.mxu0 0
  %2512 = vmatpush1.bf16.msra.mxu0 0
  %2513 = vmatprep.subr.bf16.mxu0 0
  %2514 = vmatpush1.bf16.msra.mxu0 0
  %2515 = vmatprep.mubr.bf16.mxu0 0
  %2516 = vmatmul.mubr.bf16.gmra.mrb[0].mxu0 %v2472
  %v2517 = vpop.f32.mrb[0].mxu0
  %v2518 = vadd.f32 0.0, %v2517
  %v2519 = vpop.f32.mrb[0].mxu0
  %v2520 = vpop.f32.mrb[0].mxu0
  %v2521 = vadd.f32 0.0, %v2520
  %v2522 = vpop.f32.mrb[0].mxu0
  %2523 = vmatprep.mubr.bf16.mxu0 0
  %2524 = vmatmul.mubr.bf16.gmra.mrb[0].mxu0 %v2475
  %v2525 = vpop.f32.mrb[0].mxu0
  %v2526 = vadd.f32 0.0, %v2525
  %v2527 = vpop.f32.mrb[0].mxu0
  %v2528 = vpop.f32.mrb[0].mxu0
  %v2529 = vadd.f32 0.0, %v2528
  %v2530 = vpop.f32.mrb[0].mxu0
  %2531 = vmatprep.mubr.bf16.mxu0 0
  %2532 = vmatmul.mubr.bf16.gmra.mrb[0].mxu0 %v2478
  %v2533 = vpop.f32.mrb[0].mxu0
  %v2534 = vadd.f32 0.0, %v2533
  %v2535 = vpop.f32.mrb[0].mxu0
  %v2536 = vpop.f32.mrb[0].mxu0
  %v2537 = vadd.f32 0.0, %v2536
  %v2538 = vpop.f32.mrb[0].mxu0
  %2539 = vmatprep.mubr.bf16.mxu0 0
  %2540 = vmatmul.mubr.bf16.gmra.mrb[0].mxu0 %v2481
  %v2541 = vpop.f32.mrb[0].mxu0
  %v2542 = vadd.f32 0.0, %v2541
  %v2543 = vpop.f32.mrb[0].mxu0
  %v2544 = vpop.f32.mrb[0].mxu0
  %v2545 = vadd.f32 0.0, %v2544
  %v2546 = vpop.f32.mrb[0].mxu0
  %2547 = vdwg.mxu0
  %2556 = vrot.lane.b32.xlu0 %v2518, 32
  %v2557 = vpop.permute.xlu0 %2556
  %2558 = vrot.lane.b32.xlu0 %v2521, 32
  %v2559 = vpop.permute.xlu0 %2558
  %2560 = vrot.lane.b32.xlu0 %v2526, 32
  %v2561 = vpop.permute.xlu0 %2560
  %2562 = vrot.lane.b32.xlu0 %v2529, 32
  %v2563 = vpop.permute.xlu0 %2562
  %2564 = vrot.lane.b32.xlu0 %v2534, 32
  %v2565 = vpop.permute.xlu0 %2564
  %2566 = vrot.lane.b32.xlu0 %v2537, 32
  %v2567 = vpop.permute.xlu0 %2566
  %2568 = vrot.lane.b32.xlu0 %v2542, 32
  %v2569 = vpop.permute.xlu0 %2568
  %2570 = vrot.lane.b32.xlu0 %v2545, 32
  %v2571 = vpop.permute.xlu0 %2570
  %2580 = vst.msk [vmem:[#allocation2 + $0x40] sm:$0xff] %vm1321, %v2557
  %2581 = vst.msk [vmem:[#allocation2 + $0x48] sm:$0xff] %vm1321, %v2559
  %2582 = vst.msk [vmem:[#allocation2 + $0x50] sm:$0xff] %vm1321, %v2561
  %2583 = vst.msk [vmem:[#allocation2 + $0x58] sm:$0xff] %vm1321, %v2563
  %2584 = vst.msk [vmem:[#allocation2 + $0x60] sm:$0xff] %vm1321, %v2565
  %2585 = vst.msk [vmem:[#allocation2 + $0x68] sm:$0xff] %vm1321, %v2567
  %2586 = vst.msk [vmem:[#allocation2 + $0x70] sm:$0xff] %vm1321, %v2569
  %2587 = vst.msk [vmem:[#allocation2 + $0x78] sm:$0xff] %vm1321, %v2571
  %2588 = vrot.lane.b32.xlu0 %v703, 64
  %v2589 = vpop.permute.xlu0 %2588
  %2590 = vrot.lane.b32.xlu0 %v704, 64
  %v2591 = vpop.permute.xlu0 %2590
  %2592 = vrot.lane.b32.xlu0 %v705, 64
  %v2593 = vpop.permute.xlu0 %2592
  %2594 = vrot.lane.b32.xlu0 %v706, 64
  %v2595 = vpop.permute.xlu0 %2594
  %2596 = vrot.lane.b32.xlu0 %v711, 64
  %v2597 = vpop.permute.xlu0 %2596
  %2598 = vrot.lane.b32.xlu0 %v712, 64
  %v2599 = vpop.permute.xlu0 %2598
  %2600 = vrot.lane.b32.xlu0 %v713, 64
  %v2601 = vpop.permute.xlu0 %2600
  %2602 = vrot.lane.b32.xlu0 %v714, 64
  %v2603 = vpop.permute.xlu0 %2602
  %v2605 = vsel %vm723, %v2589, 0
  %v2608 = vsel %vm723, %v2591, 0
  %v2611 = vsel %vm723, %v2593, 0
  %v2614 = vsel %vm723, %v2595, 0
  %v2617 = vsel %vm723, %v2597, 0
  %v2620 = vsel %vm723, %v2599, 0
  %v2623 = vsel %vm723, %v2601, 0
  %v2626 = vsel %vm723, %v2603, 0
  %2628 = vmatprep.subr.bf16.mxu0 0
  %2629 = vmatpush1.bf16.xpose.msra.mxu0 %v2617
  %2630 = vmatprep.subr.bf16.mxu0 0
  %2631 = vmatpush1.bf16.xpose.msra.mxu0 %v2620
  %2632 = vmatprep.subr.bf16.mxu0 0
  %2633 = vmatpush1.bf16.xpose.msra.mxu0 %v2623
  %2634 = vmatprep.subr.bf16.mxu0 0
  %2635 = vmatpush1.bf16.xpose.msra.mxu0 %v2626
  %2636 = vmatprep.subr.bf16.mxu0 0
  %2637 = vmatpush1.bf16.xpose.msra.mxu0 0
  %2638 = vmatprep.subr.bf16.mxu0 0
  %2639 = vmatpush1.bf16.xpose.msra.mxu0 0
  %2640 = vmatprep.subr.bf16.mxu0 0
  %2641 = vmatpush1.bf16.xpose.msra.mxu0 0
  %2642 = vmatprep.subr.bf16.mxu0 0
  %2643 = vmatpush1.bf16.xpose.msra.mxu0 0
  %2644 = vmatprep.subr.bf16.mxu0 0
  %2645 = vmatpush1.bf16.xpose.msra.mxu0 0
  %2646 = vmatprep.subr.bf16.mxu0 0
  %2647 = vmatpush1.bf16.xpose.msra.mxu0 0
  %2648 = vmatprep.subr.bf16.mxu0 0
  %2649 = vmatpush1.bf16.xpose.msra.mxu0 0
  %2650 = vmatprep.subr.bf16.mxu0 0
  %2651 = vmatpush1.bf16.xpose.msra.mxu0 0
  %2652 = vmatprep.subr.bf16.mxu0 0
  %2653 = vmatpush1.bf16.xpose.msra.mxu0 0
  %2654 = vmatprep.subr.bf16.mxu0 0
  %2655 = vmatpush1.bf16.xpose.msra.mxu0 0
  %2656 = vmatprep.subr.bf16.mxu0 0
  %2657 = vmatpush1.bf16.xpose.msra.mxu0 0
  %2658 = vmatprep.subr.bf16.mxu0 0
  %2659 = vmatpush1.bf16.xpose.msra.mxu0 0
  %2660 = vmatprep.mubr.bf16.mxu0 0
  %2661 = vmatmul.mubr.bf16.gmra.mrb[0].mxu0 %v2605
  %v2662 = vpop.f32.mrb[0].mxu0
  %v2663 = vadd.f32 %v73, %v2662
  %v2664 = vpop.f32.mrb[0].mxu0
  %v2665 = vpop.f32.mrb[0].mxu0
  %v2666 = vadd.f32 %v74, %v2665
  %v2667 = vpop.f32.mrb[0].mxu0
  %2668 = vmatprep.mubr.bf16.mxu0 0
  %2669 = vmatmul.mubr.bf16.gmra.mrb[0].mxu0 %v2608
  %v2670 = vpop.f32.mrb[0].mxu0
  %v2671 = vadd.f32 %v75, %v2670
  %v2672 = vpop.f32.mrb[0].mxu0
  %v2673 = vpop.f32.mrb[0].mxu0
  %v2674 = vadd.f32 %v76, %v2673
  %v2675 = vpop.f32.mrb[0].mxu0
  %2676 = vmatprep.mubr.bf16.mxu0 0
  %2677 = vmatmul.mubr.bf16.gmra.mrb[0].mxu0 %v2611
  %v2678 = vpop.f32.mrb[0].mxu0
  %v2679 = vadd.f32 %v77, %v2678
  %v2680 = vpop.f32.mrb[0].mxu0
  %v2681 = vpop.f32.mrb[0].mxu0
  %v2682 = vadd.f32 %v78, %v2681
  %v2683 = vpop.f32.mrb[0].mxu0
  %2684 = vmatprep.mubr.bf16.mxu0 0
  %2685 = vmatmul.mubr.bf16.gmra.mrb[0].mxu0 %v2614
  %v2686 = vpop.f32.mrb[0].mxu0
  %v2687 = vadd.f32 %v79, %v2686
  %v2688 = vpop.f32.mrb[0].mxu0
  %v2689 = vpop.f32.mrb[0].mxu0
  %v2690 = vadd.f32 %v80, %v2689
  %v2691 = vpop.f32.mrb[0].mxu0
  %2692 = vdwg.mxu0
  %v2693 = vsel %vm813, %v2663, -inf
  %2694 = vmax.xlane.f32.xlu0 %v2693
  %v2695 = vpop.xlane.xlu0 %2694
  %v2696 = vsel %vm813, %v2666, -inf
  %2697 = vmax.xlane.f32.xlu0 %v2696
  %v2698 = vpop.xlane.xlu0 %2697
  %v2699 = vsel %vm813, %v2671, -inf
  %2700 = vmax.xlane.f32.xlu0 %v2699
  %v2701 = vpop.xlane.xlu0 %2700
  %v2702 = vsel %vm813, %v2674, -inf
  %2703 = vmax.xlane.f32.xlu0 %v2702
  %v2704 = vpop.xlane.xlu0 %2703
  %v2705 = vsel %vm813, %v2679, -inf
  %2706 = vmax.xlane.f32.xlu0 %v2705
  %v2707 = vpop.xlane.xlu0 %2706
  %v2708 = vsel %vm813, %v2682, -inf
  %2709 = vmax.xlane.f32.xlu0 %v2708
  %v2710 = vpop.xlane.xlu0 %2709
  %v2711 = vsel %vm813, %v2687, -inf
  %2712 = vmax.xlane.f32.xlu0 %v2711
  %v2713 = vpop.xlane.xlu0 %2712
  %v2714 = vsel %vm813, %v2690, -inf
  %2715 = vmax.xlane.f32.xlu0 %v2714
  %v2716 = vpop.xlane.xlu0 %2715
  %v2717 = vsub.f32 %v2663, %v2695
  %v2718 = vsub.f32 %v2666, %v2698
  %v2719 = vsub.f32 %v2671, %v2701
  %v2720 = vsub.f32 %v2674, %v2704
  %v2721 = vsub.f32 %v2679, %v2707
  %v2722 = vsub.f32 %v2682, %v2710
  %v2723 = vsub.f32 %v2687, %v2713
  %v2724 = vsub.f32 %v2690, %v2716
  %v2725 = vmul.f32 %v2717, 1.442695
  %v2726 = vpow.pop %v2725
  %v2727 = vmul.f32 %v2718, 1.442695
  %v2728 = vpow.pop %v2727
  %v2729 = vmul.f32 %v2719, 1.442695
  %v2730 = vpow.pop %v2729
  %v2731 = vmul.f32 %v2720, 1.442695
  %v2732 = vpow.pop %v2731
  %v2733 = vmul.f32 %v2721, 1.442695
  %v2734 = vpow.pop %v2733
  %v2735 = vmul.f32 %v2722, 1.442695
  %v2736 = vpow.pop %v2735
  %v2737 = vmul.f32 %v2723, 1.442695
  %v2738 = vpow.pop %v2737
  %v2739 = vmul.f32 %v2724, 1.442695
  %v2740 = vpow.pop %v2739
  %v2741 = vsel %vm813, %v2726, 0.0
  %2742 = vadd.xlane.f32.xlu0 %v2741
  %v2743 = vpop.xlane.xlu0 %2742
  %v2744 = vsel %vm813, %v2728, 0.0
  %2745 = vadd.xlane.f32.xlu0 %v2744
  %v2746 = vpop.xlane.xlu0 %2745
  %v2747 = vsel %vm813, %v2730, 0.0
  %2748 = vadd.xlane.f32.xlu0 %v2747
  %v2749 = vpop.xlane.xlu0 %2748
  %v2750 = vsel %vm813, %v2732, 0.0
  %2751 = vadd.xlane.f32.xlu0 %v2750
  %v2752 = vpop.xlane.xlu0 %2751
  %v2753 = vsel %vm813, %v2734, 0.0
  %2754 = vadd.xlane.f32.xlu0 %v2753
  %v2755 = vpop.xlane.xlu0 %2754
  %v2756 = vsel %vm813, %v2736, 0.0
  %2757 = vadd.xlane.f32.xlu0 %v2756
  %v2758 = vpop.xlane.xlu0 %2757
  %v2759 = vsel %vm813, %v2738, 0.0
  %2760 = vadd.xlane.f32.xlu0 %v2759
  %v2761 = vpop.xlane.xlu0 %2760
  %v2762 = vsel %vm813, %v2740, 0.0
  %2763 = vadd.xlane.f32.xlu0 %v2762
  %v2764 = vpop.xlane.xlu0 %2763
  %v2765 = vrcp.pop %v2743
  %v2766 = vrcp.pop %v2746
  %v2767 = vrcp.pop %v2749
  %v2768 = vrcp.pop %v2752
  %v2769 = vrcp.pop %v2755
  %v2770 = vrcp.pop %v2758
  %v2771 = vrcp.pop %v2761
  %v2772 = vrcp.pop %v2764
  %v2773 = vmul.f32 %v2726, %v2765
  %v2774 = vmul.f32 %v2728, %v2766
  %v2775 = vmul.f32 %v2730, %v2767
  %v2776 = vmul.f32 %v2732, %v2768
  %v2777 = vmul.f32 %v2734, %v2769
  %v2778 = vmul.f32 %v2736, %v2770
  %v2779 = vmul.f32 %v2738, %v2771
  %v2780 = vmul.f32 %v2740, %v2772
  %v2781 = vpack.c.bf16 %v2774, %v2773
  %v2782 = vpack.c.bf16 %v2776, %v2775
  %v2783 = vpack.c.bf16 %v2778, %v2777
  %v2784 = vpack.c.bf16 %v2780, %v2779
  %2785 = vrot.lane.b32.xlu0 %v719, 64
  %v2786 = vpop.permute.xlu0 %2785
  %2787 = vrot.lane.b32.xlu0 %v720, 64
  %v2788 = vpop.permute.xlu0 %2787
  %2789 = vrot.lane.b32.xlu0 %v721, 64
  %v2790 = vpop.permute.xlu0 %2789
  %2791 = vrot.lane.b32.xlu0 %v722, 64
  %v2792 = vpop.permute.xlu0 %2791
  %v2798 = vsel %vm813, %v2781, 0
  %v2801 = vsel %vm813, %v2782, 0
  %v2804 = vsel %vm813, %v2783, 0
  %v2807 = vsel %vm813, %v2784, 0
  %2809 = vmatprep.subr.bf16.mxu0 0
  %2810 = vmatpush1.bf16.msra.mxu0 %v2786
  %2811 = vmatprep.subr.bf16.mxu0 0
  %2812 = vmatpush1.bf16.msra.mxu0 %v2788
  %2813 = vmatprep.subr.bf16.mxu0 0
  %2814 = vmatpush1.bf16.msra.mxu0 %v2790
  %2815 = vmatprep.subr.bf16.mxu0 0
  %2816 = vmatpush1.bf16.msra.mxu0 %v2792
  %2817 = vmatprep.subr.bf16.mxu0 0
  %2818 = vmatpush1.bf16.msra.mxu0 0
  %2819 = vmatprep.subr.bf16.mxu0 0
  %2820 = vmatpush1.bf16.msra.mxu0 0
  %2821 = vmatprep.subr.bf16.mxu0 0
  %2822 = vmatpush1.bf16.msra.mxu0 0
  %2823 = vmatprep.subr.bf16.mxu0 0
  %2824 = vmatpush1.bf16.msra.mxu0 0
  %2825 = vmatprep.subr.bf16.mxu0 0
  %2826 = vmatpush1.bf16.msra.mxu0 0
  %2827 = vmatprep.subr.bf16.mxu0 0
  %2828 = vmatpush1.bf16.msra.mxu0 0
  %2829 = vmatprep.subr.bf16.mxu0 0
  %2830 = vmatpush1.bf16.msra.mxu0 0
  %2831 = vmatprep.subr.bf16.mxu0 0
  %2832 = vmatpush1.bf16.msra.mxu0 0
  %2833 = vmatprep.subr.bf16.mxu0 0
  %2834 = vmatpush1.bf16.msra.mxu0 0
  %2835 = vmatprep.subr.bf16.mxu0 0
  %2836 = vmatpush1.bf16.msra.mxu0 0
  %2837 = vmatprep.subr.bf16.mxu0 0
  %2838 = vmatpush1.bf16.msra.mxu0 0
  %2839 = vmatprep.subr.bf16.mxu0 0
  %2840 = vmatpush1.bf16.msra.mxu0 0
  %2841 = vmatprep.mubr.bf16.mxu0 0
  %2842 = vmatmul.mubr.bf16.gmra.mrb[0].mxu0 %v2798
  %v2843 = vpop.f32.mrb[0].mxu0
  %v2844 = vadd.f32 0.0, %v2843
  %v2845 = vpop.f32.mrb[0].mxu0
  %v2846 = vpop.f32.mrb[0].mxu0
  %v2847 = vadd.f32 0.0, %v2846
  %v2848 = vpop.f32.mrb[0].mxu0
  %2849 = vmatprep.mubr.bf16.mxu0 0
  %2850 = vmatmul.mubr.bf16.gmra.mrb[0].mxu0 %v2801
  %v2851 = vpop.f32.mrb[0].mxu0
  %v2852 = vadd.f32 0.0, %v2851
  %v2853 = vpop.f32.mrb[0].mxu0
  %v2854 = vpop.f32.mrb[0].mxu0
  %v2855 = vadd.f32 0.0, %v2854
  %v2856 = vpop.f32.mrb[0].mxu0
  %2857 = vmatprep.mubr.bf16.mxu0 0
  %2858 = vmatmul.mubr.bf16.gmra.mrb[0].mxu0 %v2804
  %v2859 = vpop.f32.mrb[0].mxu0
  %v2860 = vadd.f32 0.0, %v2859
  %v2861 = vpop.f32.mrb[0].mxu0
  %v2862 = vpop.f32.mrb[0].mxu0
  %v2863 = vadd.f32 0.0, %v2862
  %v2864 = vpop.f32.mrb[0].mxu0
  %2865 = vmatprep.mubr.bf16.mxu0 0
  %2866 = vmatmul.mubr.bf16.gmra.mrb[0].mxu0 %v2807
  %v2867 = vpop.f32.mrb[0].mxu0
  %v2868 = vadd.f32 0.0, %v2867
  %v2869 = vpop.f32.mrb[0].mxu0
  %v2870 = vpop.f32.mrb[0].mxu0
  %v2871 = vadd.f32 0.0, %v2870
  %v2872 = vpop.f32.mrb[0].mxu0
  %2873 = vdwg.mxu0
  %2882 = vrot.lane.b32.xlu0 %v2844, 64
  %v2883 = vpop.permute.xlu0 %2882
  %2884 = vrot.lane.b32.xlu0 %v2847, 64
  %v2885 = vpop.permute.xlu0 %2884
  %2886 = vrot.lane.b32.xlu0 %v2852, 64
  %v2887 = vpop.permute.xlu0 %2886
  %2888 = vrot.lane.b32.xlu0 %v2855, 64
  %v2889 = vpop.permute.xlu0 %2888
  %2890 = vrot.lane.b32.xlu0 %v2860, 64
  %v2891 = vpop.permute.xlu0 %2890
  %2892 = vrot.lane.b32.xlu0 %v2863, 64
  %v2893 = vpop.permute.xlu0 %2892
  %2894 = vrot.lane.b32.xlu0 %v2868, 64
  %v2895 = vpop.permute.xlu0 %2894
  %2896 = vrot.lane.b32.xlu0 %v2871, 64
  %v2897 = vpop.permute.xlu0 %2896
  %2906 = vst.msk [vmem:[#allocation2 + $0x40] sm:$0xff] %vm1648, %v2883
  %2907 = vst.msk [vmem:[#allocation2 + $0x48] sm:$0xff] %vm1648, %v2885
  %2908 = vst.msk [vmem:[#allocation2 + $0x50] sm:$0xff] %vm1648, %v2887
  %2909 = vst.msk [vmem:[#allocation2 + $0x58] sm:$0xff] %vm1648, %v2889
  %2910 = vst.msk [vmem:[#allocation2 + $0x60] sm:$0xff] %vm1648, %v2891
  %2911 = vst.msk [vmem:[#allocation2 + $0x68] sm:$0xff] %vm1648, %v2893
  %2912 = vst.msk [vmem:[#allocation2 + $0x70] sm:$0xff] %vm1648, %v2895
  %2913 = vst.msk [vmem:[#allocation2 + $0x78] sm:$0xff] %vm1648, %v2897
  %2914 = vrot.lane.b32.xlu0 %v703, 32
  %v2915 = vpop.permute.xlu0 %2914
  %2916 = vrot.lane.b32.xlu0 %v704, 32
  %v2917 = vpop.permute.xlu0 %2916
  %2918 = vrot.lane.b32.xlu0 %v705, 32
  %v2919 = vpop.permute.xlu0 %2918
  %2920 = vrot.lane.b32.xlu0 %v706, 32
  %v2921 = vpop.permute.xlu0 %2920
  %2922 = vrot.lane.b32.xlu0 %v711, 32
  %v2923 = vpop.permute.xlu0 %2922
  %2924 = vrot.lane.b32.xlu0 %v712, 32
  %v2925 = vpop.permute.xlu0 %2924
  %2926 = vrot.lane.b32.xlu0 %v713, 32
  %v2927 = vpop.permute.xlu0 %2926
  %2928 = vrot.lane.b32.xlu0 %v714, 32
  %v2929 = vpop.permute.xlu0 %2928
  %v2931 = vsel %vm723, %v2915, 0
  %v2934 = vsel %vm723, %v2917, 0
  %v2937 = vsel %vm723, %v2919, 0
  %v2940 = vsel %vm723, %v2921, 0
  %v2943 = vsel %vm723, %v2923, 0
  %v2946 = vsel %vm723, %v2925, 0
  %v2949 = vsel %vm723, %v2927, 0
  %v2952 = vsel %vm723, %v2929, 0
  %2954 = vmatprep.subr.bf16.mxu0 0
  %2955 = vmatpush1.bf16.xpose.msra.mxu0 %v2943
  %2956 = vmatprep.subr.bf16.mxu0 0
  %2957 = vmatpush1.bf16.xpose.msra.mxu0 %v2946
  %2958 = vmatprep.subr.bf16.mxu0 0
  %2959 = vmatpush1.bf16.xpose.msra.mxu0 %v2949
  %2960 = vmatprep.subr.bf16.mxu0 0
  %2961 = vmatpush1.bf16.xpose.msra.mxu0 %v2952
  %2962 = vmatprep.subr.bf16.mxu0 0
  %2963 = vmatpush1.bf16.xpose.msra.mxu0 0
  %2964 = vmatprep.subr.bf16.mxu0 0
  %2965 = vmatpush1.bf16.xpose.msra.mxu0 0
  %2966 = vmatprep.subr.bf16.mxu0 0
  %2967 = vmatpush1.bf16.xpose.msra.mxu0 0
  %2968 = vmatprep.subr.bf16.mxu0 0
  %2969 = vmatpush1.bf16.xpose.msra.mxu0 0
  %2970 = vmatprep.subr.bf16.mxu0 0
  %2971 = vmatpush1.bf16.xpose.msra.mxu0 0
  %2972 = vmatprep.subr.bf16.mxu0 0
  %2973 = vmatpush1.bf16.xpose.msra.mxu0 0
  %2974 = vmatprep.subr.bf16.mxu0 0
  %2975 = vmatpush1.bf16.xpose.msra.mxu0 0
  %2976 = vmatprep.subr.bf16.mxu0 0
  %2977 = vmatpush1.bf16.xpose.msra.mxu0 0
  %2978 = vmatprep.subr.bf16.mxu0 0
  %2979 = vmatpush1.bf16.xpose.msra.mxu0 0
  %2980 = vmatprep.subr.bf16.mxu0 0
  %2981 = vmatpush1.bf16.xpose.msra.mxu0 0
  %2982 = vmatprep.subr.bf16.mxu0 0
  %2983 = vmatpush1.bf16.xpose.msra.mxu0 0
  %2984 = vmatprep.subr.bf16.mxu0 0
  %2985 = vmatpush1.bf16.xpose.msra.mxu0 0
  %2986 = vmatprep.mubr.bf16.mxu0 0
  %2987 = vmatmul.mubr.bf16.gmra.mrb[0].mxu0 %v2931
  %v2988 = vpop.f32.mrb[0].mxu0
  %v2989 = vadd.f32 %v73, %v2988
  %v2990 = vpop.f32.mrb[0].mxu0
  %v2991 = vpop.f32.mrb[0].mxu0
  %v2992 = vadd.f32 %v74, %v2991
  %v2993 = vpop.f32.mrb[0].mxu0
  %2994 = vmatprep.mubr.bf16.mxu0 0
  %2995 = vmatmul.mubr.bf16.gmra.mrb[0].mxu0 %v2934
  %v2996 = vpop.f32.mrb[0].mxu0
  %v2997 = vadd.f32 %v75, %v2996
  %v2998 = vpop.f32.mrb[0].mxu0
  %v2999 = vpop.f32.mrb[0].mxu0
  %v3000 = vadd.f32 %v76, %v2999
  %v3001 = vpop.f32.mrb[0].mxu0
  %3002 = vmatprep.mubr.bf16.mxu0 0
  %3003 = vmatmul.mubr.bf16.gmra.mrb[0].mxu0 %v2937
  %v3004 = vpop.f32.mrb[0].mxu0
  %v3005 = vadd.f32 %v77, %v3004
  %v3006 = vpop.f32.mrb[0].mxu0
  %v3007 = vpop.f32.mrb[0].mxu0
  %v3008 = vadd.f32 %v78, %v3007
  %v3009 = vpop.f32.mrb[0].mxu0
  %3010 = vmatprep.mubr.bf16.mxu0 0
  %3011 = vmatmul.mubr.bf16.gmra.mrb[0].mxu0 %v2940
  %v3012 = vpop.f32.mrb[0].mxu0
  %v3013 = vadd.f32 %v79, %v3012
  %v3014 = vpop.f32.mrb[0].mxu0
  %v3015 = vpop.f32.mrb[0].mxu0
  %v3016 = vadd.f32 %v80, %v3015
  %v3017 = vpop.f32.mrb[0].mxu0
  %3018 = vdwg.mxu0
  %v3019 = vsel %vm813, %v2989, -inf
  %3020 = vmax.xlane.f32.xlu0 %v3019
  %v3021 = vpop.xlane.xlu0 %3020
  %v3022 = vsel %vm813, %v2992, -inf
  %3023 = vmax.xlane.f32.xlu0 %v3022
  %v3024 = vpop.xlane.xlu0 %3023
  %v3025 = vsel %vm813, %v2997, -inf
  %3026 = vmax.xlane.f32.xlu0 %v3025
  %v3027 = vpop.xlane.xlu0 %3026
  %v3028 = vsel %vm813, %v3000, -inf
  %3029 = vmax.xlane.f32.xlu0 %v3028
  %v3030 = vpop.xlane.xlu0 %3029
  %v3031 = vsel %vm813, %v3005, -inf
  %3032 = vmax.xlane.f32.xlu0 %v3031
  %v3033 = vpop.xlane.xlu0 %3032
  %v3034 = vsel %vm813, %v3008, -inf
  %3035 = vmax.xlane.f32.xlu0 %v3034
  %v3036 = vpop.xlane.xlu0 %3035
  %v3037 = vsel %vm813, %v3013, -inf
  %3038 = vmax.xlane.f32.xlu0 %v3037
  %v3039 = vpop.xlane.xlu0 %3038
  %v3040 = vsel %vm813, %v3016, -inf
  %3041 = vmax.xlane.f32.xlu0 %v3040
  %v3042 = vpop.xlane.xlu0 %3041
  %v3043 = vsub.f32 %v2989, %v3021
  %v3044 = vsub.f32 %v2992, %v3024
  %v3045 = vsub.f32 %v2997, %v3027
  %v3046 = vsub.f32 %v3000, %v3030
  %v3047 = vsub.f32 %v3005, %v3033
  %v3048 = vsub.f32 %v3008, %v3036
  %v3049 = vsub.f32 %v3013, %v3039
  %v3050 = vsub.f32 %v3016, %v3042
  %v3051 = vmul.f32 %v3043, 1.442695
  %v3052 = vpow.pop %v3051
  %v3053 = vmul.f32 %v3044, 1.442695
  %v3054 = vpow.pop %v3053
  %v3055 = vmul.f32 %v3045, 1.442695
  %v3056 = vpow.pop %v3055
  %v3057 = vmul.f32 %v3046, 1.442695
  %v3058 = vpow.pop %v3057
  %v3059 = vmul.f32 %v3047, 1.442695
  %v3060 = vpow.pop %v3059
  %v3061 = vmul.f32 %v3048, 1.442695
  %v3062 = vpow.pop %v3061
  %v3063 = vmul.f32 %v3049, 1.442695
  %v3064 = vpow.pop %v3063
  %v3065 = vmul.f32 %v3050, 1.442695
  %v3066 = vpow.pop %v3065
  %v3067 = vsel %vm813, %v3052, 0.0
  %3068 = vadd.xlane.f32.xlu0 %v3067
  %v3069 = vpop.xlane.xlu0 %3068
  %v3070 = vsel %vm813, %v3054, 0.0
  %3071 = vadd.xlane.f32.xlu0 %v3070
  %v3072 = vpop.xlane.xlu0 %3071
  %v3073 = vsel %vm813, %v3056, 0.0
  %3074 = vadd.xlane.f32.xlu0 %v3073
  %v3075 = vpop.xlane.xlu0 %3074
  %v3076 = vsel %vm813, %v3058, 0.0
  %3077 = vadd.xlane.f32.xlu0 %v3076
  %v3078 = vpop.xlane.xlu0 %3077
  %v3079 = vsel %vm813, %v3060, 0.0
  %3080 = vadd.xlane.f32.xlu0 %v3079
  %v3081 = vpop.xlane.xlu0 %3080
  %v3082 = vsel %vm813, %v3062, 0.0
  %3083 = vadd.xlane.f32.xlu0 %v3082
  %v3084 = vpop.xlane.xlu0 %3083
  %v3085 = vsel %vm813, %v3064, 0.0
  %3086 = vadd.xlane.f32.xlu0 %v3085
  %v3087 = vpop.xlane.xlu0 %3086
  %v3088 = vsel %vm813, %v3066, 0.0
  %3089 = vadd.xlane.f32.xlu0 %v3088
  %v3090 = vpop.xlane.xlu0 %3089
  %v3091 = vrcp.pop %v3069
  %v3092 = vrcp.pop %v3072
  %v3093 = vrcp.pop %v3075
  %v3094 = vrcp.pop %v3078
  %v3095 = vrcp.pop %v3081
  %v3096 = vrcp.pop %v3084
  %v3097 = vrcp.pop %v3087
  %v3098 = vrcp.pop %v3090
  %v3099 = vmul.f32 %v3052, %v3091
  %v3100 = vmul.f32 %v3054, %v3092
  %v3101 = vmul.f32 %v3056, %v3093
  %v3102 = vmul.f32 %v3058, %v3094
  %v3103 = vmul.f32 %v3060, %v3095
  %v3104 = vmul.f32 %v3062, %v3096
  %v3105 = vmul.f32 %v3064, %v3097
  %v3106 = vmul.f32 %v3066, %v3098
  %v3107 = vpack.c.bf16 %v3100, %v3099
  %v3108 = vpack.c.bf16 %v3102, %v3101
  %v3109 = vpack.c.bf16 %v3104, %v3103
  %v3110 = vpack.c.bf16 %v3106, %v3105
  %3111 = vrot.lane.b32.xlu0 %v719, 32
  %v3112 = vpop.permute.xlu0 %3111
  %3113 = vrot.lane.b32.xlu0 %v720, 32
  %v3114 = vpop.permute.xlu0 %3113
  %3115 = vrot.lane.b32.xlu0 %v721, 32
  %v3116 = vpop.permute.xlu0 %3115
  %3117 = vrot.lane.b32.xlu0 %v722, 32
  %v3118 = vpop.permute.xlu0 %3117
  %v3124 = vsel %vm813, %v3107, 0
  %v3127 = vsel %vm813, %v3108, 0
  %v3130 = vsel %vm813, %v3109, 0
  %v3133 = vsel %vm813, %v3110, 0
  %3135 = vmatprep.subr.bf16.mxu0 0
  %3136 = vmatpush1.bf16.msra.mxu0 %v3112
  %3137 = vmatprep.subr.bf16.mxu0 0
  %3138 = vmatpush1.bf16.msra.mxu0 %v3114
  %3139 = vmatprep.subr.bf16.mxu0 0
  %3140 = vmatpush1.bf16.msra.mxu0 %v3116
  %3141 = vmatprep.subr.bf16.mxu0 0
  %3142 = vmatpush1.bf16.msra.mxu0 %v3118
  %3143 = vmatprep.subr.bf16.mxu0 0
  %3144 = vmatpush1.bf16.msra.mxu0 0
  %3145 = vmatprep.subr.bf16.mxu0 0
  %3146 = vmatpush1.bf16.msra.mxu0 0
  %3147 = vmatprep.subr.bf16.mxu0 0
  %3148 = vmatpush1.bf16.msra.mxu0 0
  %3149 = vmatprep.subr.bf16.mxu0 0
  %3150 = vmatpush1.bf16.msra.mxu0 0
  %3151 = vmatprep.subr.bf16.mxu0 0
  %3152 = vmatpush1.bf16.msra.mxu0 0
  %3153 = vmatprep.subr.bf16.mxu0 0
  %3154 = vmatpush1.bf16.msra.mxu0 0
  %3155 = vmatprep.subr.bf16.mxu0 0
  %3156 = vmatpush1.bf16.msra.mxu0 0
  %3157 = vmatprep.subr.bf16.mxu0 0
  %3158 = vmatpush1.bf16.msra.mxu0 0
  %3159 = vmatprep.subr.bf16.mxu0 0
  %3160 = vmatpush1.bf16.msra.mxu0 0
  %3161 = vmatprep.subr.bf16.mxu0 0
  %3162 = vmatpush1.bf16.msra.mxu0 0
  %3163 = vmatprep.subr.bf16.mxu0 0
  %3164 = vmatpush1.bf16.msra.mxu0 0
  %3165 = vmatprep.subr.bf16.mxu0 0
  %3166 = vmatpush1.bf16.msra.mxu0 0
  %3167 = vmatprep.mubr.bf16.mxu0 0
  %3168 = vmatmul.mubr.bf16.gmra.mrb[0].mxu0 %v3124
  %v3169 = vpop.f32.mrb[0].mxu0
  %v3170 = vadd.f32 0.0, %v3169
  %v3171 = vpop.f32.mrb[0].mxu0
  %v3172 = vpop.f32.mrb[0].mxu0
  %v3173 = vadd.f32 0.0, %v3172
  %v3174 = vpop.f32.mrb[0].mxu0
  %3175 = vmatprep.mubr.bf16.mxu0 0
  %3176 = vmatmul.mubr.bf16.gmra.mrb[0].mxu0 %v3127
  %v3177 = vpop.f32.mrb[0].mxu0
  %v3178 = vadd.f32 0.0, %v3177
  %v3179 = vpop.f32.mrb[0].mxu0
  %v3180 = vpop.f32.mrb[0].mxu0
  %v3181 = vadd.f32 0.0, %v3180
  %v3182 = vpop.f32.mrb[0].mxu0
  %3183 = vmatprep.mubr.bf16.mxu0 0
  %3184 = vmatmul.mubr.bf16.gmra.mrb[0].mxu0 %v3130
  %v3185 = vpop.f32.mrb[0].mxu0
  %v3186 = vadd.f32 0.0, %v3185
  %v3187 = vpop.f32.mrb[0].mxu0
  %v3188 = vpop.f32.mrb[0].mxu0
  %v3189 = vadd.f32 0.0, %v3188
  %v3190 = vpop.f32.mrb[0].mxu0
  %3191 = vmatprep.mubr.bf16.mxu0 0
  %3192 = vmatmul.mubr.bf16.gmra.mrb[0].mxu0 %v3133
  %v3193 = vpop.f32.mrb[0].mxu0
  %v3194 = vadd.f32 0.0, %v3193
  %v3195 = vpop.f32.mrb[0].mxu0
  %v3196 = vpop.f32.mrb[0].mxu0
  %v3197 = vadd.f32 0.0, %v3196
  %v3198 = vpop.f32.mrb[0].mxu0
  %3199 = vdwg.mxu0
  %3208 = vrot.lane.b32.xlu0 %v3170, 96
  %v3209 = vpop.permute.xlu0 %3208
  %3210 = vrot.lane.b32.xlu0 %v3173, 96
  %v3211 = vpop.permute.xlu0 %3210
  %3212 = vrot.lane.b32.xlu0 %v3178, 96
  %v3213 = vpop.permute.xlu0 %3212
  %3214 = vrot.lane.b32.xlu0 %v3181, 96
  %v3215 = vpop.permute.xlu0 %3214
  %3216 = vrot.lane.b32.xlu0 %v3186, 96
  %v3217 = vpop.permute.xlu0 %3216
  %3218 = vrot.lane.b32.xlu0 %v3189, 96
  %v3219 = vpop.permute.xlu0 %3218
  %3220 = vrot.lane.b32.xlu0 %v3194, 96
  %v3221 = vpop.permute.xlu0 %3220
  %3222 = vrot.lane.b32.xlu0 %v3197, 96
  %v3223 = vpop.permute.xlu0 %3222
  %3232 = vst.msk [vmem:[#allocation2 + $0x40] sm:$0xff] %vm1975, %v3209
  %3233 = vst.msk [vmem:[#allocation2 + $0x48] sm:$0xff] %vm1975, %v3211
  %3234 = vst.msk [vmem:[#allocation2 + $0x50] sm:$0xff] %vm1975, %v3213
  %3235 = vst.msk [vmem:[#allocation2 + $0x58] sm:$0xff] %vm1975, %v3215
  %3236 = vst.msk [vmem:[#allocation2 + $0x60] sm:$0xff] %vm1975, %v3217
  %3237 = vst.msk [vmem:[#allocation2 + $0x68] sm:$0xff] %vm1975, %v3219
  %3238 = vst.msk [vmem:[#allocation2 + $0x70] sm:$0xff] %vm1975, %v3221
  %3239 = vst.msk [vmem:[#allocation2 + $0x78] sm:$0xff] %vm1975, %v3223
  %v3240 = vld [vmem:[#allocation2] sm:$0xff]
  %v3241 = vld [vmem:[#allocation2 + $0x8] sm:$0xff]
  %v3242 = vld [vmem:[#allocation2 + $0x10] sm:$0xff]
  %v3243 = vld [vmem:[#allocation2 + $0x18] sm:$0xff]
  %v3244 = vld [vmem:[#allocation2 + $0x20] sm:$0xff]
  %v3245 = vld [vmem:[#allocation2 + $0x28] sm:$0xff]
  %v3246 = vld [vmem:[#allocation2 + $0x30] sm:$0xff]
  %v3247 = vld [vmem:[#allocation2 + $0x38] sm:$0xff]
  %v3248 = vld [vmem:[#allocation2 + $0x40] sm:$0xff]
  %v3249 = vld [vmem:[#allocation2 + $0x48] sm:$0xff]
  %v3250 = vld [vmem:[#allocation2 + $0x50] sm:$0xff]
  %v3251 = vld [vmem:[#allocation2 + $0x58] sm:$0xff]
  %v3252 = vld [vmem:[#allocation2 + $0x60] sm:$0xff]
  %v3253 = vld [vmem:[#allocation2 + $0x68] sm:$0xff]
  %v3254 = vld [vmem:[#allocation2 + $0x70] sm:$0xff]
  %v3255 = vld [vmem:[#allocation2 + $0x78] sm:$0xff]
  %v3256 = vpack.c.bf16 %v3241, %v3240
  %v3257 = vpack.c.bf16 %v3243, %v3242
  %v3258 = vpack.c.bf16 %v3245, %v3244
  %v3259 = vpack.c.bf16 %v3247, %v3246
  %v3260 = vpack.c.bf16 %v3249, %v3248
  %v3261 = vpack.c.bf16 %v3251, %v3250
  %v3262 = vpack.c.bf16 %v3253, %v3252
  %v3263 = vpack.c.bf16 %v3255, %v3254
  %v3264 = vld [vmem:[%s6] sm:$0xf]
  %v3265 = vld [vmem:[%s6 + $0x4] sm:$0xf]
  %v3266 = vld [vmem:[%s6 + $0x8] sm:$0xf]
  %v3267 = vld [vmem:[%s6 + $0xc] sm:$0xf]
  %v3268 = vld [vmem:[%s6 + $0x10] sm:$0xf]
  %v3269 = vld [vmem:[%s6 + $0x14] sm:$0xf]
  %v3270 = vld [vmem:[%s6 + $0x18] sm:$0xf]
  %v3271 = vld [vmem:[%s6 + $0x1c] sm:$0xf]
  %v3272 = vld [vmem:[%s6 + $0x20] sm:$0xf]
  %v3273 = vld [vmem:[%s6 + $0x24] sm:$0xf]
  %v3274 = vld [vmem:[%s6 + $0x28] sm:$0xf]
  %v3275 = vld [vmem:[%s6 + $0x2c] sm:$0xf]
  %v3276 = vld [vmem:[%s6 + $0x30] sm:$0xf]
  %v3277 = vld [vmem:[%s6 + $0x34] sm:$0xf]
  %v3278 = vld [vmem:[%s6 + $0x38] sm:$0xf]
  %v3279 = vld [vmem:[%s6 + $0x3c] sm:$0xf]
  %v3280 = vld [vmem:[%s7] sm:$0x1]
  %v3282 = vlaneseq
  %v3283 = vshrl.u32 %v3282, 7
  %v3284 = vsub.s32 0, %v3283
  %v3285 = vrot.slane %v3280, %v3284
  %v3303 = vunpack.c.l.b16 %v3264
  %v3304 = vunpack.c.l.b16 %v3265
  %v3305 = vunpack.c.l.b16 %v3266
  %v3306 = vunpack.c.l.b16 %v3267
  %v3307 = vunpack.c.l.b16 %v3268
  %v3308 = vunpack.c.l.b16 %v3269
  %v3309 = vunpack.c.l.b16 %v3270
  %v3310 = vunpack.c.l.b16 %v3271
  %v3311 = vunpack.c.l.b16 %v3272
  %v3312 = vunpack.c.l.b16 %v3273
  %v3313 = vunpack.c.l.b16 %v3274
  %v3314 = vunpack.c.l.b16 %v3275
  %v3315 = vunpack.c.l.b16 %v3276
  %v3316 = vunpack.c.l.b16 %v3277
  %v3317 = vunpack.c.l.b16 %v3278
  %v3318 = vunpack.c.l.b16 %v3279
  %v3319 = vpack.c.b16 %v3304, %v3303
  %v3320 = vpack.c.b16 %v3306, %v3305
  %v3321 = vpack.c.b16 %v3308, %v3307
  %v3322 = vpack.c.b16 %v3310, %v3309
  %v3323 = vpack.c.b16 %v3312, %v3311
  %v3324 = vpack.c.b16 %v3314, %v3313
  %v3325 = vpack.c.b16 %v3316, %v3315
  %v3326 = vpack.c.b16 %v3318, %v3317
  %3335 = vmatprep.subr.bf16.mxu0 0
  %3336 = vmatpush1.bf16.msra.mxu0 %v3319
  %3337 = vmatprep.subr.bf16.mxu0 0
  %3338 = vmatpush1.bf16.msra.mxu0 %v3320
  %3339 = vmatprep.subr.bf16.mxu0 0
  %3340 = vmatpush1.bf16.msra.mxu0 %v3321
  %3341 = vmatprep.subr.bf16.mxu0 0
  %3342 = vmatpush1.bf16.msra.mxu0 %v3322
  %3343 = vmatprep.subr.bf16.mxu0 0
  %3344 = vmatpush1.bf16.msra.mxu0 %v3323
  %3345 = vmatprep.subr.bf16.mxu0 0
  %3346 = vmatpush1.bf16.msra.mxu0 %v3324
  %3347 = vmatprep.subr.bf16.mxu0 0
  %3348 = vmatpush1.bf16.msra.mxu0 %v3325
  %3349 = vmatprep.subr.bf16.mxu0 0
  %3350 = vmatpush1.bf16.msra.mxu0 %v3326
  %3351 = vmatprep.subr.bf16.mxu0 0
  %3352 = vmatpush1.bf16.msra.mxu0 0
  %3353 = vmatprep.subr.bf16.mxu0 0
  %3354 = vmatpush1.bf16.msra.mxu0 0
  %3355 = vmatprep.subr.bf16.mxu0 0
  %3356 = vmatpush1.bf16.msra.mxu0 0
  %3357 = vmatprep.subr.bf16.mxu0 0
  %3358 = vmatpush1.bf16.msra.mxu0 0
  %3359 = vmatprep.subr.bf16.mxu0 0
  %3360 = vmatpush1.bf16.msra.mxu0 0
  %3361 = vmatprep.subr.bf16.mxu0 0
  %3362 = vmatpush1.bf16.msra.mxu0 0
  %3363 = vmatprep.subr.bf16.mxu0 0
  %3364 = vmatpush1.bf16.msra.mxu0 0
  %3365 = vmatprep.subr.bf16.mxu0 0
  %3366 = vmatpush1.bf16.msra.mxu0 0
  %3367 = vmatprep.mubr.bf16.mxu0 0
  %3368 = vmatmul.mubr.bf16.gmra.mrb[0].mxu0 %v3256
  %v3369 = vpop.f32.mrb[0].mxu0
  %v3370 = vadd.f32 %v3285, %v3369
  %v3371 = vpop.f32.mrb[0].mxu0
  %v3372 = vpop.f32.mrb[0].mxu0
  %v3373 = vadd.f32 %v3285, %v3372
  %v3374 = vpop.f32.mrb[0].mxu0
  %3375 = vmatprep.mubr.bf16.mxu0 0
  %3376 = vmatmul.mubr.bf16.gmra.mrb[0].mxu0 %v3257
  %v3377 = vpop.f32.mrb[0].mxu0
  %v3378 = vadd.f32 %v3285, %v3377
  %v3379 = vpop.f32.mrb[0].mxu0
  %v3380 = vpop.f32.mrb[0].mxu0
  %v3381 = vadd.f32 %v3285, %v3380
  %v3382 = vpop.f32.mrb[0].mxu0
  %3383 = vmatprep.mubr.bf16.mxu0 0
  %3384 = vmatmul.mubr.bf16.gmra.mrb[0].mxu0 %v3258
  %v3385 = vpop.f32.mrb[0].mxu0
  %v3386 = vadd.f32 %v3285, %v3385
  %v3387 = vpop.f32.mrb[0].mxu0
  %v3388 = vpop.f32.mrb[0].mxu0
  %v3389 = vadd.f32 %v3285, %v3388
  %v3390 = vpop.f32.mrb[0].mxu0
  %3391 = vmatprep.mubr.bf16.mxu0 0
  %3392 = vmatmul.mubr.bf16.gmra.mrb[0].mxu0 %v3259
  %v3393 = vpop.f32.mrb[0].mxu0
  %v3394 = vadd.f32 %v3285, %v3393
  %v3395 = vpop.f32.mrb[0].mxu0
  %v3396 = vpop.f32.mrb[0].mxu0
  %v3397 = vadd.f32 %v3285, %v3396
  %v3398 = vpop.f32.mrb[0].mxu0
  %3399 = vmatprep.mubr.bf16.mxu0 0
  %3400 = vmatmul.mubr.bf16.gmra.mrb[0].mxu0 %v3260
  %v3401 = vpop.f32.mrb[0].mxu0
  %v3402 = vadd.f32 %v3285, %v3401
  %v3403 = vpop.f32.mrb[0].mxu0
  %v3404 = vpop.f32.mrb[0].mxu0
  %v3405 = vadd.f32 %v3285, %v3404
  %v3406 = vpop.f32.mrb[0].mxu0
  %3407 = vmatprep.mubr.bf16.mxu0 0
  %3408 = vmatmul.mubr.bf16.gmra.mrb[0].mxu0 %v3261
  %v3409 = vpop.f32.mrb[0].mxu0
  %v3410 = vadd.f32 %v3285, %v3409
  %v3411 = vpop.f32.mrb[0].mxu0
  %v3412 = vpop.f32.mrb[0].mxu0
  %v3413 = vadd.f32 %v3285, %v3412
  %v3414 = vpop.f32.mrb[0].mxu0
  %3415 = vmatprep.mubr.bf16.mxu0 0
  %3416 = vmatmul.mubr.bf16.gmra.mrb[0].mxu0 %v3262
  %v3417 = vpop.f32.mrb[0].mxu0
  %v3418 = vadd.f32 %v3285, %v3417
  %v3419 = vpop.f32.mrb[0].mxu0
  %v3420 = vpop.f32.mrb[0].mxu0
  %v3421 = vadd.f32 %v3285, %v3420
  %v3422 = vpop.f32.mrb[0].mxu0
  %3423 = vmatprep.mubr.bf16.mxu0 0
  %3424 = vmatmul.mubr.bf16.gmra.mrb[0].mxu0 %v3263
  %v3425 = vpop.f32.mrb[0].mxu0
  %v3426 = vadd.f32 %v3285, %v3425
  %v3427 = vpop.f32.mrb[0].mxu0
  %v3428 = vpop.f32.mrb[0].mxu0
  %v3429 = vadd.f32 %v3285, %v3428
  %v3430 = vpop.f32.mrb[0].mxu0
  %3431 = vdwg.mxu0
  %v3432 = vadd.f32 %v57, %v3370
  %v3433 = vadd.f32 %v58, %v3373
  %v3434 = vadd.f32 %v59, %v3378
  %v3435 = vadd.f32 %v60, %v3381
  %v3436 = vadd.f32 %v61, %v3386
  %v3437 = vadd.f32 %v62, %v3389
  %v3438 = vadd.f32 %v63, %v3394
  %v3439 = vadd.f32 %v64, %v3397
  %v3440 = vadd.f32 %v65, %v3402
  %v3441 = vadd.f32 %v66, %v3405
  %v3442 = vadd.f32 %v67, %v3410
  %v3443 = vadd.f32 %v68, %v3413
  %v3444 = vadd.f32 %v69, %v3418
  %v3445 = vadd.f32 %v70, %v3421
  %v3446 = vadd.f32 %v71, %v3426
  %v3447 = vadd.f32 %v72, %v3429
  %v3448 = vld [vmem:[%s8] sm:$0x1]
  %v3449 = vld [vmem:[%s9] sm:$0x1]
  %3450 = vadd.xlane.f32.xlu0 %v3432
  %v3451 = vpop.xlane.xlu0 %3450
  %3452 = vadd.xlane.f32.xlu0 %v3433
  %v3453 = vpop.xlane.xlu0 %3452
  %3454 = vadd.xlane.f32.xlu0 %v3434
  %v3455 = vpop.xlane.xlu0 %3454
  %3456 = vadd.xlane.f32.xlu0 %v3435
  %v3457 = vpop.xlane.xlu0 %3456
  %3458 = vadd.xlane.f32.xlu0 %v3436
  %v3459 = vpop.xlane.xlu0 %3458
  %3460 = vadd.xlane.f32.xlu0 %v3437
  %v3461 = vpop.xlane.xlu0 %3460
  %3462 = vadd.xlane.f32.xlu0 %v3438
  %v3463 = vpop.xlane.xlu0 %3462
  %3464 = vadd.xlane.f32.xlu0 %v3439
  %v3465 = vpop.xlane.xlu0 %3464
  %3466 = vadd.xlane.f32.xlu0 %v3440
  %v3467 = vpop.xlane.xlu0 %3466
  %3468 = vadd.xlane.f32.xlu0 %v3441
  %v3469 = vpop.xlane.xlu0 %3468
  %3470 = vadd.xlane.f32.xlu0 %v3442
  %v3471 = vpop.xlane.xlu0 %3470
  %3472 = vadd.xlane.f32.xlu0 %v3443
  %v3473 = vpop.xlane.xlu0 %3472
  %3474 = vadd.xlane.f32.xlu0 %v3444
  %v3475 = vpop.xlane.xlu0 %3474
  %3476 = vadd.xlane.f32.xlu0 %v3445
  %v3477 = vpop.xlane.xlu0 %3476
  %3478 = vadd.xlane.f32.xlu0 %v3446
  %v3479 = vpop.xlane.xlu0 %3478
  %3480 = vadd.xlane.f32.xlu0 %v3447
  %v3481 = vpop.xlane.xlu0 %3480
  %v3482 = vmul.f32 %v3451, %v115
  %v3483 = vmul.f32 %v3453, %v115
  %v3484 = vmul.f32 %v3455, %v115
  %v3485 = vmul.f32 %v3457, %v115
  %v3486 = vmul.f32 %v3459, %v115
  %v3487 = vmul.f32 %v3461, %v115
  %v3488 = vmul.f32 %v3463, %v115
  %v3489 = vmul.f32 %v3465, %v115
  %v3490 = vmul.f32 %v3467, %v115
  %v3491 = vmul.f32 %v3469, %v115
  %v3492 = vmul.f32 %v3471, %v115
  %v3493 = vmul.f32 %v3473, %v115
  %v3494 = vmul.f32 %v3475, %v115
  %v3495 = vmul.f32 %v3477, %v115
  %v3496 = vmul.f32 %v3479, %v115
  %v3497 = vmul.f32 %v3481, %v115
  %v3498 = vsub.f32 %v3432, %v3482
  %v3499 = vsub.f32 %v3433, %v3483
  %v3500 = vsub.f32 %v3434, %v3484
  %v3501 = vsub.f32 %v3435, %v3485
  %v3502 = vsub.f32 %v3436, %v3486
  %v3503 = vsub.f32 %v3437, %v3487
  %v3504 = vsub.f32 %v3438, %v3488
  %v3505 = vsub.f32 %v3439, %v3489
  %v3506 = vsub.f32 %v3440, %v3490
  %v3507 = vsub.f32 %v3441, %v3491
  %v3508 = vsub.f32 %v3442, %v3492
  %v3509 = vsub.f32 %v3443, %v3493
  %v3510 = vsub.f32 %v3444, %v3494
  %v3511 = vsub.f32 %v3445, %v3495
  %v3512 = vsub.f32 %v3446, %v3496
  %v3513 = vsub.f32 %v3447, %v3497
  %v3514 = vmul.f32 %v3498, %v3498
  %v3515 = vmul.f32 %v3499, %v3499
  %v3516 = vmul.f32 %v3500, %v3500
  %v3517 = vmul.f32 %v3501, %v3501
  %v3518 = vmul.f32 %v3502, %v3502
  %v3519 = vmul.f32 %v3503, %v3503
  %v3520 = vmul.f32 %v3504, %v3504
  %v3521 = vmul.f32 %v3505, %v3505
  %v3522 = vmul.f32 %v3506, %v3506
  %v3523 = vmul.f32 %v3507, %v3507
  %v3524 = vmul.f32 %v3508, %v3508
  %v3525 = vmul.f32 %v3509, %v3509
  %v3526 = vmul.f32 %v3510, %v3510
  %v3527 = vmul.f32 %v3511, %v3511
  %v3528 = vmul.f32 %v3512, %v3512
  %v3529 = vmul.f32 %v3513, %v3513
  %3530 = vadd.xlane.f32.xlu0 %v3514
  %v3531 = vpop.xlane.xlu0 %3530
  %3532 = vadd.xlane.f32.xlu0 %v3515
  %v3533 = vpop.xlane.xlu0 %3532
  %3534 = vadd.xlane.f32.xlu0 %v3516
  %v3535 = vpop.xlane.xlu0 %3534
  %3536 = vadd.xlane.f32.xlu0 %v3517
  %v3537 = vpop.xlane.xlu0 %3536
  %3538 = vadd.xlane.f32.xlu0 %v3518
  %v3539 = vpop.xlane.xlu0 %3538
  %3540 = vadd.xlane.f32.xlu0 %v3519
  %v3541 = vpop.xlane.xlu0 %3540
  %3542 = vadd.xlane.f32.xlu0 %v3520
  %v3543 = vpop.xlane.xlu0 %3542
  %3544 = vadd.xlane.f32.xlu0 %v3521
  %v3545 = vpop.xlane.xlu0 %3544
  %3546 = vadd.xlane.f32.xlu0 %v3522
  %v3547 = vpop.xlane.xlu0 %3546
  %3548 = vadd.xlane.f32.xlu0 %v3523
  %v3549 = vpop.xlane.xlu0 %3548
  %3550 = vadd.xlane.f32.xlu0 %v3524
  %v3551 = vpop.xlane.xlu0 %3550
  %3552 = vadd.xlane.f32.xlu0 %v3525
  %v3553 = vpop.xlane.xlu0 %3552
  %3554 = vadd.xlane.f32.xlu0 %v3526
  %v3555 = vpop.xlane.xlu0 %3554
  %3556 = vadd.xlane.f32.xlu0 %v3527
  %v3557 = vpop.xlane.xlu0 %3556
  %3558 = vadd.xlane.f32.xlu0 %v3528
  %v3559 = vpop.xlane.xlu0 %3558
  %3560 = vadd.xlane.f32.xlu0 %v3529
  %v3561 = vpop.xlane.xlu0 %3560
  %v3562 = vmul.f32 %v3531, %v115
  %v3563 = vmul.f32 %v3533, %v115
  %v3564 = vmul.f32 %v3535, %v115
  %v3565 = vmul.f32 %v3537, %v115
  %v3566 = vmul.f32 %v3539, %v115
  %v3567 = vmul.f32 %v3541, %v115
  %v3568 = vmul.f32 %v3543, %v115
  %v3569 = vmul.f32 %v3545, %v115
  %v3570 = vmul.f32 %v3547, %v115
  %v3571 = vmul.f32 %v3549, %v115
  %v3572 = vmul.f32 %v3551, %v115
  %v3573 = vmul.f32 %v3553, %v115
  %v3574 = vmul.f32 %v3555, %v115
  %v3575 = vmul.f32 %v3557, %v115
  %v3576 = vmul.f32 %v3559, %v115
  %v3577 = vmul.f32 %v3561, %v115
  %v3578 = vadd.f32 %v3562, 1e-05
  %v3579 = vadd.f32 %v3563, 1e-05
  %v3580 = vadd.f32 %v3564, 1e-05
  %v3581 = vadd.f32 %v3565, 1e-05
  %v3582 = vadd.f32 %v3566, 1e-05
  %v3583 = vadd.f32 %v3567, 1e-05
  %v3584 = vadd.f32 %v3568, 1e-05
  %v3585 = vadd.f32 %v3569, 1e-05
  %v3586 = vadd.f32 %v3570, 1e-05
  %v3587 = vadd.f32 %v3571, 1e-05
  %v3588 = vadd.f32 %v3572, 1e-05
  %v3589 = vadd.f32 %v3573, 1e-05
  %v3590 = vadd.f32 %v3574, 1e-05
  %v3591 = vadd.f32 %v3575, 1e-05
  %v3592 = vadd.f32 %v3576, 1e-05
  %v3593 = vadd.f32 %v3577, 1e-05
  %v3594 = vrsqrt.pop %v3578
  %v3595 = vrsqrt.pop %v3579
  %v3596 = vrsqrt.pop %v3580
  %v3597 = vrsqrt.pop %v3581
  %v3598 = vrsqrt.pop %v3582
  %v3599 = vrsqrt.pop %v3583
  %v3600 = vrsqrt.pop %v3584
  %v3601 = vrsqrt.pop %v3585
  %v3602 = vrsqrt.pop %v3586
  %v3603 = vrsqrt.pop %v3587
  %v3604 = vrsqrt.pop %v3588
  %v3605 = vrsqrt.pop %v3589
  %v3606 = vrsqrt.pop %v3590
  %v3607 = vrsqrt.pop %v3591
  %v3608 = vrsqrt.pop %v3592
  %v3609 = vrsqrt.pop %v3593
  %v3610 = vmul.f32 %v3498, %v3594
  %v3611 = vmul.f32 %v3499, %v3595
  %v3612 = vmul.f32 %v3500, %v3596
  %v3613 = vmul.f32 %v3501, %v3597
  %v3614 = vmul.f32 %v3502, %v3598
  %v3615 = vmul.f32 %v3503, %v3599
  %v3616 = vmul.f32 %v3504, %v3600
  %v3617 = vmul.f32 %v3505, %v3601
  %v3618 = vmul.f32 %v3506, %v3602
  %v3619 = vmul.f32 %v3507, %v3603
  %v3620 = vmul.f32 %v3508, %v3604
  %v3621 = vmul.f32 %v3509, %v3605
  %v3622 = vmul.f32 %v3510, %v3606
  %v3623 = vmul.f32 %v3511, %v3607
  %v3624 = vmul.f32 %v3512, %v3608
  %v3625 = vmul.f32 %v3513, %v3609
  %v3627 = vlaneseq
  %v3628 = vshrl.u32 %v3627, 7
  %v3629 = vsub.s32 0, %v3628
  %v3630 = vrot.slane %v3448, %v3629
  %v3632 = vmul.f32 %v3610, %v3630
  %v3633 = vmul.f32 %v3611, %v3630
  %v3634 = vmul.f32 %v3612, %v3630
  %v3635 = vmul.f32 %v3613, %v3630
  %v3636 = vmul.f32 %v3614, %v3630
  %v3637 = vmul.f32 %v3615, %v3630
  %v3638 = vmul.f32 %v3616, %v3630
  %v3639 = vmul.f32 %v3617, %v3630
  %v3640 = vmul.f32 %v3618, %v3630
  %v3641 = vmul.f32 %v3619, %v3630
  %v3642 = vmul.f32 %v3620, %v3630
  %v3643 = vmul.f32 %v3621, %v3630
  %v3644 = vmul.f32 %v3622, %v3630
  %v3645 = vmul.f32 %v3623, %v3630
  %v3646 = vmul.f32 %v3624, %v3630
  %v3647 = vmul.f32 %v3625, %v3630
  %v3649 = vlaneseq
  %v3650 = vshrl.u32 %v3649, 7
  %v3651 = vsub.s32 0, %v3650
  %v3652 = vrot.slane %v3449, %v3651
  %v3654 = vadd.f32 %v3632, %v3652
  %v3655 = vadd.f32 %v3633, %v3652
  %v3656 = vadd.f32 %v3634, %v3652
  %v3657 = vadd.f32 %v3635, %v3652
  %v3658 = vadd.f32 %v3636, %v3652
  %v3659 = vadd.f32 %v3637, %v3652
  %v3660 = vadd.f32 %v3638, %v3652
  %v3661 = vadd.f32 %v3639, %v3652
  %v3662 = vadd.f32 %v3640, %v3652
  %v3663 = vadd.f32 %v3641, %v3652
  %v3664 = vadd.f32 %v3642, %v3652
  %v3665 = vadd.f32 %v3643, %v3652
  %v3666 = vadd.f32 %v3644, %v3652
  %v3667 = vadd.f32 %v3645, %v3652
  %v3668 = vadd.f32 %v3646, %v3652
  %v3669 = vadd.f32 %v3647, %v3652
  %v3670 = vpack.c.bf16 %v3655, %v3654
  %v3671 = vpack.c.bf16 %v3657, %v3656
  %v3672 = vpack.c.bf16 %v3659, %v3658
  %v3673 = vpack.c.bf16 %v3661, %v3660
  %v3674 = vpack.c.bf16 %v3663, %v3662
  %v3675 = vpack.c.bf16 %v3665, %v3664
  %v3676 = vpack.c.bf16 %v3667, %v3666
  %v3677 = vpack.c.bf16 %v3669, %v3668
  %v3678 = vld [vmem:[%s10] sm:$0xff]
  %v3679 = vld [vmem:[%s10 + $0x8] sm:$0xff]
  %v3680 = vld [vmem:[%s10 + $0x10] sm:$0xff]
  %v3681 = vld [vmem:[%s10 + $0x18] sm:$0xff]
  %v3682 = vld [vmem:[%s10 + $0x20] sm:$0xff]
  %v3683 = vld [vmem:[%s10 + $0x28] sm:$0xff]
  %v3684 = vld [vmem:[%s10 + $0x30] sm:$0xff]
  %v3685 = vld [vmem:[%s10 + $0x38] sm:$0xff]
  %v3686 = vld [vmem:[%s10 + $0x40] sm:$0xff]
  %v3687 = vld [vmem:[%s10 + $0x48] sm:$0xff]
  %v3688 = vld [vmem:[%s10 + $0x50] sm:$0xff]
  %v3689 = vld [vmem:[%s10 + $0x58] sm:$0xff]
  %v3690 = vld [vmem:[%s10 + $0x60] sm:$0xff]
  %v3691 = vld [vmem:[%s10 + $0x68] sm:$0xff]
  %v3692 = vld [vmem:[%s10 + $0x70] sm:$0xff]
  %v3693 = vld [vmem:[%s10 + $0x78] sm:$0xff]
  %v3694 = vld [vmem:[%s10 + $0x80] sm:$0xff]
  %v3695 = vld [vmem:[%s10 + $0x88] sm:$0xff]
  %v3696 = vld [vmem:[%s10 + $0x90] sm:$0xff]
  %v3697 = vld [vmem:[%s10 + $0x98] sm:$0xff]
  %v3698 = vld [vmem:[%s10 + $0xa0] sm:$0xff]
  %v3699 = vld [vmem:[%s10 + $0xa8] sm:$0xff]
  %v3700 = vld [vmem:[%s10 + $0xb0] sm:$0xff]
  %v3701 = vld [vmem:[%s10 + $0xb8] sm:$0xff]
  %v3702 = vld [vmem:[%s10 + $0xc0] sm:$0xff]
  %v3703 = vld [vmem:[%s10 + $0xc8] sm:$0xff]
  %v3704 = vld [vmem:[%s10 + $0xd0] sm:$0xff]
  %v3705 = vld [vmem:[%s10 + $0xd8] sm:$0xff]
  %v3706 = vld [vmem:[%s10 + $0xe0] sm:$0xff]
  %v3707 = vld [vmem:[%s10 + $0xe8] sm:$0xff]
  %v3708 = vld [vmem:[%s10 + $0xf0] sm:$0xff]
  %v3709 = vld [vmem:[%s10 + $0xf8] sm:$0xff]
  %v3710 = vld [vmem:[%s11] sm:$0xf]
  %v3712 = vlaneseq
  %v3713 = vshrl.u32 %v3712, 7
  %v3714 = vsub.s32 0, %v3713
  %v3715 = vrot.slane %v3710, %v3714
  %v3716 = vlaneseq
  %v3717 = vshrl.u32 %v3716, 7
  %v3718 = vsub.s32 1, %v3717
  %v3719 = vrot.slane %v3710, %v3718
  %v3720 = vlaneseq
  %v3721 = vshrl.u32 %v3720, 7
  %v3722 = vsub.s32 2, %v3721
  %v3723 = vrot.slane %v3710, %v3722
  %v3724 = vlaneseq
  %v3725 = vshrl.u32 %v3724, 7
  %v3726 = vsub.s32 3, %v3725
  %v3727 = vrot.slane %v3710, %v3726
  %v3764 = vunpack.c.l.b16 %v3678
  %v3765 = vunpack.c.h.b16 %v3678
  %v3766 = vunpack.c.l.b16 %v3679
  %v3767 = vunpack.c.h.b16 %v3679
  %v3768 = vunpack.c.l.b16 %v3680
  %v3769 = vunpack.c.h.b16 %v3680
  %v3770 = vunpack.c.l.b16 %v3681
  %v3771 = vunpack.c.h.b16 %v3681
  %v3772 = vunpack.c.l.b16 %v3682
  %v3773 = vunpack.c.h.b16 %v3682
  %v3774 = vunpack.c.l.b16 %v3683
  %v3775 = vunpack.c.h.b16 %v3683
  %v3776 = vunpack.c.l.b16 %v3684
  %v3777 = vunpack.c.h.b16 %v3684
  %v3778 = vunpack.c.l.b16 %v3685
  %v3779 = vunpack.c.h.b16 %v3685
  %v3780 = vunpack.c.l.b16 %v3686
  %v3781 = vunpack.c.h.b16 %v3686
  %v3782 = vunpack.c.l.b16 %v3687
  %v3783 = vunpack.c.h.b16 %v3687
  %v3784 = vunpack.c.l.b16 %v3688
  %v3785 = vunpack.c.h.b16 %v3688
  %v3786 = vunpack.c.l.b16 %v3689
  %v3787 = vunpack.c.h.b16 %v3689
  %v3788 = vunpack.c.l.b16 %v3690
  %v3789 = vunpack.c.h.b16 %v3690
  %v3790 = vunpack.c.l.b16 %v3691
  %v3791 = vunpack.c.h.b16 %v3691
  %v3792 = vunpack.c.l.b16 %v3692
  %v3793 = vunpack.c.h.b16 %v3692
  %v3794 = vunpack.c.l.b16 %v3693
  %v3795 = vunpack.c.h.b16 %v3693
  %v3796 = vunpack.c.l.b16 %v3694
  %v3797 = vunpack.c.h.b16 %v3694
  %v3798 = vunpack.c.l.b16 %v3695
  %v3799 = vunpack.c.h.b16 %v3695
  %v3800 = vunpack.c.l.b16 %v3696
  %v3801 = vunpack.c.h.b16 %v3696
  %v3802 = vunpack.c.l.b16 %v3697
  %v3803 = vunpack.c.h.b16 %v3697
  %v3804 = vunpack.c.l.b16 %v3698
  %v3805 = vunpack.c.h.b16 %v3698
  %v3806 = vunpack.c.l.b16 %v3699
  %v3807 = vunpack.c.h.b16 %v3699
  %v3808 = vunpack.c.l.b16 %v3700
  %v3809 = vunpack.c.h.b16 %v3700
  %v3810 = vunpack.c.l.b16 %v3701
  %v3811 = vunpack.c.h.b16 %v3701
  %v3812 = vunpack.c.l.b16 %v3702
  %v3813 = vunpack.c.h.b16 %v3702
  %v3814 = vunpack.c.l.b16 %v3703
  %v3815 = vunpack.c.h.b16 %v3703
  %v3816 = vunpack.c.l.b16 %v3704
  %v3817 = vunpack.c.h.b16 %v3704
  %v3818 = vunpack.c.l.b16 %v3705
  %v3819 = vunpack.c.h.b16 %v3705
  %v3820 = vunpack.c.l.b16 %v3706
  %v3821 = vunpack.c.h.b16 %v3706
  %v3822 = vunpack.c.l.b16 %v3707
  %v3823 = vunpack.c.h.b16 %v3707
  %v3824 = vunpack.c.l.b16 %v3708
  %v3825 = vunpack.c.h.b16 %v3708
  %v3826 = vunpack.c.l.b16 %v3709
  %v3827 = vunpack.c.h.b16 %v3709
  %v3828 = vpack.c.b16 %v3768, %v3764
  %v3829 = vpack.c.b16 %v3769, %v3765
  %v3830 = vpack.c.b16 %v3770, %v3766
  %v3831 = vpack.c.b16 %v3771, %v3767
  %v3832 = vpack.c.b16 %v3776, %v3772
  %v3833 = vpack.c.b16 %v3777, %v3773
  %v3834 = vpack.c.b16 %v3778, %v3774
  %v3835 = vpack.c.b16 %v3779, %v3775
  %v3836 = vpack.c.b16 %v3784, %v3780
  %v3837 = vpack.c.b16 %v3785, %v3781
  %v3838 = vpack.c.b16 %v3786, %v3782
  %v3839 = vpack.c.b16 %v3787, %v3783
  %v3840 = vpack.c.b16 %v3792, %v3788
  %v3841 = vpack.c.b16 %v3793, %v3789
  %v3842 = vpack.c.b16 %v3794, %v3790
  %v3843 = vpack.c.b16 %v3795, %v3791
  %v3844 = vpack.c.b16 %v3800, %v3796
  %v3845 = vpack.c.b16 %v3801, %v3797
  %v3846 = vpack.c.b16 %v3802, %v3798
  %v3847 = vpack.c.b16 %v3803, %v3799
  %v3848 = vpack.c.b16 %v3808, %v3804
  %v3849 = vpack.c.b16 %v3809, %v3805
  %v3850 = vpack.c.b16 %v3810, %v3806
  %v3851 = vpack.c.b16 %v3811, %v3807
  %v3852 = vpack.c.b16 %v3816, %v3812
  %v3853 = vpack.c.b16 %v3817, %v3813
  %v3854 = vpack.c.b16 %v3818, %v3814
  %v3855 = vpack.c.b16 %v3819, %v3815
  %v3856 = vpack.c.b16 %v3824, %v3820
  %v3857 = vpack.c.b16 %v3825, %v3821
  %v3858 = vpack.c.b16 %v3826, %v3822
  %v3859 = vpack.c.b16 %v3827, %v3823
  %3892 = vmatprep.subr.bf16.mxu0 %v3829
  %3893 = vmatpush1.bf16.msra.mxu0 %v3828
  %3894 = vmatprep.subr.bf16.mxu0 %v3833
  %3895 = vmatpush1.bf16.msra.mxu0 %v3832
  %3896 = vmatprep.subr.bf16.mxu0 %v3837
  %3897 = vmatpush1.bf16.msra.mxu0 %v3836
  %3898 = vmatprep.subr.bf16.mxu0 %v3841
  %3899 = vmatpush1.bf16.msra.mxu0 %v3840
  %3900 = vmatprep.subr.bf16.mxu0 %v3845
  %3901 = vmatpush1.bf16.msra.mxu0 %v3844
  %3902 = vmatprep.subr.bf16.mxu0 %v3849
  %3903 = vmatpush1.bf16.msra.mxu0 %v3848
  %3904 = vmatprep.subr.bf16.mxu0 %v3853
  %3905 = vmatpush1.bf16.msra.mxu0 %v3852
  %3906 = vmatprep.subr.bf16.mxu0 %v3857
  %3907 = vmatpush1.bf16.msra.mxu0 %v3856
  %3908 = vmatprep.subr.bf16.mxu0 0
  %3909 = vmatpush1.bf16.msra.mxu0 0
  %3910 = vmatprep.subr.bf16.mxu0 0
  %3911 = vmatpush1.bf16.msra.mxu0 0
  %3912 = vmatprep.subr.bf16.mxu0 0
  %3913 = vmatpush1.bf16.msra.mxu0 0
  %3914 = vmatprep.subr.bf16.mxu0 0
  %3915 = vmatpush1.bf16.msra.mxu0 0
  %3916 = vmatprep.subr.bf16.mxu0 0
  %3917 = vmatpush1.bf16.msra.mxu0 0
  %3918 = vmatprep.subr.bf16.mxu0 0
  %3919 = vmatpush1.bf16.msra.mxu0 0
  %3920 = vmatprep.subr.bf16.mxu0 0
  %3921 = vmatpush1.bf16.msra.mxu0 0
  %3922 = vmatprep.subr.bf16.mxu0 0
  %3923 = vmatpush1.bf16.msra.mxu0 0
  %3924 = vmatprep.mubr.bf16.mxu0 0
  %3925 = vmatmul.mubr.bf16.gmra.mrb[0].mxu0 %v3670
  %v3926 = vpop.f32.mrb[0].mxu0
  %v3927 = vadd.f32 %v3715, %v3926
  %v3928 = vpop.f32.mrb[0].mxu0
  %v3929 = vadd.f32 %v3719, %v3928
  %v3930 = vpop.f32.mrb[0].mxu0
  %v3931 = vadd.f32 %v3715, %v3930
  %v3932 = vpop.f32.mrb[0].mxu0
  %v3933 = vadd.f32 %v3719, %v3932
  %3934 = vmatprep.mubr.bf16.mxu0 0
  %3935 = vmatmul.mubr.bf16.gmra.mrb[0].mxu0 %v3671
  %v3936 = vpop.f32.mrb[0].mxu0
  %v3937 = vadd.f32 %v3715, %v3936
  %v3938 = vpop.f32.mrb[0].mxu0
  %v3939 = vadd.f32 %v3719, %v3938
  %v3940 = vpop.f32.mrb[0].mxu0
  %v3941 = vadd.f32 %v3715, %v3940
  %v3942 = vpop.f32.mrb[0].mxu0
  %v3943 = vadd.f32 %v3719, %v3942
  %3944 = vmatprep.mubr.bf16.mxu0 0
  %3945 = vmatmul.mubr.bf16.gmra.mrb[0].mxu0 %v3672
  %v3946 = vpop.f32.mrb[0].mxu0
  %v3947 = vadd.f32 %v3715, %v3946
  %v3948 = vpop.f32.mrb[0].mxu0
  %v3949 = vadd.f32 %v3719, %v3948
  %v3950 = vpop.f32.mrb[0].mxu0
  %v3951 = vadd.f32 %v3715, %v3950
  %v3952 = vpop.f32.mrb[0].mxu0
  %v3953 = vadd.f32 %v3719, %v3952
  %3954 = vmatprep.mubr.bf16.mxu0 0
  %3955 = vmatmul.mubr.bf16.gmra.mrb[0].mxu0 %v3673
  %v3956 = vpop.f32.mrb[0].mxu0
  %v3957 = vadd.f32 %v3715, %v3956
  %v3958 = vpop.f32.mrb[0].mxu0
  %v3959 = vadd.f32 %v3719, %v3958
  %v3960 = vpop.f32.mrb[0].mxu0
  %v3961 = vadd.f32 %v3715, %v3960
  %v3962 = vpop.f32.mrb[0].mxu0
  %v3963 = vadd.f32 %v3719, %v3962
  %3964 = vmatprep.mubr.bf16.mxu0 0
  %3965 = vmatmul.mubr.bf16.gmra.mrb[0].mxu0 %v3674
  %v3966 = vpop.f32.mrb[0].mxu0
  %v3967 = vadd.f32 %v3715, %v3966
  %v3968 = vpop.f32.mrb[0].mxu0
  %v3969 = vadd.f32 %v3719, %v3968
  %v3970 = vpop.f32.mrb[0].mxu0
  %v3971 = vadd.f32 %v3715, %v3970
  %v3972 = vpop.f32.mrb[0].mxu0
  %v3973 = vadd.f32 %v3719, %v3972
  %3974 = vmatprep.mubr.bf16.mxu0 0
  %3975 = vmatmul.mubr.bf16.gmra.mrb[0].mxu0 %v3675
  %v3976 = vpop.f32.mrb[0].mxu0
  %v3977 = vadd.f32 %v3715, %v3976
  %v3978 = vpop.f32.mrb[0].mxu0
  %v3979 = vadd.f32 %v3719, %v3978
  %v3980 = vpop.f32.mrb[0].mxu0
  %v3981 = vadd.f32 %v3715, %v3980
  %v3982 = vpop.f32.mrb[0].mxu0
  %v3983 = vadd.f32 %v3719, %v3982
  %3984 = vmatprep.mubr.bf16.mxu0 0
  %3985 = vmatmul.mubr.bf16.gmra.mrb[0].mxu0 %v3676
  %v3986 = vpop.f32.mrb[0].mxu0
  %v3987 = vadd.f32 %v3715, %v3986
  %v3988 = vpop.f32.mrb[0].mxu0
  %v3989 = vadd.f32 %v3719, %v3988
  %v3990 = vpop.f32.mrb[0].mxu0
  %v3991 = vadd.f32 %v3715, %v3990
  %v3992 = vpop.f32.mrb[0].mxu0
  %v3993 = vadd.f32 %v3719, %v3992
  %3994 = vmatprep.mubr.bf16.mxu0 0
  %3995 = vmatmul.mubr.bf16.gmra.mrb[0].mxu0 %v3677
  %v3996 = vpop.f32.mrb[0].mxu0
  %v3997 = vadd.f32 %v3715, %v3996
  %v3998 = vpop.f32.mrb[0].mxu0
  %v3999 = vadd.f32 %v3719, %v3998
  %v4000 = vpop.f32.mrb[0].mxu0
  %v4001 = vadd.f32 %v3715, %v4000
  %v4002 = vpop.f32.mrb[0].mxu0
  %v4003 = vadd.f32 %v3719, %v4002
  %4004 = vdwg.mxu0
  %4005 = vmatprep.subr.bf16.mxu0 %v3831
  %4006 = vmatpush1.bf16.msra.mxu0 %v3830
  %4007 = vmatprep.subr.bf16.mxu0 %v3835
  %4008 = vmatpush1.bf16.msra.mxu0 %v3834
  %4009 = vmatprep.subr.bf16.mxu0 %v3839
  %4010 = vmatpush1.bf16.msra.mxu0 %v3838
  %4011 = vmatprep.subr.bf16.mxu0 %v3843
  %4012 = vmatpush1.bf16.msra.mxu0 %v3842
  %4013 = vmatprep.subr.bf16.mxu0 %v3847
  %4014 = vmatpush1.bf16.msra.mxu0 %v3846
  %4015 = vmatprep.subr.bf16.mxu0 %v3851
  %4016 = vmatpush1.bf16.msra.mxu0 %v3850
  %4017 = vmatprep.subr.bf16.mxu0 %v3855
  %4018 = vmatpush1.bf16.msra.mxu0 %v3854
  %4019 = vmatprep.subr.bf16.mxu0 %v3859
  %4020 = vmatpush1.bf16.msra.mxu0 %v3858
  %4021 = vmatprep.subr.bf16.mxu0 0
  %4022 = vmatpush1.bf16.msra.mxu0 0
  %4023 = vmatprep.subr.bf16.mxu0 0
  %4024 = vmatpush1.bf16.msra.mxu0 0
  %4025 = vmatprep.subr.bf16.mxu0 0
  %4026 = vmatpush1.bf16.msra.mxu0 0
  %4027 = vmatprep.subr.bf16.mxu0 0
  %4028 = vmatpush1.bf16.msra.mxu0 0
  %4029 = vmatprep.subr.bf16.mxu0 0
  %4030 = vmatpush1.bf16.msra.mxu0 0
  %4031 = vmatprep.subr.bf16.mxu0 0
  %4032 = vmatpush1.bf16.msra.mxu0 0
  %4033 = vmatprep.subr.bf16.mxu0 0
  %4034 = vmatpush1.bf16.msra.mxu0 0
  %4035 = vmatprep.subr.bf16.mxu0 0
  %4036 = vmatpush1.bf16.msra.mxu0 0
  %4037 = vmatprep.mubr.bf16.mxu0 0
  %4038 = vmatmul.mubr.bf16.gmra.mrb[0].mxu0 %v3670
  %v4039 = vpop.f32.mrb[0].mxu0
  %v4040 = vadd.f32 %v3723, %v4039
  %v4041 = vpop.f32.mrb[0].mxu0
  %v4042 = vadd.f32 %v3727, %v4041
  %v4043 = vpop.f32.mrb[0].mxu0
  %v4044 = vadd.f32 %v3723, %v4043
  %v4045 = vpop.f32.mrb[0].mxu0
  %v4046 = vadd.f32 %v3727, %v4045
  %4047 = vmatprep.mubr.bf16.mxu0 0
  %4048 = vmatmul.mubr.bf16.gmra.mrb[0].mxu0 %v3671
  %v4049 = vpop.f32.mrb[0].mxu0
  %v4050 = vadd.f32 %v3723, %v4049
  %v4051 = vpop.f32.mrb[0].mxu0
  %v4052 = vadd.f32 %v3727, %v4051
  %v4053 = vpop.f32.mrb[0].mxu0
  %v4054 = vadd.f32 %v3723, %v4053
  %v4055 = vpop.f32.mrb[0].mxu0
  %v4056 = vadd.f32 %v3727, %v4055
  %4057 = vmatprep.mubr.bf16.mxu0 0
  %4058 = vmatmul.mubr.bf16.gmra.mrb[0].mxu0 %v3672
  %v4059 = vpop.f32.mrb[0].mxu0
  %v4060 = vadd.f32 %v3723, %v4059
  %v4061 = vpop.f32.mrb[0].mxu0
  %v4062 = vadd.f32 %v3727, %v4061
  %v4063 = vpop.f32.mrb[0].mxu0
  %v4064 = vadd.f32 %v3723, %v4063
  %v4065 = vpop.f32.mrb[0].mxu0
  %v4066 = vadd.f32 %v3727, %v4065
  %4067 = vmatprep.mubr.bf16.mxu0 0
  %4068 = vmatmul.mubr.bf16.gmra.mrb[0].mxu0 %v3673
  %v4069 = vpop.f32.mrb[0].mxu0
  %v4070 = vadd.f32 %v3723, %v4069
  %v4071 = vpop.f32.mrb[0].mxu0
  %v4072 = vadd.f32 %v3727, %v4071
  %v4073 = vpop.f32.mrb[0].mxu0
  %v4074 = vadd.f32 %v3723, %v4073
  %v4075 = vpop.f32.mrb[0].mxu0
  %v4076 = vadd.f32 %v3727, %v4075
  %4077 = vmatprep.mubr.bf16.mxu0 0
  %4078 = vmatmul.mubr.bf16.gmra.mrb[0].mxu0 %v3674
  %v4079 = vpop.f32.mrb[0].mxu0
  %v4080 = vadd.f32 %v3723, %v4079
  %v4081 = vpop.f32.mrb[0].mxu0
  %v4082 = vadd.f32 %v3727, %v4081
  %v4083 = vpop.f32.mrb[0].mxu0
  %v4084 = vadd.f32 %v3723, %v4083
  %v4085 = vpop.f32.mrb[0].mxu0
  %v4086 = vadd.f32 %v3727, %v4085
  %4087 = vmatprep.mubr.bf16.mxu0 0
  %4088 = vmatmul.mubr.bf16.gmra.mrb[0].mxu0 %v3675
  %v4089 = vpop.f32.mrb[0].mxu0
  %v4090 = vadd.f32 %v3723, %v4089
  %v4091 = vpop.f32.mrb[0].mxu0
  %v4092 = vadd.f32 %v3727, %v4091
  %v4093 = vpop.f32.mrb[0].mxu0
  %v4094 = vadd.f32 %v3723, %v4093
  %v4095 = vpop.f32.mrb[0].mxu0
  %v4096 = vadd.f32 %v3727, %v4095
  %4097 = vmatprep.mubr.bf16.mxu0 0
  %4098 = vmatmul.mubr.bf16.gmra.mrb[0].mxu0 %v3676
  %v4099 = vpop.f32.mrb[0].mxu0
  %v4100 = vadd.f32 %v3723, %v4099
  %v4101 = vpop.f32.mrb[0].mxu0
  %v4102 = vadd.f32 %v3727, %v4101
  %v4103 = vpop.f32.mrb[0].mxu0
  %v4104 = vadd.f32 %v3723, %v4103
  %v4105 = vpop.f32.mrb[0].mxu0
  %v4106 = vadd.f32 %v3727, %v4105
  %4107 = vmatprep.mubr.bf16.mxu0 0
  %4108 = vmatmul.mubr.bf16.gmra.mrb[0].mxu0 %v3677
  %v4109 = vpop.f32.mrb[0].mxu0
  %v4110 = vadd.f32 %v3723, %v4109
  %v4111 = vpop.f32.mrb[0].mxu0
  %v4112 = vadd.f32 %v3727, %v4111
  %v4113 = vpop.f32.mrb[0].mxu0
  %v4114 = vadd.f32 %v3723, %v4113
  %v4115 = vpop.f32.mrb[0].mxu0
  %v4116 = vadd.f32 %v3727, %v4115
  %4117 = vdwg.mxu0
  %v4118 = vmul.f32 %v3927, 0.5
  %v4119 = vmul.f32 %v3929, 0.5
  %v4120 = vmul.f32 %v4040, 0.5
  %v4121 = vmul.f32 %v4042, 0.5
  %v4122 = vmul.f32 %v3931, 0.5
  %v4123 = vmul.f32 %v3933, 0.5
  %v4124 = vmul.f32 %v4044, 0.5
  %v4125 = vmul.f32 %v4046, 0.5
  %v4126 = vmul.f32 %v3937, 0.5
  %v4127 = vmul.f32 %v3939, 0.5
  %v4128 = vmul.f32 %v4050, 0.5
  %v4129 = vmul.f32 %v4052, 0.5
  %v4130 = vmul.f32 %v3941, 0.5
  %v4131 = vmul.f32 %v3943, 0.5
  %v4132 = vmul.f32 %v4054, 0.5
  %v4133 = vmul.f32 %v4056, 0.5
  %v4134 = vmul.f32 %v3947, 0.5
  %v4135 = vmul.f32 %v3949, 0.5
  %v4136 = vmul.f32 %v4060, 0.5
  %v4137 = vmul.f32 %v4062, 0.5
  %v4138 = vmul.f32 %v3951, 0.5
  %v4139 = vmul.f32 %v3953, 0.5
  %v4140 = vmul.f32 %v4064, 0.5
  %v4141 = vmul.f32 %v4066, 0.5
  %v4142 = vmul.f32 %v3957, 0.5
  %v4143 = vmul.f32 %v3959, 0.5
  %v4144 = vmul.f32 %v4070, 0.5
  %v4145 = vmul.f32 %v4072, 0.5
  %v4146 = vmul.f32 %v3961, 0.5
  %v4147 = vmul.f32 %v3963, 0.5
  %v4148 = vmul.f32 %v4074, 0.5
  %v4149 = vmul.f32 %v4076, 0.5
  %v4150 = vmul.f32 %v3967, 0.5
  %v4151 = vmul.f32 %v3969, 0.5
  %v4152 = vmul.f32 %v4080, 0.5
  %v4153 = vmul.f32 %v4082, 0.5
  %v4154 = vmul.f32 %v3971, 0.5
  %v4155 = vmul.f32 %v3973, 0.5
  %v4156 = vmul.f32 %v4084, 0.5
  %v4157 = vmul.f32 %v4086, 0.5
  %v4158 = vmul.f32 %v3977, 0.5
  %v4159 = vmul.f32 %v3979, 0.5
  %v4160 = vmul.f32 %v4090, 0.5
  %v4161 = vmul.f32 %v4092, 0.5
  %v4162 = vmul.f32 %v3981, 0.5
  %v4163 = vmul.f32 %v3983, 0.5
  %v4164 = vmul.f32 %v4094, 0.5
  %v4165 = vmul.f32 %v4096, 0.5
  %v4166 = vmul.f32 %v3987, 0.5
  %v4167 = vmul.f32 %v3989, 0.5
  %v4168 = vmul.f32 %v4100, 0.5
  %v4169 = vmul.f32 %v4102, 0.5
  %v4170 = vmul.f32 %v3991, 0.5
  %v4171 = vmul.f32 %v3993, 0.5
  %v4172 = vmul.f32 %v4104, 0.5
  %v4173 = vmul.f32 %v4106, 0.5
  %v4174 = vmul.f32 %v3997, 0.5
  %v4175 = vmul.f32 %v3999, 0.5
  %v4176 = vmul.f32 %v4110, 0.5
  %v4177 = vmul.f32 %v4112, 0.5
  %v4178 = vmul.f32 %v4001, 0.5
  %v4179 = vmul.f32 %v4003, 0.5
  %v4180 = vmul.f32 %v4114, 0.5
  %v4181 = vmul.f32 %v4116, 0.5
  %v4182 = vmul.f32 %v3927, 0.044715
  %v4183 = vmul.f32 %v3929, 0.044715
  %v4184 = vmul.f32 %v4040, 0.044715
  %v4185 = vmul.f32 %v4042, 0.044715
  %v4186 = vmul.f32 %v3931, 0.044715
  %v4187 = vmul.f32 %v3933, 0.044715
  %v4188 = vmul.f32 %v4044, 0.044715
  %v4189 = vmul.f32 %v4046, 0.044715
  %v4190 = vmul.f32 %v3937, 0.044715
  %v4191 = vmul.f32 %v3939, 0.044715
  %v4192 = vmul.f32 %v4050, 0.044715
  %v4193 = vmul.f32 %v4052, 0.044715
  %v4194 = vmul.f32 %v3941, 0.044715
  %v4195 = vmul.f32 %v3943, 0.044715
  %v4196 = vmul.f32 %v4054, 0.044715
  %v4197 = vmul.f32 %v4056, 0.044715
  %v4198 = vmul.f32 %v3947, 0.044715
  %v4199 = vmul.f32 %v3949, 0.044715
  %v4200 = vmul.f32 %v4060, 0.044715
  %v4201 = vmul.f32 %v4062, 0.044715
  %v4202 = vmul.f32 %v3951, 0.044715
  %v4203 = vmul.f32 %v3953, 0.044715
  %v4204 = vmul.f32 %v4064, 0.044715
  %v4205 = vmul.f32 %v4066, 0.044715
  %v4206 = vmul.f32 %v3957, 0.044715
  %v4207 = vmul.f32 %v3959, 0.044715
  %v4208 = vmul.f32 %v4070, 0.044715
  %v4209 = vmul.f32 %v4072, 0.044715
  %v4210 = vmul.f32 %v3961, 0.044715
  %v4211 = vmul.f32 %v3963, 0.044715
  %v4212 = vmul.f32 %v4074, 0.044715
  %v4213 = vmul.f32 %v4076, 0.044715
  %v4214 = vmul.f32 %v3967, 0.044715
  %v4215 = vmul.f32 %v3969, 0.044715
  %v4216 = vmul.f32 %v4080, 0.044715
  %v4217 = vmul.f32 %v4082, 0.044715
  %v4218 = vmul.f32 %v3971, 0.044715
  %v4219 = vmul.f32 %v3973, 0.044715
  %v4220 = vmul.f32 %v4084, 0.044715
  %v4221 = vmul.f32 %v4086, 0.044715
  %v4222 = vmul.f32 %v3977, 0.044715
  %v4223 = vmul.f32 %v3979, 0.044715
  %v4224 = vmul.f32 %v4090, 0.044715
  %v4225 = vmul.f32 %v4092, 0.044715
  %v4226 = vmul.f32 %v3981, 0.044715
  %v4227 = vmul.f32 %v3983, 0.044715
  %v4228 = vmul.f32 %v4094, 0.044715
  %v4229 = vmul.f32 %v4096, 0.044715
  %v4230 = vmul.f32 %v3987, 0.044715
  %v4231 = vmul.f32 %v3989, 0.044715
  %v4232 = vmul.f32 %v4100, 0.044715
  %v4233 = vmul.f32 %v4102, 0.044715
  %v4234 = vmul.f32 %v3991, 0.044715
  %v4235 = vmul.f32 %v3993, 0.044715
  %v4236 = vmul.f32 %v4104, 0.044715
  %v4237 = vmul.f32 %v4106, 0.044715
  %v4238 = vmul.f32 %v3997, 0.044715
  %v4239 = vmul.f32 %v3999, 0.044715
  %v4240 = vmul.f32 %v4110, 0.044715
  %v4241 = vmul.f32 %v4112, 0.044715
  %v4242 = vmul.f32 %v4001, 0.044715
  %v4243 = vmul.f32 %v4003, 0.044715
  %v4244 = vmul.f32 %v4114, 0.044715
  %v4245 = vmul.f32 %v4116, 0.044715
  %v4246 = vmul.f32 %v4182, %v3927
  %v4247 = vmul.f32 %v4183, %v3929
  %v4248 = vmul.f32 %v4184, %v4040
  %v4249 = vmul.f32 %v4185, %v4042
  %v4250 = vmul.f32 %v4186, %v3931
  %v4251 = vmul.f32 %v4187, %v3933
  %v4252 = vmul.f32 %v4188, %v4044
  %v4253 = vmul.f32 %v4189, %v4046
  %v4254 = vmul.f32 %v4190, %v3937
  %v4255 = vmul.f32 %v4191, %v3939
  %v4256 = vmul.f32 %v4192, %v4050
  %v4257 = vmul.f32 %v4193, %v4052
  %v4258 = vmul.f32 %v4194, %v3941
  %v4259 = vmul.f32 %v4195, %v3943
  %v4260 = vmul.f32 %v4196, %v4054
  %v4261 = vmul.f32 %v4197, %v4056
  %v4262 = vmul.f32 %v4198, %v3947
  %v4263 = vmul.f32 %v4199, %v3949
  %v4264 = vmul.f32 %v4200, %v4060
  %v4265 = vmul.f32 %v4201, %v4062
  %v4266 = vmul.f32 %v4202, %v3951
  %v4267 = vmul.f32 %v4203, %v3953
  %v4268 = vmul.f32 %v4204, %v4064
  %v4269 = vmul.f32 %v4205, %v4066
  %v4270 = vmul.f32 %v4206, %v3957
  %v4271 = vmul.f32 %v4207, %v3959
  %v4272 = vmul.f32 %v4208, %v4070
  %v4273 = vmul.f32 %v4209, %v4072
  %v4274 = vmul.f32 %v4210, %v3961
  %v4275 = vmul.f32 %v4211, %v3963
  %v4276 = vmul.f32 %v4212, %v4074
  %v4277 = vmul.f32 %v4213, %v4076
  %v4278 = vmul.f32 %v4214, %v3967
  %v4279 = vmul.f32 %v4215, %v3969
  %v4280 = vmul.f32 %v4216, %v4080
  %v4281 = vmul.f32 %v4217, %v4082
  %v4282 = vmul.f32 %v4218, %v3971
  %v4283 = vmul.f32 %v4219, %v3973
  %v4284 = vmul.f32 %v4220, %v4084
  %v4285 = vmul.f32 %v4221, %v4086
  %v4286 = vmul.f32 %v4222, %v3977
  %v4287 = vmul.f32 %v4223, %v3979
  %v4288 = vmul.f32 %v4224, %v4090
  %v4289 = vmul.f32 %v4225, %v4092
  %v4290 = vmul.f32 %v4226, %v3981
  %v4291 = vmul.f32 %v4227, %v3983
  %v4292 = vmul.f32 %v4228, %v4094
  %v4293 = vmul.f32 %v4229, %v4096
  %v4294 = vmul.f32 %v4230, %v3987
  %v4295 = vmul.f32 %v4231, %v3989
  %v4296 = vmul.f32 %v4232, %v4100
  %v4297 = vmul.f32 %v4233, %v4102
  %v4298 = vmul.f32 %v4234, %v3991
  %v4299 = vmul.f32 %v4235, %v3993
  %v4300 = vmul.f32 %v4236, %v4104
  %v4301 = vmul.f32 %v4237, %v4106
  %v4302 = vmul.f32 %v4238, %v3997
  %v4303 = vmul.f32 %v4239, %v3999
  %v4304 = vmul.f32 %v4240, %v4110
  %v4305 = vmul.f32 %v4241, %v4112
  %v4306 = vmul.f32 %v4242, %v4001
  %v4307 = vmul.f32 %v4243, %v4003
  %v4308 = vmul.f32 %v4244, %v4114
  %v4309 = vmul.f32 %v4245, %v4116
  %v4310 = vmul.f32 %v4246, %v3927
  %v4311 = vmul.f32 %v4247, %v3929
  %v4312 = vmul.f32 %v4248, %v4040
  %v4313 = vmul.f32 %v4249, %v4042
  %v4314 = vmul.f32 %v4250, %v3931
  %v4315 = vmul.f32 %v4251, %v3933
  %v4316 = vmul.f32 %v4252, %v4044
  %v4317 = vmul.f32 %v4253, %v4046
  %v4318 = vmul.f32 %v4254, %v3937
  %v4319 = vmul.f32 %v4255, %v3939
  %v4320 = vmul.f32 %v4256, %v4050
  %v4321 = vmul.f32 %v4257, %v4052
  %v4322 = vmul.f32 %v4258, %v3941
  %v4323 = vmul.f32 %v4259, %v3943
  %v4324 = vmul.f32 %v4260, %v4054
  %v4325 = vmul.f32 %v4261, %v4056
  %v4326 = vmul.f32 %v4262, %v3947
  %v4327 = vmul.f32 %v4263, %v3949
  %v4328 = vmul.f32 %v4264, %v4060
  %v4329 = vmul.f32 %v4265, %v4062
  %v4330 = vmul.f32 %v4266, %v3951
  %v4331 = vmul.f32 %v4267, %v3953
  %v4332 = vmul.f32 %v4268, %v4064
  %v4333 = vmul.f32 %v4269, %v4066
  %v4334 = vmul.f32 %v4270, %v3957
  %v4335 = vmul.f32 %v4271, %v3959
  %v4336 = vmul.f32 %v4272, %v4070
  %v4337 = vmul.f32 %v4273, %v4072
  %v4338 = vmul.f32 %v4274, %v3961
  %v4339 = vmul.f32 %v4275, %v3963
  %v4340 = vmul.f32 %v4276, %v4074
  %v4341 = vmul.f32 %v4277, %v4076
  %v4342 = vmul.f32 %v4278, %v3967
  %v4343 = vmul.f32 %v4279, %v3969
  %v4344 = vmul.f32 %v4280, %v4080
  %v4345 = vmul.f32 %v4281, %v4082
  %v4346 = vmul.f32 %v4282, %v3971
  %v4347 = vmul.f32 %v4283, %v3973
  %v4348 = vmul.f32 %v4284, %v4084
  %v4349 = vmul.f32 %v4285, %v4086
  %v4350 = vmul.f32 %v4286, %v3977
  %v4351 = vmul.f32 %v4287, %v3979
  %v4352 = vmul.f32 %v4288, %v4090
  %v4353 = vmul.f32 %v4289, %v4092
  %v4354 = vmul.f32 %v4290, %v3981
  %v4355 = vmul.f32 %v4291, %v3983
  %v4356 = vmul.f32 %v4292, %v4094
  %v4357 = vmul.f32 %v4293, %v4096
  %v4358 = vmul.f32 %v4294, %v3987
  %v4359 = vmul.f32 %v4295, %v3989
  %v4360 = vmul.f32 %v4296, %v4100
  %v4361 = vmul.f32 %v4297, %v4102
  %v4362 = vmul.f32 %v4298, %v3991
  %v4363 = vmul.f32 %v4299, %v3993
  %v4364 = vmul.f32 %v4300, %v4104
  %v4365 = vmul.f32 %v4301, %v4106
  %v4366 = vmul.f32 %v4302, %v3997
  %v4367 = vmul.f32 %v4303, %v3999
  %v4368 = vmul.f32 %v4304, %v4110
  %v4369 = vmul.f32 %v4305, %v4112
  %v4370 = vmul.f32 %v4306, %v4001
  %v4371 = vmul.f32 %v4307, %v4003
  %v4372 = vmul.f32 %v4308, %v4114
  %v4373 = vmul.f32 %v4309, %v4116
  %v4374 = vadd.f32 %v3927, %v4310
  %v4375 = vadd.f32 %v3929, %v4311
  %v4376 = vadd.f32 %v4040, %v4312
  %v4377 = vadd.f32 %v4042, %v4313
  %v4378 = vadd.f32 %v3931, %v4314
  %v4379 = vadd.f32 %v3933, %v4315
  %v4380 = vadd.f32 %v4044, %v4316
  %v4381 = vadd.f32 %v4046, %v4317
  %v4382 = vadd.f32 %v3937, %v4318
  %v4383 = vadd.f32 %v3939, %v4319
  %v4384 = vadd.f32 %v4050, %v4320
  %v4385 = vadd.f32 %v4052, %v4321
  %v4386 = vadd.f32 %v3941, %v4322
  %v4387 = vadd.f32 %v3943, %v4323
  %v4388 = vadd.f32 %v4054, %v4324
  %v4389 = vadd.f32 %v4056, %v4325
  %v4390 = vadd.f32 %v3947, %v4326
  %v4391 = vadd.f32 %v3949, %v4327
  %v4392 = vadd.f32 %v4060, %v4328
  %v4393 = vadd.f32 %v4062, %v4329
  %v4394 = vadd.f32 %v3951, %v4330
  %v4395 = vadd.f32 %v3953, %v4331
  %v4396 = vadd.f32 %v4064, %v4332
  %v4397 = vadd.f32 %v4066, %v4333
  %v4398 = vadd.f32 %v3957, %v4334
  %v4399 = vadd.f32 %v3959, %v4335
  %v4400 = vadd.f32 %v4070, %v4336
  %v4401 = vadd.f32 %v4072, %v4337
  %v4402 = vadd.f32 %v3961, %v4338
  %v4403 = vadd.f32 %v3963, %v4339
  %v4404 = vadd.f32 %v4074, %v4340
  %v4405 = vadd.f32 %v4076, %v4341
  %v4406 = vadd.f32 %v3967, %v4342
  %v4407 = vadd.f32 %v3969, %v4343
  %v4408 = vadd.f32 %v4080, %v4344
  %v4409 = vadd.f32 %v4082, %v4345
  %v4410 = vadd.f32 %v3971, %v4346
  %v4411 = vadd.f32 %v3973, %v4347
  %v4412 = vadd.f32 %v4084, %v4348
  %v4413 = vadd.f32 %v4086, %v4349
  %v4414 = vadd.f32 %v3977, %v4350
  %v4415 = vadd.f32 %v3979, %v4351
  %v4416 = vadd.f32 %v4090, %v4352
  %v4417 = vadd.f32 %v4092, %v4353
  %v4418 = vadd.f32 %v3981, %v4354
  %v4419 = vadd.f32 %v3983, %v4355
  %v4420 = vadd.f32 %v4094, %v4356
  %v4421 = vadd.f32 %v4096, %v4357
  %v4422 = vadd.f32 %v3987, %v4358
  %v4423 = vadd.f32 %v3989, %v4359
  %v4424 = vadd.f32 %v4100, %v4360
  %v4425 = vadd.f32 %v4102, %v4361
  %v4426 = vadd.f32 %v3991, %v4362
  %v4427 = vadd.f32 %v3993, %v4363
  %v4428 = vadd.f32 %v4104, %v4364
  %v4429 = vadd.f32 %v4106, %v4365
  %v4430 = vadd.f32 %v3997, %v4366
  %v4431 = vadd.f32 %v3999, %v4367
  %v4432 = vadd.f32 %v4110, %v4368
  %v4433 = vadd.f32 %v4112, %v4369
  %v4434 = vadd.f32 %v4001, %v4370
  %v4435 = vadd.f32 %v4003, %v4371
  %v4436 = vadd.f32 %v4114, %v4372
  %v4437 = vadd.f32 %v4116, %v4373
  %v4438 = vmul.f32 %v4374, 0.7978846
  %v4439 = vmul.f32 %v4375, 0.7978846
  %v4440 = vmul.f32 %v4376, 0.7978846
  %v4441 = vmul.f32 %v4377, 0.7978846
  %v4442 = vmul.f32 %v4378, 0.7978846
  %v4443 = vmul.f32 %v4379, 0.7978846
  %v4444 = vmul.f32 %v4380, 0.7978846
  %v4445 = vmul.f32 %v4381, 0.7978846
  %v4446 = vmul.f32 %v4382, 0.7978846
  %v4447 = vmul.f32 %v4383, 0.7978846
  %v4448 = vmul.f32 %v4384, 0.7978846
  %v4449 = vmul.f32 %v4385, 0.7978846
  %v4450 = vmul.f32 %v4386, 0.7978846
  %v4451 = vmul.f32 %v4387, 0.7978846
  %v4452 = vmul.f32 %v4388, 0.7978846
  %v4453 = vmul.f32 %v4389, 0.7978846
  %v4454 = vmul.f32 %v4390, 0.7978846
  %v4455 = vmul.f32 %v4391, 0.7978846
  %v4456 = vmul.f32 %v4392, 0.7978846
  %v4457 = vmul.f32 %v4393, 0.7978846
  %v4458 = vmul.f32 %v4394, 0.7978846
  %v4459 = vmul.f32 %v4395, 0.7978846
  %v4460 = vmul.f32 %v4396, 0.7978846
  %v4461 = vmul.f32 %v4397, 0.7978846
  %v4462 = vmul.f32 %v4398, 0.7978846
  %v4463 = vmul.f32 %v4399, 0.7978846
  %v4464 = vmul.f32 %v4400, 0.7978846
  %v4465 = vmul.f32 %v4401, 0.7978846
  %v4466 = vmul.f32 %v4402, 0.7978846
  %v4467 = vmul.f32 %v4403, 0.7978846
  %v4468 = vmul.f32 %v4404, 0.7978846
  %v4469 = vmul.f32 %v4405, 0.7978846
  %v4470 = vmul.f32 %v4406, 0.7978846
  %v4471 = vmul.f32 %v4407, 0.7978846
  %v4472 = vmul.f32 %v4408, 0.7978846
  %v4473 = vmul.f32 %v4409, 0.7978846
  %v4474 = vmul.f32 %v4410, 0.7978846
  %v4475 = vmul.f32 %v4411, 0.7978846
  %v4476 = vmul.f32 %v4412, 0.7978846
  %v4477 = vmul.f32 %v4413, 0.7978846
  %v4478 = vmul.f32 %v4414, 0.7978846
  %v4479 = vmul.f32 %v4415, 0.7978846
  %v4480 = vmul.f32 %v4416, 0.7978846
  %v4481 = vmul.f32 %v4417, 0.7978846
  %v4482 = vmul.f32 %v4418, 0.7978846
  %v4483 = vmul.f32 %v4419, 0.7978846
  %v4484 = vmul.f32 %v4420, 0.7978846
  %v4485 = vmul.f32 %v4421, 0.7978846
  %v4486 = vmul.f32 %v4422, 0.7978846
  %v4487 = vmul.f32 %v4423, 0.7978846
  %v4488 = vmul.f32 %v4424, 0.7978846
  %v4489 = vmul.f32 %v4425, 0.7978846
  %v4490 = vmul.f32 %v4426, 0.7978846
  %v4491 = vmul.f32 %v4427, 0.7978846
  %v4492 = vmul.f32 %v4428, 0.7978846
  %v4493 = vmul.f32 %v4429, 0.7978846
  %v4494 = vmul.f32 %v4430, 0.7978846
  %v4495 = vmul.f32 %v4431, 0.7978846
  %v4496 = vmul.f32 %v4432, 0.7978846
  %v4497 = vmul.f32 %v4433, 0.7978846
  %v4498 = vmul.f32 %v4434, 0.7978846
  %v4499 = vmul.f32 %v4435, 0.7978846
  %v4500 = vmul.f32 %v4436, 0.7978846
  %v4501 = vmul.f32 %v4437, 0.7978846
  %v4502 = vtanh.pop %v4438
  %v4503 = vtanh.pop %v4439
  %v4504 = vtanh.pop %v4440
  %v4505 = vtanh.pop %v4441
  %v4506 = vtanh.pop %v4442
  %v4507 = vtanh.pop %v4443
  %v4508 = vtanh.pop %v4444
  %v4509 = vtanh.pop %v4445
  %v4510 = vtanh.pop %v4446
  %v4511 = vtanh.pop %v4447
  %v4512 = vtanh.pop %v4448
  %v4513 = vtanh.pop %v4449
  %v4514 = vtanh.pop %v4450
  %v4515 = vtanh.pop %v4451
  %v4516 = vtanh.pop %v4452
  %v4517 = vtanh.pop %v4453
  %v4518 = vtanh.pop %v4454
  %v4519 = vtanh.pop %v4455
  %v4520 = vtanh.pop %v4456
  %v4521 = vtanh.pop %v4457
  %v4522 = vtanh.pop %v4458
  %v4523 = vtanh.pop %v4459
  %v4524 = vtanh.pop %v4460
  %v4525 = vtanh.pop %v4461
  %v4526 = vtanh.pop %v4462
  %v4527 = vtanh.pop %v4463
  %v4528 = vtanh.pop %v4464
  %v4529 = vtanh.pop %v4465
  %v4530 = vtanh.pop %v4466
  %v4531 = vtanh.pop %v4467
  %v4532 = vtanh.pop %v4468
  %v4533 = vtanh.pop %v4469
  %v4534 = vtanh.pop %v4470
  %v4535 = vtanh.pop %v4471
  %v4536 = vtanh.pop %v4472
  %v4537 = vtanh.pop %v4473
  %v4538 = vtanh.pop %v4474
  %v4539 = vtanh.pop %v4475
  %v4540 = vtanh.pop %v4476
  %v4541 = vtanh.pop %v4477
  %v4542 = vtanh.pop %v4478
  %v4543 = vtanh.pop %v4479
  %v4544 = vtanh.pop %v4480
  %v4545 = vtanh.pop %v4481
  %v4546 = vtanh.pop %v4482
  %v4547 = vtanh.pop %v4483
  %v4548 = vtanh.pop %v4484
  %v4549 = vtanh.pop %v4485
  %v4550 = vtanh.pop %v4486
  %v4551 = vtanh.pop %v4487
  %v4552 = vtanh.pop %v4488
  %v4553 = vtanh.pop %v4489
  %v4554 = vtanh.pop %v4490
  %v4555 = vtanh.pop %v4491
  %v4556 = vtanh.pop %v4492
  %v4557 = vtanh.pop %v4493
  %v4558 = vtanh.pop %v4494
  %v4559 = vtanh.pop %v4495
  %v4560 = vtanh.pop %v4496
  %v4561 = vtanh.pop %v4497
  %v4562 = vtanh.pop %v4498
  %v4563 = vtanh.pop %v4499
  %v4564 = vtanh.pop %v4500
  %v4565 = vtanh.pop %v4501
  %v4566 = vadd.f32 %v4502, 1.0
  %v4567 = vadd.f32 %v4503, 1.0
  %v4568 = vadd.f32 %v4504, 1.0
  %v4569 = vadd.f32 %v4505, 1.0
  %v4570 = vadd.f32 %v4506, 1.0
  %v4571 = vadd.f32 %v4507, 1.0
  %v4572 = vadd.f32 %v4508, 1.0
  %v4573 = vadd.f32 %v4509, 1.0
  %v4574 = vadd.f32 %v4510, 1.0
  %v4575 = vadd.f32 %v4511, 1.0
  %v4576 = vadd.f32 %v4512, 1.0
  %v4577 = vadd.f32 %v4513, 1.0
  %v4578 = vadd.f32 %v4514, 1.0
  %v4579 = vadd.f32 %v4515, 1.0
  %v4580 = vadd.f32 %v4516, 1.0
  %v4581 = vadd.f32 %v4517, 1.0
  %v4582 = vadd.f32 %v4518, 1.0
  %v4583 = vadd.f32 %v4519, 1.0
  %v4584 = vadd.f32 %v4520, 1.0
  %v4585 = vadd.f32 %v4521, 1.0
  %v4586 = vadd.f32 %v4522, 1.0
  %v4587 = vadd.f32 %v4523, 1.0
  %v4588 = vadd.f32 %v4524, 1.0
  %v4589 = vadd.f32 %v4525, 1.0
  %v4590 = vadd.f32 %v4526, 1.0
  %v4591 = vadd.f32 %v4527, 1.0
  %v4592 = vadd.f32 %v4528, 1.0
  %v4593 = vadd.f32 %v4529, 1.0
  %v4594 = vadd.f32 %v4530, 1.0
  %v4595 = vadd.f32 %v4531, 1.0
  %v4596 = vadd.f32 %v4532, 1.0
  %v4597 = vadd.f32 %v4533, 1.0
  %v4598 = vadd.f32 %v4534, 1.0
  %v4599 = vadd.f32 %v4535, 1.0
  %v4600 = vadd.f32 %v4536, 1.0
  %v4601 = vadd.f32 %v4537, 1.0
  %v4602 = vadd.f32 %v4538, 1.0
  %v4603 = vadd.f32 %v4539, 1.0
  %v4604 = vadd.f32 %v4540, 1.0
  %v4605 = vadd.f32 %v4541, 1.0
  %v4606 = vadd.f32 %v4542, 1.0
  %v4607 = vadd.f32 %v4543, 1.0
  %v4608 = vadd.f32 %v4544, 1.0
  %v4609 = vadd.f32 %v4545, 1.0
  %v4610 = vadd.f32 %v4546, 1.0
  %v4611 = vadd.f32 %v4547, 1.0
  %v4612 = vadd.f32 %v4548, 1.0
  %v4613 = vadd.f32 %v4549, 1.0
  %v4614 = vadd.f32 %v4550, 1.0
  %v4615 = vadd.f32 %v4551, 1.0
  %v4616 = vadd.f32 %v4552, 1.0
  %v4617 = vadd.f32 %v4553, 1.0
  %v4618 = vadd.f32 %v4554, 1.0
  %v4619 = vadd.f32 %v4555, 1.0
  %v4620 = vadd.f32 %v4556, 1.0
  %v4621 = vadd.f32 %v4557, 1.0
  %v4622 = vadd.f32 %v4558, 1.0
  %v4623 = vadd.f32 %v4559, 1.0
  %v4624 = vadd.f32 %v4560, 1.0
  %v4625 = vadd.f32 %v4561, 1.0
  %v4626 = vadd.f32 %v4562, 1.0
  %v4627 = vadd.f32 %v4563, 1.0
  %v4628 = vadd.f32 %v4564, 1.0
  %v4629 = vadd.f32 %v4565, 1.0
  %v4630 = vmul.f32 %v4118, %v4566
  %v4631 = vmul.f32 %v4119, %v4567
  %v4632 = vmul.f32 %v4120, %v4568
  %v4633 = vmul.f32 %v4121, %v4569
  %v4634 = vmul.f32 %v4122, %v4570
  %v4635 = vmul.f32 %v4123, %v4571
  %v4636 = vmul.f32 %v4124, %v4572
  %v4637 = vmul.f32 %v4125, %v4573
  %v4638 = vmul.f32 %v4126, %v4574
  %v4639 = vmul.f32 %v4127, %v4575
  %v4640 = vmul.f32 %v4128, %v4576
  %v4641 = vmul.f32 %v4129, %v4577
  %v4642 = vmul.f32 %v4130, %v4578
  %v4643 = vmul.f32 %v4131, %v4579
  %v4644 = vmul.f32 %v4132, %v4580
  %v4645 = vmul.f32 %v4133, %v4581
  %v4646 = vmul.f32 %v4134, %v4582
  %v4647 = vmul.f32 %v4135, %v4583
  %v4648 = vmul.f32 %v4136, %v4584
  %v4649 = vmul.f32 %v4137, %v4585
  %v4650 = vmul.f32 %v4138, %v4586
  %v4651 = vmul.f32 %v4139, %v4587
  %v4652 = vmul.f32 %v4140, %v4588
  %v4653 = vmul.f32 %v4141, %v4589
  %v4654 = vmul.f32 %v4142, %v4590
  %v4655 = vmul.f32 %v4143, %v4591
  %v4656 = vmul.f32 %v4144, %v4592
  %v4657 = vmul.f32 %v4145, %v4593
  %v4658 = vmul.f32 %v4146, %v4594
  %v4659 = vmul.f32 %v4147, %v4595
  %v4660 = vmul.f32 %v4148, %v4596
  %v4661 = vmul.f32 %v4149, %v4597
  %v4662 = vmul.f32 %v4150, %v4598
  %v4663 = vmul.f32 %v4151, %v4599
  %v4664 = vmul.f32 %v4152, %v4600
  %v4665 = vmul.f32 %v4153, %v4601
  %v4666 = vmul.f32 %v4154, %v4602
  %v4667 = vmul.f32 %v4155, %v4603
  %v4668 = vmul.f32 %v4156, %v4604
  %v4669 = vmul.f32 %v4157, %v4605
  %v4670 = vmul.f32 %v4158, %v4606
  %v4671 = vmul.f32 %v4159, %v4607
  %v4672 = vmul.f32 %v4160, %v4608
  %v4673 = vmul.f32 %v4161, %v4609
  %v4674 = vmul.f32 %v4162, %v4610
  %v4675 = vmul.f32 %v4163, %v4611
  %v4676 = vmul.f32 %v4164, %v4612
  %v4677 = vmul.f32 %v4165, %v4613
  %v4678 = vmul.f32 %v4166, %v4614
  %v4679 = vmul.f32 %v4167, %v4615
  %v4680 = vmul.f32 %v4168, %v4616
  %v4681 = vmul.f32 %v4169, %v4617
  %v4682 = vmul.f32 %v4170, %v4618
  %v4683 = vmul.f32 %v4171, %v4619
  %v4684 = vmul.f32 %v4172, %v4620
  %v4685 = vmul.f32 %v4173, %v4621
  %v4686 = vmul.f32 %v4174, %v4622
  %v4687 = vmul.f32 %v4175, %v4623
  %v4688 = vmul.f32 %v4176, %v4624
  %v4689 = vmul.f32 %v4177, %v4625
  %v4690 = vmul.f32 %v4178, %v4626
  %v4691 = vmul.f32 %v4179, %v4627
  %v4692 = vmul.f32 %v4180, %v4628
  %v4693 = vmul.f32 %v4181, %v4629
  %v4694 = vpack.c.bf16 %v4634, %v4630
  %v4695 = vpack.c.bf16 %v4635, %v4631
  %v4696 = vpack.c.bf16 %v4636, %v4632
  %v4697 = vpack.c.bf16 %v4637, %v4633
  %v4698 = vpack.c.bf16 %v4642, %v4638
  %v4699 = vpack.c.bf16 %v4643, %v4639
  %v4700 = vpack.c.bf16 %v4644, %v4640
  %v4701 = vpack.c.bf16 %v4645, %v4641
  %v4702 = vpack.c.bf16 %v4650, %v4646
  %v4703 = vpack.c.bf16 %v4651, %v4647
  %v4704 = vpack.c.bf16 %v4652, %v4648
  %v4705 = vpack.c.bf16 %v4653, %v4649
  %v4706 = vpack.c.bf16 %v4658, %v4654
  %v4707 = vpack.c.bf16 %v4659, %v4655
  %v4708 = vpack.c.bf16 %v4660, %v4656
  %v4709 = vpack.c.bf16 %v4661, %v4657
  %v4710 = vpack.c.bf16 %v4666, %v4662
  %v4711 = vpack.c.bf16 %v4667, %v4663
  %v4712 = vpack.c.bf16 %v4668, %v4664
  %v4713 = vpack.c.bf16 %v4669, %v4665
  %v4714 = vpack.c.bf16 %v4674, %v4670
  %v4715 = vpack.c.bf16 %v4675, %v4671
  %v4716 = vpack.c.bf16 %v4676, %v4672
  %v4717 = vpack.c.bf16 %v4677, %v4673
  %v4718 = vpack.c.bf16 %v4682, %v4678
  %v4719 = vpack.c.bf16 %v4683, %v4679
  %v4720 = vpack.c.bf16 %v4684, %v4680
  %v4721 = vpack.c.bf16 %v4685, %v4681
  %v4722 = vpack.c.bf16 %v4690, %v4686
  %v4723 = vpack.c.bf16 %v4691, %v4687
  %v4724 = vpack.c.bf16 %v4692, %v4688
  %v4725 = vpack.c.bf16 %v4693, %v4689
  %v4726 = vld [vmem:[%s12] sm:$0xf]
  %v4727 = vld [vmem:[%s12 + $0x4] sm:$0xf]
  %v4728 = vld [vmem:[%s12 + $0x8] sm:$0xf]
  %v4729 = vld [vmem:[%s12 + $0xc] sm:$0xf]
  %v4730 = vld [vmem:[%s12 + $0x10] sm:$0xf]
  %v4731 = vld [vmem:[%s12 + $0x14] sm:$0xf]
  %v4732 = vld [vmem:[%s12 + $0x18] sm:$0xf]
  %v4733 = vld [vmem:[%s12 + $0x1c] sm:$0xf]
  %v4734 = vld [vmem:[%s12 + $0x20] sm:$0xf]
  %v4735 = vld [vmem:[%s12 + $0x24] sm:$0xf]
  %v4736 = vld [vmem:[%s12 + $0x28] sm:$0xf]
  %v4737 = vld [vmem:[%s12 + $0x2c] sm:$0xf]
  %v4738 = vld [vmem:[%s12 + $0x30] sm:$0xf]
  %v4739 = vld [vmem:[%s12 + $0x34] sm:$0xf]
  %v4740 = vld [vmem:[%s12 + $0x38] sm:$0xf]
  %v4741 = vld [vmem:[%s12 + $0x3c] sm:$0xf]
  %v4742 = vld [vmem:[%s12 + $0x40] sm:$0xf]
  %v4743 = vld [vmem:[%s12 + $0x44] sm:$0xf]
  %v4744 = vld [vmem:[%s12 + $0x48] sm:$0xf]
  %v4745 = vld [vmem:[%s12 + $0x4c] sm:$0xf]
  %v4746 = vld [vmem:[%s12 + $0x50] sm:$0xf]
  %v4747 = vld [vmem:[%s12 + $0x54] sm:$0xf]
  %v4748 = vld [vmem:[%s12 + $0x58] sm:$0xf]
  %v4749 = vld [vmem:[%s12 + $0x5c] sm:$0xf]
  %v4750 = vld [vmem:[%s12 + $0x60] sm:$0xf]
  %v4751 = vld [vmem:[%s12 + $0x64] sm:$0xf]
  %v4752 = vld [vmem:[%s12 + $0x68] sm:$0xf]
  %v4753 = vld [vmem:[%s12 + $0x6c] sm:$0xf]
  %v4754 = vld [vmem:[%s12 + $0x70] sm:$0xf]
  %v4755 = vld [vmem:[%s12 + $0x74] sm:$0xf]
  %v4756 = vld [vmem:[%s12 + $0x78] sm:$0xf]
  %v4757 = vld [vmem:[%s12 + $0x7c] sm:$0xf]
  %v4758 = vld [vmem:[%s12 + $0x80] sm:$0xf]
  %v4759 = vld [vmem:[%s12 + $0x84] sm:$0xf]
  %v4760 = vld [vmem:[%s12 + $0x88] sm:$0xf]
  %v4761 = vld [vmem:[%s12 + $0x8c] sm:$0xf]
  %v4762 = vld [vmem:[%s12 + $0x90] sm:$0xf]
  %v4763 = vld [vmem:[%s12 + $0x94] sm:$0xf]
  %v4764 = vld [vmem:[%s12 + $0x98] sm:$0xf]
  %v4765 = vld [vmem:[%s12 + $0x9c] sm:$0xf]
  %v4766 = vld [vmem:[%s12 + $0xa0] sm:$0xf]
  %v4767 = vld [vmem:[%s12 + $0xa4] sm:$0xf]
  %v4768 = vld [vmem:[%s12 + $0xa8] sm:$0xf]
  %v4769 = vld [vmem:[%s12 + $0xac] sm:$0xf]
  %v4770 = vld [vmem:[%s12 + $0xb0] sm:$0xf]
  %v4771 = vld [vmem:[%s12 + $0xb4] sm:$0xf]
  %v4772 = vld [vmem:[%s12 + $0xb8] sm:$0xf]
  %v4773 = vld [vmem:[%s12 + $0xbc] sm:$0xf]
  %v4774 = vld [vmem:[%s12 + $0xc0] sm:$0xf]
  %v4775 = vld [vmem:[%s12 + $0xc4] sm:$0xf]
  %v4776 = vld [vmem:[%s12 + $0xc8] sm:$0xf]
  %v4777 = vld [vmem:[%s12 + $0xcc] sm:$0xf]
  %v4778 = vld [vmem:[%s12 + $0xd0] sm:$0xf]
  %v4779 = vld [vmem:[%s12 + $0xd4] sm:$0xf]
  %v4780 = vld [vmem:[%s12 + $0xd8] sm:$0xf]
  %v4781 = vld [vmem:[%s12 + $0xdc] sm:$0xf]
  %v4782 = vld [vmem:[%s12 + $0xe0] sm:$0xf]
  %v4783 = vld [vmem:[%s12 + $0xe4] sm:$0xf]
  %v4784 = vld [vmem:[%s12 + $0xe8] sm:$0xf]
  %v4785 = vld [vmem:[%s12 + $0xec] sm:$0xf]
  %v4786 = vld [vmem:[%s12 + $0xf0] sm:$0xf]
  %v4787 = vld [vmem:[%s12 + $0xf4] sm:$0xf]
  %v4788 = vld [vmem:[%s12 + $0xf8] sm:$0xf]
  %v4789 = vld [vmem:[%s12 + $0xfc] sm:$0xf]
  %v4790 = vld [vmem:[%s13] sm:$0x1]
  %v4792 = vlaneseq
  %v4793 = vshrl.u32 %v4792, 7
  %v4794 = vsub.s32 0, %v4793
  %v4795 = vrot.slane %v4790, %v4794
  %v4861 = vunpack.c.l.b16 %v4726
  %v4862 = vunpack.c.l.b16 %v4727
  %v4863 = vunpack.c.l.b16 %v4728
  %v4864 = vunpack.c.l.b16 %v4729
  %v4865 = vunpack.c.l.b16 %v4730
  %v4866 = vunpack.c.l.b16 %v4731
  %v4867 = vunpack.c.l.b16 %v4732
  %v4868 = vunpack.c.l.b16 %v4733
  %v4869 = vunpack.c.l.b16 %v4734
  %v4870 = vunpack.c.l.b16 %v4735
  %v4871 = vunpack.c.l.b16 %v4736
  %v4872 = vunpack.c.l.b16 %v4737
  %v4873 = vunpack.c.l.b16 %v4738
  %v4874 = vunpack.c.l.b16 %v4739
  %v4875 = vunpack.c.l.b16 %v4740
  %v4876 = vunpack.c.l.b16 %v4741
  %v4877 = vunpack.c.l.b16 %v4742
  %v4878 = vunpack.c.l.b16 %v4743
  %v4879 = vunpack.c.l.b16 %v4744
  %v4880 = vunpack.c.l.b16 %v4745
  %v4881 = vunpack.c.l.b16 %v4746
  %v4882 = vunpack.c.l.b16 %v4747
  %v4883 = vunpack.c.l.b16 %v4748
  %v4884 = vunpack.c.l.b16 %v4749
  %v4885 = vunpack.c.l.b16 %v4750
  %v4886 = vunpack.c.l.b16 %v4751
  %v4887 = vunpack.c.l.b16 %v4752
  %v4888 = vunpack.c.l.b16 %v4753
  %v4889 = vunpack.c.l.b16 %v4754
  %v4890 = vunpack.c.l.b16 %v4755
  %v4891 = vunpack.c.l.b16 %v4756
  %v4892 = vunpack.c.l.b16 %v4757
  %v4893 = vunpack.c.l.b16 %v4758
  %v4894 = vunpack.c.l.b16 %v4759
  %v4895 = vunpack.c.l.b16 %v4760
  %v4896 = vunpack.c.l.b16 %v4761
  %v4897 = vunpack.c.l.b16 %v4762
  %v4898 = vunpack.c.l.b16 %v4763
  %v4899 = vunpack.c.l.b16 %v4764
  %v4900 = vunpack.c.l.b16 %v4765
  %v4901 = vunpack.c.l.b16 %v4766
  %v4902 = vunpack.c.l.b16 %v4767
  %v4903 = vunpack.c.l.b16 %v4768
  %v4904 = vunpack.c.l.b16 %v4769
  %v4905 = vunpack.c.l.b16 %v4770
  %v4906 = vunpack.c.l.b16 %v4771
  %v4907 = vunpack.c.l.b16 %v4772
  %v4908 = vunpack.c.l.b16 %v4773
  %v4909 = vunpack.c.l.b16 %v4774
  %v4910 = vunpack.c.l.b16 %v4775
  %v4911 = vunpack.c.l.b16 %v4776
  %v4912 = vunpack.c.l.b16 %v4777
  %v4913 = vunpack.c.l.b16 %v4778
  %v4914 = vunpack.c.l.b16 %v4779
  %v4915 = vunpack.c.l.b16 %v4780
  %v4916 = vunpack.c.l.b16 %v4781
  %v4917 = vunpack.c.l.b16 %v4782
  %v4918 = vunpack.c.l.b16 %v4783
  %v4919 = vunpack.c.l.b16 %v4784
  %v4920 = vunpack.c.l.b16 %v4785
  %v4921 = vunpack.c.l.b16 %v4786
  %v4922 = vunpack.c.l.b16 %v4787
  %v4923 = vunpack.c.l.b16 %v4788
  %v4924 = vunpack.c.l.b16 %v4789
  %v4925 = vpack.c.b16 %v4862, %v4861
  %v4926 = vpack.c.b16 %v4864, %v4863
  %v4927 = vpack.c.b16 %v4866, %v4865
  %v4928 = vpack.c.b16 %v4868, %v4867
  %v4929 = vpack.c.b16 %v4870, %v4869
  %v4930 = vpack.c.b16 %v4872, %v4871
  %v4931 = vpack.c.b16 %v4874, %v4873
  %v4932 = vpack.c.b16 %v4876, %v4875
  %v4933 = vpack.c.b16 %v4878, %v4877
  %v4934 = vpack.c.b16 %v4880, %v4879
  %v4935 = vpack.c.b16 %v4882, %v4881
  %v4936 = vpack.c.b16 %v4884, %v4883
  %v4937 = vpack.c.b16 %v4886, %v4885
  %v4938 = vpack.c.b16 %v4888, %v4887
  %v4939 = vpack.c.b16 %v4890, %v4889
  %v4940 = vpack.c.b16 %v4892, %v4891
  %v4941 = vpack.c.b16 %v4894, %v4893
  %v4942 = vpack.c.b16 %v4896, %v4895
  %v4943 = vpack.c.b16 %v4898, %v4897
  %v4944 = vpack.c.b16 %v4900, %v4899
  %v4945 = vpack.c.b16 %v4902, %v4901
  %v4946 = vpack.c.b16 %v4904, %v4903
  %v4947 = vpack.c.b16 %v4906, %v4905
  %v4948 = vpack.c.b16 %v4908, %v4907
  %v4949 = vpack.c.b16 %v4910, %v4909
  %v4950 = vpack.c.b16 %v4912, %v4911
  %v4951 = vpack.c.b16 %v4914, %v4913
  %v4952 = vpack.c.b16 %v4916, %v4915
  %v4953 = vpack.c.b16 %v4918, %v4917
  %v4954 = vpack.c.b16 %v4920, %v4919
  %v4955 = vpack.c.b16 %v4922, %v4921
  %v4956 = vpack.c.b16 %v4924, %v4923
  %4989 = vmatprep.subr.bf16.mxu0 0
  %4990 = vmatpush1.bf16.msra.mxu0 %v4925
  %4991 = vmatprep.subr.bf16.mxu0 0
  %4992 = vmatpush1.bf16.msra.mxu0 %v4926
  %4993 = vmatprep.subr.bf16.mxu0 0
  %4994 = vmatpush1.bf16.msra.mxu0 %v4927
  %4995 = vmatprep.subr.bf16.mxu0 0
  %4996 = vmatpush1.bf16.msra.mxu0 %v4928
  %4997 = vmatprep.subr.bf16.mxu0 0
  %4998 = vmatpush1.bf16.msra.mxu0 %v4929
  %4999 = vmatprep.subr.bf16.mxu0 0
  %5000 = vmatpush1.bf16.msra.mxu0 %v4930
  %5001 = vmatprep.subr.bf16.mxu0 0
  %5002 = vmatpush1.bf16.msra.mxu0 %v4931
  %5003 = vmatprep.subr.bf16.mxu0 0
  %5004 = vmatpush1.bf16.msra.mxu0 %v4932
  %5005 = vmatprep.subr.bf16.mxu0 0
  %5006 = vmatpush1.bf16.msra.mxu0 %v4933
  %5007 = vmatprep.subr.bf16.mxu0 0
  %5008 = vmatpush1.bf16.msra.mxu0 %v4934
  %5009 = vmatprep.subr.bf16.mxu0 0
  %5010 = vmatpush1.bf16.msra.mxu0 %v4935
  %5011 = vmatprep.subr.bf16.mxu0 0
  %5012 = vmatpush1.bf16.msra.mxu0 %v4936
  %5013 = vmatprep.subr.bf16.mxu0 0
  %5014 = vmatpush1.bf16.msra.mxu0 %v4937
  %5015 = vmatprep.subr.bf16.mxu0 0
  %5016 = vmatpush1.bf16.msra.mxu0 %v4938
  %5017 = vmatprep.subr.bf16.mxu0 0
  %5018 = vmatpush1.bf16.msra.mxu0 %v4939
  %5019 = vmatprep.subr.bf16.mxu0 0
  %5020 = vmatpush1.bf16.msra.mxu0 %v4940
  %5021 = vmatprep.mubr.bf16.mxu0 %v4695
  %5022 = vmatmul.mubr.bf16.gmra.mrb[0].mxu0 %v4694
  %v5023 = vpop.f32.mrb[0].mxu0
  %v5024 = vadd.f32 %v4795, %v5023
  %v5025 = vpop.f32.mrb[0].mxu0
  %v5026 = vpop.f32.mrb[0].mxu0
  %v5027 = vadd.f32 %v4795, %v5026
  %v5028 = vpop.f32.mrb[0].mxu0
  %5029 = vmatprep.mubr.bf16.mxu0 %v4699
  %5030 = vmatmul.mubr.bf16.gmra.mrb[0].mxu0 %v4698
  %v5031 = vpop.f32.mrb[0].mxu0
  %v5032 = vadd.f32 %v4795, %v5031
  %v5033 = vpop.f32.mrb[0].mxu0
  %v5034 = vpop.f32.mrb[0].mxu0
  %v5035 = vadd.f32 %v4795, %v5034
  %v5036 = vpop.f32.mrb[0].mxu0
  %5037 = vmatprep.mubr.bf16.mxu0 %v4703
  %5038 = vmatmul.mubr.bf16.gmra.mrb[0].mxu0 %v4702
  %v5039 = vpop.f32.mrb[0].mxu0
  %v5040 = vadd.f32 %v4795, %v5039
  %v5041 = vpop.f32.mrb[0].mxu0
  %v5042 = vpop.f32.mrb[0].mxu0
  %v5043 = vadd.f32 %v4795, %v5042
  %v5044 = vpop.f32.mrb[0].mxu0
  %5045 = vmatprep.mubr.bf16.mxu0 %v4707
  %5046 = vmatmul.mubr.bf16.gmra.mrb[0].mxu0 %v4706
  %v5047 = vpop.f32.mrb[0].mxu0
  %v5048 = vadd.f32 %v4795, %v5047
  %v5049 = vpop.f32.mrb[0].mxu0
  %v5050 = vpop.f32.mrb[0].mxu0
  %v5051 = vadd.f32 %v4795, %v5050
  %v5052 = vpop.f32.mrb[0].mxu0
  %5053 = vmatprep.mubr.bf16.mxu0 %v4711
  %5054 = vmatmul.mubr.bf16.gmra.mrb[0].mxu0 %v4710
  %v5055 = vpop.f32.mrb[0].mxu0
  %v5056 = vadd.f32 %v4795, %v5055
  %v5057 = vpop.f32.mrb[0].mxu0
  %v5058 = vpop.f32.mrb[0].mxu0
  %v5059 = vadd.f32 %v4795, %v5058
  %v5060 = vpop.f32.mrb[0].mxu0
  %5061 = vmatprep.mubr.bf16.mxu0 %v4715
  %5062 = vmatmul.mubr.bf16.gmra.mrb[0].mxu0 %v4714
  %v5063 = vpop.f32.mrb[0].mxu0
  %v5064 = vadd.f32 %v4795, %v5063
  %v5065 = vpop.f32.mrb[0].mxu0
  %v5066 = vpop.f32.mrb[0].mxu0
  %v5067 = vadd.f32 %v4795, %v5066
  %v5068 = vpop.f32.mrb[0].mxu0
  %5069 = vmatprep.mubr.bf16.mxu0 %v4719
  %5070 = vmatmul.mubr.bf16.gmra.mrb[0].mxu0 %v4718
  %v5071 = vpop.f32.mrb[0].mxu0
  %v5072 = vadd.f32 %v4795, %v5071
  %v5073 = vpop.f32.mrb[0].mxu0
  %v5074 = vpop.f32.mrb[0].mxu0
  %v5075 = vadd.f32 %v4795, %v5074
  %v5076 = vpop.f32.mrb[0].mxu0
  %5077 = vmatprep.mubr.bf16.mxu0 %v4723
  %5078 = vmatmul.mubr.bf16.gmra.mrb[0].mxu0 %v4722
  %v5079 = vpop.f32.mrb[0].mxu0
  %v5080 = vadd.f32 %v4795, %v5079
  %v5081 = vpop.f32.mrb[0].mxu0
  %v5082 = vpop.f32.mrb[0].mxu0
  %v5083 = vadd.f32 %v4795, %v5082
  %v5084 = vpop.f32.mrb[0].mxu0
  %5085 = vdwg.mxu0
  %5086 = vmatprep.subr.bf16.mxu0 0
  %5087 = vmatpush1.bf16.msra.mxu0 %v4941
  %5088 = vmatprep.subr.bf16.mxu0 0
  %5089 = vmatpush1.bf16.msra.mxu0 %v4942
  %5090 = vmatprep.subr.bf16.mxu0 0
  %5091 = vmatpush1.bf16.msra.mxu0 %v4943
  %5092 = vmatprep.subr.bf16.mxu0 0
  %5093 = vmatpush1.bf16.msra.mxu0 %v4944
  %5094 = vmatprep.subr.bf16.mxu0 0
  %5095 = vmatpush1.bf16.msra.mxu0 %v4945
  %5096 = vmatprep.subr.bf16.mxu0 0
  %5097 = vmatpush1.bf16.msra.mxu0 %v4946
  %5098 = vmatprep.subr.bf16.mxu0 0
  %5099 = vmatpush1.bf16.msra.mxu0 %v4947
  %5100 = vmatprep.subr.bf16.mxu0 0
  %5101 = vmatpush1.bf16.msra.mxu0 %v4948
  %5102 = vmatprep.subr.bf16.mxu0 0
  %5103 = vmatpush1.bf16.msra.mxu0 %v4949
  %5104 = vmatprep.subr.bf16.mxu0 0
  %5105 = vmatpush1.bf16.msra.mxu0 %v4950
  %5106 = vmatprep.subr.bf16.mxu0 0
  %5107 = vmatpush1.bf16.msra.mxu0 %v4951
  %5108 = vmatprep.subr.bf16.mxu0 0
  %5109 = vmatpush1.bf16.msra.mxu0 %v4952
  %5110 = vmatprep.subr.bf16.mxu0 0
  %5111 = vmatpush1.bf16.msra.mxu0 %v4953
  %5112 = vmatprep.subr.bf16.mxu0 0
  %5113 = vmatpush1.bf16.msra.mxu0 %v4954
  %5114 = vmatprep.subr.bf16.mxu0 0
  %5115 = vmatpush1.bf16.msra.mxu0 %v4955
  %5116 = vmatprep.subr.bf16.mxu0 0
  %5117 = vmatpush1.bf16.msra.mxu0 %v4956
  %5118 = vmatprep.mubr.bf16.mxu0 %v4697
  %5119 = vmatmul.mubr.bf16.gmra.mrb[0].mxu0 %v4696
  %v5120 = vpop.f32.mrb[0].mxu0
  %v5121 = vadd.f32 %v5024, %v5120
  %v5122 = vpop.f32.mrb[0].mxu0
  %v5123 = vpop.f32.mrb[0].mxu0
  %v5124 = vadd.f32 %v5027, %v5123
  %v5125 = vpop.f32.mrb[0].mxu0
  %5126 = vmatprep.mubr.bf16.mxu0 %v4701
  %5127 = vmatmul.mubr.bf16.gmra.mrb[0].mxu0 %v4700
  %v5128 = vpop.f32.mrb[0].mxu0
  %v5129 = vadd.f32 %v5032, %v5128
  %v5130 = vpop.f32.mrb[0].mxu0
  %v5131 = vpop.f32.mrb[0].mxu0
  %v5132 = vadd.f32 %v5035, %v5131
  %v5133 = vpop.f32.mrb[0].mxu0
  %5134 = vmatprep.mubr.bf16.mxu0 %v4705
  %5135 = vmatmul.mubr.bf16.gmra.mrb[0].mxu0 %v4704
  %v5136 = vpop.f32.mrb[0].mxu0
  %v5137 = vadd.f32 %v5040, %v5136
  %v5138 = vpop.f32.mrb[0].mxu0
  %v5139 = vpop.f32.mrb[0].mxu0
  %v5140 = vadd.f32 %v5043, %v5139
  %v5141 = vpop.f32.mrb[0].mxu0
  %5142 = vmatprep.mubr.bf16.mxu0 %v4709
  %5143 = vmatmul.mubr.bf16.gmra.mrb[0].mxu0 %v4708
  %v5144 = vpop.f32.mrb[0].mxu0
  %v5145 = vadd.f32 %v5048, %v5144
  %v5146 = vpop.f32.mrb[0].mxu0
  %v5147 = vpop.f32.mrb[0].mxu0
  %v5148 = vadd.f32 %v5051, %v5147
  %v5149 = vpop.f32.mrb[0].mxu0
  %5150 = vmatprep.mubr.bf16.mxu0 %v4713
  %5151 = vmatmul.mubr.bf16.gmra.mrb[0].mxu0 %v4712
  %v5152 = vpop.f32.mrb[0].mxu0
  %v5153 = vadd.f32 %v5056, %v5152
  %v5154 = vpop.f32.mrb[0].mxu0
  %v5155 = vpop.f32.mrb[0].mxu0
  %v5156 = vadd.f32 %v5059, %v5155
  %v5157 = vpop.f32.mrb[0].mxu0
  %5158 = vmatprep.mubr.bf16.mxu0 %v4717
  %5159 = vmatmul.mubr.bf16.gmra.mrb[0].mxu0 %v4716
  %v5160 = vpop.f32.mrb[0].mxu0
  %v5161 = vadd.f32 %v5064, %v5160
  %v5162 = vpop.f32.mrb[0].mxu0
  %v5163 = vpop.f32.mrb[0].mxu0
  %v5164 = vadd.f32 %v5067, %v5163
  %v5165 = vpop.f32.mrb[0].mxu0
  %5166 = vmatprep.mubr.bf16.mxu0 %v4721
  %5167 = vmatmul.mubr.bf16.gmra.mrb[0].mxu0 %v4720
  %v5168 = vpop.f32.mrb[0].mxu0
  %v5169 = vadd.f32 %v5072, %v5168
  %v5170 = vpop.f32.mrb[0].mxu0
  %v5171 = vpop.f32.mrb[0].mxu0
  %v5172 = vadd.f32 %v5075, %v5171
  %v5173 = vpop.f32.mrb[0].mxu0
  %5174 = vmatprep.mubr.bf16.mxu0 %v4725
  %5175 = vmatmul.mubr.bf16.gmra.mrb[0].mxu0 %v4724
  %v5176 = vpop.f32.mrb[0].mxu0
  %v5177 = vadd.f32 %v5080, %v5176
  %v5178 = vpop.f32.mrb[0].mxu0
  %v5179 = vpop.f32.mrb[0].mxu0
  %v5180 = vadd.f32 %v5083, %v5179
  %v5181 = vpop.f32.mrb[0].mxu0
  %5182 = vdwg.mxu0
  %v5183 = vadd.f32 %v3432, %v5121
  %v5184 = vadd.f32 %v3433, %v5124
  %v5185 = vadd.f32 %v3434, %v5129
  %v5186 = vadd.f32 %v3435, %v5132
  %v5187 = vadd.f32 %v3436, %v5137
  %v5188 = vadd.f32 %v3437, %v5140
  %v5189 = vadd.f32 %v3438, %v5145
  %v5190 = vadd.f32 %v3439, %v5148
  %v5191 = vadd.f32 %v3440, %v5153
  %v5192 = vadd.f32 %v3441, %v5156
  %v5193 = vadd.f32 %v3442, %v5161
  %v5194 = vadd.f32 %v3443, %v5164
  %v5195 = vadd.f32 %v3444, %v5169
  %v5196 = vadd.f32 %v3445, %v5172
  %v5197 = vadd.f32 %v3446, %v5177
  %v5198 = vadd.f32 %v3447, %v5180
  %s5199 = scalar_lea.vmem %s2, 1
  %v5200 = vld [vmem:[%s5199] sm:$0x1]
  %s5201 = scalar_lea.vmem %s3, 1
  %v5202 = vld [vmem:[%s5201] sm:$0x1]
  %5203 = vadd.xlane.f32.xlu0 %v5183
  %v5204 = vpop.xlane.xlu0 %5203
  %5205 = vadd.xlane.f32.xlu0 %v5184
  %v5206 = vpop.xlane.xlu0 %5205
  %5207 = vadd.xlane.f32.xlu0 %v5185
  %v5208 = vpop.xlane.xlu0 %5207
  %5209 = vadd.xlane.f32.xlu0 %v5186
  %v5210 = vpop.xlane.xlu0 %5209
  %5211 = vadd.xlane.f32.xlu0 %v5187
  %v5212 = vpop.xlane.xlu0 %5211
  %5213 = vadd.xlane.f32.xlu0 %v5188
  %v5214 = vpop.xlane.xlu0 %5213
  %5215 = vadd.xlane.f32.xlu0 %v5189
  %v5216 = vpop.xlane.xlu0 %5215
  %5217 = vadd.xlane.f32.xlu0 %v5190
  %v5218 = vpop.xlane.xlu0 %5217
  %5219 = vadd.xlane.f32.xlu0 %v5191
  %v5220 = vpop.xlane.xlu0 %5219
  %5221 = vadd.xlane.f32.xlu0 %v5192
  %v5222 = vpop.xlane.xlu0 %5221
  %5223 = vadd.xlane.f32.xlu0 %v5193
  %v5224 = vpop.xlane.xlu0 %5223
  %5225 = vadd.xlane.f32.xlu0 %v5194
  %v5226 = vpop.xlane.xlu0 %5225
  %5227 = vadd.xlane.f32.xlu0 %v5195
  %v5228 = vpop.xlane.xlu0 %5227
  %5229 = vadd.xlane.f32.xlu0 %v5196
  %v5230 = vpop.xlane.xlu0 %5229
  %5231 = vadd.xlane.f32.xlu0 %v5197
  %v5232 = vpop.xlane.xlu0 %5231
  %5233 = vadd.xlane.f32.xlu0 %v5198
  %v5234 = vpop.xlane.xlu0 %5233
  %v5235 = vmul.f32 %v5204, %v115
  %v5236 = vmul.f32 %v5206, %v115
  %v5237 = vmul.f32 %v5208, %v115
  %v5238 = vmul.f32 %v5210, %v115
  %v5239 = vmul.f32 %v5212, %v115
  %v5240 = vmul.f32 %v5214, %v115
  %v5241 = vmul.f32 %v5216, %v115
  %v5242 = vmul.f32 %v5218, %v115
  %v5243 = vmul.f32 %v5220, %v115
  %v5244 = vmul.f32 %v5222, %v115
  %v5245 = vmul.f32 %v5224, %v115
  %v5246 = vmul.f32 %v5226, %v115
  %v5247 = vmul.f32 %v5228, %v115
  %v5248 = vmul.f32 %v5230, %v115
  %v5249 = vmul.f32 %v5232, %v115
  %v5250 = vmul.f32 %v5234, %v115
  %v5251 = vsub.f32 %v5183, %v5235
  %v5252 = vsub.f32 %v5184, %v5236
  %v5253 = vsub.f32 %v5185, %v5237
  %v5254 = vsub.f32 %v5186, %v5238
  %v5255 = vsub.f32 %v5187, %v5239
  %v5256 = vsub.f32 %v5188, %v5240
  %v5257 = vsub.f32 %v5189, %v5241
  %v5258 = vsub.f32 %v5190, %v5242
  %v5259 = vsub.f32 %v5191, %v5243
  %v5260 = vsub.f32 %v5192, %v5244
  %v5261 = vsub.f32 %v5193, %v5245
  %v5262 = vsub.f32 %v5194, %v5246
  %v5263 = vsub.f32 %v5195, %v5247
  %v5264 = vsub.f32 %v5196, %v5248
  %v5265 = vsub.f32 %v5197, %v5249
  %v5266 = vsub.f32 %v5198, %v5250
  %v5267 = vmul.f32 %v5251, %v5251
  %v5268 = vmul.f32 %v5252, %v5252
  %v5269 = vmul.f32 %v5253, %v5253
  %v5270 = vmul.f32 %v5254, %v5254
  %v5271 = vmul.f32 %v5255, %v5255
  %v5272 = vmul.f32 %v5256, %v5256
  %v5273 = vmul.f32 %v5257, %v5257
  %v5274 = vmul.f32 %v5258, %v5258
  %v5275 = vmul.f32 %v5259, %v5259
  %v5276 = vmul.f32 %v5260, %v5260
  %v5277 = vmul.f32 %v5261, %v5261
  %v5278 = vmul.f32 %v5262, %v5262
  %v5279 = vmul.f32 %v5263, %v5263
  %v5280 = vmul.f32 %v5264, %v5264
  %v5281 = vmul.f32 %v5265, %v5265
  %v5282 = vmul.f32 %v5266, %v5266
  %5283 = vadd.xlane.f32.xlu0 %v5267
  %v5284 = vpop.xlane.xlu0 %5283
  %5285 = vadd.xlane.f32.xlu0 %v5268
  %v5286 = vpop.xlane.xlu0 %5285
  %5287 = vadd.xlane.f32.xlu0 %v5269
  %v5288 = vpop.xlane.xlu0 %5287
  %5289 = vadd.xlane.f32.xlu0 %v5270
  %v5290 = vpop.xlane.xlu0 %5289
  %5291 = vadd.xlane.f32.xlu0 %v5271
  %v5292 = vpop.xlane.xlu0 %5291
  %5293 = vadd.xlane.f32.xlu0 %v5272
  %v5294 = vpop.xlane.xlu0 %5293
  %5295 = vadd.xlane.f32.xlu0 %v5273
  %v5296 = vpop.xlane.xlu0 %5295
  %5297 = vadd.xlane.f32.xlu0 %v5274
  %v5298 = vpop.xlane.xlu0 %5297
  %5299 = vadd.xlane.f32.xlu0 %v5275
  %v5300 = vpop.xlane.xlu0 %5299
  %5301 = vadd.xlane.f32.xlu0 %v5276
  %v5302 = vpop.xlane.xlu0 %5301
  %5303 = vadd.xlane.f32.xlu0 %v5277
  %v5304 = vpop.xlane.xlu0 %5303
  %5305 = vadd.xlane.f32.xlu0 %v5278
  %v5306 = vpop.xlane.xlu0 %5305
  %5307 = vadd.xlane.f32.xlu0 %v5279
  %v5308 = vpop.xlane.xlu0 %5307
  %5309 = vadd.xlane.f32.xlu0 %v5280
  %v5310 = vpop.xlane.xlu0 %5309
  %5311 = vadd.xlane.f32.xlu0 %v5281
  %v5312 = vpop.xlane.xlu0 %5311
  %5313 = vadd.xlane.f32.xlu0 %v5282
  %v5314 = vpop.xlane.xlu0 %5313
  %v5315 = vmul.f32 %v5284, %v115
  %v5316 = vmul.f32 %v5286, %v115
  %v5317 = vmul.f32 %v5288, %v115
  %v5318 = vmul.f32 %v5290, %v115
  %v5319 = vmul.f32 %v5292, %v115
  %v5320 = vmul.f32 %v5294, %v115
  %v5321 = vmul.f32 %v5296, %v115
  %v5322 = vmul.f32 %v5298, %v115
  %v5323 = vmul.f32 %v5300, %v115
  %v5324 = vmul.f32 %v5302, %v115
  %v5325 = vmul.f32 %v5304, %v115
  %v5326 = vmul.f32 %v5306, %v115
  %v5327 = vmul.f32 %v5308, %v115
  %v5328 = vmul.f32 %v5310, %v115
  %v5329 = vmul.f32 %v5312, %v115
  %v5330 = vmul.f32 %v5314, %v115
  %v5331 = vadd.f32 %v5315, 1e-05
  %v5332 = vadd.f32 %v5316, 1e-05
  %v5333 = vadd.f32 %v5317, 1e-05
  %v5334 = vadd.f32 %v5318, 1e-05
  %v5335 = vadd.f32 %v5319, 1e-05
  %v5336 = vadd.f32 %v5320, 1e-05
  %v5337 = vadd.f32 %v5321, 1e-05
  %v5338 = vadd.f32 %v5322, 1e-05
  %v5339 = vadd.f32 %v5323, 1e-05
  %v5340 = vadd.f32 %v5324, 1e-05
  %v5341 = vadd.f32 %v5325, 1e-05
  %v5342 = vadd.f32 %v5326, 1e-05
  %v5343 = vadd.f32 %v5327, 1e-05
  %v5344 = vadd.f32 %v5328, 1e-05
  %v5345 = vadd.f32 %v5329, 1e-05
  %v5346 = vadd.f32 %v5330, 1e-05
  %v5347 = vrsqrt.pop %v5331
  %v5348 = vrsqrt.pop %v5332
  %v5349 = vrsqrt.pop %v5333
  %v5350 = vrsqrt.pop %v5334
  %v5351 = vrsqrt.pop %v5335
  %v5352 = vrsqrt.pop %v5336
  %v5353 = vrsqrt.pop %v5337
  %v5354 = vrsqrt.pop %v5338
  %v5355 = vrsqrt.pop %v5339
  %v5356 = vrsqrt.pop %v5340
  %v5357 = vrsqrt.pop %v5341
  %v5358 = vrsqrt.pop %v5342
  %v5359 = vrsqrt.pop %v5343
  %v5360 = vrsqrt.pop %v5344
  %v5361 = vrsqrt.pop %v5345
  %v5362 = vrsqrt.pop %v5346
  %v5363 = vmul.f32 %v5251, %v5347
  %v5364 = vmul.f32 %v5252, %v5348
  %v5365 = vmul.f32 %v5253, %v5349
  %v5366 = vmul.f32 %v5254, %v5350
  %v5367 = vmul.f32 %v5255, %v5351
  %v5368 = vmul.f32 %v5256, %v5352
  %v5369 = vmul.f32 %v5257, %v5353
  %v5370 = vmul.f32 %v5258, %v5354
  %v5371 = vmul.f32 %v5259, %v5355
  %v5372 = vmul.f32 %v5260, %v5356
  %v5373 = vmul.f32 %v5261, %v5357
  %v5374 = vmul.f32 %v5262, %v5358
  %v5375 = vmul.f32 %v5263, %v5359
  %v5376 = vmul.f32 %v5264, %v5360
  %v5377 = vmul.f32 %v5265, %v5361
  %v5378 = vmul.f32 %v5266, %v5362
  %v5380 = vlaneseq
  %v5381 = vshrl.u32 %v5380, 7
  %v5382 = vsub.s32 0, %v5381
  %v5383 = vrot.slane %v5200, %v5382
  %v5385 = vmul.f32 %v5363, %v5383
  %v5386 = vmul.f32 %v5364, %v5383
  %v5387 = vmul.f32 %v5365, %v5383
  %v5388 = vmul.f32 %v5366, %v5383
  %v5389 = vmul.f32 %v5367, %v5383
  %v5390 = vmul.f32 %v5368, %v5383
  %v5391 = vmul.f32 %v5369, %v5383
  %v5392 = vmul.f32 %v5370, %v5383
  %v5393 = vmul.f32 %v5371, %v5383
  %v5394 = vmul.f32 %v5372, %v5383
  %v5395 = vmul.f32 %v5373, %v5383
  %v5396 = vmul.f32 %v5374, %v5383
  %v5397 = vmul.f32 %v5375, %v5383
  %v5398 = vmul.f32 %v5376, %v5383
  %v5399 = vmul.f32 %v5377, %v5383
  %v5400 = vmul.f32 %v5378, %v5383
  %v5402 = vlaneseq
  %v5403 = vshrl.u32 %v5402, 7
  %v5404 = vsub.s32 0, %v5403
  %v5405 = vrot.slane %v5202, %v5404
  %v5407 = vadd.f32 %v5385, %v5405
  %v5408 = vadd.f32 %v5386, %v5405
  %v5409 = vadd.f32 %v5387, %v5405
  %v5410 = vadd.f32 %v5388, %v5405
  %v5411 = vadd.f32 %v5389, %v5405
  %v5412 = vadd.f32 %v5390, %v5405
  %v5413 = vadd.f32 %v5391, %v5405
  %v5414 = vadd.f32 %v5392, %v5405
  %v5415 = vadd.f32 %v5393, %v5405
  %v5416 = vadd.f32 %v5394, %v5405
  %v5417 = vadd.f32 %v5395, %v5405
  %v5418 = vadd.f32 %v5396, %v5405
  %v5419 = vadd.f32 %v5397, %v5405
  %v5420 = vadd.f32 %v5398, %v5405
  %v5421 = vadd.f32 %v5399, %v5405
  %v5422 = vadd.f32 %v5400, %v5405
  %v5423 = vpack.c.bf16 %v5408, %v5407
  %v5424 = vpack.c.bf16 %v5410, %v5409
  %v5425 = vpack.c.bf16 %v5412, %v5411
  %v5426 = vpack.c.bf16 %v5414, %v5413
  %v5427 = vpack.c.bf16 %v5416, %v5415
  %v5428 = vpack.c.bf16 %v5418, %v5417
  %v5429 = vpack.c.bf16 %v5420, %v5419
  %v5430 = vpack.c.bf16 %v5422, %v5421
  %s5431 = scalar_lea.vmem %s4, 192
  %v5432 = vld [vmem:[%s5431] sm:$0xff]
  %v5433 = vld [vmem:[%s5431 + $0x8] sm:$0xf]
  %v5434 = vld [vmem:[%s5431 + $0xc] sm:$0xff]
  %v5435 = vld [vmem:[%s5431 + $0x14] sm:$0xf]
  %v5436 = vld [vmem:[%s5431 + $0x18] sm:$0xff]
  %v5437 = vld [vmem:[%s5431 + $0x20] sm:$0xf]
  %v5438 = vld [vmem:[%s5431 + $0x24] sm:$0xff]
  %v5439 = vld [vmem:[%s5431 + $0x2c] sm:$0xf]
  %v5440 = vld [vmem:[%s5431 + $0x30] sm:$0xff]
  %v5441 = vld [vmem:[%s5431 + $0x38] sm:$0xf]
  %v5442 = vld [vmem:[%s5431 + $0x3c] sm:$0xff]
  %v5443 = vld [vmem:[%s5431 + $0x44] sm:$0xf]
  %v5444 = vld [vmem:[%s5431 + $0x48] sm:$0xff]
  %v5445 = vld [vmem:[%s5431 + $0x50] sm:$0xf]
  %v5446 = vld [vmem:[%s5431 + $0x54] sm:$0xff]
  %v5447 = vld [vmem:[%s5431 + $0x5c] sm:$0xf]
  %v5448 = vld [vmem:[%s5431 + $0x60] sm:$0xff]
  %v5449 = vld [vmem:[%s5431 + $0x68] sm:$0xf]
  %v5450 = vld [vmem:[%s5431 + $0x6c] sm:$0xff]
  %v5451 = vld [vmem:[%s5431 + $0x74] sm:$0xf]
  %v5452 = vld [vmem:[%s5431 + $0x78] sm:$0xff]
  %v5453 = vld [vmem:[%s5431 + $0x80] sm:$0xf]
  %v5454 = vld [vmem:[%s5431 + $0x84] sm:$0xff]
  %v5455 = vld [vmem:[%s5431 + $0x8c] sm:$0xf]
  %v5456 = vld [vmem:[%s5431 + $0x90] sm:$0xff]
  %v5457 = vld [vmem:[%s5431 + $0x98] sm:$0xf]
  %v5458 = vld [vmem:[%s5431 + $0x9c] sm:$0xff]
  %v5459 = vld [vmem:[%s5431 + $0xa4] sm:$0xf]
  %v5460 = vld [vmem:[%s5431 + $0xa8] sm:$0xff]
  %v5461 = vld [vmem:[%s5431 + $0xb0] sm:$0xf]
  %v5462 = vld [vmem:[%s5431 + $0xb4] sm:$0xff]
  %v5463 = vld [vmem:[%s5431 + $0xbc] sm:$0xf]
  %s5464 = scalar_lea.vmem %s5, 3
  %v5465 = vld [vmem:[%s5464] sm:$0x7]
  %v5467 = vlaneseq
  %v5468 = vshrl.u32 %v5467, 7
  %v5469 = vsub.s32 0, %v5468
  %v5470 = vrot.slane %v5465, %v5469
  %v5471 = vlaneseq
  %v5472 = vshrl.u32 %v5471, 7
  %v5473 = vsub.s32 1, %v5472
  %v5474 = vrot.slane %v5465, %v5473
  %v5475 = vlaneseq
  %v5476 = vshrl.u32 %v5475, 7
  %v5477 = vsub.s32 2, %v5476
  %v5478 = vrot.slane %v5465, %v5477
  %v5514 = vunpack.c.l.b16 %v5432
  %v5515 = vunpack.c.h.b16 %v5432
  %v5516 = vunpack.c.l.b16 %v5433
  %v5517 = vunpack.c.l.b16 %v5434
  %v5518 = vunpack.c.h.b16 %v5434
  %v5519 = vunpack.c.l.b16 %v5435
  %v5520 = vunpack.c.l.b16 %v5436
  %v5521 = vunpack.c.h.b16 %v5436
  %v5522 = vunpack.c.l.b16 %v5437
  %v5523 = vunpack.c.l.b16 %v5438
  %v5524 = vunpack.c.h.b16 %v5438
  %v5525 = vunpack.c.l.b16 %v5439
  %v5526 = vunpack.c.l.b16 %v5440
  %v5527 = vunpack.c.h.b16 %v5440
  %v5528 = vunpack.c.l.b16 %v5441
  %v5529 = vunpack.c.l.b16 %v5442
  %v5530 = vunpack.c.h.b16 %v5442
  %v5531 = vunpack.c.l.b16 %v5443
  %v5532 = vunpack.c.l.b16 %v5444
  %v5533 = vunpack.c.h.b16 %v5444
  %v5534 = vunpack.c.l.b16 %v5445
  %v5535 = vunpack.c.l.b16 %v5446
  %v5536 = vunpack.c.h.b16 %v5446
  %v5537 = vunpack.c.l.b16 %v5447
  %v5538 = vunpack.c.l.b16 %v5448
  %v5539 = vunpack.c.h.b16 %v5448
  %v5540 = vunpack.c.l.b16 %v5449
  %v5541 = vunpack.c.l.b16 %v5450
  %v5542 = vunpack.c.h.b16 %v5450
  %v5543 = vunpack.c.l.b16 %v5451
  %v5544 = vunpack.c.l.b16 %v5452
  %v5545 = vunpack.c.h.b16 %v5452
  %v5546 = vunpack.c.l.b16 %v5453
  %v5547 = vunpack.c.l.b16 %v5454
  %v5548 = vunpack.c.h.b16 %v5454
  %v5549 = vunpack.c.l.b16 %v5455
  %v5550 = vunpack.c.l.b16 %v5456
  %v5551 = vunpack.c.h.b16 %v5456
  %v5552 = vunpack.c.l.b16 %v5457
  %v5553 = vunpack.c.l.b16 %v5458
  %v5554 = vunpack.c.h.b16 %v5458
  %v5555 = vunpack.c.l.b16 %v5459
  %v5556 = vunpack.c.l.b16 %v5460
  %v5557 = vunpack.c.h.b16 %v5460
  %v5558 = vunpack.c.l.b16 %v5461
  %v5559 = vunpack.c.l.b16 %v5462
  %v5560 = vunpack.c.h.b16 %v5462
  %v5561 = vunpack.c.l.b16 %v5463
  %v5562 = vpack.c.b16 %v5517, %v5514
  %v5563 = vpack.c.b16 %v5518, %v5515
  %v5564 = vpack.c.b16 %v5519, %v5516
  %v5565 = vpack.c.b16 %v5523, %v5520
  %v5566 = vpack.c.b16 %v5524, %v5521
  %v5567 = vpack.c.b16 %v5525, %v5522
  %v5568 = vpack.c.b16 %v5529, %v5526
  %v5569 = vpack.c.b16 %v5530, %v5527
  %v5570 = vpack.c.b16 %v5531, %v5528
  %v5571 = vpack.c.b16 %v5535, %v5532
  %v5572 = vpack.c.b16 %v5536, %v5533
  %v5573 = vpack.c.b16 %v5537, %v5534
  %v5574 = vpack.c.b16 %v5541, %v5538
  %v5575 = vpack.c.b16 %v5542, %v5539
  %v5576 = vpack.c.b16 %v5543, %v5540
  %v5577 = vpack.c.b16 %v5547, %v5544
  %v5578 = vpack.c.b16 %v5548, %v5545
  %v5579 = vpack.c.b16 %v5549, %v5546
  %v5580 = vpack.c.b16 %v5553, %v5550
  %v5581 = vpack.c.b16 %v5554, %v5551
  %v5582 = vpack.c.b16 %v5555, %v5552
  %v5583 = vpack.c.b16 %v5559, %v5556
  %v5584 = vpack.c.b16 %v5560, %v5557
  %v5585 = vpack.c.b16 %v5561, %v5558
  %5610 = vmatprep.subr.bf16.mxu0 %v5563
  %5611 = vmatpush1.bf16.msra.mxu0 %v5562
  %5612 = vmatprep.subr.bf16.mxu0 %v5566
  %5613 = vmatpush1.bf16.msra.mxu0 %v5565
  %5614 = vmatprep.subr.bf16.mxu0 %v5569
  %5615 = vmatpush1.bf16.msra.mxu0 %v5568
  %5616 = vmatprep.subr.bf16.mxu0 %v5572
  %5617 = vmatpush1.bf16.msra.mxu0 %v5571
  %5618 = vmatprep.subr.bf16.mxu0 %v5575
  %5619 = vmatpush1.bf16.msra.mxu0 %v5574
  %5620 = vmatprep.subr.bf16.mxu0 %v5578
  %5621 = vmatpush1.bf16.msra.mxu0 %v5577
  %5622 = vmatprep.subr.bf16.mxu0 %v5581
  %5623 = vmatpush1.bf16.msra.mxu0 %v5580
  %5624 = vmatprep.subr.bf16.mxu0 %v5584
  %5625 = vmatpush1.bf16.msra.mxu0 %v5583
  %5626 = vmatprep.subr.bf16.mxu0 0
  %5627 = vmatpush1.bf16.msra.mxu0 0
  %5628 = vmatprep.subr.bf16.mxu0 0
  %5629 = vmatpush1.bf16.msra.mxu0 0
  %5630 = vmatprep.subr.bf16.mxu0 0
  %5631 = vmatpush1.bf16.msra.mxu0 0
  %5632 = vmatprep.subr.bf16.mxu0 0
  %5633 = vmatpush1.bf16.msra.mxu0 0
  %5634 = vmatprep.subr.bf16.mxu0 0
  %5635 = vmatpush1.bf16.msra.mxu0 0
  %5636 = vmatprep.subr.bf16.mxu0 0
  %5637 = vmatpush1.bf16.msra.mxu0 0
  %5638 = vmatprep.subr.bf16.mxu0 0
  %5639 = vmatpush1.bf16.msra.mxu0 0
  %5640 = vmatprep.subr.bf16.mxu0 0
  %5641 = vmatpush1.bf16.msra.mxu0 0
  %5642 = vmatprep.mubr.bf16.mxu0 0
  %5643 = vmatmul.mubr.bf16.gmra.mrb[0].mxu0 %v5423
  %v5644 = vpop.f32.mrb[0].mxu0
  %v5645 = vadd.f32 %v5470, %v5644
  %v5646 = vpop.f32.mrb[0].mxu0
  %v5647 = vadd.f32 %v5474, %v5646
  %v5648 = vpop.f32.mrb[0].mxu0
  %v5649 = vadd.f32 %v5470, %v5648
  %v5650 = vpop.f32.mrb[0].mxu0
  %v5651 = vadd.f32 %v5474, %v5650
  %5652 = vmatprep.mubr.bf16.mxu0 0
  %5653 = vmatmul.mubr.bf16.gmra.mrb[0].mxu0 %v5424
  %v5654 = vpop.f32.mrb[0].mxu0
  %v5655 = vadd.f32 %v5470, %v5654
  %v5656 = vpop.f32.mrb[0].mxu0
  %v5657 = vadd.f32 %v5474, %v5656
  %v5658 = vpop.f32.mrb[0].mxu0
  %v5659 = vadd.f32 %v5470, %v5658
  %v5660 = vpop.f32.mrb[0].mxu0
  %v5661 = vadd.f32 %v5474, %v5660
  %5662 = vmatprep.mubr.bf16.mxu0 0
  %5663 = vmatmul.mubr.bf16.gmra.mrb[0].mxu0 %v5425
  %v5664 = vpop.f32.mrb[0].mxu0
  %v5665 = vadd.f32 %v5470, %v5664
  %v5666 = vpop.f32.mrb[0].mxu0
  %v5667 = vadd.f32 %v5474, %v5666
  %v5668 = vpop.f32.mrb[0].mxu0
  %v5669 = vadd.f32 %v5470, %v5668
  %v5670 = vpop.f32.mrb[0].mxu0
  %v5671 = vadd.f32 %v5474, %v5670
  %5672 = vmatprep.mubr.bf16.mxu0 0
  %5673 = vmatmul.mubr.bf16.gmra.mrb[0].mxu0 %v5426
  %v5674 = vpop.f32.mrb[0].mxu0
  %v5675 = vadd.f32 %v5470, %v5674
  %v5676 = vpop.f32.mrb[0].mxu0
  %v5677 = vadd.f32 %v5474, %v5676
  %v5678 = vpop.f32.mrb[0].mxu0
  %v5679 = vadd.f32 %v5470, %v5678
  %v5680 = vpop.f32.mrb[0].mxu0
  %v5681 = vadd.f32 %v5474, %v5680
  %5682 = vmatprep.mubr.bf16.mxu0 0
  %5683 = vmatmul.mubr.bf16.gmra.mrb[0].mxu0 %v5427
  %v5684 = vpop.f32.mrb[0].mxu0
  %v5685 = vadd.f32 %v5470, %v5684
  %v5686 = vpop.f32.mrb[0].mxu0
  %v5687 = vadd.f32 %v5474, %v5686
  %v5688 = vpop.f32.mrb[0].mxu0
  %v5689 = vadd.f32 %v5470, %v5688
  %v5690 = vpop.f32.mrb[0].mxu0
  %v5691 = vadd.f32 %v5474, %v5690
  %5692 = vmatprep.mubr.bf16.mxu0 0
  %5693 = vmatmul.mubr.bf16.gmra.mrb[0].mxu0 %v5428
  %v5694 = vpop.f32.mrb[0].mxu0
  %v5695 = vadd.f32 %v5470, %v5694
  %v5696 = vpop.f32.mrb[0].mxu0
  %v5697 = vadd.f32 %v5474, %v5696
  %v5698 = vpop.f32.mrb[0].mxu0
  %v5699 = vadd.f32 %v5470, %v5698
  %v5700 = vpop.f32.mrb[0].mxu0
  %v5701 = vadd.f32 %v5474, %v5700
  %5702 = vmatprep.mubr.bf16.mxu0 0
  %5703 = vmatmul.mubr.bf16.gmra.mrb[0].mxu0 %v5429
  %v5704 = vpop.f32.mrb[0].mxu0
  %v5705 = vadd.f32 %v5470, %v5704
  %v5706 = vpop.f32.mrb[0].mxu0
  %v5707 = vadd.f32 %v5474, %v5706
  %v5708 = vpop.f32.mrb[0].mxu0
  %v5709 = vadd.f32 %v5470, %v5708
  %v5710 = vpop.f32.mrb[0].mxu0
  %v5711 = vadd.f32 %v5474, %v5710
  %5712 = vmatprep.mubr.bf16.mxu0 0
  %5713 = vmatmul.mubr.bf16.gmra.mrb[0].mxu0 %v5430
  %v5714 = vpop.f32.mrb[0].mxu0
  %v5715 = vadd.f32 %v5470, %v5714
  %v5716 = vpop.f32.mrb[0].mxu0
  %v5717 = vadd.f32 %v5474, %v5716
  %v5718 = vpop.f32.mrb[0].mxu0
  %v5719 = vadd.f32 %v5470, %v5718
  %v5720 = vpop.f32.mrb[0].mxu0
  %v5721 = vadd.f32 %v5474, %v5720
  %5722 = vdwg.mxu0
  %5723 = vmatprep.subr.bf16.mxu0 0
  %5724 = vmatpush1.bf16.msra.mxu0 %v5564
  %5725 = vmatprep.subr.bf16.mxu0 0
  %5726 = vmatpush1.bf16.msra.mxu0 %v5567
  %5727 = vmatprep.subr.bf16.mxu0 0
  %5728 = vmatpush1.bf16.msra.mxu0 %v5570
  %5729 = vmatprep.subr.bf16.mxu0 0
  %5730 = vmatpush1.bf16.msra.mxu0 %v5573
  %5731 = vmatprep.subr.bf16.mxu0 0
  %5732 = vmatpush1.bf16.msra.mxu0 %v5576
  %5733 = vmatprep.subr.bf16.mxu0 0
  %5734 = vmatpush1.bf16.msra.mxu0 %v5579
  %5735 = vmatprep.subr.bf16.mxu0 0
  %5736 = vmatpush1.bf16.msra.mxu0 %v5582
  %5737 = vmatprep.subr.bf16.mxu0 0
  %5738 = vmatpush1.bf16.msra.mxu0 %v5585
  %5739 = vmatprep.subr.bf16.mxu0 0
  %5740 = vmatpush1.bf16.msra.mxu0 0
  %5741 = vmatprep.subr.bf16.mxu0 0
  %5742 = vmatpush1.bf16.msra.mxu0 0
  %5743 = vmatprep.subr.bf16.mxu0 0
  %5744 = vmatpush1.bf16.msra.mxu0 0
  %5745 = vmatprep.subr.bf16.mxu0 0
  %5746 = vmatpush1.bf16.msra.mxu0 0
  %5747 = vmatprep.subr.bf16.mxu0 0
  %5748 = vmatpush1.bf16.msra.mxu0 0
  %5749 = vmatprep.subr.bf16.mxu0 0
  %5750 = vmatpush1.bf16.msra.mxu0 0
  %5751 = vmatprep.subr.bf16.mxu0 0
  %5752 = vmatpush1.bf16.msra.mxu0 0
  %5753 = vmatprep.subr.bf16.mxu0 0
  %5754 = vmatpush1.bf16.msra.mxu0 0
  %5755 = vmatprep.mubr.bf16.mxu0 0
  %5756 = vmatmul.mubr.bf16.gmra.mrb[0].mxu0 %v5423
  %v5757 = vpop.f32.mrb[0].mxu0
  %v5758 = vadd.f32 %v5478, %v5757
  %v5759 = vpop.f32.mrb[0].mxu0
  %v5760 = vpop.f32.mrb[0].mxu0
  %v5761 = vadd.f32 %v5478, %v5760
  %v5762 = vpop.f32.mrb[0].mxu0
  %5763 = vmatprep.mubr.bf16.mxu0 0
  %5764 = vmatmul.mubr.bf16.gmra.mrb[0].mxu0 %v5424
  %v5765 = vpop.f32.mrb[0].mxu0
  %v5766 = vadd.f32 %v5478, %v5765
  %v5767 = vpop.f32.mrb[0].mxu0
  %v5768 = vpop.f32.mrb[0].mxu0
  %v5769 = vadd.f32 %v5478, %v5768
  %v5770 = vpop.f32.mrb[0].mxu0
  %5771 = vmatprep.mubr.bf16.mxu0 0
  %5772 = vmatmul.mubr.bf16.gmra.mrb[0].mxu0 %v5425
  %v5773 = vpop.f32.mrb[0].mxu0
  %v5774 = vadd.f32 %v5478, %v5773
  %v5775 = vpop.f32.mrb[0].mxu0
  %v5776 = vpop.f32.mrb[0].mxu0
  %v5777 = vadd.f32 %v5478, %v5776
  %v5778 = vpop.f32.mrb[0].mxu0
  %5779 = vmatprep.mubr.bf16.mxu0 0
  %5780 = vmatmul.mubr.bf16.gmra.mrb[0].mxu0 %v5426
  %v5781 = vpop.f32.mrb[0].mxu0
  %v5782 = vadd.f32 %v5478, %v5781
  %v5783 = vpop.f32.mrb[0].mxu0
  %v5784 = vpop.f32.mrb[0].mxu0
  %v5785 = vadd.f32 %v5478, %v5784
  %v5786 = vpop.f32.mrb[0].mxu0
  %5787 = vmatprep.mubr.bf16.mxu0 0
  %5788 = vmatmul.mubr.bf16.gmra.mrb[0].mxu0 %v5427
  %v5789 = vpop.f32.mrb[0].mxu0
  %v5790 = vadd.f32 %v5478, %v5789
  %v5791 = vpop.f32.mrb[0].mxu0
  %v5792 = vpop.f32.mrb[0].mxu0
  %v5793 = vadd.f32 %v5478, %v5792
  %v5794 = vpop.f32.mrb[0].mxu0
  %5795 = vmatprep.mubr.bf16.mxu0 0
  %5796 = vmatmul.mubr.bf16.gmra.mrb[0].mxu0 %v5428
  %v5797 = vpop.f32.mrb[0].mxu0
  %v5798 = vadd.f32 %v5478, %v5797
  %v5799 = vpop.f32.mrb[0].mxu0
  %v5800 = vpop.f32.mrb[0].mxu0
  %v5801 = vadd.f32 %v5478, %v5800
  %v5802 = vpop.f32.mrb[0].mxu0
  %5803 = vmatprep.mubr.bf16.mxu0 0
  %5804 = vmatmul.mubr.bf16.gmra.mrb[0].mxu0 %v5429
  %v5805 = vpop.f32.mrb[0].mxu0
  %v5806 = vadd.f32 %v5478, %v5805
  %v5807 = vpop.f32.mrb[0].mxu0
  %v5808 = vpop.f32.mrb[0].mxu0
  %v5809 = vadd.f32 %v5478, %v5808
  %v5810 = vpop.f32.mrb[0].mxu0
  %5811 = vmatprep.mubr.bf16.mxu0 0
  %5812 = vmatmul.mubr.bf16.gmra.mrb[0].mxu0 %v5430
  %v5813 = vpop.f32.mrb[0].mxu0
  %v5814 = vadd.f32 %v5478, %v5813
  %v5815 = vpop.f32.mrb[0].mxu0
  %v5816 = vpop.f32.mrb[0].mxu0
  %v5817 = vadd.f32 %v5478, %v5816
  %v5818 = vpop.f32.mrb[0].mxu0
  %5819 = vdwg.mxu0
  %v5820 = vpack.c.bf16 %v5649, %v5645
  %v5821 = vpack.c.bf16 %v5659, %v5655
  %v5822 = vpack.c.bf16 %v5669, %v5665
  %v5823 = vpack.c.bf16 %v5679, %v5675
  %v5824 = vpack.c.bf16 %v5689, %v5685
  %v5825 = vpack.c.bf16 %v5699, %v5695
  %v5826 = vpack.c.bf16 %v5709, %v5705
  %v5827 = vpack.c.bf16 %v5719, %v5715
  %v5828 = vpack.c.bf16 %v5651, %v5647
  %v5829 = vpack.c.bf16 %v5661, %v5657
  %v5830 = vpack.c.bf16 %v5671, %v5667
  %v5831 = vpack.c.bf16 %v5681, %v5677
  %v5832 = vpack.c.bf16 %v5691, %v5687
  %v5833 = vpack.c.bf16 %v5701, %v5697
  %v5834 = vpack.c.bf16 %v5711, %v5707
  %v5835 = vpack.c.bf16 %v5721, %v5717
  %v5836 = vpack.c.bf16 %v5761, %v5758
  %v5837 = vpack.c.bf16 %v5769, %v5766
  %v5838 = vpack.c.bf16 %v5777, %v5774
  %v5839 = vpack.c.bf16 %v5785, %v5782
  %v5840 = vpack.c.bf16 %v5793, %v5790
  %v5841 = vpack.c.bf16 %v5801, %v5798
  %v5842 = vpack.c.bf16 %v5809, %v5806
  %v5843 = vpack.c.bf16 %v5817, %v5814
  %v5845 = vsel %vm723, %v5820, 0
  %v5848 = vsel %vm723, %v5821, 0
  %v5851 = vsel %vm723, %v5822, 0
  %v5854 = vsel %vm723, %v5823, 0
  %v5857 = vsel %vm723, %v5828, 0
  %v5860 = vsel %vm723, %v5829, 0
  %v5863 = vsel %vm723, %v5830, 0
  %v5866 = vsel %vm723, %v5831, 0
  %5868 = vmatprep.subr.bf16.mxu0 0
  %5869 = vmatpush1.bf16.xpose.msra.mxu0 %v5857
  %5870 = vmatprep.subr.bf16.mxu0 0
  %5871 = vmatpush1.bf16.xpose.msra.mxu0 %v5860
  %5872 = vmatprep.subr.bf16.mxu0 0
  %5873 = vmatpush1.bf16.xpose.msra.mxu0 %v5863
  %5874 = vmatprep.subr.bf16.mxu0 0
  %5875 = vmatpush1.bf16.xpose.msra.mxu0 %v5866
  %5876 = vmatprep.subr.bf16.mxu0 0
  %5877 = vmatpush1.bf16.xpose.msra.mxu0 0
  %5878 = vmatprep.subr.bf16.mxu0 0
  %5879 = vmatpush1.bf16.xpose.msra.mxu0 0
  %5880 = vmatprep.subr.bf16.mxu0 0
  %5881 = vmatpush1.bf16.xpose.msra.mxu0 0
  %5882 = vmatprep.subr.bf16.mxu0 0
  %5883 = vmatpush1.bf16.xpose.msra.mxu0 0
  %5884 = vmatprep.subr.bf16.mxu0 0
  %5885 = vmatpush1.bf16.xpose.msra.mxu0 0
  %5886 = vmatprep.subr.bf16.mxu0 0
  %5887 = vmatpush1.bf16.xpose.msra.mxu0 0
  %5888 = vmatprep.subr.bf16.mxu0 0
  %5889 = vmatpush1.bf16.xpose.msra.mxu0 0
  %5890 = vmatprep.subr.bf16.mxu0 0
  %5891 = vmatpush1.bf16.xpose.msra.mxu0 0
  %5892 = vmatprep.subr.bf16.mxu0 0
  %5893 = vmatpush1.bf16.xpose.msra.mxu0 0
  %5894 = vmatprep.subr.bf16.mxu0 0
  %5895 = vmatpush1.bf16.xpose.msra.mxu0 0
  %5896 = vmatprep.subr.bf16.mxu0 0
  %5897 = vmatpush1.bf16.xpose.msra.mxu0 0
  %5898 = vmatprep.subr.bf16.mxu0 0
  %5899 = vmatpush1.bf16.xpose.msra.mxu0 0
  %5900 = vmatprep.mubr.bf16.mxu0 0
  %5901 = vmatmul.mubr.bf16.gmra.mrb[0].mxu0 %v5845
  %v5902 = vpop.f32.mrb[0].mxu0
  %v5903 = vadd.f32 %v73, %v5902
  %v5904 = vpop.f32.mrb[0].mxu0
  %v5905 = vpop.f32.mrb[0].mxu0
  %v5906 = vadd.f32 %v74, %v5905
  %v5907 = vpop.f32.mrb[0].mxu0
  %5908 = vmatprep.mubr.bf16.mxu0 0
  %5909 = vmatmul.mubr.bf16.gmra.mrb[0].mxu0 %v5848
  %v5910 = vpop.f32.mrb[0].mxu0
  %v5911 = vadd.f32 %v75, %v5910
  %v5912 = vpop.f32.mrb[0].mxu0
  %v5913 = vpop.f32.mrb[0].mxu0
  %v5914 = vadd.f32 %v76, %v5913
  %v5915 = vpop.f32.mrb[0].mxu0
  %5916 = vmatprep.mubr.bf16.mxu0 0
  %5917 = vmatmul.mubr.bf16.gmra.mrb[0].mxu0 %v5851
  %v5918 = vpop.f32.mrb[0].mxu0
  %v5919 = vadd.f32 %v77, %v5918
  %v5920 = vpop.f32.mrb[0].mxu0
  %v5921 = vpop.f32.mrb[0].mxu0
  %v5922 = vadd.f32 %v78, %v5921
  %v5923 = vpop.f32.mrb[0].mxu0
  %5924 = vmatprep.mubr.bf16.mxu0 0
  %5925 = vmatmul.mubr.bf16.gmra.mrb[0].mxu0 %v5854
  %v5926 = vpop.f32.mrb[0].mxu0
  %v5927 = vadd.f32 %v79, %v5926
  %v5928 = vpop.f32.mrb[0].mxu0
  %v5929 = vpop.f32.mrb[0].mxu0
  %v5930 = vadd.f32 %v80, %v5929
  %v5931 = vpop.f32.mrb[0].mxu0
  %5932 = vdwg.mxu0
  %v5933 = vsel %vm813, %v5903, -inf
  %5934 = vmax.xlane.f32.xlu0 %v5933
  %v5935 = vpop.xlane.xlu0 %5934
  %v5936 = vsel %vm813, %v5906, -inf
  %5937 = vmax.xlane.f32.xlu0 %v5936
  %v5938 = vpop.xlane.xlu0 %5937
  %v5939 = vsel %vm813, %v5911, -inf
  %5940 = vmax.xlane.f32.xlu0 %v5939
  %v5941 = vpop.xlane.xlu0 %5940
  %v5942 = vsel %vm813, %v5914, -inf
  %5943 = vmax.xlane.f32.xlu0 %v5942
  %v5944 = vpop.xlane.xlu0 %5943
  %v5945 = vsel %vm813, %v5919, -inf
  %5946 = vmax.xlane.f32.xlu0 %v5945
  %v5947 = vpop.xlane.xlu0 %5946
  %v5948 = vsel %vm813, %v5922, -inf
  %5949 = vmax.xlane.f32.xlu0 %v5948
  %v5950 = vpop.xlane.xlu0 %5949
  %v5951 = vsel %vm813, %v5927, -inf
  %5952 = vmax.xlane.f32.xlu0 %v5951
  %v5953 = vpop.xlane.xlu0 %5952
  %v5954 = vsel %vm813, %v5930, -inf
  %5955 = vmax.xlane.f32.xlu0 %v5954
  %v5956 = vpop.xlane.xlu0 %5955
  %v5957 = vsub.f32 %v5903, %v5935
  %v5958 = vsub.f32 %v5906, %v5938
  %v5959 = vsub.f32 %v5911, %v5941
  %v5960 = vsub.f32 %v5914, %v5944
  %v5961 = vsub.f32 %v5919, %v5947
  %v5962 = vsub.f32 %v5922, %v5950
  %v5963 = vsub.f32 %v5927, %v5953
  %v5964 = vsub.f32 %v5930, %v5956
  %v5965 = vmul.f32 %v5957, 1.442695
  %v5966 = vpow.pop %v5965
  %v5967 = vmul.f32 %v5958, 1.442695
  %v5968 = vpow.pop %v5967
  %v5969 = vmul.f32 %v5959, 1.442695
  %v5970 = vpow.pop %v5969
  %v5971 = vmul.f32 %v5960, 1.442695
  %v5972 = vpow.pop %v5971
  %v5973 = vmul.f32 %v5961, 1.442695
  %v5974 = vpow.pop %v5973
  %v5975 = vmul.f32 %v5962, 1.442695
  %v5976 = vpow.pop %v5975
  %v5977 = vmul.f32 %v5963, 1.442695
  %v5978 = vpow.pop %v5977
  %v5979 = vmul.f32 %v5964, 1.442695
  %v5980 = vpow.pop %v5979
  %v5981 = vsel %vm813, %v5966, 0.0
  %5982 = vadd.xlane.f32.xlu0 %v5981
  %v5983 = vpop.xlane.xlu0 %5982
  %v5984 = vsel %vm813, %v5968, 0.0
  %5985 = vadd.xlane.f32.xlu0 %v5984
  %v5986 = vpop.xlane.xlu0 %5985
  %v5987 = vsel %vm813, %v5970, 0.0
  %5988 = vadd.xlane.f32.xlu0 %v5987
  %v5989 = vpop.xlane.xlu0 %5988
  %v5990 = vsel %vm813, %v5972, 0.0
  %5991 = vadd.xlane.f32.xlu0 %v5990
  %v5992 = vpop.xlane.xlu0 %5991
  %v5993 = vsel %vm813, %v5974, 0.0
  %5994 = vadd.xlane.f32.xlu0 %v5993
  %v5995 = vpop.xlane.xlu0 %5994
  %v5996 = vsel %vm813, %v5976, 0.0
  %5997 = vadd.xlane.f32.xlu0 %v5996
  %v5998 = vpop.xlane.xlu0 %5997
  %v5999 = vsel %vm813, %v5978, 0.0
  %6000 = vadd.xlane.f32.xlu0 %v5999
  %v6001 = vpop.xlane.xlu0 %6000
  %v6002 = vsel %vm813, %v5980, 0.0
  %6003 = vadd.xlane.f32.xlu0 %v6002
  %v6004 = vpop.xlane.xlu0 %6003
  %v6005 = vrcp.pop %v5983
  %v6006 = vrcp.pop %v5986
  %v6007 = vrcp.pop %v5989
  %v6008 = vrcp.pop %v5992
  %v6009 = vrcp.pop %v5995
  %v6010 = vrcp.pop %v5998
  %v6011 = vrcp.pop %v6001
  %v6012 = vrcp.pop %v6004
  %v6013 = vmul.f32 %v5966, %v6005
  %v6014 = vmul.f32 %v5968, %v6006
  %v6015 = vmul.f32 %v5970, %v6007
  %v6016 = vmul.f32 %v5972, %v6008
  %v6017 = vmul.f32 %v5974, %v6009
  %v6018 = vmul.f32 %v5976, %v6010
  %v6019 = vmul.f32 %v5978, %v6011
  %v6020 = vmul.f32 %v5980, %v6012
  %v6021 = vpack.c.bf16 %v6014, %v6013
  %v6022 = vpack.c.bf16 %v6016, %v6015
  %v6023 = vpack.c.bf16 %v6018, %v6017
  %v6024 = vpack.c.bf16 %v6020, %v6019
  %v6026 = vsel %vm813, %v6021, 0
  %v6029 = vsel %vm813, %v6022, 0
  %v6032 = vsel %vm813, %v6023, 0
  %v6035 = vsel %vm813, %v6024, 0
  %6037 = vmatprep.subr.bf16.mxu0 0
  %6038 = vmatpush1.bf16.msra.mxu0 %v5836
  %6039 = vmatprep.subr.bf16.mxu0 0
  %6040 = vmatpush1.bf16.msra.mxu0 %v5837
  %6041 = vmatprep.subr.bf16.mxu0 0
  %6042 = vmatpush1.bf16.msra.mxu0 %v5838
  %6043 = vmatprep.subr.bf16.mxu0 0
  %6044 = vmatpush1.bf16.msra.mxu0 %v5839
  %6045 = vmatprep.subr.bf16.mxu0 0
  %6046 = vmatpush1.bf16.msra.mxu0 0
  %6047 = vmatprep.subr.bf16.mxu0 0
  %6048 = vmatpush1.bf16.msra.mxu0 0
  %6049 = vmatprep.subr.bf16.mxu0 0
  %6050 = vmatpush1.bf16.msra.mxu0 0
  %6051 = vmatprep.subr.bf16.mxu0 0
  %6052 = vmatpush1.bf16.msra.mxu0 0
  %6053 = vmatprep.subr.bf16.mxu0 0
  %6054 = vmatpush1.bf16.msra.mxu0 0
  %6055 = vmatprep.subr.bf16.mxu0 0
  %6056 = vmatpush1.bf16.msra.mxu0 0
  %6057 = vmatprep.subr.bf16.mxu0 0
  %6058 = vmatpush1.bf16.msra.mxu0 0
  %6059 = vmatprep.subr.bf16.mxu0 0
  %6060 = vmatpush1.bf16.msra.mxu0 0
  %6061 = vmatprep.subr.bf16.mxu0 0
  %6062 = vmatpush1.bf16.msra.mxu0 0
  %6063 = vmatprep.subr.bf16.mxu0 0
  %6064 = vmatpush1.bf16.msra.mxu0 0
  %6065 = vmatprep.subr.bf16.mxu0 0
  %6066 = vmatpush1.bf16.msra.mxu0 0
  %6067 = vmatprep.subr.bf16.mxu0 0
  %6068 = vmatpush1.bf16.msra.mxu0 0
  %6069 = vmatprep.mubr.bf16.mxu0 0
  %6070 = vmatmul.mubr.bf16.gmra.mrb[0].mxu0 %v6026
  %v6071 = vpop.f32.mrb[0].mxu0
  %v6072 = vadd.f32 0.0, %v6071
  %v6073 = vpop.f32.mrb[0].mxu0
  %v6074 = vpop.f32.mrb[0].mxu0
  %v6075 = vadd.f32 0.0, %v6074
  %v6076 = vpop.f32.mrb[0].mxu0
  %6077 = vmatprep.mubr.bf16.mxu0 0
  %6078 = vmatmul.mubr.bf16.gmra.mrb[0].mxu0 %v6029
  %v6079 = vpop.f32.mrb[0].mxu0
  %v6080 = vadd.f32 0.0, %v6079
  %v6081 = vpop.f32.mrb[0].mxu0
  %v6082 = vpop.f32.mrb[0].mxu0
  %v6083 = vadd.f32 0.0, %v6082
  %v6084 = vpop.f32.mrb[0].mxu0
  %6085 = vmatprep.mubr.bf16.mxu0 0
  %6086 = vmatmul.mubr.bf16.gmra.mrb[0].mxu0 %v6032
  %v6087 = vpop.f32.mrb[0].mxu0
  %v6088 = vadd.f32 0.0, %v6087
  %v6089 = vpop.f32.mrb[0].mxu0
  %v6090 = vpop.f32.mrb[0].mxu0
  %v6091 = vadd.f32 0.0, %v6090
  %v6092 = vpop.f32.mrb[0].mxu0
  %6093 = vmatprep.mubr.bf16.mxu0 0
  %6094 = vmatmul.mubr.bf16.gmra.mrb[0].mxu0 %v6035
  %v6095 = vpop.f32.mrb[0].mxu0
  %v6096 = vadd.f32 0.0, %v6095
  %v6097 = vpop.f32.mrb[0].mxu0
  %v6098 = vpop.f32.mrb[0].mxu0
  %v6099 = vadd.f32 0.0, %v6098
  %v6100 = vpop.f32.mrb[0].mxu0
  %6101 = vdwg.mxu0
  %6102 = vst.msk [vmem:[#allocation2] sm:$0xff] %vm723, %v6072
  %6103 = vst.msk [vmem:[#allocation2 + $0x8] sm:$0xff] %vm723, %v6075
  %6104 = vst.msk [vmem:[#allocation2 + $0x10] sm:$0xff] %vm723, %v6080
  %6105 = vst.msk [vmem:[#allocation2 + $0x18] sm:$0xff] %vm723, %v6083
  %6106 = vst.msk [vmem:[#allocation2 + $0x20] sm:$0xff] %vm723, %v6088
  %6107 = vst.msk [vmem:[#allocation2 + $0x28] sm:$0xff] %vm723, %v6091
  %6108 = vst.msk [vmem:[#allocation2 + $0x30] sm:$0xff] %vm723, %v6096
  %6109 = vst.msk [vmem:[#allocation2 + $0x38] sm:$0xff] %vm723, %v6099
  %6114 = vrot.lane.b32.xlu0 %v5820, 96
  %v6115 = vpop.permute.xlu0 %6114
  %6116 = vrot.lane.b32.xlu0 %v5821, 96
  %v6117 = vpop.permute.xlu0 %6116
  %6118 = vrot.lane.b32.xlu0 %v5822, 96
  %v6119 = vpop.permute.xlu0 %6118
  %6120 = vrot.lane.b32.xlu0 %v5823, 96
  %v6121 = vpop.permute.xlu0 %6120
  %6126 = vrot.lane.b32.xlu0 %v5828, 96
  %v6127 = vpop.permute.xlu0 %6126
  %6128 = vrot.lane.b32.xlu0 %v5829, 96
  %v6129 = vpop.permute.xlu0 %6128
  %6130 = vrot.lane.b32.xlu0 %v5830, 96
  %v6131 = vpop.permute.xlu0 %6130
  %6132 = vrot.lane.b32.xlu0 %v5831, 96
  %v6133 = vpop.permute.xlu0 %6132
  %v6135 = vsel %vm723, %v6115, 0
  %v6138 = vsel %vm723, %v6117, 0
  %v6141 = vsel %vm723, %v6119, 0
  %v6144 = vsel %vm723, %v6121, 0
  %v6147 = vsel %vm723, %v6127, 0
  %v6150 = vsel %vm723, %v6129, 0
  %v6153 = vsel %vm723, %v6131, 0
  %v6156 = vsel %vm723, %v6133, 0
  %6158 = vmatprep.subr.bf16.mxu0 0
  %6159 = vmatpush1.bf16.xpose.msra.mxu0 %v6147
  %6160 = vmatprep.subr.bf16.mxu0 0
  %6161 = vmatpush1.bf16.xpose.msra.mxu0 %v6150
  %6162 = vmatprep.subr.bf16.mxu0 0
  %6163 = vmatpush1.bf16.xpose.msra.mxu0 %v6153
  %6164 = vmatprep.subr.bf16.mxu0 0
  %6165 = vmatpush1.bf16.xpose.msra.mxu0 %v6156
  %6166 = vmatprep.subr.bf16.mxu0 0
  %6167 = vmatpush1.bf16.xpose.msra.mxu0 0
  %6168 = vmatprep.subr.bf16.mxu0 0
  %6169 = vmatpush1.bf16.xpose.msra.mxu0 0
  %6170 = vmatprep.subr.bf16.mxu0 0
  %6171 = vmatpush1.bf16.xpose.msra.mxu0 0
  %6172 = vmatprep.subr.bf16.mxu0 0
  %6173 = vmatpush1.bf16.xpose.msra.mxu0 0
  %6174 = vmatprep.subr.bf16.mxu0 0
  %6175 = vmatpush1.bf16.xpose.msra.mxu0 0
  %6176 = vmatprep.subr.bf16.mxu0 0
  %6177 = vmatpush1.bf16.xpose.msra.mxu0 0
  %6178 = vmatprep.subr.bf16.mxu0 0
  %6179 = vmatpush1.bf16.xpose.msra.mxu0 0
  %6180 = vmatprep.subr.bf16.mxu0 0
  %6181 = vmatpush1.bf16.xpose.msra.mxu0 0
  %6182 = vmatprep.subr.bf16.mxu0 0
  %6183 = vmatpush1.bf16.xpose.msra.mxu0 0
  %6184 = vmatprep.subr.bf16.mxu0 0
  %6185 = vmatpush1.bf16.xpose.msra.mxu0 0
  %6186 = vmatprep.subr.bf16.mxu0 0
  %6187 = vmatpush1.bf16.xpose.msra.mxu0 0
  %6188 = vmatprep.subr.bf16.mxu0 0
  %6189 = vmatpush1.bf16.xpose.msra.mxu0 0
  %6190 = vmatprep.mubr.bf16.mxu0 0
  %6191 = vmatmul.mubr.bf16.gmra.mrb[0].mxu0 %v6135
  %v6192 = vpop.f32.mrb[0].mxu0
  %v6193 = vadd.f32 %v73, %v6192
  %v6194 = vpop.f32.mrb[0].mxu0
  %v6195 = vpop.f32.mrb[0].mxu0
  %v6196 = vadd.f32 %v74, %v6195
  %v6197 = vpop.f32.mrb[0].mxu0
  %6198 = vmatprep.mubr.bf16.mxu0 0
  %6199 = vmatmul.mubr.bf16.gmra.mrb[0].mxu0 %v6138
  %v6200 = vpop.f32.mrb[0].mxu0
  %v6201 = vadd.f32 %v75, %v6200
  %v6202 = vpop.f32.mrb[0].mxu0
  %v6203 = vpop.f32.mrb[0].mxu0
  %v6204 = vadd.f32 %v76, %v6203
  %v6205 = vpop.f32.mrb[0].mxu0
  %6206 = vmatprep.mubr.bf16.mxu0 0
  %6207 = vmatmul.mubr.bf16.gmra.mrb[0].mxu0 %v6141
  %v6208 = vpop.f32.mrb[0].mxu0
  %v6209 = vadd.f32 %v77, %v6208
  %v6210 = vpop.f32.mrb[0].mxu0
  %v6211 = vpop.f32.mrb[0].mxu0
  %v6212 = vadd.f32 %v78, %v6211
  %v6213 = vpop.f32.mrb[0].mxu0
  %6214 = vmatprep.mubr.bf16.mxu0 0
  %6215 = vmatmul.mubr.bf16.gmra.mrb[0].mxu0 %v6144
  %v6216 = vpop.f32.mrb[0].mxu0
  %v6217 = vadd.f32 %v79, %v6216
  %v6218 = vpop.f32.mrb[0].mxu0
  %v6219 = vpop.f32.mrb[0].mxu0
  %v6220 = vadd.f32 %v80, %v6219
  %v6221 = vpop.f32.mrb[0].mxu0
  %6222 = vdwg.mxu0
  %v6223 = vsel %vm813, %v6193, -inf
  %6224 = vmax.xlane.f32.xlu0 %v6223
  %v6225 = vpop.xlane.xlu0 %6224
  %v6226 = vsel %vm813, %v6196, -inf
  %6227 = vmax.xlane.f32.xlu0 %v6226
  %v6228 = vpop.xlane.xlu0 %6227
  %v6229 = vsel %vm813, %v6201, -inf
  %6230 = vmax.xlane.f32.xlu0 %v6229
  %v6231 = vpop.xlane.xlu0 %6230
  %v6232 = vsel %vm813, %v6204, -inf
  %6233 = vmax.xlane.f32.xlu0 %v6232
  %v6234 = vpop.xlane.xlu0 %6233
  %v6235 = vsel %vm813, %v6209, -inf
  %6236 = vmax.xlane.f32.xlu0 %v6235
  %v6237 = vpop.xlane.xlu0 %6236
  %v6238 = vsel %vm813, %v6212, -inf
  %6239 = vmax.xlane.f32.xlu0 %v6238
  %v6240 = vpop.xlane.xlu0 %6239
  %v6241 = vsel %vm813, %v6217, -inf
  %6242 = vmax.xlane.f32.xlu0 %v6241
  %v6243 = vpop.xlane.xlu0 %6242
  %v6244 = vsel %vm813, %v6220, -inf
  %6245 = vmax.xlane.f32.xlu0 %v6244
  %v6246 = vpop.xlane.xlu0 %6245
  %v6247 = vsub.f32 %v6193, %v6225
  %v6248 = vsub.f32 %v6196, %v6228
  %v6249 = vsub.f32 %v6201, %v6231
  %v6250 = vsub.f32 %v6204, %v6234
  %v6251 = vsub.f32 %v6209, %v6237
  %v6252 = vsub.f32 %v6212, %v6240
  %v6253 = vsub.f32 %v6217, %v6243
  %v6254 = vsub.f32 %v6220, %v6246
  %v6255 = vmul.f32 %v6247, 1.442695
  %v6256 = vpow.pop %v6255
  %v6257 = vmul.f32 %v6248, 1.442695
  %v6258 = vpow.pop %v6257
  %v6259 = vmul.f32 %v6249, 1.442695
  %v6260 = vpow.pop %v6259
  %v6261 = vmul.f32 %v6250, 1.442695
  %v6262 = vpow.pop %v6261
  %v6263 = vmul.f32 %v6251, 1.442695
  %v6264 = vpow.pop %v6263
  %v6265 = vmul.f32 %v6252, 1.442695
  %v6266 = vpow.pop %v6265
  %v6267 = vmul.f32 %v6253, 1.442695
  %v6268 = vpow.pop %v6267
  %v6269 = vmul.f32 %v6254, 1.442695
  %v6270 = vpow.pop %v6269
  %v6271 = vsel %vm813, %v6256, 0.0
  %6272 = vadd.xlane.f32.xlu0 %v6271
  %v6273 = vpop.xlane.xlu0 %6272
  %v6274 = vsel %vm813, %v6258, 0.0
  %6275 = vadd.xlane.f32.xlu0 %v6274
  %v6276 = vpop.xlane.xlu0 %6275
  %v6277 = vsel %vm813, %v6260, 0.0
  %6278 = vadd.xlane.f32.xlu0 %v6277
  %v6279 = vpop.xlane.xlu0 %6278
  %v6280 = vsel %vm813, %v6262, 0.0
  %6281 = vadd.xlane.f32.xlu0 %v6280
  %v6282 = vpop.xlane.xlu0 %6281
  %v6283 = vsel %vm813, %v6264, 0.0
  %6284 = vadd.xlane.f32.xlu0 %v6283
  %v6285 = vpop.xlane.xlu0 %6284
  %v6286 = vsel %vm813, %v6266, 0.0
  %6287 = vadd.xlane.f32.xlu0 %v6286
  %v6288 = vpop.xlane.xlu0 %6287
  %v6289 = vsel %vm813, %v6268, 0.0
  %6290 = vadd.xlane.f32.xlu0 %v6289
  %v6291 = vpop.xlane.xlu0 %6290
  %v6292 = vsel %vm813, %v6270, 0.0
  %6293 = vadd.xlane.f32.xlu0 %v6292
  %v6294 = vpop.xlane.xlu0 %6293
  %v6295 = vrcp.pop %v6273
  %v6296 = vrcp.pop %v6276
  %v6297 = vrcp.pop %v6279
  %v6298 = vrcp.pop %v6282
  %v6299 = vrcp.pop %v6285
  %v6300 = vrcp.pop %v6288
  %v6301 = vrcp.pop %v6291
  %v6302 = vrcp.pop %v6294
  %v6303 = vmul.f32 %v6256, %v6295
  %v6304 = vmul.f32 %v6258, %v6296
  %v6305 = vmul.f32 %v6260, %v6297
  %v6306 = vmul.f32 %v6262, %v6298
  %v6307 = vmul.f32 %v6264, %v6299
  %v6308 = vmul.f32 %v6266, %v6300
  %v6309 = vmul.f32 %v6268, %v6301
  %v6310 = vmul.f32 %v6270, %v6302
  %v6311 = vpack.c.bf16 %v6304, %v6303
  %v6312 = vpack.c.bf16 %v6306, %v6305
  %v6313 = vpack.c.bf16 %v6308, %v6307
  %v6314 = vpack.c.bf16 %v6310, %v6309
  %6319 = vrot.lane.b32.xlu0 %v5836, 96
  %v6320 = vpop.permute.xlu0 %6319
  %6321 = vrot.lane.b32.xlu0 %v5837, 96
  %v6322 = vpop.permute.xlu0 %6321
  %6323 = vrot.lane.b32.xlu0 %v5838, 96
  %v6324 = vpop.permute.xlu0 %6323
  %6325 = vrot.lane.b32.xlu0 %v5839, 96
  %v6326 = vpop.permute.xlu0 %6325
  %v6332 = vsel %vm813, %v6311, 0
  %v6335 = vsel %vm813, %v6312, 0
  %v6338 = vsel %vm813, %v6313, 0
  %v6341 = vsel %vm813, %v6314, 0
  %6343 = vmatprep.subr.bf16.mxu0 0
  %6344 = vmatpush1.bf16.msra.mxu0 %v6320
  %6345 = vmatprep.subr.bf16.mxu0 0
  %6346 = vmatpush1.bf16.msra.mxu0 %v6322
  %6347 = vmatprep.subr.bf16.mxu0 0
  %6348 = vmatpush1.bf16.msra.mxu0 %v6324
  %6349 = vmatprep.subr.bf16.mxu0 0
  %6350 = vmatpush1.bf16.msra.mxu0 %v6326
  %6351 = vmatprep.subr.bf16.mxu0 0
  %6352 = vmatpush1.bf16.msra.mxu0 0
  %6353 = vmatprep.subr.bf16.mxu0 0
  %6354 = vmatpush1.bf16.msra.mxu0 0
  %6355 = vmatprep.subr.bf16.mxu0 0
  %6356 = vmatpush1.bf16.msra.mxu0 0
  %6357 = vmatprep.subr.bf16.mxu0 0
  %6358 = vmatpush1.bf16.msra.mxu0 0
  %6359 = vmatprep.subr.bf16.mxu0 0
  %6360 = vmatpush1.bf16.msra.mxu0 0
  %6361 = vmatprep.subr.bf16.mxu0 0
  %6362 = vmatpush1.bf16.msra.mxu0 0
  %6363 = vmatprep.subr.bf16.mxu0 0
  %6364 = vmatpush1.bf16.msra.mxu0 0
  %6365 = vmatprep.subr.bf16.mxu0 0
  %6366 = vmatpush1.bf16.msra.mxu0 0
  %6367 = vmatprep.subr.bf16.mxu0 0
  %6368 = vmatpush1.bf16.msra.mxu0 0
  %6369 = vmatprep.subr.bf16.mxu0 0
  %6370 = vmatpush1.bf16.msra.mxu0 0
  %6371 = vmatprep.subr.bf16.mxu0 0
  %6372 = vmatpush1.bf16.msra.mxu0 0
  %6373 = vmatprep.subr.bf16.mxu0 0
  %6374 = vmatpush1.bf16.msra.mxu0 0
  %6375 = vmatprep.mubr.bf16.mxu0 0
  %6376 = vmatmul.mubr.bf16.gmra.mrb[0].mxu0 %v6332
  %v6377 = vpop.f32.mrb[0].mxu0
  %v6378 = vadd.f32 0.0, %v6377
  %v6379 = vpop.f32.mrb[0].mxu0
  %v6380 = vpop.f32.mrb[0].mxu0
  %v6381 = vadd.f32 0.0, %v6380
  %v6382 = vpop.f32.mrb[0].mxu0
  %6383 = vmatprep.mubr.bf16.mxu0 0
  %6384 = vmatmul.mubr.bf16.gmra.mrb[0].mxu0 %v6335
  %v6385 = vpop.f32.mrb[0].mxu0
  %v6386 = vadd.f32 0.0, %v6385
  %v6387 = vpop.f32.mrb[0].mxu0
  %v6388 = vpop.f32.mrb[0].mxu0
  %v6389 = vadd.f32 0.0, %v6388
  %v6390 = vpop.f32.mrb[0].mxu0
  %6391 = vmatprep.mubr.bf16.mxu0 0
  %6392 = vmatmul.mubr.bf16.gmra.mrb[0].mxu0 %v6338
  %v6393 = vpop.f32.mrb[0].mxu0
  %v6394 = vadd.f32 0.0, %v6393
  %v6395 = vpop.f32.mrb[0].mxu0
  %v6396 = vpop.f32.mrb[0].mxu0
  %v6397 = vadd.f32 0.0, %v6396
  %v6398 = vpop.f32.mrb[0].mxu0
  %6399 = vmatprep.mubr.bf16.mxu0 0
  %6400 = vmatmul.mubr.bf16.gmra.mrb[0].mxu0 %v6341
  %v6401 = vpop.f32.mrb[0].mxu0
  %v6402 = vadd.f32 0.0, %v6401
  %v6403 = vpop.f32.mrb[0].mxu0
  %v6404 = vpop.f32.mrb[0].mxu0
  %v6405 = vadd.f32 0.0, %v6404
  %v6406 = vpop.f32.mrb[0].mxu0
  %6407 = vdwg.mxu0
  %6416 = vrot.lane.b32.xlu0 %v6378, 32
  %v6417 = vpop.permute.xlu0 %6416
  %6418 = vrot.lane.b32.xlu0 %v6381, 32
  %v6419 = vpop.permute.xlu0 %6418
  %6420 = vrot.lane.b32.xlu0 %v6386, 32
  %v6421 = vpop.permute.xlu0 %6420
  %6422 = vrot.lane.b32.xlu0 %v6389, 32
  %v6423 = vpop.permute.xlu0 %6422
  %6424 = vrot.lane.b32.xlu0 %v6394, 32
  %v6425 = vpop.permute.xlu0 %6424
  %6426 = vrot.lane.b32.xlu0 %v6397, 32
  %v6427 = vpop.permute.xlu0 %6426
  %6428 = vrot.lane.b32.xlu0 %v6402, 32
  %v6429 = vpop.permute.xlu0 %6428
  %6430 = vrot.lane.b32.xlu0 %v6405, 32
  %v6431 = vpop.permute.xlu0 %6430
  %6440 = vst.msk [vmem:[#allocation2] sm:$0xff] %vm1321, %v6417
  %6441 = vst.msk [vmem:[#allocation2 + $0x8] sm:$0xff] %vm1321, %v6419
  %6442 = vst.msk [vmem:[#allocation2 + $0x10] sm:$0xff] %vm1321, %v6421
  %6443 = vst.msk [vmem:[#allocation2 + $0x18] sm:$0xff] %vm1321, %v6423
  %6444 = vst.msk [vmem:[#allocation2 + $0x20] sm:$0xff] %vm1321, %v6425
  %6445 = vst.msk [vmem:[#allocation2 + $0x28] sm:$0xff] %vm1321, %v6427
  %6446 = vst.msk [vmem:[#allocation2 + $0x30] sm:$0xff] %vm1321, %v6429
  %6447 = vst.msk [vmem:[#allocation2 + $0x38] sm:$0xff] %vm1321, %v6431
  %6448 = vrot.lane.b32.xlu0 %v5820, 64
  %v6449 = vpop.permute.xlu0 %6448
  %6450 = vrot.lane.b32.xlu0 %v5821, 64
  %v6451 = vpop.permute.xlu0 %6450
  %6452 = vrot.lane.b32.xlu0 %v5822, 64
  %v6453 = vpop.permute.xlu0 %6452
  %6454 = vrot.lane.b32.xlu0 %v5823, 64
  %v6455 = vpop.permute.xlu0 %6454
  %6456 = vrot.lane.b32.xlu0 %v5828, 64
  %v6457 = vpop.permute.xlu0 %6456
  %6458 = vrot.lane.b32.xlu0 %v5829, 64
  %v6459 = vpop.permute.xlu0 %6458
  %6460 = vrot.lane.b32.xlu0 %v5830, 64
  %v6461 = vpop.permute.xlu0 %6460
  %6462 = vrot.lane.b32.xlu0 %v5831, 64
  %v6463 = vpop.permute.xlu0 %6462
  %v6465 = vsel %vm723, %v6449, 0
  %v6468 = vsel %vm723, %v6451, 0
  %v6471 = vsel %vm723, %v6453, 0
  %v6474 = vsel %vm723, %v6455, 0
  %v6477 = vsel %vm723, %v6457, 0
  %v6480 = vsel %vm723, %v6459, 0
  %v6483 = vsel %vm723, %v6461, 0
  %v6486 = vsel %vm723, %v6463, 0
  %6488 = vmatprep.subr.bf16.mxu0 0
  %6489 = vmatpush1.bf16.xpose.msra.mxu0 %v6477
  %6490 = vmatprep.subr.bf16.mxu0 0
  %6491 = vmatpush1.bf16.xpose.msra.mxu0 %v6480
  %6492 = vmatprep.subr.bf16.mxu0 0
  %6493 = vmatpush1.bf16.xpose.msra.mxu0 %v6483
  %6494 = vmatprep.subr.bf16.mxu0 0
  %6495 = vmatpush1.bf16.xpose.msra.mxu0 %v6486
  %6496 = vmatprep.subr.bf16.mxu0 0
  %6497 = vmatpush1.bf16.xpose.msra.mxu0 0
  %6498 = vmatprep.subr.bf16.mxu0 0
  %6499 = vmatpush1.bf16.xpose.msra.mxu0 0
  %6500 = vmatprep.subr.bf16.mxu0 0
  %6501 = vmatpush1.bf16.xpose.msra.mxu0 0
  %6502 = vmatprep.subr.bf16.mxu0 0
  %6503 = vmatpush1.bf16.xpose.msra.mxu0 0
  %6504 = vmatprep.subr.bf16.mxu0 0
  %6505 = vmatpush1.bf16.xpose.msra.mxu0 0
  %6506 = vmatprep.subr.bf16.mxu0 0
  %6507 = vmatpush1.bf16.xpose.msra.mxu0 0
  %6508 = vmatprep.subr.bf16.mxu0 0
  %6509 = vmatpush1.bf16.xpose.msra.mxu0 0
  %6510 = vmatprep.subr.bf16.mxu0 0
  %6511 = vmatpush1.bf16.xpose.msra.mxu0 0
  %6512 = vmatprep.subr.bf16.mxu0 0
  %6513 = vmatpush1.bf16.xpose.msra.mxu0 0
  %6514 = vmatprep.subr.bf16.mxu0 0
  %6515 = vmatpush1.bf16.xpose.msra.mxu0 0
  %6516 = vmatprep.subr.bf16.mxu0 0
  %6517 = vmatpush1.bf16.xpose.msra.mxu0 0
  %6518 = vmatprep.subr.bf16.mxu0 0
  %6519 = vmatpush1.bf16.xpose.msra.mxu0 0
  %6520 = vmatprep.mubr.bf16.mxu0 0
  %6521 = vmatmul.mubr.bf16.gmra.mrb[0].mxu0 %v6465
  %v6522 = vpop.f32.mrb[0].mxu0
  %v6523 = vadd.f32 %v73, %v6522
  %v6524 = vpop.f32.mrb[0].mxu0
  %v6525 = vpop.f32.mrb[0].mxu0
  %v6526 = vadd.f32 %v74, %v6525
  %v6527 = vpop.f32.mrb[0].mxu0
  %6528 = vmatprep.mubr.bf16.mxu0 0
  %6529 = vmatmul.mubr.bf16.gmra.mrb[0].mxu0 %v6468
  %v6530 = vpop.f32.mrb[0].mxu0
  %v6531 = vadd.f32 %v75, %v6530
  %v6532 = vpop.f32.mrb[0].mxu0
  %v6533 = vpop.f32.mrb[0].mxu0
  %v6534 = vadd.f32 %v76, %v6533
  %v6535 = vpop.f32.mrb[0].mxu0
  %6536 = vmatprep.mubr.bf16.mxu0 0
  %6537 = vmatmul.mubr.bf16.gmra.mrb[0].mxu0 %v6471
  %v6538 = vpop.f32.mrb[0].mxu0
  %v6539 = vadd.f32 %v77, %v6538
  %v6540 = vpop.f32.mrb[0].mxu0
  %v6541 = vpop.f32.mrb[0].mxu0
  %v6542 = vadd.f32 %v78, %v6541
  %v6543 = vpop.f32.mrb[0].mxu0
  %6544 = vmatprep.mubr.bf16.mxu0 0
  %6545 = vmatmul.mubr.bf16.gmra.mrb[0].mxu0 %v6474
  %v6546 = vpop.f32.mrb[0].mxu0
  %v6547 = vadd.f32 %v79, %v6546
  %v6548 = vpop.f32.mrb[0].mxu0
  %v6549 = vpop.f32.mrb[0].mxu0
  %v6550 = vadd.f32 %v80, %v6549
  %v6551 = vpop.f32.mrb[0].mxu0
  %6552 = vdwg.mxu0
  %v6553 = vsel %vm813, %v6523, -inf
  %6554 = vmax.xlane.f32.xlu0 %v6553
  %v6555 = vpop.xlane.xlu0 %6554
  %v6556 = vsel %vm813, %v6526, -inf
  %6557 = vmax.xlane.f32.xlu0 %v6556
  %v6558 = vpop.xlane.xlu0 %6557
  %v6559 = vsel %vm813, %v6531, -inf
  %6560 = vmax.xlane.f32.xlu0 %v6559
  %v6561 = vpop.xlane.xlu0 %6560
  %v6562 = vsel %vm813, %v6534, -inf
  %6563 = vmax.xlane.f32.xlu0 %v6562
  %v6564 = vpop.xlane.xlu0 %6563
  %v6565 = vsel %vm813, %v6539, -inf
  %6566 = vmax.xlane.f32.xlu0 %v6565
  %v6567 = vpop.xlane.xlu0 %6566
  %v6568 = vsel %vm813, %v6542, -inf
  %6569 = vmax.xlane.f32.xlu0 %v6568
  %v6570 = vpop.xlane.xlu0 %6569
  %v6571 = vsel %vm813, %v6547, -inf
  %6572 = vmax.xlane.f32.xlu0 %v6571
  %v6573 = vpop.xlane.xlu0 %6572
  %v6574 = vsel %vm813, %v6550, -inf
  %6575 = vmax.xlane.f32.xlu0 %v6574
  %v6576 = vpop.xlane.xlu0 %6575
  %v6577 = vsub.f32 %v6523, %v6555
  %v6578 = vsub.f32 %v6526, %v6558
  %v6579 = vsub.f32 %v6531, %v6561
  %v6580 = vsub.f32 %v6534, %v6564
  %v6581 = vsub.f32 %v6539, %v6567
  %v6582 = vsub.f32 %v6542, %v6570
  %v6583 = vsub.f32 %v6547, %v6573
  %v6584 = vsub.f32 %v6550, %v6576
  %v6585 = vmul.f32 %v6577, 1.442695
  %v6586 = vpow.pop %v6585
  %v6587 = vmul.f32 %v6578, 1.442695
  %v6588 = vpow.pop %v6587
  %v6589 = vmul.f32 %v6579, 1.442695
  %v6590 = vpow.pop %v6589
  %v6591 = vmul.f32 %v6580, 1.442695
  %v6592 = vpow.pop %v6591
  %v6593 = vmul.f32 %v6581, 1.442695
  %v6594 = vpow.pop %v6593
  %v6595 = vmul.f32 %v6582, 1.442695
  %v6596 = vpow.pop %v6595
  %v6597 = vmul.f32 %v6583, 1.442695
  %v6598 = vpow.pop %v6597
  %v6599 = vmul.f32 %v6584, 1.442695
  %v6600 = vpow.pop %v6599
  %v6601 = vsel %vm813, %v6586, 0.0
  %6602 = vadd.xlane.f32.xlu0 %v6601
  %v6603 = vpop.xlane.xlu0 %6602
  %v6604 = vsel %vm813, %v6588, 0.0
  %6605 = vadd.xlane.f32.xlu0 %v6604
  %v6606 = vpop.xlane.xlu0 %6605
  %v6607 = vsel %vm813, %v6590, 0.0
  %6608 = vadd.xlane.f32.xlu0 %v6607
  %v6609 = vpop.xlane.xlu0 %6608
  %v6610 = vsel %vm813, %v6592, 0.0
  %6611 = vadd.xlane.f32.xlu0 %v6610
  %v6612 = vpop.xlane.xlu0 %6611
  %v6613 = vsel %vm813, %v6594, 0.0
  %6614 = vadd.xlane.f32.xlu0 %v6613
  %v6615 = vpop.xlane.xlu0 %6614
  %v6616 = vsel %vm813, %v6596, 0.0
  %6617 = vadd.xlane.f32.xlu0 %v6616
  %v6618 = vpop.xlane.xlu0 %6617
  %v6619 = vsel %vm813, %v6598, 0.0
  %6620 = vadd.xlane.f32.xlu0 %v6619
  %v6621 = vpop.xlane.xlu0 %6620
  %v6622 = vsel %vm813, %v6600, 0.0
  %6623 = vadd.xlane.f32.xlu0 %v6622
  %v6624 = vpop.xlane.xlu0 %6623
  %v6625 = vrcp.pop %v6603
  %v6626 = vrcp.pop %v6606
  %v6627 = vrcp.pop %v6609
  %v6628 = vrcp.pop %v6612
  %v6629 = vrcp.pop %v6615
  %v6630 = vrcp.pop %v6618
  %v6631 = vrcp.pop %v6621
  %v6632 = vrcp.pop %v6624
  %v6633 = vmul.f32 %v6586, %v6625
  %v6634 = vmul.f32 %v6588, %v6626
  %v6635 = vmul.f32 %v6590, %v6627
  %v6636 = vmul.f32 %v6592, %v6628
  %v6637 = vmul.f32 %v6594, %v6629
  %v6638 = vmul.f32 %v6596, %v6630
  %v6639 = vmul.f32 %v6598, %v6631
  %v6640 = vmul.f32 %v6600, %v6632
  %v6641 = vpack.c.bf16 %v6634, %v6633
  %v6642 = vpack.c.bf16 %v6636, %v6635
  %v6643 = vpack.c.bf16 %v6638, %v6637
  %v6644 = vpack.c.bf16 %v6640, %v6639
  %6645 = vrot.lane.b32.xlu0 %v5836, 64
  %v6646 = vpop.permute.xlu0 %6645
  %6647 = vrot.lane.b32.xlu0 %v5837, 64
  %v6648 = vpop.permute.xlu0 %6647
  %6649 = vrot.lane.b32.xlu0 %v5838, 64
  %v6650 = vpop.permute.xlu0 %6649
  %6651 = vrot.lane.b32.xlu0 %v5839, 64
  %v6652 = vpop.permute.xlu0 %6651
  %v6658 = vsel %vm813, %v6641, 0
  %v6661 = vsel %vm813, %v6642, 0
  %v6664 = vsel %vm813, %v6643, 0
  %v6667 = vsel %vm813, %v6644, 0
  %6669 = vmatprep.subr.bf16.mxu0 0
  %6670 = vmatpush1.bf16.msra.mxu0 %v6646
  %6671 = vmatprep.subr.bf16.mxu0 0
  %6672 = vmatpush1.bf16.msra.mxu0 %v6648
  %6673 = vmatprep.subr.bf16.mxu0 0
  %6674 = vmatpush1.bf16.msra.mxu0 %v6650
  %6675 = vmatprep.subr.bf16.mxu0 0
  %6676 = vmatpush1.bf16.msra.mxu0 %v6652
  %6677 = vmatprep.subr.bf16.mxu0 0
  %6678 = vmatpush1.bf16.msra.mxu0 0
  %6679 = vmatprep.subr.bf16.mxu0 0
  %6680 = vmatpush1.bf16.msra.mxu0 0
  %6681 = vmatprep.subr.bf16.mxu0 0
  %6682 = vmatpush1.bf16.msra.mxu0 0
  %6683 = vmatprep.subr.bf16.mxu0 0
  %6684 = vmatpush1.bf16.msra.mxu0 0
  %6685 = vmatprep.subr.bf16.mxu0 0
  %6686 = vmatpush1.bf16.msra.mxu0 0
  %6687 = vmatprep.subr.bf16.mxu0 0
  %6688 = vmatpush1.bf16.msra.mxu0 0
  %6689 = vmatprep.subr.bf16.mxu0 0
  %6690 = vmatpush1.bf16.msra.mxu0 0
  %6691 = vmatprep.subr.bf16.mxu0 0
  %6692 = vmatpush1.bf16.msra.mxu0 0
  %6693 = vmatprep.subr.bf16.mxu0 0
  %6694 = vmatpush1.bf16.msra.mxu0 0
  %6695 = vmatprep.subr.bf16.mxu0 0
  %6696 = vmatpush1.bf16.msra.mxu0 0
  %6697 = vmatprep.subr.bf16.mxu0 0
  %6698 = vmatpush1.bf16.msra.mxu0 0
  %6699 = vmatprep.subr.bf16.mxu0 0
  %6700 = vmatpush1.bf16.msra.mxu0 0
  %6701 = vmatprep.mubr.bf16.mxu0 0
  %6702 = vmatmul.mubr.bf16.gmra.mrb[0].mxu0 %v6658
  %v6703 = vpop.f32.mrb[0].mxu0
  %v6704 = vadd.f32 0.0, %v6703
  %v6705 = vpop.f32.mrb[0].mxu0
  %v6706 = vpop.f32.mrb[0].mxu0
  %v6707 = vadd.f32 0.0, %v6706
  %v6708 = vpop.f32.mrb[0].mxu0
  %6709 = vmatprep.mubr.bf16.mxu0 0
  %6710 = vmatmul.mubr.bf16.gmra.mrb[0].mxu0 %v6661
  %v6711 = vpop.f32.mrb[0].mxu0
  %v6712 = vadd.f32 0.0, %v6711
  %v6713 = vpop.f32.mrb[0].mxu0
  %v6714 = vpop.f32.mrb[0].mxu0
  %v6715 = vadd.f32 0.0, %v6714
  %v6716 = vpop.f32.mrb[0].mxu0
  %6717 = vmatprep.mubr.bf16.mxu0 0
  %6718 = vmatmul.mubr.bf16.gmra.mrb[0].mxu0 %v6664
  %v6719 = vpop.f32.mrb[0].mxu0
  %v6720 = vadd.f32 0.0, %v6719
  %v6721 = vpop.f32.mrb[0].mxu0
  %v6722 = vpop.f32.mrb[0].mxu0
  %v6723 = vadd.f32 0.0, %v6722
  %v6724 = vpop.f32.mrb[0].mxu0
  %6725 = vmatprep.mubr.bf16.mxu0 0
  %6726 = vmatmul.mubr.bf16.gmra.mrb[0].mxu0 %v6667
  %v6727 = vpop.f32.mrb[0].mxu0
  %v6728 = vadd.f32 0.0, %v6727
  %v6729 = vpop.f32.mrb[0].mxu0
  %v6730 = vpop.f32.mrb[0].mxu0
  %v6731 = vadd.f32 0.0, %v6730
  %v6732 = vpop.f32.mrb[0].mxu0
  %6733 = vdwg.mxu0
  %6742 = vrot.lane.b32.xlu0 %v6704, 64
  %v6743 = vpop.permute.xlu0 %6742
  %6744 = vrot.lane.b32.xlu0 %v6707, 64
  %v6745 = vpop.permute.xlu0 %6744
  %6746 = vrot.lane.b32.xlu0 %v6712, 64
  %v6747 = vpop.permute.xlu0 %6746
  %6748 = vrot.lane.b32.xlu0 %v6715, 64
  %v6749 = vpop.permute.xlu0 %6748
  %6750 = vrot.lane.b32.xlu0 %v6720, 64
  %v6751 = vpop.permute.xlu0 %6750
  %6752 = vrot.lane.b32.xlu0 %v6723, 64
  %v6753 = vpop.permute.xlu0 %6752
  %6754 = vrot.lane.b32.xlu0 %v6728, 64
  %v6755 = vpop.permute.xlu0 %6754
  %6756 = vrot.lane.b32.xlu0 %v6731, 64
  %v6757 = vpop.permute.xlu0 %6756
  %6766 = vst.msk [vmem:[#allocation2] sm:$0xff] %vm1648, %v6743
  %6767 = vst.msk [vmem:[#allocation2 + $0x8] sm:$0xff] %vm1648, %v6745
  %6768 = vst.msk [vmem:[#allocation2 + $0x10] sm:$0xff] %vm1648, %v6747
  %6769 = vst.msk [vmem:[#allocation2 + $0x18] sm:$0xff] %vm1648, %v6749
  %6770 = vst.msk [vmem:[#allocation2 + $0x20] sm:$0xff] %vm1648, %v6751
  %6771 = vst.msk [vmem:[#allocation2 + $0x28] sm:$0xff] %vm1648, %v6753
  %6772 = vst.msk [vmem:[#allocation2 + $0x30] sm:$0xff] %vm1648, %v6755
  %6773 = vst.msk [vmem:[#allocation2 + $0x38] sm:$0xff] %vm1648, %v6757
  %6774 = vrot.lane.b32.xlu0 %v5820, 32
  %v6775 = vpop.permute.xlu0 %6774
  %6776 = vrot.lane.b32.xlu0 %v5821, 32
  %v6777 = vpop.permute.xlu0 %6776
  %6778 = vrot.lane.b32.xlu0 %v5822, 32
  %v6779 = vpop.permute.xlu0 %6778
  %6780 = vrot.lane.b32.xlu0 %v5823, 32
  %v6781 = vpop.permute.xlu0 %6780
  %6782 = vrot.lane.b32.xlu0 %v5828, 32
  %v6783 = vpop.permute.xlu0 %6782
  %6784 = vrot.lane.b32.xlu0 %v5829, 32
  %v6785 = vpop.permute.xlu0 %6784
  %6786 = vrot.lane.b32.xlu0 %v5830, 32
  %v6787 = vpop.permute.xlu0 %6786
  %6788 = vrot.lane.b32.xlu0 %v5831, 32
  %v6789 = vpop.permute.xlu0 %6788
  %v6791 = vsel %vm723, %v6775, 0
  %v6794 = vsel %vm723, %v6777, 0
  %v6797 = vsel %vm723, %v6779, 0
  %v6800 = vsel %vm723, %v6781, 0
  %v6803 = vsel %vm723, %v6783, 0
  %v6806 = vsel %vm723, %v6785, 0
  %v6809 = vsel %vm723, %v6787, 0
  %v6812 = vsel %vm723, %v6789, 0
  %6814 = vmatprep.subr.bf16.mxu0 0
  %6815 = vmatpush1.bf16.xpose.msra.mxu0 %v6803
  %6816 = vmatprep.subr.bf16.mxu0 0
  %6817 = vmatpush1.bf16.xpose.msra.mxu0 %v6806
  %6818 = vmatprep.subr.bf16.mxu0 0
  %6819 = vmatpush1.bf16.xpose.msra.mxu0 %v6809
  %6820 = vmatprep.subr.bf16.mxu0 0
  %6821 = vmatpush1.bf16.xpose.msra.mxu0 %v6812
  %6822 = vmatprep.subr.bf16.mxu0 0
  %6823 = vmatpush1.bf16.xpose.msra.mxu0 0
  %6824 = vmatprep.subr.bf16.mxu0 0
  %6825 = vmatpush1.bf16.xpose.msra.mxu0 0
  %6826 = vmatprep.subr.bf16.mxu0 0
  %6827 = vmatpush1.bf16.xpose.msra.mxu0 0
  %6828 = vmatprep.subr.bf16.mxu0 0
  %6829 = vmatpush1.bf16.xpose.msra.mxu0 0
  %6830 = vmatprep.subr.bf16.mxu0 0
  %6831 = vmatpush1.bf16.xpose.msra.mxu0 0
  %6832 = vmatprep.subr.bf16.mxu0 0
  %6833 = vmatpush1.bf16.xpose.msra.mxu0 0
  %6834 = vmatprep.subr.bf16.mxu0 0
  %6835 = vmatpush1.bf16.xpose.msra.mxu0 0
  %6836 = vmatprep.subr.bf16.mxu0 0
  %6837 = vmatpush1.bf16.xpose.msra.mxu0 0
  %6838 = vmatprep.subr.bf16.mxu0 0
  %6839 = vmatpush1.bf16.xpose.msra.mxu0 0
  %6840 = vmatprep.subr.bf16.mxu0 0
  %6841 = vmatpush1.bf16.xpose.msra.mxu0 0
  %6842 = vmatprep.subr.bf16.mxu0 0
  %6843 = vmatpush1.bf16.xpose.msra.mxu0 0
  %6844 = vmatprep.subr.bf16.mxu0 0
  %6845 = vmatpush1.bf16.xpose.msra.mxu0 0
  %6846 = vmatprep.mubr.bf16.mxu0 0
  %6847 = vmatmul.mubr.bf16.gmra.mrb[0].mxu0 %v6791
  %v6848 = vpop.f32.mrb[0].mxu0
  %v6849 = vadd.f32 %v73, %v6848
  %v6850 = vpop.f32.mrb[0].mxu0
  %v6851 = vpop.f32.mrb[0].mxu0
  %v6852 = vadd.f32 %v74, %v6851
  %v6853 = vpop.f32.mrb[0].mxu0
  %6854 = vmatprep.mubr.bf16.mxu0 0
  %6855 = vmatmul.mubr.bf16.gmra.mrb[0].mxu0 %v6794
  %v6856 = vpop.f32.mrb[0].mxu0
  %v6857 = vadd.f32 %v75, %v6856
  %v6858 = vpop.f32.mrb[0].mxu0
  %v6859 = vpop.f32.mrb[0].mxu0
  %v6860 = vadd.f32 %v76, %v6859
  %v6861 = vpop.f32.mrb[0].mxu0
  %6862 = vmatprep.mubr.bf16.mxu0 0
  %6863 = vmatmul.mubr.bf16.gmra.mrb[0].mxu0 %v6797
  %v6864 = vpop.f32.mrb[0].mxu0
  %v6865 = vadd.f32 %v77, %v6864
  %v6866 = vpop.f32.mrb[0].mxu0
  %v6867 = vpop.f32.mrb[0].mxu0
  %v6868 = vadd.f32 %v78, %v6867
  %v6869 = vpop.f32.mrb[0].mxu0
  %6870 = vmatprep.mubr.bf16.mxu0 0
  %6871 = vmatmul.mubr.bf16.gmra.mrb[0].mxu0 %v6800
  %v6872 = vpop.f32.mrb[0].mxu0
  %v6873 = vadd.f32 %v79, %v6872
  %v6874 = vpop.f32.mrb[0].mxu0
  %v6875 = vpop.f32.mrb[0].mxu0
  %v6876 = vadd.f32 %v80, %v6875
  %v6877 = vpop.f32.mrb[0].mxu0
  %6878 = vdwg.mxu0
  %v6879 = vsel %vm813, %v6849, -inf
  %6880 = vmax.xlane.f32.xlu0 %v6879
  %v6881 = vpop.xlane.xlu0 %6880
  %v6882 = vsel %vm813, %v6852, -inf
  %6883 = vmax.xlane.f32.xlu0 %v6882
  %v6884 = vpop.xlane.xlu0 %6883
  %v6885 = vsel %vm813, %v6857, -inf
  %6886 = vmax.xlane.f32.xlu0 %v6885
  %v6887 = vpop.xlane.xlu0 %6886
  %v6888 = vsel %vm813, %v6860, -inf
  %6889 = vmax.xlane.f32.xlu0 %v6888
  %v6890 = vpop.xlane.xlu0 %6889
  %v6891 = vsel %vm813, %v6865, -inf
  %6892 = vmax.xlane.f32.xlu0 %v6891
  %v6893 = vpop.xlane.xlu0 %6892
  %v6894 = vsel %vm813, %v6868, -inf
  %6895 = vmax.xlane.f32.xlu0 %v6894
  %v6896 = vpop.xlane.xlu0 %6895
  %v6897 = vsel %vm813, %v6873, -inf
  %6898 = vmax.xlane.f32.xlu0 %v6897
  %v6899 = vpop.xlane.xlu0 %6898
  %v6900 = vsel %vm813, %v6876, -inf
  %6901 = vmax.xlane.f32.xlu0 %v6900
  %v6902 = vpop.xlane.xlu0 %6901
  %v6903 = vsub.f32 %v6849, %v6881
  %v6904 = vsub.f32 %v6852, %v6884
  %v6905 = vsub.f32 %v6857, %v6887
  %v6906 = vsub.f32 %v6860, %v6890
  %v6907 = vsub.f32 %v6865, %v6893
  %v6908 = vsub.f32 %v6868, %v6896
  %v6909 = vsub.f32 %v6873, %v6899
  %v6910 = vsub.f32 %v6876, %v6902
  %v6911 = vmul.f32 %v6903, 1.442695
  %v6912 = vpow.pop %v6911
  %v6913 = vmul.f32 %v6904, 1.442695
  %v6914 = vpow.pop %v6913
  %v6915 = vmul.f32 %v6905, 1.442695
  %v6916 = vpow.pop %v6915
  %v6917 = vmul.f32 %v6906, 1.442695
  %v6918 = vpow.pop %v6917
  %v6919 = vmul.f32 %v6907, 1.442695
  %v6920 = vpow.pop %v6919
  %v6921 = vmul.f32 %v6908, 1.442695
  %v6922 = vpow.pop %v6921
  %v6923 = vmul.f32 %v6909, 1.442695
  %v6924 = vpow.pop %v6923
  %v6925 = vmul.f32 %v6910, 1.442695
  %v6926 = vpow.pop %v6925
  %v6927 = vsel %vm813, %v6912, 0.0
  %6928 = vadd.xlane.f32.xlu0 %v6927
  %v6929 = vpop.xlane.xlu0 %6928
  %v6930 = vsel %vm813, %v6914, 0.0
  %6931 = vadd.xlane.f32.xlu0 %v6930
  %v6932 = vpop.xlane.xlu0 %6931
  %v6933 = vsel %vm813, %v6916, 0.0
  %6934 = vadd.xlane.f32.xlu0 %v6933
  %v6935 = vpop.xlane.xlu0 %6934
  %v6936 = vsel %vm813, %v6918, 0.0
  %6937 = vadd.xlane.f32.xlu0 %v6936
  %v6938 = vpop.xlane.xlu0 %6937
  %v6939 = vsel %vm813, %v6920, 0.0
  %6940 = vadd.xlane.f32.xlu0 %v6939
  %v6941 = vpop.xlane.xlu0 %6940
  %v6942 = vsel %vm813, %v6922, 0.0
  %6943 = vadd.xlane.f32.xlu0 %v6942
  %v6944 = vpop.xlane.xlu0 %6943
  %v6945 = vsel %vm813, %v6924, 0.0
  %6946 = vadd.xlane.f32.xlu0 %v6945
  %v6947 = vpop.xlane.xlu0 %6946
  %v6948 = vsel %vm813, %v6926, 0.0
  %6949 = vadd.xlane.f32.xlu0 %v6948
  %v6950 = vpop.xlane.xlu0 %6949
  %v6951 = vrcp.pop %v6929
  %v6952 = vrcp.pop %v6932
  %v6953 = vrcp.pop %v6935
  %v6954 = vrcp.pop %v6938
  %v6955 = vrcp.pop %v6941
  %v6956 = vrcp.pop %v6944
  %v6957 = vrcp.pop %v6947
  %v6958 = vrcp.pop %v6950
  %v6959 = vmul.f32 %v6912, %v6951
  %v6960 = vmul.f32 %v6914, %v6952
  %v6961 = vmul.f32 %v6916, %v6953
  %v6962 = vmul.f32 %v6918, %v6954
  %v6963 = vmul.f32 %v6920, %v6955
  %v6964 = vmul.f32 %v6922, %v6956
  %v6965 = vmul.f32 %v6924, %v6957
  %v6966 = vmul.f32 %v6926, %v6958
  %v6967 = vpack.c.bf16 %v6960, %v6959
  %v6968 = vpack.c.bf16 %v6962, %v6961
  %v6969 = vpack.c.bf16 %v6964, %v6963
  %v6970 = vpack.c.bf16 %v6966, %v6965
  %6971 = vrot.lane.b32.xlu0 %v5836, 32
  %v6972 = vpop.permute.xlu0 %6971
  %6973 = vrot.lane.b32.xlu0 %v5837, 32
  %v6974 = vpop.permute.xlu0 %6973
  %6975 = vrot.lane.b32.xlu0 %v5838, 32
  %v6976 = vpop.permute.xlu0 %6975
  %6977 = vrot.lane.b32.xlu0 %v5839, 32
  %v6978 = vpop.permute.xlu0 %6977
  %v6984 = vsel %vm813, %v6967, 0
  %v6987 = vsel %vm813, %v6968, 0
  %v6990 = vsel %vm813, %v6969, 0
  %v6993 = vsel %vm813, %v6970, 0
  %6995 = vmatprep.subr.bf16.mxu0 0
  %6996 = vmatpush1.bf16.msra.mxu0 %v6972
  %6997 = vmatprep.subr.bf16.mxu0 0
  %6998 = vmatpush1.bf16.msra.mxu0 %v6974
  %6999 = vmatprep.subr.bf16.mxu0 0
  %7000 = vmatpush1.bf16.msra.mxu0 %v6976
  %7001 = vmatprep.subr.bf16.mxu0 0
  %7002 = vmatpush1.bf16.msra.mxu0 %v6978
  %7003 = vmatprep.subr.bf16.mxu0 0
  %7004 = vmatpush1.bf16.msra.mxu0 0
  %7005 = vmatprep.subr.bf16.mxu0 0
  %7006 = vmatpush1.bf16.msra.mxu0 0
  %7007 = vmatprep.subr.bf16.mxu0 0
  %7008 = vmatpush1.bf16.msra.mxu0 0
  %7009 = vmatprep.subr.bf16.mxu0 0
  %7010 = vmatpush1.bf16.msra.mxu0 0
  %7011 = vmatprep.subr.bf16.mxu0 0
  %7012 = vmatpush1.bf16.msra.mxu0 0
  %7013 = vmatprep.subr.bf16.mxu0 0
  %7014 = vmatpush1.bf16.msra.mxu0 0
  %7015 = vmatprep.subr.bf16.mxu0 0
  %7016 = vmatpush1.bf16.msra.mxu0 0
  %7017 = vmatprep.subr.bf16.mxu0 0
  %7018 = vmatpush1.bf16.msra.mxu0 0
  %7019 = vmatprep.subr.bf16.mxu0 0
  %7020 = vmatpush1.bf16.msra.mxu0 0
  %7021 = vmatprep.subr.bf16.mxu0 0
  %7022 = vmatpush1.bf16.msra.mxu0 0
  %7023 = vmatprep.subr.bf16.mxu0 0
  %7024 = vmatpush1.bf16.msra.mxu0 0
  %7025 = vmatprep.subr.bf16.mxu0 0
  %7026 = vmatpush1.bf16.msra.mxu0 0
  %7027 = vmatprep.mubr.bf16.mxu0 0
  %7028 = vmatmul.mubr.bf16.gmra.mrb[0].mxu0 %v6984
  %v7029 = vpop.f32.mrb[0].mxu0
  %v7030 = vadd.f32 0.0, %v7029
  %v7031 = vpop.f32.mrb[0].mxu0
  %v7032 = vpop.f32.mrb[0].mxu0
  %v7033 = vadd.f32 0.0, %v7032
  %v7034 = vpop.f32.mrb[0].mxu0
  %7035 = vmatprep.mubr.bf16.mxu0 0
  %7036 = vmatmul.mubr.bf16.gmra.mrb[0].mxu0 %v6987
  %v7037 = vpop.f32.mrb[0].mxu0
  %v7038 = vadd.f32 0.0, %v7037
  %v7039 = vpop.f32.mrb[0].mxu0
  %v7040 = vpop.f32.mrb[0].mxu0
  %v7041 = vadd.f32 0.0, %v7040
  %v7042 = vpop.f32.mrb[0].mxu0
  %7043 = vmatprep.mubr.bf16.mxu0 0
  %7044 = vmatmul.mubr.bf16.gmra.mrb[0].mxu0 %v6990
  %v7045 = vpop.f32.mrb[0].mxu0
  %v7046 = vadd.f32 0.0, %v7045
  %v7047 = vpop.f32.mrb[0].mxu0
  %v7048 = vpop.f32.mrb[0].mxu0
  %v7049 = vadd.f32 0.0, %v7048
  %v7050 = vpop.f32.mrb[0].mxu0
  %7051 = vmatprep.mubr.bf16.mxu0 0
  %7052 = vmatmul.mubr.bf16.gmra.mrb[0].mxu0 %v6993
  %v7053 = vpop.f32.mrb[0].mxu0
  %v7054 = vadd.f32 0.0, %v7053
  %v7055 = vpop.f32.mrb[0].mxu0
  %v7056 = vpop.f32.mrb[0].mxu0
  %v7057 = vadd.f32 0.0, %v7056
  %v7058 = vpop.f32.mrb[0].mxu0
  %7059 = vdwg.mxu0
  %7068 = vrot.lane.b32.xlu0 %v7030, 96
  %v7069 = vpop.permute.xlu0 %7068
  %7070 = vrot.lane.b32.xlu0 %v7033, 96
  %v7071 = vpop.permute.xlu0 %7070
  %7072 = vrot.lane.b32.xlu0 %v7038, 96
  %v7073 = vpop.permute.xlu0 %7072
  %7074 = vrot.lane.b32.xlu0 %v7041, 96
  %v7075 = vpop.permute.xlu0 %7074
  %7076 = vrot.lane.b32.xlu0 %v7046, 96
  %v7077 = vpop.permute.xlu0 %7076
  %7078 = vrot.lane.b32.xlu0 %v7049, 96
  %v7079 = vpop.permute.xlu0 %7078
  %7080 = vrot.lane.b32.xlu0 %v7054, 96
  %v7081 = vpop.permute.xlu0 %7080
  %7082 = vrot.lane.b32.xlu0 %v7057, 96
  %v7083 = vpop.permute.xlu0 %7082
  %7092 = vst.msk [vmem:[#allocation2] sm:$0xff] %vm1975, %v7069
  %7093 = vst.msk [vmem:[#allocation2 + $0x8] sm:$0xff] %vm1975, %v7071
  %7094 = vst.msk [vmem:[#allocation2 + $0x10] sm:$0xff] %vm1975, %v7073
  %7095 = vst.msk [vmem:[#allocation2 + $0x18] sm:$0xff] %vm1975, %v7075
  %7096 = vst.msk [vmem:[#allocation2 + $0x20] sm:$0xff] %vm1975, %v7077
  %7097 = vst.msk [vmem:[#allocation2 + $0x28] sm:$0xff] %vm1975, %v7079
  %7098 = vst.msk [vmem:[#allocation2 + $0x30] sm:$0xff] %vm1975, %v7081
  %7099 = vst.msk [vmem:[#allocation2 + $0x38] sm:$0xff] %vm1975, %v7083
  %v7101 = vsel %vm723, %v5824, 0
  %v7104 = vsel %vm723, %v5825, 0
  %v7107 = vsel %vm723, %v5826, 0
  %v7110 = vsel %vm723, %v5827, 0
  %v7113 = vsel %vm723, %v5832, 0
  %v7116 = vsel %vm723, %v5833, 0
  %v7119 = vsel %vm723, %v5834, 0
  %v7122 = vsel %vm723, %v5835, 0
  %7124 = vmatprep.subr.bf16.mxu0 0
  %7125 = vmatpush1.bf16.xpose.msra.mxu0 %v7113
  %7126 = vmatprep.subr.bf16.mxu0 0
  %7127 = vmatpush1.bf16.xpose.msra.mxu0 %v7116
  %7128 = vmatprep.subr.bf16.mxu0 0
  %7129 = vmatpush1.bf16.xpose.msra.mxu0 %v7119
  %7130 = vmatprep.subr.bf16.mxu0 0
  %7131 = vmatpush1.bf16.xpose.msra.mxu0 %v7122
  %7132 = vmatprep.subr.bf16.mxu0 0
  %7133 = vmatpush1.bf16.xpose.msra.mxu0 0
  %7134 = vmatprep.subr.bf16.mxu0 0
  %7135 = vmatpush1.bf16.xpose.msra.mxu0 0
  %7136 = vmatprep.subr.bf16.mxu0 0
  %7137 = vmatpush1.bf16.xpose.msra.mxu0 0
  %7138 = vmatprep.subr.bf16.mxu0 0
  %7139 = vmatpush1.bf16.xpose.msra.mxu0 0
  %7140 = vmatprep.subr.bf16.mxu0 0
  %7141 = vmatpush1.bf16.xpose.msra.mxu0 0
  %7142 = vmatprep.subr.bf16.mxu0 0
  %7143 = vmatpush1.bf16.xpose.msra.mxu0 0
  %7144 = vmatprep.subr.bf16.mxu0 0
  %7145 = vmatpush1.bf16.xpose.msra.mxu0 0
  %7146 = vmatprep.subr.bf16.mxu0 0
  %7147 = vmatpush1.bf16.xpose.msra.mxu0 0
  %7148 = vmatprep.subr.bf16.mxu0 0
  %7149 = vmatpush1.bf16.xpose.msra.mxu0 0
  %7150 = vmatprep.subr.bf16.mxu0 0
  %7151 = vmatpush1.bf16.xpose.msra.mxu0 0
  %7152 = vmatprep.subr.bf16.mxu0 0
  %7153 = vmatpush1.bf16.xpose.msra.mxu0 0
  %7154 = vmatprep.subr.bf16.mxu0 0
  %7155 = vmatpush1.bf16.xpose.msra.mxu0 0
  %7156 = vmatprep.mubr.bf16.mxu0 0
  %7157 = vmatmul.mubr.bf16.gmra.mrb[0].mxu0 %v7101
  %v7158 = vpop.f32.mrb[0].mxu0
  %v7159 = vadd.f32 %v73, %v7158
  %v7160 = vpop.f32.mrb[0].mxu0
  %v7161 = vpop.f32.mrb[0].mxu0
  %v7162 = vadd.f32 %v74, %v7161
  %v7163 = vpop.f32.mrb[0].mxu0
  %7164 = vmatprep.mubr.bf16.mxu0 0
  %7165 = vmatmul.mubr.bf16.gmra.mrb[0].mxu0 %v7104
  %v7166 = vpop.f32.mrb[0].mxu0
  %v7167 = vadd.f32 %v75, %v7166
  %v7168 = vpop.f32.mrb[0].mxu0
  %v7169 = vpop.f32.mrb[0].mxu0
  %v7170 = vadd.f32 %v76, %v7169
  %v7171 = vpop.f32.mrb[0].mxu0
  %7172 = vmatprep.mubr.bf16.mxu0 0
  %7173 = vmatmul.mubr.bf16.gmra.mrb[0].mxu0 %v7107
  %v7174 = vpop.f32.mrb[0].mxu0
  %v7175 = vadd.f32 %v77, %v7174
  %v7176 = vpop.f32.mrb[0].mxu0
  %v7177 = vpop.f32.mrb[0].mxu0
  %v7178 = vadd.f32 %v78, %v7177
  %v7179 = vpop.f32.mrb[0].mxu0
  %7180 = vmatprep.mubr.bf16.mxu0 0
  %7181 = vmatmul.mubr.bf16.gmra.mrb[0].mxu0 %v7110
  %v7182 = vpop.f32.mrb[0].mxu0
  %v7183 = vadd.f32 %v79, %v7182
  %v7184 = vpop.f32.mrb[0].mxu0
  %v7185 = vpop.f32.mrb[0].mxu0
  %v7186 = vadd.f32 %v80, %v7185
  %v7187 = vpop.f32.mrb[0].mxu0
  %7188 = vdwg.mxu0
  %v7189 = vsel %vm813, %v7159, -inf
  %7190 = vmax.xlane.f32.xlu0 %v7189
  %v7191 = vpop.xlane.xlu0 %7190
  %v7192 = vsel %vm813, %v7162, -inf
  %7193 = vmax.xlane.f32.xlu0 %v7192
  %v7194 = vpop.xlane.xlu0 %7193
  %v7195 = vsel %vm813, %v7167, -inf
  %7196 = vmax.xlane.f32.xlu0 %v7195
  %v7197 = vpop.xlane.xlu0 %7196
  %v7198 = vsel %vm813, %v7170, -inf
  %7199 = vmax.xlane.f32.xlu0 %v7198
  %v7200 = vpop.xlane.xlu0 %7199
  %v7201 = vsel %vm813, %v7175, -inf
  %7202 = vmax.xlane.f32.xlu0 %v7201
  %v7203 = vpop.xlane.xlu0 %7202
  %v7204 = vsel %vm813, %v7178, -inf
  %7205 = vmax.xlane.f32.xlu0 %v7204
  %v7206 = vpop.xlane.xlu0 %7205
  %v7207 = vsel %vm813, %v7183, -inf
  %7208 = vmax.xlane.f32.xlu0 %v7207
  %v7209 = vpop.xlane.xlu0 %7208
  %v7210 = vsel %vm813, %v7186, -inf
  %7211 = vmax.xlane.f32.xlu0 %v7210
  %v7212 = vpop.xlane.xlu0 %7211
  %v7213 = vsub.f32 %v7159, %v7191
  %v7214 = vsub.f32 %v7162, %v7194
  %v7215 = vsub.f32 %v7167, %v7197
  %v7216 = vsub.f32 %v7170, %v7200
  %v7217 = vsub.f32 %v7175, %v7203
  %v7218 = vsub.f32 %v7178, %v7206
  %v7219 = vsub.f32 %v7183, %v7209
  %v7220 = vsub.f32 %v7186, %v7212
  %v7221 = vmul.f32 %v7213, 1.442695
  %v7222 = vpow.pop %v7221
  %v7223 = vmul.f32 %v7214, 1.442695
  %v7224 = vpow.pop %v7223
  %v7225 = vmul.f32 %v7215, 1.442695
  %v7226 = vpow.pop %v7225
  %v7227 = vmul.f32 %v7216, 1.442695
  %v7228 = vpow.pop %v7227
  %v7229 = vmul.f32 %v7217, 1.442695
  %v7230 = vpow.pop %v7229
  %v7231 = vmul.f32 %v7218, 1.442695
  %v7232 = vpow.pop %v7231
  %v7233 = vmul.f32 %v7219, 1.442695
  %v7234 = vpow.pop %v7233
  %v7235 = vmul.f32 %v7220, 1.442695
  %v7236 = vpow.pop %v7235
  %v7237 = vsel %vm813, %v7222, 0.0
  %7238 = vadd.xlane.f32.xlu0 %v7237
  %v7239 = vpop.xlane.xlu0 %7238
  %v7240 = vsel %vm813, %v7224, 0.0
  %7241 = vadd.xlane.f32.xlu0 %v7240
  %v7242 = vpop.xlane.xlu0 %7241
  %v7243 = vsel %vm813, %v7226, 0.0
  %7244 = vadd.xlane.f32.xlu0 %v7243
  %v7245 = vpop.xlane.xlu0 %7244
  %v7246 = vsel %vm813, %v7228, 0.0
  %7247 = vadd.xlane.f32.xlu0 %v7246
  %v7248 = vpop.xlane.xlu0 %7247
  %v7249 = vsel %vm813, %v7230, 0.0
  %7250 = vadd.xlane.f32.xlu0 %v7249
  %v7251 = vpop.xlane.xlu0 %7250
  %v7252 = vsel %vm813, %v7232, 0.0
  %7253 = vadd.xlane.f32.xlu0 %v7252
  %v7254 = vpop.xlane.xlu0 %7253
  %v7255 = vsel %vm813, %v7234, 0.0
  %7256 = vadd.xlane.f32.xlu0 %v7255
  %v7257 = vpop.xlane.xlu0 %7256
  %v7258 = vsel %vm813, %v7236, 0.0
  %7259 = vadd.xlane.f32.xlu0 %v7258
  %v7260 = vpop.xlane.xlu0 %7259
  %v7261 = vrcp.pop %v7239
  %v7262 = vrcp.pop %v7242
  %v7263 = vrcp.pop %v7245
  %v7264 = vrcp.pop %v7248
  %v7265 = vrcp.pop %v7251
  %v7266 = vrcp.pop %v7254
  %v7267 = vrcp.pop %v7257
  %v7268 = vrcp.pop %v7260
  %v7269 = vmul.f32 %v7222, %v7261
  %v7270 = vmul.f32 %v7224, %v7262
  %v7271 = vmul.f32 %v7226, %v7263
  %v7272 = vmul.f32 %v7228, %v7264
  %v7273 = vmul.f32 %v7230, %v7265
  %v7274 = vmul.f32 %v7232, %v7266
  %v7275 = vmul.f32 %v7234, %v7267
  %v7276 = vmul.f32 %v7236, %v7268
  %v7277 = vpack.c.bf16 %v7270, %v7269
  %v7278 = vpack.c.bf16 %v7272, %v7271
  %v7279 = vpack.c.bf16 %v7274, %v7273
  %v7280 = vpack.c.bf16 %v7276, %v7275
  %v7282 = vsel %vm813, %v7277, 0
  %v7285 = vsel %vm813, %v7278, 0
  %v7288 = vsel %vm813, %v7279, 0
  %v7291 = vsel %vm813, %v7280, 0
  %7293 = vmatprep.subr.bf16.mxu0 0
  %7294 = vmatpush1.bf16.msra.mxu0 %v5840
  %7295 = vmatprep.subr.bf16.mxu0 0
  %7296 = vmatpush1.bf16.msra.mxu0 %v5841
  %7297 = vmatprep.subr.bf16.mxu0 0
  %7298 = vmatpush1.bf16.msra.mxu0 %v5842
  %7299 = vmatprep.subr.bf16.mxu0 0
  %7300 = vmatpush1.bf16.msra.mxu0 %v5843
  %7301 = vmatprep.subr.bf16.mxu0 0
  %7302 = vmatpush1.bf16.msra.mxu0 0
  %7303 = vmatprep.subr.bf16.mxu0 0
  %7304 = vmatpush1.bf16.msra.mxu0 0
  %7305 = vmatprep.subr.bf16.mxu0 0
  %7306 = vmatpush1.bf16.msra.mxu0 0
  %7307 = vmatprep.subr.bf16.mxu0 0
  %7308 = vmatpush1.bf16.msra.mxu0 0
  %7309 = vmatprep.subr.bf16.mxu0 0
  %7310 = vmatpush1.bf16.msra.mxu0 0
  %7311 = vmatprep.subr.bf16.mxu0 0
  %7312 = vmatpush1.bf16.msra.mxu0 0
  %7313 = vmatprep.subr.bf16.mxu0 0
  %7314 = vmatpush1.bf16.msra.mxu0 0
  %7315 = vmatprep.subr.bf16.mxu0 0
  %7316 = vmatpush1.bf16.msra.mxu0 0
  %7317 = vmatprep.subr.bf16.mxu0 0
  %7318 = vmatpush1.bf16.msra.mxu0 0
  %7319 = vmatprep.subr.bf16.mxu0 0
  %7320 = vmatpush1.bf16.msra.mxu0 0
  %7321 = vmatprep.subr.bf16.mxu0 0
  %7322 = vmatpush1.bf16.msra.mxu0 0
  %7323 = vmatprep.subr.bf16.mxu0 0
  %7324 = vmatpush1.bf16.msra.mxu0 0
  %7325 = vmatprep.mubr.bf16.mxu0 0
  %7326 = vmatmul.mubr.bf16.gmra.mrb[0].mxu0 %v7282
  %v7327 = vpop.f32.mrb[0].mxu0
  %v7328 = vadd.f32 0.0, %v7327
  %v7329 = vpop.f32.mrb[0].mxu0
  %v7330 = vpop.f32.mrb[0].mxu0
  %v7331 = vadd.f32 0.0, %v7330
  %v7332 = vpop.f32.mrb[0].mxu0
  %7333 = vmatprep.mubr.bf16.mxu0 0
  %7334 = vmatmul.mubr.bf16.gmra.mrb[0].mxu0 %v7285
  %v7335 = vpop.f32.mrb[0].mxu0
  %v7336 = vadd.f32 0.0, %v7335
  %v7337 = vpop.f32.mrb[0].mxu0
  %v7338 = vpop.f32.mrb[0].mxu0
  %v7339 = vadd.f32 0.0, %v7338
  %v7340 = vpop.f32.mrb[0].mxu0
  %7341 = vmatprep.mubr.bf16.mxu0 0
  %7342 = vmatmul.mubr.bf16.gmra.mrb[0].mxu0 %v7288
  %v7343 = vpop.f32.mrb[0].mxu0
  %v7344 = vadd.f32 0.0, %v7343
  %v7345 = vpop.f32.mrb[0].mxu0
  %v7346 = vpop.f32.mrb[0].mxu0
  %v7347 = vadd.f32 0.0, %v7346
  %v7348 = vpop.f32.mrb[0].mxu0
  %7349 = vmatprep.mubr.bf16.mxu0 0
  %7350 = vmatmul.mubr.bf16.gmra.mrb[0].mxu0 %v7291
  %v7351 = vpop.f32.mrb[0].mxu0
  %v7352 = vadd.f32 0.0, %v7351
  %v7353 = vpop.f32.mrb[0].mxu0
  %v7354 = vpop.f32.mrb[0].mxu0
  %v7355 = vadd.f32 0.0, %v7354
  %v7356 = vpop.f32.mrb[0].mxu0
  %7357 = vdwg.mxu0
  %7358 = vst.msk [vmem:[#allocation2 + $0x40] sm:$0xff] %vm723, %v7328
  %7359 = vst.msk [vmem:[#allocation2 + $0x48] sm:$0xff] %vm723, %v7331
  %7360 = vst.msk [vmem:[#allocation2 + $0x50] sm:$0xff] %vm723, %v7336
  %7361 = vst.msk [vmem:[#allocation2 + $0x58] sm:$0xff] %vm723, %v7339
  %7362 = vst.msk [vmem:[#allocation2 + $0x60] sm:$0xff] %vm723, %v7344
  %7363 = vst.msk [vmem:[#allocation2 + $0x68] sm:$0xff] %vm723, %v7347
  %7364 = vst.msk [vmem:[#allocation2 + $0x70] sm:$0xff] %vm723, %v7352
  %7365 = vst.msk [vmem:[#allocation2 + $0x78] sm:$0xff] %vm723, %v7355
  %7370 = vrot.lane.b32.xlu0 %v5824, 96
  %v7371 = vpop.permute.xlu0 %7370
  %7372 = vrot.lane.b32.xlu0 %v5825, 96
  %v7373 = vpop.permute.xlu0 %7372
  %7374 = vrot.lane.b32.xlu0 %v5826, 96
  %v7375 = vpop.permute.xlu0 %7374
  %7376 = vrot.lane.b32.xlu0 %v5827, 96
  %v7377 = vpop.permute.xlu0 %7376
  %7382 = vrot.lane.b32.xlu0 %v5832, 96
  %v7383 = vpop.permute.xlu0 %7382
  %7384 = vrot.lane.b32.xlu0 %v5833, 96
  %v7385 = vpop.permute.xlu0 %7384
  %7386 = vrot.lane.b32.xlu0 %v5834, 96
  %v7387 = vpop.permute.xlu0 %7386
  %7388 = vrot.lane.b32.xlu0 %v5835, 96
  %v7389 = vpop.permute.xlu0 %7388
  %v7391 = vsel %vm723, %v7371, 0
  %v7394 = vsel %vm723, %v7373, 0
  %v7397 = vsel %vm723, %v7375, 0
  %v7400 = vsel %vm723, %v7377, 0
  %v7403 = vsel %vm723, %v7383, 0
  %v7406 = vsel %vm723, %v7385, 0
  %v7409 = vsel %vm723, %v7387, 0
  %v7412 = vsel %vm723, %v7389, 0
  %7414 = vmatprep.subr.bf16.mxu0 0
  %7415 = vmatpush1.bf16.xpose.msra.mxu0 %v7403
  %7416 = vmatprep.subr.bf16.mxu0 0
  %7417 = vmatpush1.bf16.xpose.msra.mxu0 %v7406
  %7418 = vmatprep.subr.bf16.mxu0 0
  %7419 = vmatpush1.bf16.xpose.msra.mxu0 %v7409
  %7420 = vmatprep.subr.bf16.mxu0 0
  %7421 = vmatpush1.bf16.xpose.msra.mxu0 %v7412
  %7422 = vmatprep.subr.bf16.mxu0 0
  %7423 = vmatpush1.bf16.xpose.msra.mxu0 0
  %7424 = vmatprep.subr.bf16.mxu0 0
  %7425 = vmatpush1.bf16.xpose.msra.mxu0 0
  %7426 = vmatprep.subr.bf16.mxu0 0
  %7427 = vmatpush1.bf16.xpose.msra.mxu0 0
  %7428 = vmatprep.subr.bf16.mxu0 0
  %7429 = vmatpush1.bf16.xpose.msra.mxu0 0
  %7430 = vmatprep.subr.bf16.mxu0 0
  %7431 = vmatpush1.bf16.xpose.msra.mxu0 0
  %7432 = vmatprep.subr.bf16.mxu0 0
  %7433 = vmatpush1.bf16.xpose.msra.mxu0 0
  %7434 = vmatprep.subr.bf16.mxu0 0
  %7435 = vmatpush1.bf16.xpose.msra.mxu0 0
  %7436 = vmatprep.subr.bf16.mxu0 0
  %7437 = vmatpush1.bf16.xpose.msra.mxu0 0
  %7438 = vmatprep.subr.bf16.mxu0 0
  %7439 = vmatpush1.bf16.xpose.msra.mxu0 0
  %7440 = vmatprep.subr.bf16.mxu0 0
  %7441 = vmatpush1.bf16.xpose.msra.mxu0 0
  %7442 = vmatprep.subr.bf16.mxu0 0
  %7443 = vmatpush1.bf16.xpose.msra.mxu0 0
  %7444 = vmatprep.subr.bf16.mxu0 0
  %7445 = vmatpush1.bf16.xpose.msra.mxu0 0
  %7446 = vmatprep.mubr.bf16.mxu0 0
  %7447 = vmatmul.mubr.bf16.gmra.mrb[0].mxu0 %v7391
  %v7448 = vpop.f32.mrb[0].mxu0
  %v7449 = vadd.f32 %v73, %v7448
  %v7450 = vpop.f32.mrb[0].mxu0
  %v7451 = vpop.f32.mrb[0].mxu0
  %v7452 = vadd.f32 %v74, %v7451
  %v7453 = vpop.f32.mrb[0].mxu0
  %7454 = vmatprep.mubr.bf16.mxu0 0
  %7455 = vmatmul.mubr.bf16.gmra.mrb[0].mxu0 %v7394
  %v7456 = vpop.f32.mrb[0].mxu0
  %v7457 = vadd.f32 %v75, %v7456
  %v7458 = vpop.f32.mrb[0].mxu0
  %v7459 = vpop.f32.mrb[0].mxu0
  %v7460 = vadd.f32 %v76, %v7459
  %v7461 = vpop.f32.mrb[0].mxu0
  %7462 = vmatprep.mubr.bf16.mxu0 0
  %7463 = vmatmul.mubr.bf16.gmra.mrb[0].mxu0 %v7397
  %v7464 = vpop.f32.mrb[0].mxu0
  %v7465 = vadd.f32 %v77, %v7464
  %v7466 = vpop.f32.mrb[0].mxu0
  %v7467 = vpop.f32.mrb[0].mxu0
  %v7468 = vadd.f32 %v78, %v7467
  %v7469 = vpop.f32.mrb[0].mxu0
  %7470 = vmatprep.mubr.bf16.mxu0 0
  %7471 = vmatmul.mubr.bf16.gmra.mrb[0].mxu0 %v7400
  %v7472 = vpop.f32.mrb[0].mxu0
  %v7473 = vadd.f32 %v79, %v7472
  %v7474 = vpop.f32.mrb[0].mxu0
  %v7475 = vpop.f32.mrb[0].mxu0
  %v7476 = vadd.f32 %v80, %v7475
  %v7477 = vpop.f32.mrb[0].mxu0
  %7478 = vdwg.mxu0
  %v7479 = vsel %vm813, %v7449, -inf
  %7480 = vmax.xlane.f32.xlu0 %v7479
  %v7481 = vpop.xlane.xlu0 %7480
  %v7482 = vsel %vm813, %v7452, -inf
  %7483 = vmax.xlane.f32.xlu0 %v7482
  %v7484 = vpop.xlane.xlu0 %7483
  %v7485 = vsel %vm813, %v7457, -inf
  %7486 = vmax.xlane.f32.xlu0 %v7485
  %v7487 = vpop.xlane.xlu0 %7486
  %v7488 = vsel %vm813, %v7460, -inf
  %7489 = vmax.xlane.f32.xlu0 %v7488
  %v7490 = vpop.xlane.xlu0 %7489
  %v7491 = vsel %vm813, %v7465, -inf
  %7492 = vmax.xlane.f32.xlu0 %v7491
  %v7493 = vpop.xlane.xlu0 %7492
  %v7494 = vsel %vm813, %v7468, -inf
  %7495 = vmax.xlane.f32.xlu0 %v7494
  %v7496 = vpop.xlane.xlu0 %7495
  %v7497 = vsel %vm813, %v7473, -inf
  %7498 = vmax.xlane.f32.xlu0 %v7497
  %v7499 = vpop.xlane.xlu0 %7498
  %v7500 = vsel %vm813, %v7476, -inf
  %7501 = vmax.xlane.f32.xlu0 %v7500
  %v7502 = vpop.xlane.xlu0 %7501
  %v7503 = vsub.f32 %v7449, %v7481
  %v7504 = vsub.f32 %v7452, %v7484
  %v7505 = vsub.f32 %v7457, %v7487
  %v7506 = vsub.f32 %v7460, %v7490
  %v7507 = vsub.f32 %v7465, %v7493
  %v7508 = vsub.f32 %v7468, %v7496
  %v7509 = vsub.f32 %v7473, %v7499
  %v7510 = vsub.f32 %v7476, %v7502
  %v7511 = vmul.f32 %v7503, 1.442695
  %v7512 = vpow.pop %v7511
  %v7513 = vmul.f32 %v7504, 1.442695
  %v7514 = vpow.pop %v7513
  %v7515 = vmul.f32 %v7505, 1.442695
  %v7516 = vpow.pop %v7515
  %v7517 = vmul.f32 %v7506, 1.442695
  %v7518 = vpow.pop %v7517
  %v7519 = vmul.f32 %v7507, 1.442695
  %v7520 = vpow.pop %v7519
  %v7521 = vmul.f32 %v7508, 1.442695
  %v7522 = vpow.pop %v7521
  %v7523 = vmul.f32 %v7509, 1.442695
  %v7524 = vpow.pop %v7523
  %v7525 = vmul.f32 %v7510, 1.442695
  %v7526 = vpow.pop %v7525
  %v7527 = vsel %vm813, %v7512, 0.0
  %7528 = vadd.xlane.f32.xlu0 %v7527
  %v7529 = vpop.xlane.xlu0 %7528
  %v7530 = vsel %vm813, %v7514, 0.0
  %7531 = vadd.xlane.f32.xlu0 %v7530
  %v7532 = vpop.xlane.xlu0 %7531
  %v7533 = vsel %vm813, %v7516, 0.0
  %7534 = vadd.xlane.f32.xlu0 %v7533
  %v7535 = vpop.xlane.xlu0 %7534
  %v7536 = vsel %vm813, %v7518, 0.0
  %7537 = vadd.xlane.f32.xlu0 %v7536
  %v7538 = vpop.xlane.xlu0 %7537
  %v7539 = vsel %vm813, %v7520, 0.0
  %7540 = vadd.xlane.f32.xlu0 %v7539
  %v7541 = vpop.xlane.xlu0 %7540
  %v7542 = vsel %vm813, %v7522, 0.0
  %7543 = vadd.xlane.f32.xlu0 %v7542
  %v7544 = vpop.xlane.xlu0 %7543
  %v7545 = vsel %vm813, %v7524, 0.0
  %7546 = vadd.xlane.f32.xlu0 %v7545
  %v7547 = vpop.xlane.xlu0 %7546
  %v7548 = vsel %vm813, %v7526, 0.0
  %7549 = vadd.xlane.f32.xlu0 %v7548
  %v7550 = vpop.xlane.xlu0 %7549
  %v7551 = vrcp.pop %v7529
  %v7552 = vrcp.pop %v7532
  %v7553 = vrcp.pop %v7535
  %v7554 = vrcp.pop %v7538
  %v7555 = vrcp.pop %v7541
  %v7556 = vrcp.pop %v7544
  %v7557 = vrcp.pop %v7547
  %v7558 = vrcp.pop %v7550
  %v7559 = vmul.f32 %v7512, %v7551
  %v7560 = vmul.f32 %v7514, %v7552
  %v7561 = vmul.f32 %v7516, %v7553
  %v7562 = vmul.f32 %v7518, %v7554
  %v7563 = vmul.f32 %v7520, %v7555
  %v7564 = vmul.f32 %v7522, %v7556
  %v7565 = vmul.f32 %v7524, %v7557
  %v7566 = vmul.f32 %v7526, %v7558
  %v7567 = vpack.c.bf16 %v7560, %v7559
  %v7568 = vpack.c.bf16 %v7562, %v7561
  %v7569 = vpack.c.bf16 %v7564, %v7563
  %v7570 = vpack.c.bf16 %v7566, %v7565
  %7575 = vrot.lane.b32.xlu0 %v5840, 96
  %v7576 = vpop.permute.xlu0 %7575
  %7577 = vrot.lane.b32.xlu0 %v5841, 96
  %v7578 = vpop.permute.xlu0 %7577
  %7579 = vrot.lane.b32.xlu0 %v5842, 96
  %v7580 = vpop.permute.xlu0 %7579
  %7581 = vrot.lane.b32.xlu0 %v5843, 96
  %v7582 = vpop.permute.xlu0 %7581
  %v7588 = vsel %vm813, %v7567, 0
  %v7591 = vsel %vm813, %v7568, 0
  %v7594 = vsel %vm813, %v7569, 0
  %v7597 = vsel %vm813, %v7570, 0
  %7599 = vmatprep.subr.bf16.mxu0 0
  %7600 = vmatpush1.bf16.msra.mxu0 %v7576
  %7601 = vmatprep.subr.bf16.mxu0 0
  %7602 = vmatpush1.bf16.msra.mxu0 %v7578
  %7603 = vmatprep.subr.bf16.mxu0 0
  %7604 = vmatpush1.bf16.msra.mxu0 %v7580
  %7605 = vmatprep.subr.bf16.mxu0 0
  %7606 = vmatpush1.bf16.msra.mxu0 %v7582
  %7607 = vmatprep.subr.bf16.mxu0 0
  %7608 = vmatpush1.bf16.msra.mxu0 0
  %7609 = vmatprep.subr.bf16.mxu0 0
  %7610 = vmatpush1.bf16.msra.mxu0 0
  %7611 = vmatprep.subr.bf16.mxu0 0
  %7612 = vmatpush1.bf16.msra.mxu0 0
  %7613 = vmatprep.subr.bf16.mxu0 0
  %7614 = vmatpush1.bf16.msra.mxu0 0
  %7615 = vmatprep.subr.bf16.mxu0 0
  %7616 = vmatpush1.bf16.msra.mxu0 0
  %7617 = vmatprep.subr.bf16.mxu0 0
  %7618 = vmatpush1.bf16.msra.mxu0 0
  %7619 = vmatprep.subr.bf16.mxu0 0
  %7620 = vmatpush1.bf16.msra.mxu0 0
  %7621 = vmatprep.subr.bf16.mxu0 0
  %7622 = vmatpush1.bf16.msra.mxu0 0
  %7623 = vmatprep.subr.bf16.mxu0 0
  %7624 = vmatpush1.bf16.msra.mxu0 0
  %7625 = vmatprep.subr.bf16.mxu0 0
  %7626 = vmatpush1.bf16.msra.mxu0 0
  %7627 = vmatprep.subr.bf16.mxu0 0
  %7628 = vmatpush1.bf16.msra.mxu0 0
  %7629 = vmatprep.subr.bf16.mxu0 0
  %7630 = vmatpush1.bf16.msra.mxu0 0
  %7631 = vmatprep.mubr.bf16.mxu0 0
  %7632 = vmatmul.mubr.bf16.gmra.mrb[0].mxu0 %v7588
  %v7633 = vpop.f32.mrb[0].mxu0
  %v7634 = vadd.f32 0.0, %v7633
  %v7635 = vpop.f32.mrb[0].mxu0
  %v7636 = vpop.f32.mrb[0].mxu0
  %v7637 = vadd.f32 0.0, %v7636
  %v7638 = vpop.f32.mrb[0].mxu0
  %7639 = vmatprep.mubr.bf16.mxu0 0
  %7640 = vmatmul.mubr.bf16.gmra.mrb[0].mxu0 %v7591
  %v7641 = vpop.f32.mrb[0].mxu0
  %v7642 = vadd.f32 0.0, %v7641
  %v7643 = vpop.f32.mrb[0].mxu0
  %v7644 = vpop.f32.mrb[0].mxu0
  %v7645 = vadd.f32 0.0, %v7644
  %v7646 = vpop.f32.mrb[0].mxu0
  %7647 = vmatprep.mubr.bf16.mxu0 0
  %7648 = vmatmul.mubr.bf16.gmra.mrb[0].mxu0 %v7594
  %v7649 = vpop.f32.mrb[0].mxu0
  %v7650 = vadd.f32 0.0, %v7649
  %v7651 = vpop.f32.mrb[0].mxu0
  %v7652 = vpop.f32.mrb[0].mxu0
  %v7653 = vadd.f32 0.0, %v7652
  %v7654 = vpop.f32.mrb[0].mxu0
  %7655 = vmatprep.mubr.bf16.mxu0 0
  %7656 = vmatmul.mubr.bf16.gmra.mrb[0].mxu0 %v7597
  %v7657 = vpop.f32.mrb[0].mxu0
  %v7658 = vadd.f32 0.0, %v7657
  %v7659 = vpop.f32.mrb[0].mxu0
  %v7660 = vpop.f32.mrb[0].mxu0
  %v7661 = vadd.f32 0.0, %v7660
  %v7662 = vpop.f32.mrb[0].mxu0
  %7663 = vdwg.mxu0
  %7672 = vrot.lane.b32.xlu0 %v7634, 32
  %v7673 = vpop.permute.xlu0 %7672
  %7674 = vrot.lane.b32.xlu0 %v7637, 32
  %v7675 = vpop.permute.xlu0 %7674
  %7676 = vrot.lane.b32.xlu0 %v7642, 32
  %v7677 = vpop.permute.xlu0 %7676
  %7678 = vrot.lane.b32.xlu0 %v7645, 32
  %v7679 = vpop.permute.xlu0 %7678
  %7680 = vrot.lane.b32.xlu0 %v7650, 32
  %v7681 = vpop.permute.xlu0 %7680
  %7682 = vrot.lane.b32.xlu0 %v7653, 32
  %v7683 = vpop.permute.xlu0 %7682
  %7684 = vrot.lane.b32.xlu0 %v7658, 32
  %v7685 = vpop.permute.xlu0 %7684
  %7686 = vrot.lane.b32.xlu0 %v7661, 32
  %v7687 = vpop.permute.xlu0 %7686
  %7696 = vst.msk [vmem:[#allocation2 + $0x40] sm:$0xff] %vm1321, %v7673
  %7697 = vst.msk [vmem:[#allocation2 + $0x48] sm:$0xff] %vm1321, %v7675
  %7698 = vst.msk [vmem:[#allocation2 + $0x50] sm:$0xff] %vm1321, %v7677
  %7699 = vst.msk [vmem:[#allocation2 + $0x58] sm:$0xff] %vm1321, %v7679
  %7700 = vst.msk [vmem:[#allocation2 + $0x60] sm:$0xff] %vm1321, %v7681
  %7701 = vst.msk [vmem:[#allocation2 + $0x68] sm:$0xff] %vm1321, %v7683
  %7702 = vst.msk [vmem:[#allocation2 + $0x70] sm:$0xff] %vm1321, %v7685
  %7703 = vst.msk [vmem:[#allocation2 + $0x78] sm:$0xff] %vm1321, %v7687
  %7704 = vrot.lane.b32.xlu0 %v5824, 64
  %v7705 = vpop.permute.xlu0 %7704
  %7706 = vrot.lane.b32.xlu0 %v5825, 64
  %v7707 = vpop.permute.xlu0 %7706
  %7708 = vrot.lane.b32.xlu0 %v5826, 64
  %v7709 = vpop.permute.xlu0 %7708
  %7710 = vrot.lane.b32.xlu0 %v5827, 64
  %v7711 = vpop.permute.xlu0 %7710
  %7712 = vrot.lane.b32.xlu0 %v5832, 64
  %v7713 = vpop.permute.xlu0 %7712
  %7714 = vrot.lane.b32.xlu0 %v5833, 64
  %v7715 = vpop.permute.xlu0 %7714
  %7716 = vrot.lane.b32.xlu0 %v5834, 64
  %v7717 = vpop.permute.xlu0 %7716
  %7718 = vrot.lane.b32.xlu0 %v5835, 64
  %v7719 = vpop.permute.xlu0 %7718
  %v7721 = vsel %vm723, %v7705, 0
  %v7724 = vsel %vm723, %v7707, 0
  %v7727 = vsel %vm723, %v7709, 0
  %v7730 = vsel %vm723, %v7711, 0
  %v7733 = vsel %vm723, %v7713, 0
  %v7736 = vsel %vm723, %v7715, 0
  %v7739 = vsel %vm723, %v7717, 0
  %v7742 = vsel %vm723, %v7719, 0
  %7744 = vmatprep.subr.bf16.mxu0 0
  %7745 = vmatpush1.bf16.xpose.msra.mxu0 %v7733
  %7746 = vmatprep.subr.bf16.mxu0 0
  %7747 = vmatpush1.bf16.xpose.msra.mxu0 %v7736
  %7748 = vmatprep.subr.bf16.mxu0 0
  %7749 = vmatpush1.bf16.xpose.msra.mxu0 %v7739
  %7750 = vmatprep.subr.bf16.mxu0 0
  %7751 = vmatpush1.bf16.xpose.msra.mxu0 %v7742
  %7752 = vmatprep.subr.bf16.mxu0 0
  %7753 = vmatpush1.bf16.xpose.msra.mxu0 0
  %7754 = vmatprep.subr.bf16.mxu0 0
  %7755 = vmatpush1.bf16.xpose.msra.mxu0 0
  %7756 = vmatprep.subr.bf16.mxu0 0
  %7757 = vmatpush1.bf16.xpose.msra.mxu0 0
  %7758 = vmatprep.subr.bf16.mxu0 0
  %7759 = vmatpush1.bf16.xpose.msra.mxu0 0
  %7760 = vmatprep.subr.bf16.mxu0 0
  %7761 = vmatpush1.bf16.xpose.msra.mxu0 0
  %7762 = vmatprep.subr.bf16.mxu0 0
  %7763 = vmatpush1.bf16.xpose.msra.mxu0 0
  %7764 = vmatprep.subr.bf16.mxu0 0
  %7765 = vmatpush1.bf16.xpose.msra.mxu0 0
  %7766 = vmatprep.subr.bf16.mxu0 0
  %7767 = vmatpush1.bf16.xpose.msra.mxu0 0
  %7768 = vmatprep.subr.bf16.mxu0 0
  %7769 = vmatpush1.bf16.xpose.msra.mxu0 0
  %7770 = vmatprep.subr.bf16.mxu0 0
  %7771 = vmatpush1.bf16.xpose.msra.mxu0 0
  %7772 = vmatprep.subr.bf16.mxu0 0
  %7773 = vmatpush1.bf16.xpose.msra.mxu0 0
  %7774 = vmatprep.subr.bf16.mxu0 0
  %7775 = vmatpush1.bf16.xpose.msra.mxu0 0
  %7776 = vmatprep.mubr.bf16.mxu0 0
  %7777 = vmatmul.mubr.bf16.gmra.mrb[0].mxu0 %v7721
  %v7778 = vpop.f32.mrb[0].mxu0
  %v7779 = vadd.f32 %v73, %v7778
  %v7780 = vpop.f32.mrb[0].mxu0
  %v7781 = vpop.f32.mrb[0].mxu0
  %v7782 = vadd.f32 %v74, %v7781
  %v7783 = vpop.f32.mrb[0].mxu0
  %7784 = vmatprep.mubr.bf16.mxu0 0
  %7785 = vmatmul.mubr.bf16.gmra.mrb[0].mxu0 %v7724
  %v7786 = vpop.f32.mrb[0].mxu0
  %v7787 = vadd.f32 %v75, %v7786
  %v7788 = vpop.f32.mrb[0].mxu0
  %v7789 = vpop.f32.mrb[0].mxu0
  %v7790 = vadd.f32 %v76, %v7789
  %v7791 = vpop.f32.mrb[0].mxu0
  %7792 = vmatprep.mubr.bf16.mxu0 0
  %7793 = vmatmul.mubr.bf16.gmra.mrb[0].mxu0 %v7727
  %v7794 = vpop.f32.mrb[0].mxu0
  %v7795 = vadd.f32 %v77, %v7794
  %v7796 = vpop.f32.mrb[0].mxu0
  %v7797 = vpop.f32.mrb[0].mxu0
  %v7798 = vadd.f32 %v78, %v7797
  %v7799 = vpop.f32.mrb[0].mxu0
  %7800 = vmatprep.mubr.bf16.mxu0 0
  %7801 = vmatmul.mubr.bf16.gmra.mrb[0].mxu0 %v7730
  %v7802 = vpop.f32.mrb[0].mxu0
  %v7803 = vadd.f32 %v79, %v7802
  %v7804 = vpop.f32.mrb[0].mxu0
  %v7805 = vpop.f32.mrb[0].mxu0
  %v7806 = vadd.f32 %v80, %v7805
  %v7807 = vpop.f32.mrb[0].mxu0
  %7808 = vdwg.mxu0
  %v7809 = vsel %vm813, %v7779, -inf
  %7810 = vmax.xlane.f32.xlu0 %v7809
  %v7811 = vpop.xlane.xlu0 %7810
  %v7812 = vsel %vm813, %v7782, -inf
  %7813 = vmax.xlane.f32.xlu0 %v7812
  %v7814 = vpop.xlane.xlu0 %7813
  %v7815 = vsel %vm813, %v7787, -inf
  %7816 = vmax.xlane.f32.xlu0 %v7815
  %v7817 = vpop.xlane.xlu0 %7816
  %v7818 = vsel %vm813, %v7790, -inf
  %7819 = vmax.xlane.f32.xlu0 %v7818
  %v7820 = vpop.xlane.xlu0 %7819
  %v7821 = vsel %vm813, %v7795, -inf
  %7822 = vmax.xlane.f32.xlu0 %v7821
  %v7823 = vpop.xlane.xlu0 %7822
  %v7824 = vsel %vm813, %v7798, -inf
  %7825 = vmax.xlane.f32.xlu0 %v7824
  %v7826 = vpop.xlane.xlu0 %7825
  %v7827 = vsel %vm813, %v7803, -inf
  %7828 = vmax.xlane.f32.xlu0 %v7827
  %v7829 = vpop.xlane.xlu0 %7828
  %v7830 = vsel %vm813, %v7806, -inf
  %7831 = vmax.xlane.f32.xlu0 %v7830
  %v7832 = vpop.xlane.xlu0 %7831
  %v7833 = vsub.f32 %v7779, %v7811
  %v7834 = vsub.f32 %v7782, %v7814
  %v7835 = vsub.f32 %v7787, %v7817
  %v7836 = vsub.f32 %v7790, %v7820
  %v7837 = vsub.f32 %v7795, %v7823
  %v7838 = vsub.f32 %v7798, %v7826
  %v7839 = vsub.f32 %v7803, %v7829
  %v7840 = vsub.f32 %v7806, %v7832
  %v7841 = vmul.f32 %v7833, 1.442695
  %v7842 = vpow.pop %v7841
  %v7843 = vmul.f32 %v7834, 1.442695
  %v7844 = vpow.pop %v7843
  %v7845 = vmul.f32 %v7835, 1.442695
  %v7846 = vpow.pop %v7845
  %v7847 = vmul.f32 %v7836, 1.442695
  %v7848 = vpow.pop %v7847
  %v7849 = vmul.f32 %v7837, 1.442695
  %v7850 = vpow.pop %v7849
  %v7851 = vmul.f32 %v7838, 1.442695
  %v7852 = vpow.pop %v7851
  %v7853 = vmul.f32 %v7839, 1.442695
  %v7854 = vpow.pop %v7853
  %v7855 = vmul.f32 %v7840, 1.442695
  %v7856 = vpow.pop %v7855
  %v7857 = vsel %vm813, %v7842, 0.0
  %7858 = vadd.xlane.f32.xlu0 %v7857
  %v7859 = vpop.xlane.xlu0 %7858
  %v7860 = vsel %vm813, %v7844, 0.0
  %7861 = vadd.xlane.f32.xlu0 %v7860
  %v7862 = vpop.xlane.xlu0 %7861
  %v7863 = vsel %vm813, %v7846, 0.0
  %7864 = vadd.xlane.f32.xlu0 %v7863
  %v7865 = vpop.xlane.xlu0 %7864
  %v7866 = vsel %vm813, %v7848, 0.0
  %7867 = vadd.xlane.f32.xlu0 %v7866
  %v7868 = vpop.xlane.xlu0 %7867
  %v7869 = vsel %vm813, %v7850, 0.0
  %7870 = vadd.xlane.f32.xlu0 %v7869
  %v7871 = vpop.xlane.xlu0 %7870
  %v7872 = vsel %vm813, %v7852, 0.0
  %7873 = vadd.xlane.f32.xlu0 %v7872
  %v7874 = vpop.xlane.xlu0 %7873
  %v7875 = vsel %vm813, %v7854, 0.0
  %7876 = vadd.xlane.f32.xlu0 %v7875
  %v7877 = vpop.xlane.xlu0 %7876
  %v7878 = vsel %vm813, %v7856, 0.0
  %7879 = vadd.xlane.f32.xlu0 %v7878
  %v7880 = vpop.xlane.xlu0 %7879
  %v7881 = vrcp.pop %v7859
  %v7882 = vrcp.pop %v7862
  %v7883 = vrcp.pop %v7865
  %v7884 = vrcp.pop %v7868
  %v7885 = vrcp.pop %v7871
  %v7886 = vrcp.pop %v7874
  %v7887 = vrcp.pop %v7877
  %v7888 = vrcp.pop %v7880
  %v7889 = vmul.f32 %v7842, %v7881
  %v7890 = vmul.f32 %v7844, %v7882
  %v7891 = vmul.f32 %v7846, %v7883
  %v7892 = vmul.f32 %v7848, %v7884
  %v7893 = vmul.f32 %v7850, %v7885
  %v7894 = vmul.f32 %v7852, %v7886
  %v7895 = vmul.f32 %v7854, %v7887
  %v7896 = vmul.f32 %v7856, %v7888
  %v7897 = vpack.c.bf16 %v7890, %v7889
  %v7898 = vpack.c.bf16 %v7892, %v7891
  %v7899 = vpack.c.bf16 %v7894, %v7893
  %v7900 = vpack.c.bf16 %v7896, %v7895
  %7901 = vrot.lane.b32.xlu0 %v5840, 64
  %v7902 = vpop.permute.xlu0 %7901
  %7903 = vrot.lane.b32.xlu0 %v5841, 64
  %v7904 = vpop.permute.xlu0 %7903
  %7905 = vrot.lane.b32.xlu0 %v5842, 64
  %v7906 = vpop.permute.xlu0 %7905
  %7907 = vrot.lane.b32.xlu0 %v5843, 64
  %v7908 = vpop.permute.xlu0 %7907
  %v7914 = vsel %vm813, %v7897, 0
  %v7917 = vsel %vm813, %v7898, 0
  %v7920 = vsel %vm813, %v7899, 0
  %v7923 = vsel %vm813, %v7900, 0
  %7925 = vmatprep.subr.bf16.mxu0 0
  %7926 = vmatpush1.bf16.msra.mxu0 %v7902
  %7927 = vmatprep.subr.bf16.mxu0 0
  %7928 = vmatpush1.bf16.msra.mxu0 %v7904
  %7929 = vmatprep.subr.bf16.mxu0 0
  %7930 = vmatpush1.bf16.msra.mxu0 %v7906
  %7931 = vmatprep.subr.bf16.mxu0 0
  %7932 = vmatpush1.bf16.msra.mxu0 %v7908
  %7933 = vmatprep.subr.bf16.mxu0 0
  %7934 = vmatpush1.bf16.msra.mxu0 0
  %7935 = vmatprep.subr.bf16.mxu0 0
  %7936 = vmatpush1.bf16.msra.mxu0 0
  %7937 = vmatprep.subr.bf16.mxu0 0
  %7938 = vmatpush1.bf16.msra.mxu0 0
  %7939 = vmatprep.subr.bf16.mxu0 0
  %7940 = vmatpush1.bf16.msra.mxu0 0
  %7941 = vmatprep.subr.bf16.mxu0 0
  %7942 = vmatpush1.bf16.msra.mxu0 0
  %7943 = vmatprep.subr.bf16.mxu0 0
  %7944 = vmatpush1.bf16.msra.mxu0 0
  %7945 = vmatprep.subr.bf16.mxu0 0
  %7946 = vmatpush1.bf16.msra.mxu0 0
  %7947 = vmatprep.subr.bf16.mxu0 0
  %7948 = vmatpush1.bf16.msra.mxu0 0
  %7949 = vmatprep.subr.bf16.mxu0 0
  %7950 = vmatpush1.bf16.msra.mxu0 0
  %7951 = vmatprep.subr.bf16.mxu0 0
  %7952 = vmatpush1.bf16.msra.mxu0 0
  %7953 = vmatprep.subr.bf16.mxu0 0
  %7954 = vmatpush1.bf16.msra.mxu0 0
  %7955 = vmatprep.subr.bf16.mxu0 0
  %7956 = vmatpush1.bf16.msra.mxu0 0
  %7957 = vmatprep.mubr.bf16.mxu0 0
  %7958 = vmatmul.mubr.bf16.gmra.mrb[0].mxu0 %v7914
  %v7959 = vpop.f32.mrb[0].mxu0
  %v7960 = vadd.f32 0.0, %v7959
  %v7961 = vpop.f32.mrb[0].mxu0
  %v7962 = vpop.f32.mrb[0].mxu0
  %v7963 = vadd.f32 0.0, %v7962
  %v7964 = vpop.f32.mrb[0].mxu0
  %7965 = vmatprep.mubr.bf16.mxu0 0
  %7966 = vmatmul.mubr.bf16.gmra.mrb[0].mxu0 %v7917
  %v7967 = vpop.f32.mrb[0].mxu0
  %v7968 = vadd.f32 0.0, %v7967
  %v7969 = vpop.f32.mrb[0].mxu0
  %v7970 = vpop.f32.mrb[0].mxu0
  %v7971 = vadd.f32 0.0, %v7970
  %v7972 = vpop.f32.mrb[0].mxu0
  %7973 = vmatprep.mubr.bf16.mxu0 0
  %7974 = vmatmul.mubr.bf16.gmra.mrb[0].mxu0 %v7920
  %v7975 = vpop.f32.mrb[0].mxu0
  %v7976 = vadd.f32 0.0, %v7975
  %v7977 = vpop.f32.mrb[0].mxu0
  %v7978 = vpop.f32.mrb[0].mxu0
  %v7979 = vadd.f32 0.0, %v7978
  %v7980 = vpop.f32.mrb[0].mxu0
  %7981 = vmatprep.mubr.bf16.mxu0 0
  %7982 = vmatmul.mubr.bf16.gmra.mrb[0].mxu0 %v7923
  %v7983 = vpop.f32.mrb[0].mxu0
  %v7984 = vadd.f32 0.0, %v7983
  %v7985 = vpop.f32.mrb[0].mxu0
  %v7986 = vpop.f32.mrb[0].mxu0
  %v7987 = vadd.f32 0.0, %v7986
  %v7988 = vpop.f32.mrb[0].mxu0
  %7989 = vdwg.mxu0
  %7998 = vrot.lane.b32.xlu0 %v7960, 64
  %v7999 = vpop.permute.xlu0 %7998
  %8000 = vrot.lane.b32.xlu0 %v7963, 64
  %v8001 = vpop.permute.xlu0 %8000
  %8002 = vrot.lane.b32.xlu0 %v7968, 64
  %v8003 = vpop.permute.xlu0 %8002
  %8004 = vrot.lane.b32.xlu0 %v7971, 64
  %v8005 = vpop.permute.xlu0 %8004
  %8006 = vrot.lane.b32.xlu0 %v7976, 64
  %v8007 = vpop.permute.xlu0 %8006
  %8008 = vrot.lane.b32.xlu0 %v7979, 64
  %v8009 = vpop.permute.xlu0 %8008
  %8010 = vrot.lane.b32.xlu0 %v7984, 64
  %v8011 = vpop.permute.xlu0 %8010
  %8012 = vrot.lane.b32.xlu0 %v7987, 64
  %v8013 = vpop.permute.xlu0 %8012
  %8022 = vst.msk [vmem:[#allocation2 + $0x40] sm:$0xff] %vm1648, %v7999
  %8023 = vst.msk [vmem:[#allocation2 + $0x48] sm:$0xff] %vm1648, %v8001
  %8024 = vst.msk [vmem:[#allocation2 + $0x50] sm:$0xff] %vm1648, %v8003
  %8025 = vst.msk [vmem:[#allocation2 + $0x58] sm:$0xff] %vm1648, %v8005
  %8026 = vst.msk [vmem:[#allocation2 + $0x60] sm:$0xff] %vm1648, %v8007
  %8027 = vst.msk [vmem:[#allocation2 + $0x68] sm:$0xff] %vm1648, %v8009
  %8028 = vst.msk [vmem:[#allocation2 + $0x70] sm:$0xff] %vm1648, %v8011
  %8029 = vst.msk [vmem:[#allocation2 + $0x78] sm:$0xff] %vm1648, %v8013
  %8030 = vrot.lane.b32.xlu0 %v5824, 32
  %v8031 = vpop.permute.xlu0 %8030
  %8032 = vrot.lane.b32.xlu0 %v5825, 32
  %v8033 = vpop.permute.xlu0 %8032
  %8034 = vrot.lane.b32.xlu0 %v5826, 32
  %v8035 = vpop.permute.xlu0 %8034
  %8036 = vrot.lane.b32.xlu0 %v5827, 32
  %v8037 = vpop.permute.xlu0 %8036
  %8038 = vrot.lane.b32.xlu0 %v5832, 32
  %v8039 = vpop.permute.xlu0 %8038
  %8040 = vrot.lane.b32.xlu0 %v5833, 32
  %v8041 = vpop.permute.xlu0 %8040
  %8042 = vrot.lane.b32.xlu0 %v5834, 32
  %v8043 = vpop.permute.xlu0 %8042
  %8044 = vrot.lane.b32.xlu0 %v5835, 32
  %v8045 = vpop.permute.xlu0 %8044
  %v8047 = vsel %vm723, %v8031, 0
  %v8050 = vsel %vm723, %v8033, 0
  %v8053 = vsel %vm723, %v8035, 0
  %v8056 = vsel %vm723, %v8037, 0
  %v8059 = vsel %vm723, %v8039, 0
  %v8062 = vsel %vm723, %v8041, 0
  %v8065 = vsel %vm723, %v8043, 0
  %v8068 = vsel %vm723, %v8045, 0
  %8070 = vmatprep.subr.bf16.mxu0 0
  %8071 = vmatpush1.bf16.xpose.msra.mxu0 %v8059
  %8072 = vmatprep.subr.bf16.mxu0 0
  %8073 = vmatpush1.bf16.xpose.msra.mxu0 %v8062
  %8074 = vmatprep.subr.bf16.mxu0 0
  %8075 = vmatpush1.bf16.xpose.msra.mxu0 %v8065
  %8076 = vmatprep.subr.bf16.mxu0 0
  %8077 = vmatpush1.bf16.xpose.msra.mxu0 %v8068
  %8078 = vmatprep.subr.bf16.mxu0 0
  %8079 = vmatpush1.bf16.xpose.msra.mxu0 0
  %8080 = vmatprep.subr.bf16.mxu0 0
  %8081 = vmatpush1.bf16.xpose.msra.mxu0 0
  %8082 = vmatprep.subr.bf16.mxu0 0
  %8083 = vmatpush1.bf16.xpose.msra.mxu0 0
  %8084 = vmatprep.subr.bf16.mxu0 0
  %8085 = vmatpush1.bf16.xpose.msra.mxu0 0
  %8086 = vmatprep.subr.bf16.mxu0 0
  %8087 = vmatpush1.bf16.xpose.msra.mxu0 0
  %8088 = vmatprep.subr.bf16.mxu0 0
  %8089 = vmatpush1.bf16.xpose.msra.mxu0 0
  %8090 = vmatprep.subr.bf16.mxu0 0
  %8091 = vmatpush1.bf16.xpose.msra.mxu0 0
  %8092 = vmatprep.subr.bf16.mxu0 0
  %8093 = vmatpush1.bf16.xpose.msra.mxu0 0
  %8094 = vmatprep.subr.bf16.mxu0 0
  %8095 = vmatpush1.bf16.xpose.msra.mxu0 0
  %8096 = vmatprep.subr.bf16.mxu0 0
  %8097 = vmatpush1.bf16.xpose.msra.mxu0 0
  %8098 = vmatprep.subr.bf16.mxu0 0
  %8099 = vmatpush1.bf16.xpose.msra.mxu0 0
  %8100 = vmatprep.subr.bf16.mxu0 0
  %8101 = vmatpush1.bf16.xpose.msra.mxu0 0
  %8102 = vmatprep.mubr.bf16.mxu0 0
  %8103 = vmatmul.mubr.bf16.gmra.mrb[0].mxu0 %v8047
  %v8104 = vpop.f32.mrb[0].mxu0
  %v8105 = vadd.f32 %v73, %v8104
  %v8106 = vpop.f32.mrb[0].mxu0
  %v8107 = vpop.f32.mrb[0].mxu0
  %v8108 = vadd.f32 %v74, %v8107
  %v8109 = vpop.f32.mrb[0].mxu0
  %8110 = vmatprep.mubr.bf16.mxu0 0
  %8111 = vmatmul.mubr.bf16.gmra.mrb[0].mxu0 %v8050
  %v8112 = vpop.f32.mrb[0].mxu0
  %v8113 = vadd.f32 %v75, %v8112
  %v8114 = vpop.f32.mrb[0].mxu0
  %v8115 = vpop.f32.mrb[0].mxu0
  %v8116 = vadd.f32 %v76, %v8115
  %v8117 = vpop.f32.mrb[0].mxu0
  %8118 = vmatprep.mubr.bf16.mxu0 0
  %8119 = vmatmul.mubr.bf16.gmra.mrb[0].mxu0 %v8053
  %v8120 = vpop.f32.mrb[0].mxu0
  %v8121 = vadd.f32 %v77, %v8120
  %v8122 = vpop.f32.mrb[0].mxu0
  %v8123 = vpop.f32.mrb[0].mxu0
  %v8124 = vadd.f32 %v78, %v8123
  %v8125 = vpop.f32.mrb[0].mxu0
  %8126 = vmatprep.mubr.bf16.mxu0 0
  %8127 = vmatmul.mubr.bf16.gmra.mrb[0].mxu0 %v8056
  %v8128 = vpop.f32.mrb[0].mxu0
  %v8129 = vadd.f32 %v79, %v8128
  %v8130 = vpop.f32.mrb[0].mxu0
  %v8131 = vpop.f32.mrb[0].mxu0
  %v8132 = vadd.f32 %v80, %v8131
  %v8133 = vpop.f32.mrb[0].mxu0
  %8134 = vdwg.mxu0
  %v8135 = vsel %vm813, %v8105, -inf
  %8136 = vmax.xlane.f32.xlu0 %v8135
  %v8137 = vpop.xlane.xlu0 %8136
  %v8138 = vsel %vm813, %v8108, -inf
  %8139 = vmax.xlane.f32.xlu0 %v8138
  %v8140 = vpop.xlane.xlu0 %8139
  %v8141 = vsel %vm813, %v8113, -inf
  %8142 = vmax.xlane.f32.xlu0 %v8141
  %v8143 = vpop.xlane.xlu0 %8142
  %v8144 = vsel %vm813, %v8116, -inf
  %8145 = vmax.xlane.f32.xlu0 %v8144
  %v8146 = vpop.xlane.xlu0 %8145
  %v8147 = vsel %vm813, %v8121, -inf
  %8148 = vmax.xlane.f32.xlu0 %v8147
  %v8149 = vpop.xlane.xlu0 %8148
  %v8150 = vsel %vm813, %v8124, -inf
  %8151 = vmax.xlane.f32.xlu0 %v8150
  %v8152 = vpop.xlane.xlu0 %8151
  %v8153 = vsel %vm813, %v8129, -inf
  %8154 = vmax.xlane.f32.xlu0 %v8153
  %v8155 = vpop.xlane.xlu0 %8154
  %v8156 = vsel %vm813, %v8132, -inf
  %8157 = vmax.xlane.f32.xlu0 %v8156
  %v8158 = vpop.xlane.xlu0 %8157
  %v8159 = vsub.f32 %v8105, %v8137
  %v8160 = vsub.f32 %v8108, %v8140
  %v8161 = vsub.f32 %v8113, %v8143
  %v8162 = vsub.f32 %v8116, %v8146
  %v8163 = vsub.f32 %v8121, %v8149
  %v8164 = vsub.f32 %v8124, %v8152
  %v8165 = vsub.f32 %v8129, %v8155
  %v8166 = vsub.f32 %v8132, %v8158
  %v8167 = vmul.f32 %v8159, 1.442695
  %v8168 = vpow.pop %v8167
  %v8169 = vmul.f32 %v8160, 1.442695
  %v8170 = vpow.pop %v8169
  %v8171 = vmul.f32 %v8161, 1.442695
  %v8172 = vpow.pop %v8171
  %v8173 = vmul.f32 %v8162, 1.442695
  %v8174 = vpow.pop %v8173
  %v8175 = vmul.f32 %v8163, 1.442695
  %v8176 = vpow.pop %v8175
  %v8177 = vmul.f32 %v8164, 1.442695
  %v8178 = vpow.pop %v8177
  %v8179 = vmul.f32 %v8165, 1.442695
  %v8180 = vpow.pop %v8179
  %v8181 = vmul.f32 %v8166, 1.442695
  %v8182 = vpow.pop %v8181
  %v8183 = vsel %vm813, %v8168, 0.0
  %8184 = vadd.xlane.f32.xlu0 %v8183
  %v8185 = vpop.xlane.xlu0 %8184
  %v8186 = vsel %vm813, %v8170, 0.0
  %8187 = vadd.xlane.f32.xlu0 %v8186
  %v8188 = vpop.xlane.xlu0 %8187
  %v8189 = vsel %vm813, %v8172, 0.0
  %8190 = vadd.xlane.f32.xlu0 %v8189
  %v8191 = vpop.xlane.xlu0 %8190
  %v8192 = vsel %vm813, %v8174, 0.0
  %8193 = vadd.xlane.f32.xlu0 %v8192
  %v8194 = vpop.xlane.xlu0 %8193
  %v8195 = vsel %vm813, %v8176, 0.0
  %8196 = vadd.xlane.f32.xlu0 %v8195
  %v8197 = vpop.xlane.xlu0 %8196
  %v8198 = vsel %vm813, %v8178, 0.0
  %8199 = vadd.xlane.f32.xlu0 %v8198
  %v8200 = vpop.xlane.xlu0 %8199
  %v8201 = vsel %vm813, %v8180, 0.0
  %8202 = vadd.xlane.f32.xlu0 %v8201
  %v8203 = vpop.xlane.xlu0 %8202
  %v8204 = vsel %vm813, %v8182, 0.0
  %8205 = vadd.xlane.f32.xlu0 %v8204
  %v8206 = vpop.xlane.xlu0 %8205
  %v8207 = vrcp.pop %v8185
  %v8208 = vrcp.pop %v8188
  %v8209 = vrcp.pop %v8191
  %v8210 = vrcp.pop %v8194
  %v8211 = vrcp.pop %v8197
  %v8212 = vrcp.pop %v8200
  %v8213 = vrcp.pop %v8203
  %v8214 = vrcp.pop %v8206
  %v8215 = vmul.f32 %v8168, %v8207
  %v8216 = vmul.f32 %v8170, %v8208
  %v8217 = vmul.f32 %v8172, %v8209
  %v8218 = vmul.f32 %v8174, %v8210
  %v8219 = vmul.f32 %v8176, %v8211
  %v8220 = vmul.f32 %v8178, %v8212
  %v8221 = vmul.f32 %v8180, %v8213
  %v8222 = vmul.f32 %v8182, %v8214
  %v8223 = vpack.c.bf16 %v8216, %v8215
  %v8224 = vpack.c.bf16 %v8218, %v8217
  %v8225 = vpack.c.bf16 %v8220, %v8219
  %v8226 = vpack.c.bf16 %v8222, %v8221
  %8227 = vrot.lane.b32.xlu0 %v5840, 32
  %v8228 = vpop.permute.xlu0 %8227
  %8229 = vrot.lane.b32.xlu0 %v5841, 32
  %v8230 = vpop.permute.xlu0 %8229
  %8231 = vrot.lane.b32.xlu0 %v5842, 32
  %v8232 = vpop.permute.xlu0 %8231
  %8233 = vrot.lane.b32.xlu0 %v5843, 32
  %v8234 = vpop.permute.xlu0 %8233
  %v8240 = vsel %vm813, %v8223, 0
  %v8243 = vsel %vm813, %v8224, 0
  %v8246 = vsel %vm813, %v8225, 0
  %v8249 = vsel %vm813, %v8226, 0
  %8251 = vmatprep.subr.bf16.mxu0 0
  %8252 = vmatpush1.bf16.msra.mxu0 %v8228
  %8253 = vmatprep.subr.bf16.mxu0 0
  %8254 = vmatpush1.bf16.msra.mxu0 %v8230
  %8255 = vmatprep.subr.bf16.mxu0 0
  %8256 = vmatpush1.bf16.msra.mxu0 %v8232
  %8257 = vmatprep.subr.bf16.mxu0 0
  %8258 = vmatpush1.bf16.msra.mxu0 %v8234
  %8259 = vmatprep.subr.bf16.mxu0 0
  %8260 = vmatpush1.bf16.msra.mxu0 0
  %8261 = vmatprep.subr.bf16.mxu0 0
  %8262 = vmatpush1.bf16.msra.mxu0 0
  %8263 = vmatprep.subr.bf16.mxu0 0
  %8264 = vmatpush1.bf16.msra.mxu0 0
  %8265 = vmatprep.subr.bf16.mxu0 0
  %8266 = vmatpush1.bf16.msra.mxu0 0
  %8267 = vmatprep.subr.bf16.mxu0 0
  %8268 = vmatpush1.bf16.msra.mxu0 0
  %8269 = vmatprep.subr.bf16.mxu0 0
  %8270 = vmatpush1.bf16.msra.mxu0 0
  %8271 = vmatprep.subr.bf16.mxu0 0
  %8272 = vmatpush1.bf16.msra.mxu0 0
  %8273 = vmatprep.subr.bf16.mxu0 0
  %8274 = vmatpush1.bf16.msra.mxu0 0
  %8275 = vmatprep.subr.bf16.mxu0 0
  %8276 = vmatpush1.bf16.msra.mxu0 0
  %8277 = vmatprep.subr.bf16.mxu0 0
  %8278 = vmatpush1.bf16.msra.mxu0 0
  %8279 = vmatprep.subr.bf16.mxu0 0
  %8280 = vmatpush1.bf16.msra.mxu0 0
  %8281 = vmatprep.subr.bf16.mxu0 0
  %8282 = vmatpush1.bf16.msra.mxu0 0
  %8283 = vmatprep.mubr.bf16.mxu0 0
  %8284 = vmatmul.mubr.bf16.gmra.mrb[0].mxu0 %v8240
  %v8285 = vpop.f32.mrb[0].mxu0
  %v8286 = vadd.f32 0.0, %v8285
  %v8287 = vpop.f32.mrb[0].mxu0
  %v8288 = vpop.f32.mrb[0].mxu0
  %v8289 = vadd.f32 0.0, %v8288
  %v8290 = vpop.f32.mrb[0].mxu0
  %8291 = vmatprep.mubr.bf16.mxu0 0
  %8292 = vmatmul.mubr.bf16.gmra.mrb[0].mxu0 %v8243
  %v8293 = vpop.f32.mrb[0].mxu0
  %v8294 = vadd.f32 0.0, %v8293
  %v8295 = vpop.f32.mrb[0].mxu0
  %v8296 = vpop.f32.mrb[0].mxu0
  %v8297 = vadd.f32 0.0, %v8296
  %v8298 = vpop.f32.mrb[0].mxu0
  %8299 = vmatprep.mubr.bf16.mxu0 0
  %8300 = vmatmul.mubr.bf16.gmra.mrb[0].mxu0 %v8246
  %v8301 = vpop.f32.mrb[0].mxu0
  %v8302 = vadd.f32 0.0, %v8301
  %v8303 = vpop.f32.mrb[0].mxu0
  %v8304 = vpop.f32.mrb[0].mxu0
  %v8305 = vadd.f32 0.0, %v8304
  %v8306 = vpop.f32.mrb[0].mxu0
  %8307 = vmatprep.mubr.bf16.mxu0 0
  %8308 = vmatmul.mubr.bf16.gmra.mrb[0].mxu0 %v8249
  %v8309 = vpop.f32.mrb[0].mxu0
  %v8310 = vadd.f32 0.0, %v8309
  %v8311 = vpop.f32.mrb[0].mxu0
  %v8312 = vpop.f32.mrb[0].mxu0
  %v8313 = vadd.f32 0.0, %v8312
  %v8314 = vpop.f32.mrb[0].mxu0
  %8315 = vdwg.mxu0
  %8324 = vrot.lane.b32.xlu0 %v8286, 96
  %v8325 = vpop.permute.xlu0 %8324
  %8326 = vrot.lane.b32.xlu0 %v8289, 96
  %v8327 = vpop.permute.xlu0 %8326
  %8328 = vrot.lane.b32.xlu0 %v8294, 96
  %v8329 = vpop.permute.xlu0 %8328
  %8330 = vrot.lane.b32.xlu0 %v8297, 96
  %v8331 = vpop.permute.xlu0 %8330
  %8332 = vrot.lane.b32.xlu0 %v8302, 96
  %v8333 = vpop.permute.xlu0 %8332
  %8334 = vrot.lane.b32.xlu0 %v8305, 96
  %v8335 = vpop.permute.xlu0 %8334
  %8336 = vrot.lane.b32.xlu0 %v8310, 96
  %v8337 = vpop.permute.xlu0 %8336
  %8338 = vrot.lane.b32.xlu0 %v8313, 96
  %v8339 = vpop.permute.xlu0 %8338
  %8348 = vst.msk [vmem:[#allocation2 + $0x40] sm:$0xff] %vm1975, %v8325
  %8349 = vst.msk [vmem:[#allocation2 + $0x48] sm:$0xff] %vm1975, %v8327
  %8350 = vst.msk [vmem:[#allocation2 + $0x50] sm:$0xff] %vm1975, %v8329
  %8351 = vst.msk [vmem:[#allocation2 + $0x58] sm:$0xff] %vm1975, %v8331
  %8352 = vst.msk [vmem:[#allocation2 + $0x60] sm:$0xff] %vm1975, %v8333
  %8353 = vst.msk [vmem:[#allocation2 + $0x68] sm:$0xff] %vm1975, %v8335
  %8354 = vst.msk [vmem:[#allocation2 + $0x70] sm:$0xff] %vm1975, %v8337
  %8355 = vst.msk [vmem:[#allocation2 + $0x78] sm:$0xff] %vm1975, %v8339
  %v8356 = vld [vmem:[#allocation2] sm:$0xff]
  %v8357 = vld [vmem:[#allocation2 + $0x8] sm:$0xff]
  %v8358 = vld [vmem:[#allocation2 + $0x10] sm:$0xff]
  %v8359 = vld [vmem:[#allocation2 + $0x18] sm:$0xff]
  %v8360 = vld [vmem:[#allocation2 + $0x20] sm:$0xff]
  %v8361 = vld [vmem:[#allocation2 + $0x28] sm:$0xff]
  %v8362 = vld [vmem:[#allocation2 + $0x30] sm:$0xff]
  %v8363 = vld [vmem:[#allocation2 + $0x38] sm:$0xff]
  %v8364 = vld [vmem:[#allocation2 + $0x40] sm:$0xff]
  %v8365 = vld [vmem:[#allocation2 + $0x48] sm:$0xff]
  %v8366 = vld [vmem:[#allocation2 + $0x50] sm:$0xff]
  %v8367 = vld [vmem:[#allocation2 + $0x58] sm:$0xff]
  %v8368 = vld [vmem:[#allocation2 + $0x60] sm:$0xff]
  %v8369 = vld [vmem:[#allocation2 + $0x68] sm:$0xff]
  %v8370 = vld [vmem:[#allocation2 + $0x70] sm:$0xff]
  %v8371 = vld [vmem:[#allocation2 + $0x78] sm:$0xff]
  %v8372 = vpack.c.bf16 %v8357, %v8356
  %v8373 = vpack.c.bf16 %v8359, %v8358
  %v8374 = vpack.c.bf16 %v8361, %v8360
  %v8375 = vpack.c.bf16 %v8363, %v8362
  %v8376 = vpack.c.bf16 %v8365, %v8364
  %v8377 = vpack.c.bf16 %v8367, %v8366
  %v8378 = vpack.c.bf16 %v8369, %v8368
  %v8379 = vpack.c.bf16 %v8371, %v8370
  %s8380 = scalar_lea.vmem %s6, 64
  %v8381 = vld [vmem:[%s8380] sm:$0xf]
  %v8382 = vld [vmem:[%s8380 + $0x4] sm:$0xf]
  %v8383 = vld [vmem:[%s8380 + $0x8] sm:$0xf]
  %v8384 = vld [vmem:[%s8380 + $0xc] sm:$0xf]
  %v8385 = vld [vmem:[%s8380 + $0x10] sm:$0xf]
  %v8386 = vld [vmem:[%s8380 + $0x14] sm:$0xf]
  %v8387 = vld [vmem:[%s8380 + $0x18] sm:$0xf]
  %v8388 = vld [vmem:[%s8380 + $0x1c] sm:$0xf]
  %v8389 = vld [vmem:[%s8380 + $0x20] sm:$0xf]
  %v8390 = vld [vmem:[%s8380 + $0x24] sm:$0xf]
  %v8391 = vld [vmem:[%s8380 + $0x28] sm:$0xf]
  %v8392 = vld [vmem:[%s8380 + $0x2c] sm:$0xf]
  %v8393 = vld [vmem:[%s8380 + $0x30] sm:$0xf]
  %v8394 = vld [vmem:[%s8380 + $0x34] sm:$0xf]
  %v8395 = vld [vmem:[%s8380 + $0x38] sm:$0xf]
  %v8396 = vld [vmem:[%s8380 + $0x3c] sm:$0xf]
  %s8397 = scalar_lea.vmem %s7, 1
  %v8398 = vld [vmem:[%s8397] sm:$0x1]
  %v8400 = vlaneseq
  %v8401 = vshrl.u32 %v8400, 7
  %v8402 = vsub.s32 0, %v8401
  %v8403 = vrot.slane %v8398, %v8402
  %v8421 = vunpack.c.l.b16 %v8381
  %v8422 = vunpack.c.l.b16 %v8382
  %v8423 = vunpack.c.l.b16 %v8383
  %v8424 = vunpack.c.l.b16 %v8384
  %v8425 = vunpack.c.l.b16 %v8385
  %v8426 = vunpack.c.l.b16 %v8386
  %v8427 = vunpack.c.l.b16 %v8387
  %v8428 = vunpack.c.l.b16 %v8388
  %v8429 = vunpack.c.l.b16 %v8389
  %v8430 = vunpack.c.l.b16 %v8390
  %v8431 = vunpack.c.l.b16 %v8391
  %v8432 = vunpack.c.l.b16 %v8392
  %v8433 = vunpack.c.l.b16 %v8393
  %v8434 = vunpack.c.l.b16 %v8394
  %v8435 = vunpack.c.l.b16 %v8395
  %v8436 = vunpack.c.l.b16 %v8396
  %v8437 = vpack.c.b16 %v8422, %v8421
  %v8438 = vpack.c.b16 %v8424, %v8423
  %v8439 = vpack.c.b16 %v8426, %v8425
  %v8440 = vpack.c.b16 %v8428, %v8427
  %v8441 = vpack.c.b16 %v8430, %v8429
  %v8442 = vpack.c.b16 %v8432, %v8431
  %v8443 = vpack.c.b16 %v8434, %v8433
  %v8444 = vpack.c.b16 %v8436, %v8435
  %8453 = vmatprep.subr.bf16.mxu0 0
  %8454 = vmatpush1.bf16.msra.mxu0 %v8437
  %8455 = vmatprep.subr.bf16.mxu0 0
  %8456 = vmatpush1.bf16.msra.mxu0 %v8438
  %8457 = vmatprep.subr.bf16.mxu0 0
  %8458 = vmatpush1.bf16.msra.mxu0 %v8439
  %8459 = vmatprep.subr.bf16.mxu0 0
  %8460 = vmatpush1.bf16.msra.mxu0 %v8440
  %8461 = vmatprep.subr.bf16.mxu0 0
  %8462 = vmatpush1.bf16.msra.mxu0 %v8441
  %8463 = vmatprep.subr.bf16.mxu0 0
  %8464 = vmatpush1.bf16.msra.mxu0 %v8442
  %8465 = vmatprep.subr.bf16.mxu0 0
  %8466 = vmatpush1.bf16.msra.mxu0 %v8443
  %8467 = vmatprep.subr.bf16.mxu0 0
  %8468 = vmatpush1.bf16.msra.mxu0 %v8444
  %8469 = vmatprep.subr.bf16.mxu0 0
  %8470 = vmatpush1.bf16.msra.mxu0 0
  %8471 = vmatprep.subr.bf16.mxu0 0
  %8472 = vmatpush1.bf16.msra.mxu0 0
  %8473 = vmatprep.subr.bf16.mxu0 0
  %8474 = vmatpush1.bf16.msra.mxu0 0
  %8475 = vmatprep.subr.bf16.mxu0 0
  %8476 = vmatpush1.bf16.msra.mxu0 0
  %8477 = vmatprep.subr.bf16.mxu0 0
  %8478 = vmatpush1.bf16.msra.mxu0 0
  %8479 = vmatprep.subr.bf16.mxu0 0
  %8480 = vmatpush1.bf16.msra.mxu0 0
  %8481 = vmatprep.subr.bf16.mxu0 0
  %8482 = vmatpush1.bf16.msra.mxu0 0
  %8483 = vmatprep.subr.bf16.mxu0 0
  %8484 = vmatpush1.bf16.msra.mxu0 0
  %8485 = vmatprep.mubr.bf16.mxu0 0
  %8486 = vmatmul.mubr.bf16.gmra.mrb[0].mxu0 %v8372
  %v8487 = vpop.f32.mrb[0].mxu0
  %v8488 = vadd.f32 %v8403, %v8487
  %v8489 = vpop.f32.mrb[0].mxu0
  %v8490 = vpop.f32.mrb[0].mxu0
  %v8491 = vadd.f32 %v8403, %v8490
  %v8492 = vpop.f32.mrb[0].mxu0
  %8493 = vmatprep.mubr.bf16.mxu0 0
  %8494 = vmatmul.mubr.bf16.gmra.mrb[0].mxu0 %v8373
  %v8495 = vpop.f32.mrb[0].mxu0
  %v8496 = vadd.f32 %v8403, %v8495
  %v8497 = vpop.f32.mrb[0].mxu0
  %v8498 = vpop.f32.mrb[0].mxu0
  %v8499 = vadd.f32 %v8403, %v8498
  %v8500 = vpop.f32.mrb[0].mxu0
  %8501 = vmatprep.mubr.bf16.mxu0 0
  %8502 = vmatmul.mubr.bf16.gmra.mrb[0].mxu0 %v8374
  %v8503 = vpop.f32.mrb[0].mxu0
  %v8504 = vadd.f32 %v8403, %v8503
  %v8505 = vpop.f32.mrb[0].mxu0
  %v8506 = vpop.f32.mrb[0].mxu0
  %v8507 = vadd.f32 %v8403, %v8506
  %v8508 = vpop.f32.mrb[0].mxu0
  %8509 = vmatprep.mubr.bf16.mxu0 0
  %8510 = vmatmul.mubr.bf16.gmra.mrb[0].mxu0 %v8375
  %v8511 = vpop.f32.mrb[0].mxu0
  %v8512 = vadd.f32 %v8403, %v8511
  %v8513 = vpop.f32.mrb[0].mxu0
  %v8514 = vpop.f32.mrb[0].mxu0
  %v8515 = vadd.f32 %v8403, %v8514
  %v8516 = vpop.f32.mrb[0].mxu0
  %8517 = vmatprep.mubr.bf16.mxu0 0
  %8518 = vmatmul.mubr.bf16.gmra.mrb[0].mxu0 %v8376
  %v8519 = vpop.f32.mrb[0].mxu0
  %v8520 = vadd.f32 %v8403, %v8519
  %v8521 = vpop.f32.mrb[0].mxu0
  %v8522 = vpop.f32.mrb[0].mxu0
  %v8523 = vadd.f32 %v8403, %v8522
  %v8524 = vpop.f32.mrb[0].mxu0
  %8525 = vmatprep.mubr.bf16.mxu0 0
  %8526 = vmatmul.mubr.bf16.gmra.mrb[0].mxu0 %v8377
  %v8527 = vpop.f32.mrb[0].mxu0
  %v8528 = vadd.f32 %v8403, %v8527
  %v8529 = vpop.f32.mrb[0].mxu0
  %v8530 = vpop.f32.mrb[0].mxu0
  %v8531 = vadd.f32 %v8403, %v8530
  %v8532 = vpop.f32.mrb[0].mxu0
  %8533 = vmatprep.mubr.bf16.mxu0 0
  %8534 = vmatmul.mubr.bf16.gmra.mrb[0].mxu0 %v8378
  %v8535 = vpop.f32.mrb[0].mxu0
  %v8536 = vadd.f32 %v8403, %v8535
  %v8537 = vpop.f32.mrb[0].mxu0
  %v8538 = vpop.f32.mrb[0].mxu0
  %v8539 = vadd.f32 %v8403, %v8538
  %v8540 = vpop.f32.mrb[0].mxu0
  %8541 = vmatprep.mubr.bf16.mxu0 0
  %8542 = vmatmul.mubr.bf16.gmra.mrb[0].mxu0 %v8379
  %v8543 = vpop.f32.mrb[0].mxu0
  %v8544 = vadd.f32 %v8403, %v8543
  %v8545 = vpop.f32.mrb[0].mxu0
  %v8546 = vpop.f32.mrb[0].mxu0
  %v8547 = vadd.f32 %v8403, %v8546
  %v8548 = vpop.f32.mrb[0].mxu0
  %8549 = vdwg.mxu0
  %v8550 = vadd.f32 %v5183, %v8488
  %v8551 = vadd.f32 %v5184, %v8491
  %v8552 = vadd.f32 %v5185, %v8496
  %v8553 = vadd.f32 %v5186, %v8499
  %v8554 = vadd.f32 %v5187, %v8504
  %v8555 = vadd.f32 %v5188, %v8507
  %v8556 = vadd.f32 %v5189, %v8512
  %v8557 = vadd.f32 %v5190, %v8515
  %v8558 = vadd.f32 %v5191, %v8520
  %v8559 = vadd.f32 %v5192, %v8523
  %v8560 = vadd.f32 %v5193, %v8528
  %v8561 = vadd.f32 %v5194, %v8531
  %v8562 = vadd.f32 %v5195, %v8536
  %v8563 = vadd.f32 %v5196, %v8539
  %v8564 = vadd.f32 %v5197, %v8544
  %v8565 = vadd.f32 %v5198, %v8547
  %s8566 = scalar_lea.vmem %s8, 1
  %v8567 = vld [vmem:[%s8566] sm:$0x1]
  %s8568 = scalar_lea.vmem %s9, 1
  %v8569 = vld [vmem:[%s8568] sm:$0x1]
  %8570 = vadd.xlane.f32.xlu0 %v8550
  %v8571 = vpop.xlane.xlu0 %8570
  %8572 = vadd.xlane.f32.xlu0 %v8551
  %v8573 = vpop.xlane.xlu0 %8572
  %8574 = vadd.xlane.f32.xlu0 %v8552
  %v8575 = vpop.xlane.xlu0 %8574
  %8576 = vadd.xlane.f32.xlu0 %v8553
  %v8577 = vpop.xlane.xlu0 %8576
  %8578 = vadd.xlane.f32.xlu0 %v8554
  %v8579 = vpop.xlane.xlu0 %8578
  %8580 = vadd.xlane.f32.xlu0 %v8555
  %v8581 = vpop.xlane.xlu0 %8580
  %8582 = vadd.xlane.f32.xlu0 %v8556
  %v8583 = vpop.xlane.xlu0 %8582
  %8584 = vadd.xlane.f32.xlu0 %v8557
  %v8585 = vpop.xlane.xlu0 %8584
  %8586 = vadd.xlane.f32.xlu0 %v8558
  %v8587 = vpop.xlane.xlu0 %8586
  %8588 = vadd.xlane.f32.xlu0 %v8559
  %v8589 = vpop.xlane.xlu0 %8588
  %8590 = vadd.xlane.f32.xlu0 %v8560
  %v8591 = vpop.xlane.xlu0 %8590
  %8592 = vadd.xlane.f32.xlu0 %v8561
  %v8593 = vpop.xlane.xlu0 %8592
  %8594 = vadd.xlane.f32.xlu0 %v8562
  %v8595 = vpop.xlane.xlu0 %8594
  %8596 = vadd.xlane.f32.xlu0 %v8563
  %v8597 = vpop.xlane.xlu0 %8596
  %8598 = vadd.xlane.f32.xlu0 %v8564
  %v8599 = vpop.xlane.xlu0 %8598
  %8600 = vadd.xlane.f32.xlu0 %v8565
  %v8601 = vpop.xlane.xlu0 %8600
  %v8602 = vmul.f32 %v8571, %v115
  %v8603 = vmul.f32 %v8573, %v115
  %v8604 = vmul.f32 %v8575, %v115
  %v8605 = vmul.f32 %v8577, %v115
  %v8606 = vmul.f32 %v8579, %v115
  %v8607 = vmul.f32 %v8581, %v115
  %v8608 = vmul.f32 %v8583, %v115
  %v8609 = vmul.f32 %v8585, %v115
  %v8610 = vmul.f32 %v8587, %v115
  %v8611 = vmul.f32 %v8589, %v115
  %v8612 = vmul.f32 %v8591, %v115
  %v8613 = vmul.f32 %v8593, %v115
  %v8614 = vmul.f32 %v8595, %v115
  %v8615 = vmul.f32 %v8597, %v115
  %v8616 = vmul.f32 %v8599, %v115
  %v8617 = vmul.f32 %v8601, %v115
  %v8618 = vsub.f32 %v8550, %v8602
  %v8619 = vsub.f32 %v8551, %v8603
  %v8620 = vsub.f32 %v8552, %v8604
  %v8621 = vsub.f32 %v8553, %v8605
  %v8622 = vsub.f32 %v8554, %v8606
  %v8623 = vsub.f32 %v8555, %v8607
  %v8624 = vsub.f32 %v8556, %v8608
  %v8625 = vsub.f32 %v8557, %v8609
  %v8626 = vsub.f32 %v8558, %v8610
  %v8627 = vsub.f32 %v8559, %v8611
  %v8628 = vsub.f32 %v8560, %v8612
  %v8629 = vsub.f32 %v8561, %v8613
  %v8630 = vsub.f32 %v8562, %v8614
  %v8631 = vsub.f32 %v8563, %v8615
  %v8632 = vsub.f32 %v8564, %v8616
  %v8633 = vsub.f32 %v8565, %v8617
  %v8634 = vmul.f32 %v8618, %v8618
  %v8635 = vmul.f32 %v8619, %v8619
  %v8636 = vmul.f32 %v8620, %v8620
  %v8637 = vmul.f32 %v8621, %v8621
  %v8638 = vmul.f32 %v8622, %v8622
  %v8639 = vmul.f32 %v8623, %v8623
  %v8640 = vmul.f32 %v8624, %v8624
  %v8641 = vmul.f32 %v8625, %v8625
  %v8642 = vmul.f32 %v8626, %v8626
  %v8643 = vmul.f32 %v8627, %v8627
  %v8644 = vmul.f32 %v8628, %v8628
  %v8645 = vmul.f32 %v8629, %v8629
  %v8646 = vmul.f32 %v8630, %v8630
  %v8647 = vmul.f32 %v8631, %v8631
  %v8648 = vmul.f32 %v8632, %v8632
  %v8649 = vmul.f32 %v8633, %v8633
  %8650 = vadd.xlane.f32.xlu0 %v8634
  %v8651 = vpop.xlane.xlu0 %8650
  %8652 = vadd.xlane.f32.xlu0 %v8635
  %v8653 = vpop.xlane.xlu0 %8652
  %8654 = vadd.xlane.f32.xlu0 %v8636
  %v8655 = vpop.xlane.xlu0 %8654
  %8656 = vadd.xlane.f32.xlu0 %v8637
  %v8657 = vpop.xlane.xlu0 %8656
  %8658 = vadd.xlane.f32.xlu0 %v8638
  %v8659 = vpop.xlane.xlu0 %8658
  %8660 = vadd.xlane.f32.xlu0 %v8639
  %v8661 = vpop.xlane.xlu0 %8660
  %8662 = vadd.xlane.f32.xlu0 %v8640
  %v8663 = vpop.xlane.xlu0 %8662
  %8664 = vadd.xlane.f32.xlu0 %v8641
  %v8665 = vpop.xlane.xlu0 %8664
  %8666 = vadd.xlane.f32.xlu0 %v8642
  %v8667 = vpop.xlane.xlu0 %8666
  %8668 = vadd.xlane.f32.xlu0 %v8643
  %v8669 = vpop.xlane.xlu0 %8668
  %8670 = vadd.xlane.f32.xlu0 %v8644
  %v8671 = vpop.xlane.xlu0 %8670
  %8672 = vadd.xlane.f32.xlu0 %v8645
  %v8673 = vpop.xlane.xlu0 %8672
  %8674 = vadd.xlane.f32.xlu0 %v8646
  %v8675 = vpop.xlane.xlu0 %8674
  %8676 = vadd.xlane.f32.xlu0 %v8647
  %v8677 = vpop.xlane.xlu0 %8676
  %8678 = vadd.xlane.f32.xlu0 %v8648
  %v8679 = vpop.xlane.xlu0 %8678
  %8680 = vadd.xlane.f32.xlu0 %v8649
  %v8681 = vpop.xlane.xlu0 %8680
  %v8682 = vmul.f32 %v8651, %v115
  %v8683 = vmul.f32 %v8653, %v115
  %v8684 = vmul.f32 %v8655, %v115
  %v8685 = vmul.f32 %v8657, %v115
  %v8686 = vmul.f32 %v8659, %v115
  %v8687 = vmul.f32 %v8661, %v115
  %v8688 = vmul.f32 %v8663, %v115
  %v8689 = vmul.f32 %v8665, %v115
  %v8690 = vmul.f32 %v8667, %v115
  %v8691 = vmul.f32 %v8669, %v115
  %v8692 = vmul.f32 %v8671, %v115
  %v8693 = vmul.f32 %v8673, %v115
  %v8694 = vmul.f32 %v8675, %v115
  %v8695 = vmul.f32 %v8677, %v115
  %v8696 = vmul.f32 %v8679, %v115
  %v8697 = vmul.f32 %v8681, %v115
  %v8698 = vadd.f32 %v8682, 1e-05
  %v8699 = vadd.f32 %v8683, 1e-05
  %v8700 = vadd.f32 %v8684, 1e-05
  %v8701 = vadd.f32 %v8685, 1e-05
  %v8702 = vadd.f32 %v8686, 1e-05
  %v8703 = vadd.f32 %v8687, 1e-05
  %v8704 = vadd.f32 %v8688, 1e-05
  %v8705 = vadd.f32 %v8689, 1e-05
  %v8706 = vadd.f32 %v8690, 1e-05
  %v8707 = vadd.f32 %v8691, 1e-05
  %v8708 = vadd.f32 %v8692, 1e-05
  %v8709 = vadd.f32 %v8693, 1e-05
  %v8710 = vadd.f32 %v8694, 1e-05
  %v8711 = vadd.f32 %v8695, 1e-05
  %v8712 = vadd.f32 %v8696, 1e-05
  %v8713 = vadd.f32 %v8697, 1e-05
  %v8714 = vrsqrt.pop %v8698
  %v8715 = vrsqrt.pop %v8699
  %v8716 = vrsqrt.pop %v8700
  %v8717 = vrsqrt.pop %v8701
  %v8718 = vrsqrt.pop %v8702
  %v8719 = vrsqrt.pop %v8703
  %v8720 = vrsqrt.pop %v8704
  %v8721 = vrsqrt.pop %v8705
  %v8722 = vrsqrt.pop %v8706
  %v8723 = vrsqrt.pop %v8707
  %v8724 = vrsqrt.pop %v8708
  %v8725 = vrsqrt.pop %v8709
  %v8726 = vrsqrt.pop %v8710
  %v8727 = vrsqrt.pop %v8711
  %v8728 = vrsqrt.pop %v8712
  %v8729 = vrsqrt.pop %v8713
  %v8730 = vmul.f32 %v8618, %v8714
  %v8731 = vmul.f32 %v8619, %v8715
  %v8732 = vmul.f32 %v8620, %v8716
  %v8733 = vmul.f32 %v8621, %v8717
  %v8734 = vmul.f32 %v8622, %v8718
  %v8735 = vmul.f32 %v8623, %v8719
  %v8736 = vmul.f32 %v8624, %v8720
  %v8737 = vmul.f32 %v8625, %v8721
  %v8738 = vmul.f32 %v8626, %v8722
  %v8739 = vmul.f32 %v8627, %v8723
  %v8740 = vmul.f32 %v8628, %v8724
  %v8741 = vmul.f32 %v8629, %v8725
  %v8742 = vmul.f32 %v8630, %v8726
  %v8743 = vmul.f32 %v8631, %v8727
  %v8744 = vmul.f32 %v8632, %v8728
  %v8745 = vmul.f32 %v8633, %v8729
  %v8747 = vlaneseq
  %v8748 = vshrl.u32 %v8747, 7
  %v8749 = vsub.s32 0, %v8748
  %v8750 = vrot.slane %v8567, %v8749
  %v8752 = vmul.f32 %v8730, %v8750
  %v8753 = vmul.f32 %v8731, %v8750
  %v8754 = vmul.f32 %v8732, %v8750
  %v8755 = vmul.f32 %v8733, %v8750
  %v8756 = vmul.f32 %v8734, %v8750
  %v8757 = vmul.f32 %v8735, %v8750
  %v8758 = vmul.f32 %v8736, %v8750
  %v8759 = vmul.f32 %v8737, %v8750
  %v8760 = vmul.f32 %v8738, %v8750
  %v8761 = vmul.f32 %v8739, %v8750
  %v8762 = vmul.f32 %v8740, %v8750
  %v8763 = vmul.f32 %v8741, %v8750
  %v8764 = vmul.f32 %v8742, %v8750
  %v8765 = vmul.f32 %v8743, %v8750
  %v8766 = vmul.f32 %v8744, %v8750
  %v8767 = vmul.f32 %v8745, %v8750
  %v8769 = vlaneseq
  %v8770 = vshrl.u32 %v8769, 7
  %v8771 = vsub.s32 0, %v8770
  %v8772 = vrot.slane %v8569, %v8771
  %v8774 = vadd.f32 %v8752, %v8772
  %v8775 = vadd.f32 %v8753, %v8772
  %v8776 = vadd.f32 %v8754, %v8772
  %v8777 = vadd.f32 %v8755, %v8772
  %v8778 = vadd.f32 %v8756, %v8772
  %v8779 = vadd.f32 %v8757, %v8772
  %v8780 = vadd.f32 %v8758, %v8772
  %v8781 = vadd.f32 %v8759, %v8772
  %v8782 = vadd.f32 %v8760, %v8772
  %v8783 = vadd.f32 %v8761, %v8772
  %v8784 = vadd.f32 %v8762, %v8772
  %v8785 = vadd.f32 %v8763, %v8772
  %v8786 = vadd.f32 %v8764, %v8772
  %v8787 = vadd.f32 %v8765, %v8772
  %v8788 = vadd.f32 %v8766, %v8772
  %v8789 = vadd.f32 %v8767, %v8772
  %v8790 = vpack.c.bf16 %v8775, %v8774
  %v8791 = vpack.c.bf16 %v8777, %v8776
  %v8792 = vpack.c.bf16 %v8779, %v8778
  %v8793 = vpack.c.bf16 %v8781, %v8780
  %v8794 = vpack.c.bf16 %v8783, %v8782
  %v8795 = vpack.c.bf16 %v8785, %v8784
  %v8796 = vpack.c.bf16 %v8787, %v8786
  %v8797 = vpack.c.bf16 %v8789, %v8788
  %s8798 = scalar_lea.vmem %s10, 256
  %v8799 = vld [vmem:[%s8798] sm:$0xff]
  %v8800 = vld [vmem:[%s8798 + $0x8] sm:$0xff]
  %v8801 = vld [vmem:[%s8798 + $0x10] sm:$0xff]
  %v8802 = vld [vmem:[%s8798 + $0x18] sm:$0xff]
  %v8803 = vld [vmem:[%s8798 + $0x20] sm:$0xff]
  %v8804 = vld [vmem:[%s8798 + $0x28] sm:$0xff]
  %v8805 = vld [vmem:[%s8798 + $0x30] sm:$0xff]
  %v8806 = vld [vmem:[%s8798 + $0x38] sm:$0xff]
  %v8807 = vld [vmem:[%s8798 + $0x40] sm:$0xff]
  %v8808 = vld [vmem:[%s8798 + $0x48] sm:$0xff]
  %v8809 = vld [vmem:[%s8798 + $0x50] sm:$0xff]
  %v8810 = vld [vmem:[%s8798 + $0x58] sm:$0xff]
  %v8811 = vld [vmem:[%s8798 + $0x60] sm:$0xff]
  %v8812 = vld [vmem:[%s8798 + $0x68] sm:$0xff]
  %v8813 = vld [vmem:[%s8798 + $0x70] sm:$0xff]
  %v8814 = vld [vmem:[%s8798 + $0x78] sm:$0xff]
  %v8815 = vld [vmem:[%s8798 + $0x80] sm:$0xff]
  %v8816 = vld [vmem:[%s8798 + $0x88] sm:$0xff]
  %v8817 = vld [vmem:[%s8798 + $0x90] sm:$0xff]
  %v8818 = vld [vmem:[%s8798 + $0x98] sm:$0xff]
  %v8819 = vld [vmem:[%s8798 + $0xa0] sm:$0xff]
  %v8820 = vld [vmem:[%s8798 + $0xa8] sm:$0xff]
  %v8821 = vld [vmem:[%s8798 + $0xb0] sm:$0xff]
  %v8822 = vld [vmem:[%s8798 + $0xb8] sm:$0xff]
  %v8823 = vld [vmem:[%s8798 + $0xc0] sm:$0xff]
  %v8824 = vld [vmem:[%s8798 + $0xc8] sm:$0xff]
  %v8825 = vld [vmem:[%s8798 + $0xd0] sm:$0xff]
  %v8826 = vld [vmem:[%s8798 + $0xd8] sm:$0xff]
  %v8827 = vld [vmem:[%s8798 + $0xe0] sm:$0xff]
  %v8828 = vld [vmem:[%s8798 + $0xe8] sm:$0xff]
  %v8829 = vld [vmem:[%s8798 + $0xf0] sm:$0xff]
  %v8830 = vld [vmem:[%s8798 + $0xf8] sm:$0xff]
  %s8831 = scalar_lea.vmem %s11, 4
  %v8832 = vld [vmem:[%s8831] sm:$0xf]
  %v8834 = vlaneseq
  %v8835 = vshrl.u32 %v8834, 7
  %v8836 = vsub.s32 0, %v8835
  %v8837 = vrot.slane %v8832, %v8836
  %v8838 = vlaneseq
  %v8839 = vshrl.u32 %v8838, 7
  %v8840 = vsub.s32 1, %v8839
  %v8841 = vrot.slane %v8832, %v8840
  %v8842 = vlaneseq
  %v8843 = vshrl.u32 %v8842, 7
  %v8844 = vsub.s32 2, %v8843
  %v8845 = vrot.slane %v8832, %v8844
  %v8846 = vlaneseq
  %v8847 = vshrl.u32 %v8846, 7
  %v8848 = vsub.s32 3, %v8847
  %v8849 = vrot.slane %v8832, %v8848
  %v8886 = vunpack.c.l.b16 %v8799
  %v8887 = vunpack.c.h.b16 %v8799
  %v8888 = vunpack.c.l.b16 %v8800
  %v8889 = vunpack.c.h.b16 %v8800
  %v8890 = vunpack.c.l.b16 %v8801
  %v8891 = vunpack.c.h.b16 %v8801
  %v8892 = vunpack.c.l.b16 %v8802
  %v8893 = vunpack.c.h.b16 %v8802
  %v8894 = vunpack.c.l.b16 %v8803
  %v8895 = vunpack.c.h.b16 %v8803
  %v8896 = vunpack.c.l.b16 %v8804
  %v8897 = vunpack.c.h.b16 %v8804
  %v8898 = vunpack.c.l.b16 %v8805
  %v8899 = vunpack.c.h.b16 %v8805
  %v8900 = vunpack.c.l.b16 %v8806
  %v8901 = vunpack.c.h.b16 %v8806
  %v8902 = vunpack.c.l.b16 %v8807
  %v8903 = vunpack.c.h.b16 %v8807
  %v8904 = vunpack.c.l.b16 %v8808
  %v8905 = vunpack.c.h.b16 %v8808
  %v8906 = vunpack.c.l.b16 %v8809
  %v8907 = vunpack.c.h.b16 %v8809
  %v8908 = vunpack.c.l.b16 %v8810
  %v8909 = vunpack.c.h.b16 %v8810
  %v8910 = vunpack.c.l.b16 %v8811
  %v8911 = vunpack.c.h.b16 %v8811
  %v8912 = vunpack.c.l.b16 %v8812
  %v8913 = vunpack.c.h.b16 %v8812
  %v8914 = vunpack.c.l.b16 %v8813
  %v8915 = vunpack.c.h.b16 %v8813
  %v8916 = vunpack.c.l.b16 %v8814
  %v8917 = vunpack.c.h.b16 %v8814
  %v8918 = vunpack.c.l.b16 %v8815
  %v8919 = vunpack.c.h.b16 %v8815
  %v8920 = vunpack.c.l.b16 %v8816
  %v8921 = vunpack.c.h.b16 %v8816
  %v8922 = vunpack.c.l.b16 %v8817
  %v8923 = vunpack.c.h.b16 %v8817
  %v8924 = vunpack.c.l.b16 %v8818
  %v8925 = vunpack.c.h.b16 %v8818
  %v8926 = vunpack.c.l.b16 %v8819
  %v8927 = vunpack.c.h.b16 %v8819
  %v8928 = vunpack.c.l.b16 %v8820
  %v8929 = vunpack.c.h.b16 %v8820
  %v8930 = vunpack.c.l.b16 %v8821
  %v8931 = vunpack.c.h.b16 %v8821
  %v8932 = vunpack.c.l.b16 %v8822
  %v8933 = vunpack.c.h.b16 %v8822
  %v8934 = vunpack.c.l.b16 %v8823
  %v8935 = vunpack.c.h.b16 %v8823
  %v8936 = vunpack.c.l.b16 %v8824
  %v8937 = vunpack.c.h.b16 %v8824
  %v8938 = vunpack.c.l.b16 %v8825
  %v8939 = vunpack.c.h.b16 %v8825
  %v8940 = vunpack.c.l.b16 %v8826
  %v8941 = vunpack.c.h.b16 %v8826
  %v8942 = vunpack.c.l.b16 %v8827
  %v8943 = vunpack.c.h.b16 %v8827
  %v8944 = vunpack.c.l.b16 %v8828
  %v8945 = vunpack.c.h.b16 %v8828
  %v8946 = vunpack.c.l.b16 %v8829
  %v8947 = vunpack.c.h.b16 %v8829
  %v8948 = vunpack.c.l.b16 %v8830
  %v8949 = vunpack.c.h.b16 %v8830
  %v8950 = vpack.c.b16 %v8890, %v8886
  %v8951 = vpack.c.b16 %v8891, %v8887
  %v8952 = vpack.c.b16 %v8892, %v8888
  %v8953 = vpack.c.b16 %v8893, %v8889
  %v8954 = vpack.c.b16 %v8898, %v8894
  %v8955 = vpack.c.b16 %v8899, %v8895
  %v8956 = vpack.c.b16 %v8900, %v8896
  %v8957 = vpack.c.b16 %v8901, %v8897
  %v8958 = vpack.c.b16 %v8906, %v8902
  %v8959 = vpack.c.b16 %v8907, %v8903
  %v8960 = vpack.c.b16 %v8908, %v8904
  %v8961 = vpack.c.b16 %v8909, %v8905
  %v8962 = vpack.c.b16 %v8914, %v8910
  %v8963 = vpack.c.b16 %v8915, %v8911
  %v8964 = vpack.c.b16 %v8916, %v8912
  %v8965 = vpack.c.b16 %v8917, %v8913
  %v8966 = vpack.c.b16 %v8922, %v8918
  %v8967 = vpack.c.b16 %v8923, %v8919
  %v8968 = vpack.c.b16 %v8924, %v8920
  %v8969 = vpack.c.b16 %v8925, %v8921
  %v8970 = vpack.c.b16 %v8930, %v8926
  %v8971 = vpack.c.b16 %v8931, %v8927
  %v8972 = vpack.c.b16 %v8932, %v8928
  %v8973 = vpack.c.b16 %v8933, %v8929
  %v8974 = vpack.c.b16 %v8938, %v8934
  %v8975 = vpack.c.b16 %v8939, %v8935
  %v8976 = vpack.c.b16 %v8940, %v8936
  %v8977 = vpack.c.b16 %v8941, %v8937
  %v8978 = vpack.c.b16 %v8946, %v8942
  %v8979 = vpack.c.b16 %v8947, %v8943
  %v8980 = vpack.c.b16 %v8948, %v8944
  %v8981 = vpack.c.b16 %v8949, %v8945
  %9014 = vmatprep.subr.bf16.mxu0 %v8951
  %9015 = vmatpush1.bf16.msra.mxu0 %v8950
  %9016 = vmatprep.subr.bf16.mxu0 %v8955
  %9017 = vmatpush1.bf16.msra.mxu0 %v8954
  %9018 = vmatprep.subr.bf16.mxu0 %v8959
  %9019 = vmatpush1.bf16.msra.mxu0 %v8958
  %9020 = vmatprep.subr.bf16.mxu0 %v8963
  %9021 = vmatpush1.bf16.msra.mxu0 %v8962
  %9022 = vmatprep.subr.bf16.mxu0 %v8967
  %9023 = vmatpush1.bf16.msra.mxu0 %v8966
  %9024 = vmatprep.subr.bf16.mxu0 %v8971
  %9025 = vmatpush1.bf16.msra.mxu0 %v8970
  %9026 = vmatprep.subr.bf16.mxu0 %v8975
  %9027 = vmatpush1.bf16.msra.mxu0 %v8974
  %9028 = vmatprep.subr.bf16.mxu0 %v8979
  %9029 = vmatpush1.bf16.msra.mxu0 %v8978
  %9030 = vmatprep.subr.bf16.mxu0 0
  %9031 = vmatpush1.bf16.msra.mxu0 0
  %9032 = vmatprep.subr.bf16.mxu0 0
  %9033 = vmatpush1.bf16.msra.mxu0 0
  %9034 = vmatprep.subr.bf16.mxu0 0
  %9035 = vmatpush1.bf16.msra.mxu0 0
  %9036 = vmatprep.subr.bf16.mxu0 0
  %9037 = vmatpush1.bf16.msra.mxu0 0
  %9038 = vmatprep.subr.bf16.mxu0 0
  %9039 = vmatpush1.bf16.msra.mxu0 0
  %9040 = vmatprep.subr.bf16.mxu0 0
  %9041 = vmatpush1.bf16.msra.mxu0 0
  %9042 = vmatprep.subr.bf16.mxu0 0
  %9043 = vmatpush1.bf16.msra.mxu0 0
  %9044 = vmatprep.subr.bf16.mxu0 0
  %9045 = vmatpush1.bf16.msra.mxu0 0
  %9046 = vmatprep.mubr.bf16.mxu0 0
  %9047 = vmatmul.mubr.bf16.gmra.mrb[0].mxu0 %v8790
  %v9048 = vpop.f32.mrb[0].mxu0
  %v9049 = vadd.f32 %v8837, %v9048
  %v9050 = vpop.f32.mrb[0].mxu0
  %v9051 = vadd.f32 %v8841, %v9050
  %v9052 = vpop.f32.mrb[0].mxu0
  %v9053 = vadd.f32 %v8837, %v9052
  %v9054 = vpop.f32.mrb[0].mxu0
  %v9055 = vadd.f32 %v8841, %v9054
  %9056 = vmatprep.mubr.bf16.mxu0 0
  %9057 = vmatmul.mubr.bf16.gmra.mrb[0].mxu0 %v8791
  %v9058 = vpop.f32.mrb[0].mxu0
  %v9059 = vadd.f32 %v8837, %v9058
  %v9060 = vpop.f32.mrb[0].mxu0
  %v9061 = vadd.f32 %v8841, %v9060
  %v9062 = vpop.f32.mrb[0].mxu0
  %v9063 = vadd.f32 %v8837, %v9062
  %v9064 = vpop.f32.mrb[0].mxu0
  %v9065 = vadd.f32 %v8841, %v9064
  %9066 = vmatprep.mubr.bf16.mxu0 0
  %9067 = vmatmul.mubr.bf16.gmra.mrb[0].mxu0 %v8792
  %v9068 = vpop.f32.mrb[0].mxu0
  %v9069 = vadd.f32 %v8837, %v9068
  %v9070 = vpop.f32.mrb[0].mxu0
  %v9071 = vadd.f32 %v8841, %v9070
  %v9072 = vpop.f32.mrb[0].mxu0
  %v9073 = vadd.f32 %v8837, %v9072
  %v9074 = vpop.f32.mrb[0].mxu0
  %v9075 = vadd.f32 %v8841, %v9074
  %9076 = vmatprep.mubr.bf16.mxu0 0
  %9077 = vmatmul.mubr.bf16.gmra.mrb[0].mxu0 %v8793
  %v9078 = vpop.f32.mrb[0].mxu0
  %v9079 = vadd.f32 %v8837, %v9078
  %v9080 = vpop.f32.mrb[0].mxu0
  %v9081 = vadd.f32 %v8841, %v9080
  %v9082 = vpop.f32.mrb[0].mxu0
  %v9083 = vadd.f32 %v8837, %v9082
  %v9084 = vpop.f32.mrb[0].mxu0
  %v9085 = vadd.f32 %v8841, %v9084
  %9086 = vmatprep.mubr.bf16.mxu0 0
  %9087 = vmatmul.mubr.bf16.gmra.mrb[0].mxu0 %v8794
  %v9088 = vpop.f32.mrb[0].mxu0
  %v9089 = vadd.f32 %v8837, %v9088
  %v9090 = vpop.f32.mrb[0].mxu0
  %v9091 = vadd.f32 %v8841, %v9090
  %v9092 = vpop.f32.mrb[0].mxu0
  %v9093 = vadd.f32 %v8837, %v9092
  %v9094 = vpop.f32.mrb[0].mxu0
  %v9095 = vadd.f32 %v8841, %v9094
  %9096 = vmatprep.mubr.bf16.mxu0 0
  %9097 = vmatmul.mubr.bf16.gmra.mrb[0].mxu0 %v8795
  %v9098 = vpop.f32.mrb[0].mxu0
  %v9099 = vadd.f32 %v8837, %v9098
  %v9100 = vpop.f32.mrb[0].mxu0
  %v9101 = vadd.f32 %v8841, %v9100
  %v9102 = vpop.f32.mrb[0].mxu0
  %v9103 = vadd.f32 %v8837, %v9102
  %v9104 = vpop.f32.mrb[0].mxu0
  %v9105 = vadd.f32 %v8841, %v9104
  %9106 = vmatprep.mubr.bf16.mxu0 0
  %9107 = vmatmul.mubr.bf16.gmra.mrb[0].mxu0 %v8796
  %v9108 = vpop.f32.mrb[0].mxu0
  %v9109 = vadd.f32 %v8837, %v9108
  %v9110 = vpop.f32.mrb[0].mxu0
  %v9111 = vadd.f32 %v8841, %v9110
  %v9112 = vpop.f32.mrb[0].mxu0
  %v9113 = vadd.f32 %v8837, %v9112
  %v9114 = vpop.f32.mrb[0].mxu0
  %v9115 = vadd.f32 %v8841, %v9114
  %9116 = vmatprep.mubr.bf16.mxu0 0
  %9117 = vmatmul.mubr.bf16.gmra.mrb[0].mxu0 %v8797
  %v9118 = vpop.f32.mrb[0].mxu0
  %v9119 = vadd.f32 %v8837, %v9118
  %v9120 = vpop.f32.mrb[0].mxu0
  %v9121 = vadd.f32 %v8841, %v9120
  %v9122 = vpop.f32.mrb[0].mxu0
  %v9123 = vadd.f32 %v8837, %v9122
  %v9124 = vpop.f32.mrb[0].mxu0
  %v9125 = vadd.f32 %v8841, %v9124
  %9126 = vdwg.mxu0
  %9127 = vmatprep.subr.bf16.mxu0 %v8953
  %9128 = vmatpush1.bf16.msra.mxu0 %v8952
  %9129 = vmatprep.subr.bf16.mxu0 %v8957
  %9130 = vmatpush1.bf16.msra.mxu0 %v8956
  %9131 = vmatprep.subr.bf16.mxu0 %v8961
  %9132 = vmatpush1.bf16.msra.mxu0 %v8960
  %9133 = vmatprep.subr.bf16.mxu0 %v8965
  %9134 = vmatpush1.bf16.msra.mxu0 %v8964
  %9135 = vmatprep.subr.bf16.mxu0 %v8969
  %9136 = vmatpush1.bf16.msra.mxu0 %v8968
  %9137 = vmatprep.subr.bf16.mxu0 %v8973
  %9138 = vmatpush1.bf16.msra.mxu0 %v8972
  %9139 = vmatprep.subr.bf16.mxu0 %v8977
  %9140 = vmatpush1.bf16.msra.mxu0 %v8976
  %9141 = vmatprep.subr.bf16.mxu0 %v8981
  %9142 = vmatpush1.bf16.msra.mxu0 %v8980
  %9143 = vmatprep.subr.bf16.mxu0 0
  %9144 = vmatpush1.bf16.msra.mxu0 0
  %9145 = vmatprep.subr.bf16.mxu0 0
  %9146 = vmatpush1.bf16.msra.mxu0 0
  %9147 = vmatprep.subr.bf16.mxu0 0
  %9148 = vmatpush1.bf16.msra.mxu0 0
  %9149 = vmatprep.subr.bf16.mxu0 0
  %9150 = vmatpush1.bf16.msra.mxu0 0
  %9151 = vmatprep.subr.bf16.mxu0 0
  %9152 = vmatpush1.bf16.msra.mxu0 0
  %9153 = vmatprep.subr.bf16.mxu0 0
  %9154 = vmatpush1.bf16.msra.mxu0 0
  %9155 = vmatprep.subr.bf16.mxu0 0
  %9156 = vmatpush1.bf16.msra.mxu0 0
  %9157 = vmatprep.subr.bf16.mxu0 0
  %9158 = vmatpush1.bf16.msra.mxu0 0
  %9159 = vmatprep.mubr.bf16.mxu0 0
  %9160 = vmatmul.mubr.bf16.gmra.mrb[0].mxu0 %v8790
  %v9161 = vpop.f32.mrb[0].mxu0
  %v9162 = vadd.f32 %v8845, %v9161
  %v9163 = vpop.f32.mrb[0].mxu0
  %v9164 = vadd.f32 %v8849, %v9163
  %v9165 = vpop.f32.mrb[0].mxu0
  %v9166 = vadd.f32 %v8845, %v9165
  %v9167 = vpop.f32.mrb[0].mxu0
  %v9168 = vadd.f32 %v8849, %v9167
  %9169 = vmatprep.mubr.bf16.mxu0 0
  %9170 = vmatmul.mubr.bf16.gmra.mrb[0].mxu0 %v8791
  %v9171 = vpop.f32.mrb[0].mxu0
  %v9172 = vadd.f32 %v8845, %v9171
  %v9173 = vpop.f32.mrb[0].mxu0
  %v9174 = vadd.f32 %v8849, %v9173
  %v9175 = vpop.f32.mrb[0].mxu0
  %v9176 = vadd.f32 %v8845, %v9175
  %v9177 = vpop.f32.mrb[0].mxu0
  %v9178 = vadd.f32 %v8849, %v9177
  %9179 = vmatprep.mubr.bf16.mxu0 0
  %9180 = vmatmul.mubr.bf16.gmra.mrb[0].mxu0 %v8792
  %v9181 = vpop.f32.mrb[0].mxu0
  %v9182 = vadd.f32 %v8845, %v9181
  %v9183 = vpop.f32.mrb[0].mxu0
  %v9184 = vadd.f32 %v8849, %v9183
  %v9185 = vpop.f32.mrb[0].mxu0
  %v9186 = vadd.f32 %v8845, %v9185
  %v9187 = vpop.f32.mrb[0].mxu0
  %v9188 = vadd.f32 %v8849, %v9187
  %9189 = vmatprep.mubr.bf16.mxu0 0
  %9190 = vmatmul.mubr.bf16.gmra.mrb[0].mxu0 %v8793
  %v9191 = vpop.f32.mrb[0].mxu0
  %v9192 = vadd.f32 %v8845, %v9191
  %v9193 = vpop.f32.mrb[0].mxu0
  %v9194 = vadd.f32 %v8849, %v9193
  %v9195 = vpop.f32.mrb[0].mxu0
  %v9196 = vadd.f32 %v8845, %v9195
  %v9197 = vpop.f32.mrb[0].mxu0
  %v9198 = vadd.f32 %v8849, %v9197
  %9199 = vmatprep.mubr.bf16.mxu0 0
  %9200 = vmatmul.mubr.bf16.gmra.mrb[0].mxu0 %v8794
  %v9201 = vpop.f32.mrb[0].mxu0
  %v9202 = vadd.f32 %v8845, %v9201
  %v9203 = vpop.f32.mrb[0].mxu0
  %v9204 = vadd.f32 %v8849, %v9203
  %v9205 = vpop.f32.mrb[0].mxu0
  %v9206 = vadd.f32 %v8845, %v9205
  %v9207 = vpop.f32.mrb[0].mxu0
  %v9208 = vadd.f32 %v8849, %v9207
  %9209 = vmatprep.mubr.bf16.mxu0 0
  %9210 = vmatmul.mubr.bf16.gmra.mrb[0].mxu0 %v8795
  %v9211 = vpop.f32.mrb[0].mxu0
  %v9212 = vadd.f32 %v8845, %v9211
  %v9213 = vpop.f32.mrb[0].mxu0
  %v9214 = vadd.f32 %v8849, %v9213
  %v9215 = vpop.f32.mrb[0].mxu0
  %v9216 = vadd.f32 %v8845, %v9215
  %v9217 = vpop.f32.mrb[0].mxu0
  %v9218 = vadd.f32 %v8849, %v9217
  %9219 = vmatprep.mubr.bf16.mxu0 0
  %9220 = vmatmul.mubr.bf16.gmra.mrb[0].mxu0 %v8796
  %v9221 = vpop.f32.mrb[0].mxu0
  %v9222 = vadd.f32 %v8845, %v9221
  %v9223 = vpop.f32.mrb[0].mxu0
  %v9224 = vadd.f32 %v8849, %v9223
  %v9225 = vpop.f32.mrb[0].mxu0
  %v9226 = vadd.f32 %v8845, %v9225
  %v9227 = vpop.f32.mrb[0].mxu0
  %v9228 = vadd.f32 %v8849, %v9227
  %9229 = vmatprep.mubr.bf16.mxu0 0
  %9230 = vmatmul.mubr.bf16.gmra.mrb[0].mxu0 %v8797
  %v9231 = vpop.f32.mrb[0].mxu0
  %v9232 = vadd.f32 %v8845, %v9231
  %v9233 = vpop.f32.mrb[0].mxu0
  %v9234 = vadd.f32 %v8849, %v9233
  %v9235 = vpop.f32.mrb[0].mxu0
  %v9236 = vadd.f32 %v8845, %v9235
  %v9237 = vpop.f32.mrb[0].mxu0
  %v9238 = vadd.f32 %v8849, %v9237
  %9239 = vdwg.mxu0
  %v9240 = vmul.f32 %v9049, 0.5
  %v9241 = vmul.f32 %v9051, 0.5
  %v9242 = vmul.f32 %v9162, 0.5
  %v9243 = vmul.f32 %v9164, 0.5
  %v9244 = vmul.f32 %v9053, 0.5
  %v9245 = vmul.f32 %v9055, 0.5
  %v9246 = vmul.f32 %v9166, 0.5
  %v9247 = vmul.f32 %v9168, 0.5
  %v9248 = vmul.f32 %v9059, 0.5
  %v9249 = vmul.f32 %v9061, 0.5
  %v9250 = vmul.f32 %v9172, 0.5
  %v9251 = vmul.f32 %v9174, 0.5
  %v9252 = vmul.f32 %v9063, 0.5
  %v9253 = vmul.f32 %v9065, 0.5
  %v9254 = vmul.f32 %v9176, 0.5
  %v9255 = vmul.f32 %v9178, 0.5
  %v9256 = vmul.f32 %v9069, 0.5
  %v9257 = vmul.f32 %v9071, 0.5
  %v9258 = vmul.f32 %v9182, 0.5
  %v9259 = vmul.f32 %v9184, 0.5
  %v9260 = vmul.f32 %v9073, 0.5
  %v9261 = vmul.f32 %v9075, 0.5
  %v9262 = vmul.f32 %v9186, 0.5
  %v9263 = vmul.f32 %v9188, 0.5
  %v9264 = vmul.f32 %v9079, 0.5
  %v9265 = vmul.f32 %v9081, 0.5
  %v9266 = vmul.f32 %v9192, 0.5
  %v9267 = vmul.f32 %v9194, 0.5
  %v9268 = vmul.f32 %v9083, 0.5
  %v9269 = vmul.f32 %v9085, 0.5
  %v9270 = vmul.f32 %v9196, 0.5
  %v9271 = vmul.f32 %v9198, 0.5
  %v9272 = vmul.f32 %v9089, 0.5
  %v9273 = vmul.f32 %v9091, 0.5
  %v9274 = vmul.f32 %v9202, 0.5
  %v9275 = vmul.f32 %v9204, 0.5
  %v9276 = vmul.f32 %v9093, 0.5
  %v9277 = vmul.f32 %v9095, 0.5
  %v9278 = vmul.f32 %v9206, 0.5
  %v9279 = vmul.f32 %v9208, 0.5
  %v9280 = vmul.f32 %v9099, 0.5
  %v9281 = vmul.f32 %v9101, 0.5
  %v9282 = vmul.f32 %v9212, 0.5
  %v9283 = vmul.f32 %v9214, 0.5
  %v9284 = vmul.f32 %v9103, 0.5
  %v9285 = vmul.f32 %v9105, 0.5
  %v9286 = vmul.f32 %v9216, 0.5
  %v9287 = vmul.f32 %v9218, 0.5
  %v9288 = vmul.f32 %v9109, 0.5
  %v9289 = vmul.f32 %v9111, 0.5
  %v9290 = vmul.f32 %v9222, 0.5
  %v9291 = vmul.f32 %v9224, 0.5
  %v9292 = vmul.f32 %v9113, 0.5
  %v9293 = vmul.f32 %v9115, 0.5
  %v9294 = vmul.f32 %v9226, 0.5
  %v9295 = vmul.f32 %v9228, 0.5
  %v9296 = vmul.f32 %v9119, 0.5
  %v9297 = vmul.f32 %v9121, 0.5
  %v9298 = vmul.f32 %v9232, 0.5
  %v9299 = vmul.f32 %v9234, 0.5
  %v9300 = vmul.f32 %v9123, 0.5
  %v9301 = vmul.f32 %v9125, 0.5
  %v9302 = vmul.f32 %v9236, 0.5
  %v9303 = vmul.f32 %v9238, 0.5
  %v9304 = vmul.f32 %v9049, 0.044715
  %v9305 = vmul.f32 %v9051, 0.044715
  %v9306 = vmul.f32 %v9162, 0.044715
  %v9307 = vmul.f32 %v9164, 0.044715
  %v9308 = vmul.f32 %v9053, 0.044715
  %v9309 = vmul.f32 %v9055, 0.044715
  %v9310 = vmul.f32 %v9166, 0.044715
  %v9311 = vmul.f32 %v9168, 0.044715
  %v9312 = vmul.f32 %v9059, 0.044715
  %v9313 = vmul.f32 %v9061, 0.044715
  %v9314 = vmul.f32 %v9172, 0.044715
  %v9315 = vmul.f32 %v9174, 0.044715
  %v9316 = vmul.f32 %v9063, 0.044715
  %v9317 = vmul.f32 %v9065, 0.044715
  %v9318 = vmul.f32 %v9176, 0.044715
  %v9319 = vmul.f32 %v9178, 0.044715
  %v9320 = vmul.f32 %v9069, 0.044715
  %v9321 = vmul.f32 %v9071, 0.044715
  %v9322 = vmul.f32 %v9182, 0.044715
  %v9323 = vmul.f32 %v9184, 0.044715
  %v9324 = vmul.f32 %v9073, 0.044715
  %v9325 = vmul.f32 %v9075, 0.044715
  %v9326 = vmul.f32 %v9186, 0.044715
  %v9327 = vmul.f32 %v9188, 0.044715
  %v9328 = vmul.f32 %v9079, 0.044715
  %v9329 = vmul.f32 %v9081, 0.044715
  %v9330 = vmul.f32 %v9192, 0.044715
  %v9331 = vmul.f32 %v9194, 0.044715
  %v9332 = vmul.f32 %v9083, 0.044715
  %v9333 = vmul.f32 %v9085, 0.044715
  %v9334 = vmul.f32 %v9196, 0.044715
  %v9335 = vmul.f32 %v9198, 0.044715
  %v9336 = vmul.f32 %v9089, 0.044715
  %v9337 = vmul.f32 %v9091, 0.044715
  %v9338 = vmul.f32 %v9202, 0.044715
  %v9339 = vmul.f32 %v9204, 0.044715
  %v9340 = vmul.f32 %v9093, 0.044715
  %v9341 = vmul.f32 %v9095, 0.044715
  %v9342 = vmul.f32 %v9206, 0.044715
  %v9343 = vmul.f32 %v9208, 0.044715
  %v9344 = vmul.f32 %v9099, 0.044715
  %v9345 = vmul.f32 %v9101, 0.044715
  %v9346 = vmul.f32 %v9212, 0.044715
  %v9347 = vmul.f32 %v9214, 0.044715
  %v9348 = vmul.f32 %v9103, 0.044715
  %v9349 = vmul.f32 %v9105, 0.044715
  %v9350 = vmul.f32 %v9216, 0.044715
  %v9351 = vmul.f32 %v9218, 0.044715
  %v9352 = vmul.f32 %v9109, 0.044715
  %v9353 = vmul.f32 %v9111, 0.044715
  %v9354 = vmul.f32 %v9222, 0.044715
  %v9355 = vmul.f32 %v9224, 0.044715
  %v9356 = vmul.f32 %v9113, 0.044715
  %v9357 = vmul.f32 %v9115, 0.044715
  %v9358 = vmul.f32 %v9226, 0.044715
  %v9359 = vmul.f32 %v9228, 0.044715
  %v9360 = vmul.f32 %v9119, 0.044715
  %v9361 = vmul.f32 %v9121, 0.044715
  %v9362 = vmul.f32 %v9232, 0.044715
  %v9363 = vmul.f32 %v9234, 0.044715
  %v9364 = vmul.f32 %v9123, 0.044715
  %v9365 = vmul.f32 %v9125, 0.044715
  %v9366 = vmul.f32 %v9236, 0.044715
  %v9367 = vmul.f32 %v9238, 0.044715
  %v9368 = vmul.f32 %v9304, %v9049
  %v9369 = vmul.f32 %v9305, %v9051
  %v9370 = vmul.f32 %v9306, %v9162
  %v9371 = vmul.f32 %v9307, %v9164
  %v9372 = vmul.f32 %v9308, %v9053
  %v9373 = vmul.f32 %v9309, %v9055
  %v9374 = vmul.f32 %v9310, %v9166
  %v9375 = vmul.f32 %v9311, %v9168
  %v9376 = vmul.f32 %v9312, %v9059
  %v9377 = vmul.f32 %v9313, %v9061
  %v9378 = vmul.f32 %v9314, %v9172
  %v9379 = vmul.f32 %v9315, %v9174
  %v9380 = vmul.f32 %v9316, %v9063
  %v9381 = vmul.f32 %v9317, %v9065
  %v9382 = vmul.f32 %v9318, %v9176
  %v9383 = vmul.f32 %v9319, %v9178
  %v9384 = vmul.f32 %v9320, %v9069
  %v9385 = vmul.f32 %v9321, %v9071
  %v9386 = vmul.f32 %v9322, %v9182
  %v9387 = vmul.f32 %v9323, %v9184
  %v9388 = vmul.f32 %v9324, %v9073
  %v9389 = vmul.f32 %v9325, %v9075
  %v9390 = vmul.f32 %v9326, %v9186
  %v9391 = vmul.f32 %v9327, %v9188
  %v9392 = vmul.f32 %v9328, %v9079
  %v9393 = vmul.f32 %v9329, %v9081
  %v9394 = vmul.f32 %v9330, %v9192
  %v9395 = vmul.f32 %v9331, %v9194
  %v9396 = vmul.f32 %v9332, %v9083
  %v9397 = vmul.f32 %v9333, %v9085
  %v9398 = vmul.f32 %v9334, %v9196
  %v9399 = vmul.f32 %v9335, %v9198
  %v9400 = vmul.f32 %v9336, %v9089
  %v9401 = vmul.f32 %v9337, %v9091
  %v9402 = vmul.f32 %v9338, %v9202
  %v9403 = vmul.f32 %v9339, %v9204
  %v9404 = vmul.f32 %v9340, %v9093
  %v9405 = vmul.f32 %v9341, %v9095
  %v9406 = vmul.f32 %v9342, %v9206
  %v9407 = vmul.f32 %v9343, %v9208
  %v9408 = vmul.f32 %v9344, %v9099
  %v9409 = vmul.f32 %v9345, %v9101
  %v9410 = vmul.f32 %v9346, %v9212
  %v9411 = vmul.f32 %v9347, %v9214
  %v9412 = vmul.f32 %v9348, %v9103
  %v9413 = vmul.f32 %v9349, %v9105
  %v9414 = vmul.f32 %v9350, %v9216
  %v9415 = vmul.f32 %v9351, %v9218
  %v9416 = vmul.f32 %v9352, %v9109
  %v9417 = vmul.f32 %v9353, %v9111
  %v9418 = vmul.f32 %v9354, %v9222
  %v9419 = vmul.f32 %v9355, %v9224
  %v9420 = vmul.f32 %v9356, %v9113
  %v9421 = vmul.f32 %v9357, %v9115
  %v9422 = vmul.f32 %v9358, %v9226
  %v9423 = vmul.f32 %v9359, %v9228
  %v9424 = vmul.f32 %v9360, %v9119
  %v9425 = vmul.f32 %v9361, %v9121
  %v9426 = vmul.f32 %v9362, %v9232
  %v9427 = vmul.f32 %v9363, %v9234
  %v9428 = vmul.f32 %v9364, %v9123
  %v9429 = vmul.f32 %v9365, %v9125
  %v9430 = vmul.f32 %v9366, %v9236
  %v9431 = vmul.f32 %v9367, %v9238
  %v9432 = vmul.f32 %v9368, %v9049
  %v9433 = vmul.f32 %v9369, %v9051
  %v9434 = vmul.f32 %v9370, %v9162
  %v9435 = vmul.f32 %v9371, %v9164
  %v9436 = vmul.f32 %v9372, %v9053
  %v9437 = vmul.f32 %v9373, %v9055
  %v9438 = vmul.f32 %v9374, %v9166
  %v9439 = vmul.f32 %v9375, %v9168
  %v9440 = vmul.f32 %v9376, %v9059
  %v9441 = vmul.f32 %v9377, %v9061
  %v9442 = vmul.f32 %v9378, %v9172
  %v9443 = vmul.f32 %v9379, %v9174
  %v9444 = vmul.f32 %v9380, %v9063
  %v9445 = vmul.f32 %v9381, %v9065
  %v9446 = vmul.f32 %v9382, %v9176
  %v9447 = vmul.f32 %v9383, %v9178
  %v9448 = vmul.f32 %v9384, %v9069
  %v9449 = vmul.f32 %v9385, %v9071
  %v9450 = vmul.f32 %v9386, %v9182
  %v9451 = vmul.f32 %v9387, %v9184
  %v9452 = vmul.f32 %v9388, %v9073
  %v9453 = vmul.f32 %v9389, %v9075
  %v9454 = vmul.f32 %v9390, %v9186
  %v9455 = vmul.f32 %v9391, %v9188
  %v9456 = vmul.f32 %v9392, %v9079
  %v9457 = vmul.f32 %v9393, %v9081
  %v9458 = vmul.f32 %v9394, %v9192
  %v9459 = vmul.f32 %v9395, %v9194
  %v9460 = vmul.f32 %v9396, %v9083
  %v9461 = vmul.f32 %v9397, %v9085
  %v9462 = vmul.f32 %v9398, %v9196
  %v9463 = vmul.f32 %v9399, %v9198
  %v9464 = vmul.f32 %v9400, %v9089
  %v9465 = vmul.f32 %v9401, %v9091
  %v9466 = vmul.f32 %v9402, %v9202
  %v9467 = vmul.f32 %v9403, %v9204
  %v9468 = vmul.f32 %v9404, %v9093
  %v9469 = vmul.f32 %v9405, %v9095
  %v9470 = vmul.f32 %v9406, %v9206
  %v9471 = vmul.f32 %v9407, %v9208
  %v9472 = vmul.f32 %v9408, %v9099
  %v9473 = vmul.f32 %v9409, %v9101
  %v9474 = vmul.f32 %v9410, %v9212
  %v9475 = vmul.f32 %v9411, %v9214
  %v9476 = vmul.f32 %v9412, %v9103
  %v9477 = vmul.f32 %v9413, %v9105
  %v9478 = vmul.f32 %v9414, %v9216
  %v9479 = vmul.f32 %v9415, %v9218
  %v9480 = vmul.f32 %v9416, %v9109
  %v9481 = vmul.f32 %v9417, %v9111
  %v9482 = vmul.f32 %v9418, %v9222
  %v9483 = vmul.f32 %v9419, %v9224
  %v9484 = vmul.f32 %v9420, %v9113
  %v9485 = vmul.f32 %v9421, %v9115
  %v9486 = vmul.f32 %v9422, %v9226
  %v9487 = vmul.f32 %v9423, %v9228
  %v9488 = vmul.f32 %v9424, %v9119
  %v9489 = vmul.f32 %v9425, %v9121
  %v9490 = vmul.f32 %v9426, %v9232
  %v9491 = vmul.f32 %v9427, %v9234
  %v9492 = vmul.f32 %v9428, %v9123
  %v9493 = vmul.f32 %v9429, %v9125
  %v9494 = vmul.f32 %v9430, %v9236
  %v9495 = vmul.f32 %v9431, %v9238
  %v9496 = vadd.f32 %v9049, %v9432
  %v9497 = vadd.f32 %v9051, %v9433
  %v9498 = vadd.f32 %v9162, %v9434
  %v9499 = vadd.f32 %v9164, %v9435
  %v9500 = vadd.f32 %v9053, %v9436
  %v9501 = vadd.f32 %v9055, %v9437
  %v9502 = vadd.f32 %v9166, %v9438
  %v9503 = vadd.f32 %v9168, %v9439
  %v9504 = vadd.f32 %v9059, %v9440
  %v9505 = vadd.f32 %v9061, %v9441
  %v9506 = vadd.f32 %v9172, %v9442
  %v9507 = vadd.f32 %v9174, %v9443
  %v9508 = vadd.f32 %v9063, %v9444
  %v9509 = vadd.f32 %v9065, %v9445
  %v9510 = vadd.f32 %v9176, %v9446
  %v9511 = vadd.f32 %v9178, %v9447
  %v9512 = vadd.f32 %v9069, %v9448
  %v9513 = vadd.f32 %v9071, %v9449
  %v9514 = vadd.f32 %v9182, %v9450
  %v9515 = vadd.f32 %v9184, %v9451
  %v9516 = vadd.f32 %v9073, %v9452
  %v9517 = vadd.f32 %v9075, %v9453
  %v9518 = vadd.f32 %v9186, %v9454
  %v9519 = vadd.f32 %v9188, %v9455
  %v9520 = vadd.f32 %v9079, %v9456
  %v9521 = vadd.f32 %v9081, %v9457
  %v9522 = vadd.f32 %v9192, %v9458
  %v9523 = vadd.f32 %v9194, %v9459
  %v9524 = vadd.f32 %v9083, %v9460
  %v9525 = vadd.f32 %v9085, %v9461
  %v9526 = vadd.f32 %v9196, %v9462
  %v9527 = vadd.f32 %v9198, %v9463
  %v9528 = vadd.f32 %v9089, %v9464
  %v9529 = vadd.f32 %v9091, %v9465
  %v9530 = vadd.f32 %v9202, %v9466
  %v9531 = vadd.f32 %v9204, %v9467
  %v9532 = vadd.f32 %v9093, %v9468
  %v9533 = vadd.f32 %v9095, %v9469
  %v9534 = vadd.f32 %v9206, %v9470
  %v9535 = vadd.f32 %v9208, %v9471
  %v9536 = vadd.f32 %v9099, %v9472
  %v9537 = vadd.f32 %v9101, %v9473
  %v9538 = vadd.f32 %v9212, %v9474
  %v9539 = vadd.f32 %v9214, %v9475
  %v9540 = vadd.f32 %v9103, %v9476
  %v9541 = vadd.f32 %v9105, %v9477
  %v9542 = vadd.f32 %v9216, %v9478
  %v9543 = vadd.f32 %v9218, %v9479
  %v9544 = vadd.f32 %v9109, %v9480
  %v9545 = vadd.f32 %v9111, %v9481
  %v9546 = vadd.f32 %v9222, %v9482
  %v9547 = vadd.f32 %v9224, %v9483
  %v9548 = vadd.f32 %v9113, %v9484
  %v9549 = vadd.f32 %v9115, %v9485
  %v9550 = vadd.f32 %v9226, %v9486
  %v9551 = vadd.f32 %v9228, %v9487
  %v9552 = vadd.f32 %v9119, %v9488
  %v9553 = vadd.f32 %v9121, %v9489
  %v9554 = vadd.f32 %v9232, %v9490
  %v9555 = vadd.f32 %v9234, %v9491
  %v9556 = vadd.f32 %v9123, %v9492
  %v9557 = vadd.f32 %v9125, %v9493
  %v9558 = vadd.f32 %v9236, %v9494
  %v9559 = vadd.f32 %v9238, %v9495
  %v9560 = vmul.f32 %v9496, 0.7978846
  %v9561 = vmul.f32 %v9497, 0.7978846
  %v9562 = vmul.f32 %v9498, 0.7978846
  %v9563 = vmul.f32 %v9499, 0.7978846
  %v9564 = vmul.f32 %v9500, 0.7978846
  %v9565 = vmul.f32 %v9501, 0.7978846
  %v9566 = vmul.f32 %v9502, 0.7978846
  %v9567 = vmul.f32 %v9503, 0.7978846
  %v9568 = vmul.f32 %v9504, 0.7978846
  %v9569 = vmul.f32 %v9505, 0.7978846
  %v9570 = vmul.f32 %v9506, 0.7978846
  %v9571 = vmul.f32 %v9507, 0.7978846
  %v9572 = vmul.f32 %v9508, 0.7978846
  %v9573 = vmul.f32 %v9509, 0.7978846
  %v9574 = vmul.f32 %v9510, 0.7978846
  %v9575 = vmul.f32 %v9511, 0.7978846
  %v9576 = vmul.f32 %v9512, 0.7978846
  %v9577 = vmul.f32 %v9513, 0.7978846
  %v9578 = vmul.f32 %v9514, 0.7978846
  %v9579 = vmul.f32 %v9515, 0.7978846
  %v9580 = vmul.f32 %v9516, 0.7978846
  %v9581 = vmul.f32 %v9517, 0.7978846
  %v9582 = vmul.f32 %v9518, 0.7978846
  %v9583 = vmul.f32 %v9519, 0.7978846
  %v9584 = vmul.f32 %v9520, 0.7978846
  %v9585 = vmul.f32 %v9521, 0.7978846
  %v9586 = vmul.f32 %v9522, 0.7978846
  %v9587 = vmul.f32 %v9523, 0.7978846
  %v9588 = vmul.f32 %v9524, 0.7978846
  %v9589 = vmul.f32 %v9525, 0.7978846
  %v9590 = vmul.f32 %v9526, 0.7978846
  %v9591 = vmul.f32 %v9527, 0.7978846
  %v9592 = vmul.f32 %v9528, 0.7978846
  %v9593 = vmul.f32 %v9529, 0.7978846
  %v9594 = vmul.f32 %v9530, 0.7978846
  %v9595 = vmul.f32 %v9531, 0.7978846
  %v9596 = vmul.f32 %v9532, 0.7978846
  %v9597 = vmul.f32 %v9533, 0.7978846
  %v9598 = vmul.f32 %v9534, 0.7978846
  %v9599 = vmul.f32 %v9535, 0.7978846
  %v9600 = vmul.f32 %v9536, 0.7978846
  %v9601 = vmul.f32 %v9537, 0.7978846
  %v9602 = vmul.f32 %v9538, 0.7978846
  %v9603 = vmul.f32 %v9539, 0.7978846
  %v9604 = vmul.f32 %v9540, 0.7978846
  %v9605 = vmul.f32 %v9541, 0.7978846
  %v9606 = vmul.f32 %v9542, 0.7978846
  %v9607 = vmul.f32 %v9543, 0.7978846
  %v9608 = vmul.f32 %v9544, 0.7978846
  %v9609 = vmul.f32 %v9545, 0.7978846
  %v9610 = vmul.f32 %v9546, 0.7978846
  %v9611 = vmul.f32 %v9547, 0.7978846
  %v9612 = vmul.f32 %v9548, 0.7978846
  %v9613 = vmul.f32 %v9549, 0.7978846
  %v9614 = vmul.f32 %v9550, 0.7978846
  %v9615 = vmul.f32 %v9551, 0.7978846
  %v9616 = vmul.f32 %v9552, 0.7978846
  %v9617 = vmul.f32 %v9553, 0.7978846
  %v9618 = vmul.f32 %v9554, 0.7978846
  %v9619 = vmul.f32 %v9555, 0.7978846
  %v9620 = vmul.f32 %v9556, 0.7978846
  %v9621 = vmul.f32 %v9557, 0.7978846
  %v9622 = vmul.f32 %v9558, 0.7978846
  %v9623 = vmul.f32 %v9559, 0.7978846
  %v9624 = vtanh.pop %v9560
  %v9625 = vtanh.pop %v9561
  %v9626 = vtanh.pop %v9562
  %v9627 = vtanh.pop %v9563
  %v9628 = vtanh.pop %v9564
  %v9629 = vtanh.pop %v9565
  %v9630 = vtanh.pop %v9566
  %v9631 = vtanh.pop %v9567
  %v9632 = vtanh.pop %v9568
  %v9633 = vtanh.pop %v9569
  %v9634 = vtanh.pop %v9570
  %v9635 = vtanh.pop %v9571
  %v9636 = vtanh.pop %v9572
  %v9637 = vtanh.pop %v9573
  %v9638 = vtanh.pop %v9574
  %v9639 = vtanh.pop %v9575
  %v9640 = vtanh.pop %v9576
  %v9641 = vtanh.pop %v9577
  %v9642 = vtanh.pop %v9578
  %v9643 = vtanh.pop %v9579
  %v9644 = vtanh.pop %v9580
  %v9645 = vtanh.pop %v9581
  %v9646 = vtanh.pop %v9582
  %v9647 = vtanh.pop %v9583
  %v9648 = vtanh.pop %v9584
  %v9649 = vtanh.pop %v9585
  %v9650 = vtanh.pop %v9586
  %v9651 = vtanh.pop %v9587
  %v9652 = vtanh.pop %v9588
  %v9653 = vtanh.pop %v9589
  %v9654 = vtanh.pop %v9590
  %v9655 = vtanh.pop %v9591
  %v9656 = vtanh.pop %v9592
  %v9657 = vtanh.pop %v9593
  %v9658 = vtanh.pop %v9594
  %v9659 = vtanh.pop %v9595
  %v9660 = vtanh.pop %v9596
  %v9661 = vtanh.pop %v9597
  %v9662 = vtanh.pop %v9598
  %v9663 = vtanh.pop %v9599
  %v9664 = vtanh.pop %v9600
  %v9665 = vtanh.pop %v9601
  %v9666 = vtanh.pop %v9602
  %v9667 = vtanh.pop %v9603
  %v9668 = vtanh.pop %v9604
  %v9669 = vtanh.pop %v9605
  %v9670 = vtanh.pop %v9606
  %v9671 = vtanh.pop %v9607
  %v9672 = vtanh.pop %v9608
  %v9673 = vtanh.pop %v9609
  %v9674 = vtanh.pop %v9610
  %v9675 = vtanh.pop %v9611
  %v9676 = vtanh.pop %v9612
  %v9677 = vtanh.pop %v9613
  %v9678 = vtanh.pop %v9614
  %v9679 = vtanh.pop %v9615
  %v9680 = vtanh.pop %v9616
  %v9681 = vtanh.pop %v9617
  %v9682 = vtanh.pop %v9618
  %v9683 = vtanh.pop %v9619
  %v9684 = vtanh.pop %v9620
  %v9685 = vtanh.pop %v9621
  %v9686 = vtanh.pop %v9622
  %v9687 = vtanh.pop %v9623
  %v9688 = vadd.f32 %v9624, 1.0
  %v9689 = vadd.f32 %v9625, 1.0
  %v9690 = vadd.f32 %v9626, 1.0
  %v9691 = vadd.f32 %v9627, 1.0
  %v9692 = vadd.f32 %v9628, 1.0
  %v9693 = vadd.f32 %v9629, 1.0
  %v9694 = vadd.f32 %v9630, 1.0
  %v9695 = vadd.f32 %v9631, 1.0
  %v9696 = vadd.f32 %v9632, 1.0
  %v9697 = vadd.f32 %v9633, 1.0
  %v9698 = vadd.f32 %v9634, 1.0
  %v9699 = vadd.f32 %v9635, 1.0
  %v9700 = vadd.f32 %v9636, 1.0
  %v9701 = vadd.f32 %v9637, 1.0
  %v9702 = vadd.f32 %v9638, 1.0
  %v9703 = vadd.f32 %v9639, 1.0
  %v9704 = vadd.f32 %v9640, 1.0
  %v9705 = vadd.f32 %v9641, 1.0
  %v9706 = vadd.f32 %v9642, 1.0
  %v9707 = vadd.f32 %v9643, 1.0
  %v9708 = vadd.f32 %v9644, 1.0
  %v9709 = vadd.f32 %v9645, 1.0
  %v9710 = vadd.f32 %v9646, 1.0
  %v9711 = vadd.f32 %v9647, 1.0
  %v9712 = vadd.f32 %v9648, 1.0
  %v9713 = vadd.f32 %v9649, 1.0
  %v9714 = vadd.f32 %v9650, 1.0
  %v9715 = vadd.f32 %v9651, 1.0
  %v9716 = vadd.f32 %v9652, 1.0
  %v9717 = vadd.f32 %v9653, 1.0
  %v9718 = vadd.f32 %v9654, 1.0
  %v9719 = vadd.f32 %v9655, 1.0
  %v9720 = vadd.f32 %v9656, 1.0
  %v9721 = vadd.f32 %v9657, 1.0
  %v9722 = vadd.f32 %v9658, 1.0
  %v9723 = vadd.f32 %v9659, 1.0
  %v9724 = vadd.f32 %v9660, 1.0
  %v9725 = vadd.f32 %v9661, 1.0
  %v9726 = vadd.f32 %v9662, 1.0
  %v9727 = vadd.f32 %v9663, 1.0
  %v9728 = vadd.f32 %v9664, 1.0
  %v9729 = vadd.f32 %v9665, 1.0
  %v9730 = vadd.f32 %v9666, 1.0
  %v9731 = vadd.f32 %v9667, 1.0
  %v9732 = vadd.f32 %v9668, 1.0
  %v9733 = vadd.f32 %v9669, 1.0
  %v9734 = vadd.f32 %v9670, 1.0
  %v9735 = vadd.f32 %v9671, 1.0
  %v9736 = vadd.f32 %v9672, 1.0
  %v9737 = vadd.f32 %v9673, 1.0
  %v9738 = vadd.f32 %v9674, 1.0
  %v9739 = vadd.f32 %v9675, 1.0
  %v9740 = vadd.f32 %v9676, 1.0
  %v9741 = vadd.f32 %v9677, 1.0
  %v9742 = vadd.f32 %v9678, 1.0
  %v9743 = vadd.f32 %v9679, 1.0
  %v9744 = vadd.f32 %v9680, 1.0
  %v9745 = vadd.f32 %v9681, 1.0
  %v9746 = vadd.f32 %v9682, 1.0
  %v9747 = vadd.f32 %v9683, 1.0
  %v9748 = vadd.f32 %v9684, 1.0
  %v9749 = vadd.f32 %v9685, 1.0
  %v9750 = vadd.f32 %v9686, 1.0
  %v9751 = vadd.f32 %v9687, 1.0
  %v9752 = vmul.f32 %v9240, %v9688
  %v9753 = vmul.f32 %v9241, %v9689
  %v9754 = vmul.f32 %v9242, %v9690
  %v9755 = vmul.f32 %v9243, %v9691
  %v9756 = vmul.f32 %v9244, %v9692
  %v9757 = vmul.f32 %v9245, %v9693
  %v9758 = vmul.f32 %v9246, %v9694
  %v9759 = vmul.f32 %v9247, %v9695
  %v9760 = vmul.f32 %v9248, %v9696
  %v9761 = vmul.f32 %v9249, %v9697
  %v9762 = vmul.f32 %v9250, %v9698
  %v9763 = vmul.f32 %v9251, %v9699
  %v9764 = vmul.f32 %v9252, %v9700
  %v9765 = vmul.f32 %v9253, %v9701
  %v9766 = vmul.f32 %v9254, %v9702
  %v9767 = vmul.f32 %v9255, %v9703
  %v9768 = vmul.f32 %v9256, %v9704
  %v9769 = vmul.f32 %v9257, %v9705
  %v9770 = vmul.f32 %v9258, %v9706
  %v9771 = vmul.f32 %v9259, %v9707
  %v9772 = vmul.f32 %v9260, %v9708
  %v9773 = vmul.f32 %v9261, %v9709
  %v9774 = vmul.f32 %v9262, %v9710
  %v9775 = vmul.f32 %v9263, %v9711
  %v9776 = vmul.f32 %v9264, %v9712
  %v9777 = vmul.f32 %v9265, %v9713
  %v9778 = vmul.f32 %v9266, %v9714
  %v9779 = vmul.f32 %v9267, %v9715
  %v9780 = vmul.f32 %v9268, %v9716
  %v9781 = vmul.f32 %v9269, %v9717
  %v9782 = vmul.f32 %v9270, %v9718
  %v9783 = vmul.f32 %v9271, %v9719
  %v9784 = vmul.f32 %v9272, %v9720
  %v9785 = vmul.f32 %v9273, %v9721
  %v9786 = vmul.f32 %v9274, %v9722
  %v9787 = vmul.f32 %v9275, %v9723
  %v9788 = vmul.f32 %v9276, %v9724
  %v9789 = vmul.f32 %v9277, %v9725
  %v9790 = vmul.f32 %v9278, %v9726
  %v9791 = vmul.f32 %v9279, %v9727
  %v9792 = vmul.f32 %v9280, %v9728
  %v9793 = vmul.f32 %v9281, %v9729
  %v9794 = vmul.f32 %v9282, %v9730
  %v9795 = vmul.f32 %v9283, %v9731
  %v9796 = vmul.f32 %v9284, %v9732
  %v9797 = vmul.f32 %v9285, %v9733
  %v9798 = vmul.f32 %v9286, %v9734
  %v9799 = vmul.f32 %v9287, %v9735
  %v9800 = vmul.f32 %v9288, %v9736
  %v9801 = vmul.f32 %v9289, %v9737
  %v9802 = vmul.f32 %v9290, %v9738
  %v9803 = vmul.f32 %v9291, %v9739
  %v9804 = vmul.f32 %v9292, %v9740
  %v9805 = vmul.f32 %v9293, %v9741
  %v9806 = vmul.f32 %v9294, %v9742
  %v9807 = vmul.f32 %v9295, %v9743
  %v9808 = vmul.f32 %v9296, %v9744
  %v9809 = vmul.f32 %v9297, %v9745
  %v9810 = vmul.f32 %v9298, %v9746
  %v9811 = vmul.f32 %v9299, %v9747
  %v9812 = vmul.f32 %v9300, %v9748
  %v9813 = vmul.f32 %v9301, %v9749
  %v9814 = vmul.f32 %v9302, %v9750
  %v9815 = vmul.f32 %v9303, %v9751
  %v9816 = vpack.c.bf16 %v9756, %v9752
  %v9817 = vpack.c.bf16 %v9757, %v9753
  %v9818 = vpack.c.bf16 %v9758, %v9754
  %v9819 = vpack.c.bf16 %v9759, %v9755
  %v9820 = vpack.c.bf16 %v9764, %v9760
  %v9821 = vpack.c.bf16 %v9765, %v9761
  %v9822 = vpack.c.bf16 %v9766, %v9762
  %v9823 = vpack.c.bf16 %v9767, %v9763
  %v9824 = vpack.c.bf16 %v9772, %v9768
  %v9825 = vpack.c.bf16 %v9773, %v9769
  %v9826 = vpack.c.bf16 %v9774, %v9770
  %v9827 = vpack.c.bf16 %v9775, %v9771
  %v9828 = vpack.c.bf16 %v9780, %v9776
  %v9829 = vpack.c.bf16 %v9781, %v9777
  %v9830 = vpack.c.bf16 %v9782, %v9778
  %v9831 = vpack.c.bf16 %v9783, %v9779
  %v9832 = vpack.c.bf16 %v9788, %v9784
  %v9833 = vpack.c.bf16 %v9789, %v9785
  %v9834 = vpack.c.bf16 %v9790, %v9786
  %v9835 = vpack.c.bf16 %v9791, %v9787
  %v9836 = vpack.c.bf16 %v9796, %v9792
  %v9837 = vpack.c.bf16 %v9797, %v9793
  %v9838 = vpack.c.bf16 %v9798, %v9794
  %v9839 = vpack.c.bf16 %v9799, %v9795
  %v9840 = vpack.c.bf16 %v9804, %v9800
  %v9841 = vpack.c.bf16 %v9805, %v9801
  %v9842 = vpack.c.bf16 %v9806, %v9802
  %v9843 = vpack.c.bf16 %v9807, %v9803
  %v9844 = vpack.c.bf16 %v9812, %v9808
  %v9845 = vpack.c.bf16 %v9813, %v9809
  %v9846 = vpack.c.bf16 %v9814, %v9810
  %v9847 = vpack.c.bf16 %v9815, %v9811
  %s9848 = scalar_lea.vmem %s12, 256
  %v9849 = vld [vmem:[%s9848] sm:$0xf]
  %v9850 = vld [vmem:[%s9848 + $0x4] sm:$0xf]
  %v9851 = vld [vmem:[%s9848 + $0x8] sm:$0xf]
  %v9852 = vld [vmem:[%s9848 + $0xc] sm:$0xf]
  %v9853 = vld [vmem:[%s9848 + $0x10] sm:$0xf]
  %v9854 = vld [vmem:[%s9848 + $0x14] sm:$0xf]
  %v9855 = vld [vmem:[%s9848 + $0x18] sm:$0xf]
  %v9856 = vld [vmem:[%s9848 + $0x1c] sm:$0xf]
  %v9857 = vld [vmem:[%s9848 + $0x20] sm:$0xf]
  %v9858 = vld [vmem:[%s9848 + $0x24] sm:$0xf]
  %v9859 = vld [vmem:[%s9848 + $0x28] sm:$0xf]
  %v9860 = vld [vmem:[%s9848 + $0x2c] sm:$0xf]
  %v9861 = vld [vmem:[%s9848 + $0x30] sm:$0xf]
  %v9862 = vld [vmem:[%s9848 + $0x34] sm:$0xf]
  %v9863 = vld [vmem:[%s9848 + $0x38] sm:$0xf]
  %v9864 = vld [vmem:[%s9848 + $0x3c] sm:$0xf]
  %v9865 = vld [vmem:[%s9848 + $0x40] sm:$0xf]
  %v9866 = vld [vmem:[%s9848 + $0x44] sm:$0xf]
  %v9867 = vld [vmem:[%s9848 + $0x48] sm:$0xf]
  %v9868 = vld [vmem:[%s9848 + $0x4c] sm:$0xf]
  %v9869 = vld [vmem:[%s9848 + $0x50] sm:$0xf]
  %v9870 = vld [vmem:[%s9848 + $0x54] sm:$0xf]
  %v9871 = vld [vmem:[%s9848 + $0x58] sm:$0xf]
  %v9872 = vld [vmem:[%s9848 + $0x5c] sm:$0xf]
  %v9873 = vld [vmem:[%s9848 + $0x60] sm:$0xf]
  %v9874 = vld [vmem:[%s9848 + $0x64] sm:$0xf]
  %v9875 = vld [vmem:[%s9848 + $0x68] sm:$0xf]
  %v9876 = vld [vmem:[%s9848 + $0x6c] sm:$0xf]
  %v9877 = vld [vmem:[%s9848 + $0x70] sm:$0xf]
  %v9878 = vld [vmem:[%s9848 + $0x74] sm:$0xf]
  %v9879 = vld [vmem:[%s9848 + $0x78] sm:$0xf]
  %v9880 = vld [vmem:[%s9848 + $0x7c] sm:$0xf]
  %v9881 = vld [vmem:[%s9848 + $0x80] sm:$0xf]
  %v9882 = vld [vmem:[%s9848 + $0x84] sm:$0xf]
  %v9883 = vld [vmem:[%s9848 + $0x88] sm:$0xf]
  %v9884 = vld [vmem:[%s9848 + $0x8c] sm:$0xf]
  %v9885 = vld [vmem:[%s9848 + $0x90] sm:$0xf]
  %v9886 = vld [vmem:[%s9848 + $0x94] sm:$0xf]
  %v9887 = vld [vmem:[%s9848 + $0x98] sm:$0xf]
  %v9888 = vld [vmem:[%s9848 + $0x9c] sm:$0xf]
  %v9889 = vld [vmem:[%s9848 + $0xa0] sm:$0xf]
  %v9890 = vld [vmem:[%s9848 + $0xa4] sm:$0xf]
  %v9891 = vld [vmem:[%s9848 + $0xa8] sm:$0xf]
  %v9892 = vld [vmem:[%s9848 + $0xac] sm:$0xf]
  %v9893 = vld [vmem:[%s9848 + $0xb0] sm:$0xf]
  %v9894 = vld [vmem:[%s9848 + $0xb4] sm:$0xf]
  %v9895 = vld [vmem:[%s9848 + $0xb8] sm:$0xf]
  %v9896 = vld [vmem:[%s9848 + $0xbc] sm:$0xf]
  %v9897 = vld [vmem:[%s9848 + $0xc0] sm:$0xf]
  %v9898 = vld [vmem:[%s9848 + $0xc4] sm:$0xf]
  %v9899 = vld [vmem:[%s9848 + $0xc8] sm:$0xf]
  %v9900 = vld [vmem:[%s9848 + $0xcc] sm:$0xf]
  %v9901 = vld [vmem:[%s9848 + $0xd0] sm:$0xf]
  %v9902 = vld [vmem:[%s9848 + $0xd4] sm:$0xf]
  %v9903 = vld [vmem:[%s9848 + $0xd8] sm:$0xf]
  %v9904 = vld [vmem:[%s9848 + $0xdc] sm:$0xf]
  %v9905 = vld [vmem:[%s9848 + $0xe0] sm:$0xf]
  %v9906 = vld [vmem:[%s9848 + $0xe4] sm:$0xf]
  %v9907 = vld [vmem:[%s9848 + $0xe8] sm:$0xf]
  %v9908 = vld [vmem:[%s9848 + $0xec] sm:$0xf]
  %v9909 = vld [vmem:[%s9848 + $0xf0] sm:$0xf]
  %v9910 = vld [vmem:[%s9848 + $0xf4] sm:$0xf]
  %v9911 = vld [vmem:[%s9848 + $0xf8] sm:$0xf]
  %v9912 = vld [vmem:[%s9848 + $0xfc] sm:$0xf]
  %s9913 = scalar_lea.vmem %s13, 1
  %v9914 = vld [vmem:[%s9913] sm:$0x1]
  %v9916 = vlaneseq
  %v9917 = vshrl.u32 %v9916, 7
  %v9918 = vsub.s32 0, %v9917
  %v9919 = vrot.slane %v9914, %v9918
  %v9985 = vunpack.c.l.b16 %v9849
  %v9986 = vunpack.c.l.b16 %v9850
  %v9987 = vunpack.c.l.b16 %v9851
  %v9988 = vunpack.c.l.b16 %v9852
  %v9989 = vunpack.c.l.b16 %v9853
  %v9990 = vunpack.c.l.b16 %v9854
  %v9991 = vunpack.c.l.b16 %v9855
  %v9992 = vunpack.c.l.b16 %v9856
  %v9993 = vunpack.c.l.b16 %v9857
  %v9994 = vunpack.c.l.b16 %v9858
  %v9995 = vunpack.c.l.b16 %v9859
  %v9996 = vunpack.c.l.b16 %v9860
  %v9997 = vunpack.c.l.b16 %v9861
  %v9998 = vunpack.c.l.b16 %v9862
  %v9999 = vunpack.c.l.b16 %v9863
  %v10000 = vunpack.c.l.b16 %v9864
  %v10001 = vunpack.c.l.b16 %v9865
  %v10002 = vunpack.c.l.b16 %v9866
  %v10003 = vunpack.c.l.b16 %v9867
  %v10004 = vunpack.c.l.b16 %v9868
  %v10005 = vunpack.c.l.b16 %v9869
  %v10006 = vunpack.c.l.b16 %v9870
  %v10007 = vunpack.c.l.b16 %v9871
  %v10008 = vunpack.c.l.b16 %v9872
  %v10009 = vunpack.c.l.b16 %v9873
  %v10010 = vunpack.c.l.b16 %v9874
  %v10011 = vunpack.c.l.b16 %v9875
  %v10012 = vunpack.c.l.b16 %v9876
  %v10013 = vunpack.c.l.b16 %v9877
  %v10014 = vunpack.c.l.b16 %v9878
  %v10015 = vunpack.c.l.b16 %v9879
  %v10016 = vunpack.c.l.b16 %v9880
  %v10017 = vunpack.c.l.b16 %v9881
  %v10018 = vunpack.c.l.b16 %v9882
  %v10019 = vunpack.c.l.b16 %v9883
  %v10020 = vunpack.c.l.b16 %v9884
  %v10021 = vunpack.c.l.b16 %v9885
  %v10022 = vunpack.c.l.b16 %v9886
  %v10023 = vunpack.c.l.b16 %v9887
  %v10024 = vunpack.c.l.b16 %v9888
  %v10025 = vunpack.c.l.b16 %v9889
  %v10026 = vunpack.c.l.b16 %v9890
  %v10027 = vunpack.c.l.b16 %v9891
  %v10028 = vunpack.c.l.b16 %v9892
  %v10029 = vunpack.c.l.b16 %v9893
  %v10030 = vunpack.c.l.b16 %v9894
  %v10031 = vunpack.c.l.b16 %v9895
  %v10032 = vunpack.c.l.b16 %v9896
  %v10033 = vunpack.c.l.b16 %v9897
  %v10034 = vunpack.c.l.b16 %v9898
  %v10035 = vunpack.c.l.b16 %v9899
  %v10036 = vunpack.c.l.b16 %v9900
  %v10037 = vunpack.c.l.b16 %v9901
  %v10038 = vunpack.c.l.b16 %v9902
  %v10039 = vunpack.c.l.b16 %v9903
  %v10040 = vunpack.c.l.b16 %v9904
  %v10041 = vunpack.c.l.b16 %v9905
  %v10042 = vunpack.c.l.b16 %v9906
  %v10043 = vunpack.c.l.b16 %v9907
  %v10044 = vunpack.c.l.b16 %v9908
  %v10045 = vunpack.c.l.b16 %v9909
  %v10046 = vunpack.c.l.b16 %v9910
  %v10047 = vunpack.c.l.b16 %v9911
  %v10048 = vunpack.c.l.b16 %v9912
  %v10049 = vpack.c.b16 %v9986, %v9985
  %v10050 = vpack.c.b16 %v9988, %v9987
  %v10051 = vpack.c.b16 %v9990, %v9989
  %v10052 = vpack.c.b16 %v9992, %v9991
  %v10053 = vpack.c.b16 %v9994, %v9993
  %v10054 = vpack.c.b16 %v9996, %v9995
  %v10055 = vpack.c.b16 %v9998, %v9997
  %v10056 = vpack.c.b16 %v10000, %v9999
  %v10057 = vpack.c.b16 %v10002, %v10001
  %v10058 = vpack.c.b16 %v10004, %v10003
  %v10059 = vpack.c.b16 %v10006, %v10005
  %v10060 = vpack.c.b16 %v10008, %v10007
  %v10061 = vpack.c.b16 %v10010, %v10009
  %v10062 = vpack.c.b16 %v10012, %v10011
  %v10063 = vpack.c.b16 %v10014, %v10013
  %v10064 = vpack.c.b16 %v10016, %v10015
  %v10065 = vpack.c.b16 %v10018, %v10017
  %v10066 = vpack.c.b16 %v10020, %v10019
  %v10067 = vpack.c.b16 %v10022, %v10021
  %v10068 = vpack.c.b16 %v10024, %v10023
  %v10069 = vpack.c.b16 %v10026, %v10025
  %v10070 = vpack.c.b16 %v10028, %v10027
  %v10071 = vpack.c.b16 %v10030, %v10029
  %v10072 = vpack.c.b16 %v10032, %v10031
  %v10073 = vpack.c.b16 %v10034, %v10033
  %v10074 = vpack.c.b16 %v10036, %v10035
  %v10075 = vpack.c.b16 %v10038, %v10037
  %v10076 = vpack.c.b16 %v10040, %v10039
  %v10077 = vpack.c.b16 %v10042, %v10041
  %v10078 = vpack.c.b16 %v10044, %v10043
  %v10079 = vpack.c.b16 %v10046, %v10045
  %v10080 = vpack.c.b16 %v10048, %v10047
  %10113 = vmatprep.subr.bf16.mxu0 0
  %10114 = vmatpush1.bf16.msra.mxu0 %v10049
  %10115 = vmatprep.subr.bf16.mxu0 0
  %10116 = vmatpush1.bf16.msra.mxu0 %v10050
  %10117 = vmatprep.subr.bf16.mxu0 0
  %10118 = vmatpush1.bf16.msra.mxu0 %v10051
  %10119 = vmatprep.subr.bf16.mxu0 0
  %10120 = vmatpush1.bf16.msra.mxu0 %v10052
  %10121 = vmatprep.subr.bf16.mxu0 0
  %10122 = vmatpush1.bf16.msra.mxu0 %v10053
  %10123 = vmatprep.subr.bf16.mxu0 0
  %10124 = vmatpush1.bf16.msra.mxu0 %v10054
  %10125 = vmatprep.subr.bf16.mxu0 0
  %10126 = vmatpush1.bf16.msra.mxu0 %v10055
  %10127 = vmatprep.subr.bf16.mxu0 0
  %10128 = vmatpush1.bf16.msra.mxu0 %v10056
  %10129 = vmatprep.subr.bf16.mxu0 0
  %10130 = vmatpush1.bf16.msra.mxu0 %v10057
  %10131 = vmatprep.subr.bf16.mxu0 0
  %10132 = vmatpush1.bf16.msra.mxu0 %v10058
  %10133 = vmatprep.subr.bf16.mxu0 0
  %10134 = vmatpush1.bf16.msra.mxu0 %v10059
  %10135 = vmatprep.subr.bf16.mxu0 0
  %10136 = vmatpush1.bf16.msra.mxu0 %v10060
  %10137 = vmatprep.subr.bf16.mxu0 0
  %10138 = vmatpush1.bf16.msra.mxu0 %v10061
  %10139 = vmatprep.subr.bf16.mxu0 0
  %10140 = vmatpush1.bf16.msra.mxu0 %v10062
  %10141 = vmatprep.subr.bf16.mxu0 0
  %10142 = vmatpush1.bf16.msra.mxu0 %v10063
  %10143 = vmatprep.subr.bf16.mxu0 0
  %10144 = vmatpush1.bf16.msra.mxu0 %v10064
  %10145 = vmatprep.mubr.bf16.mxu0 %v9817
  %10146 = vmatmul.mubr.bf16.gmra.mrb[0].mxu0 %v9816
  %v10147 = vpop.f32.mrb[0].mxu0
  %v10148 = vadd.f32 %v9919, %v10147
  %v10149 = vpop.f32.mrb[0].mxu0
  %v10150 = vpop.f32.mrb[0].mxu0
  %v10151 = vadd.f32 %v9919, %v10150
  %v10152 = vpop.f32.mrb[0].mxu0
  %10153 = vmatprep.mubr.bf16.mxu0 %v9821
  %10154 = vmatmul.mubr.bf16.gmra.mrb[0].mxu0 %v9820
  %v10155 = vpop.f32.mrb[0].mxu0
  %v10156 = vadd.f32 %v9919, %v10155
  %v10157 = vpop.f32.mrb[0].mxu0
  %v10158 = vpop.f32.mrb[0].mxu0
  %v10159 = vadd.f32 %v9919, %v10158
  %v10160 = vpop.f32.mrb[0].mxu0
  %10161 = vmatprep.mubr.bf16.mxu0 %v9825
  %10162 = vmatmul.mubr.bf16.gmra.mrb[0].mxu0 %v9824
  %v10163 = vpop.f32.mrb[0].mxu0
  %v10164 = vadd.f32 %v9919, %v10163
  %v10165 = vpop.f32.mrb[0].mxu0
  %v10166 = vpop.f32.mrb[0].mxu0
  %v10167 = vadd.f32 %v9919, %v10166
  %v10168 = vpop.f32.mrb[0].mxu0
  %10169 = vmatprep.mubr.bf16.mxu0 %v9829
  %10170 = vmatmul.mubr.bf16.gmra.mrb[0].mxu0 %v9828
  %v10171 = vpop.f32.mrb[0].mxu0
  %v10172 = vadd.f32 %v9919, %v10171
  %v10173 = vpop.f32.mrb[0].mxu0
  %v10174 = vpop.f32.mrb[0].mxu0
  %v10175 = vadd.f32 %v9919, %v10174
  %v10176 = vpop.f32.mrb[0].mxu0
  %10177 = vmatprep.mubr.bf16.mxu0 %v9833
  %10178 = vmatmul.mubr.bf16.gmra.mrb[0].mxu0 %v9832
  %v10179 = vpop.f32.mrb[0].mxu0
  %v10180 = vadd.f32 %v9919, %v10179
  %v10181 = vpop.f32.mrb[0].mxu0
  %v10182 = vpop.f32.mrb[0].mxu0
  %v10183 = vadd.f32 %v9919, %v10182
  %v10184 = vpop.f32.mrb[0].mxu0
  %10185 = vmatprep.mubr.bf16.mxu0 %v9837
  %10186 = vmatmul.mubr.bf16.gmra.mrb[0].mxu0 %v9836
  %v10187 = vpop.f32.mrb[0].mxu0
  %v10188 = vadd.f32 %v9919, %v10187
  %v10189 = vpop.f32.mrb[0].mxu0
  %v10190 = vpop.f32.mrb[0].mxu0
  %v10191 = vadd.f32 %v9919, %v10190
  %v10192 = vpop.f32.mrb[0].mxu0
  %10193 = vmatprep.mubr.bf16.mxu0 %v9841
  %10194 = vmatmul.mubr.bf16.gmra.mrb[0].mxu0 %v9840
  %v10195 = vpop.f32.mrb[0].mxu0
  %v10196 = vadd.f32 %v9919, %v10195
  %v10197 = vpop.f32.mrb[0].mxu0
  %v10198 = vpop.f32.mrb[0].mxu0
  %v10199 = vadd.f32 %v9919, %v10198
  %v10200 = vpop.f32.mrb[0].mxu0
  %10201 = vmatprep.mubr.bf16.mxu0 %v9845
  %10202 = vmatmul.mubr.bf16.gmra.mrb[0].mxu0 %v9844
  %v10203 = vpop.f32.mrb[0].mxu0
  %v10204 = vadd.f32 %v9919, %v10203
  %v10205 = vpop.f32.mrb[0].mxu0
  %v10206 = vpop.f32.mrb[0].mxu0
  %v10207 = vadd.f32 %v9919, %v10206
  %v10208 = vpop.f32.mrb[0].mxu0
  %10209 = vdwg.mxu0
  %10210 = vmatprep.subr.bf16.mxu0 0
  %10211 = vmatpush1.bf16.msra.mxu0 %v10065
  %10212 = vmatprep.subr.bf16.mxu0 0
  %10213 = vmatpush1.bf16.msra.mxu0 %v10066
  %10214 = vmatprep.subr.bf16.mxu0 0
  %10215 = vmatpush1.bf16.msra.mxu0 %v10067
  %10216 = vmatprep.subr.bf16.mxu0 0
  %10217 = vmatpush1.bf16.msra.mxu0 %v10068
  %10218 = vmatprep.subr.bf16.mxu0 0
  %10219 = vmatpush1.bf16.msra.mxu0 %v10069
  %10220 = vmatprep.subr.bf16.mxu0 0
  %10221 = vmatpush1.bf16.msra.mxu0 %v10070
  %10222 = vmatprep.subr.bf16.mxu0 0
  %10223 = vmatpush1.bf16.msra.mxu0 %v10071
  %10224 = vmatprep.subr.bf16.mxu0 0
  %10225 = vmatpush1.bf16.msra.mxu0 %v10072
  %10226 = vmatprep.subr.bf16.mxu0 0
  %10227 = vmatpush1.bf16.msra.mxu0 %v10073
  %10228 = vmatprep.subr.bf16.mxu0 0
  %10229 = vmatpush1.bf16.msra.mxu0 %v10074
  %10230 = vmatprep.subr.bf16.mxu0 0
  %10231 = vmatpush1.bf16.msra.mxu0 %v10075
  %10232 = vmatprep.subr.bf16.mxu0 0
  %10233 = vmatpush1.bf16.msra.mxu0 %v10076
  %10234 = vmatprep.subr.bf16.mxu0 0
  %10235 = vmatpush1.bf16.msra.mxu0 %v10077
  %10236 = vmatprep.subr.bf16.mxu0 0
  %10237 = vmatpush1.bf16.msra.mxu0 %v10078
  %10238 = vmatprep.subr.bf16.mxu0 0
  %10239 = vmatpush1.bf16.msra.mxu0 %v10079
  %10240 = vmatprep.subr.bf16.mxu0 0
  %10241 = vmatpush1.bf16.msra.mxu0 %v10080
  %10242 = vmatprep.mubr.bf16.mxu0 %v9819
  %10243 = vmatmul.mubr.bf16.gmra.mrb[0].mxu0 %v9818
  %v10244 = vpop.f32.mrb[0].mxu0
  %v10245 = vadd.f32 %v10148, %v10244
  %v10246 = vpop.f32.mrb[0].mxu0
  %v10247 = vpop.f32.mrb[0].mxu0
  %v10248 = vadd.f32 %v10151, %v10247
  %v10249 = vpop.f32.mrb[0].mxu0
  %10250 = vmatprep.mubr.bf16.mxu0 %v9823
  %10251 = vmatmul.mubr.bf16.gmra.mrb[0].mxu0 %v9822
  %v10252 = vpop.f32.mrb[0].mxu0
  %v10253 = vadd.f32 %v10156, %v10252
  %v10254 = vpop.f32.mrb[0].mxu0
  %v10255 = vpop.f32.mrb[0].mxu0
  %v10256 = vadd.f32 %v10159, %v10255
  %v10257 = vpop.f32.mrb[0].mxu0
  %10258 = vmatprep.mubr.bf16.mxu0 %v9827
  %10259 = vmatmul.mubr.bf16.gmra.mrb[0].mxu0 %v9826
  %v10260 = vpop.f32.mrb[0].mxu0
  %v10261 = vadd.f32 %v10164, %v10260
  %v10262 = vpop.f32.mrb[0].mxu0
  %v10263 = vpop.f32.mrb[0].mxu0
  %v10264 = vadd.f32 %v10167, %v10263
  %v10265 = vpop.f32.mrb[0].mxu0
  %10266 = vmatprep.mubr.bf16.mxu0 %v9831
  %10267 = vmatmul.mubr.bf16.gmra.mrb[0].mxu0 %v9830
  %v10268 = vpop.f32.mrb[0].mxu0
  %v10269 = vadd.f32 %v10172, %v10268
  %v10270 = vpop.f32.mrb[0].mxu0
  %v10271 = vpop.f32.mrb[0].mxu0
  %v10272 = vadd.f32 %v10175, %v10271
  %v10273 = vpop.f32.mrb[0].mxu0
  %10274 = vmatprep.mubr.bf16.mxu0 %v9835
  %10275 = vmatmul.mubr.bf16.gmra.mrb[0].mxu0 %v9834
  %v10276 = vpop.f32.mrb[0].mxu0
  %v10277 = vadd.f32 %v10180, %v10276
  %v10278 = vpop.f32.mrb[0].mxu0
  %v10279 = vpop.f32.mrb[0].mxu0
  %v10280 = vadd.f32 %v10183, %v10279
  %v10281 = vpop.f32.mrb[0].mxu0
  %10282 = vmatprep.mubr.bf16.mxu0 %v9839
  %10283 = vmatmul.mubr.bf16.gmra.mrb[0].mxu0 %v9838
  %v10284 = vpop.f32.mrb[0].mxu0
  %v10285 = vadd.f32 %v10188, %v10284
  %v10286 = vpop.f32.mrb[0].mxu0
  %v10287 = vpop.f32.mrb[0].mxu0
  %v10288 = vadd.f32 %v10191, %v10287
  %v10289 = vpop.f32.mrb[0].mxu0
  %10290 = vmatprep.mubr.bf16.mxu0 %v9843
  %10291 = vmatmul.mubr.bf16.gmra.mrb[0].mxu0 %v9842
  %v10292 = vpop.f32.mrb[0].mxu0
  %v10293 = vadd.f32 %v10196, %v10292
  %v10294 = vpop.f32.mrb[0].mxu0
  %v10295 = vpop.f32.mrb[0].mxu0
  %v10296 = vadd.f32 %v10199, %v10295
  %v10297 = vpop.f32.mrb[0].mxu0
  %10298 = vmatprep.mubr.bf16.mxu0 %v9847
  %10299 = vmatmul.mubr.bf16.gmra.mrb[0].mxu0 %v9846
  %v10300 = vpop.f32.mrb[0].mxu0
  %v10301 = vadd.f32 %v10204, %v10300
  %v10302 = vpop.f32.mrb[0].mxu0
  %v10303 = vpop.f32.mrb[0].mxu0
  %v10304 = vadd.f32 %v10207, %v10303
  %v10305 = vpop.f32.mrb[0].mxu0
  %10306 = vdwg.mxu0
  %v10307 = vadd.f32 %v8550, %v10245
  %v10308 = vadd.f32 %v8551, %v10248
  %v10309 = vadd.f32 %v8552, %v10253
  %v10310 = vadd.f32 %v8553, %v10256
  %v10311 = vadd.f32 %v8554, %v10261
  %v10312 = vadd.f32 %v8555, %v10264
  %v10313 = vadd.f32 %v8556, %v10269
  %v10314 = vadd.f32 %v8557, %v10272
  %v10315 = vadd.f32 %v8558, %v10277
  %v10316 = vadd.f32 %v8559, %v10280
  %v10317 = vadd.f32 %v8560, %v10285
  %v10318 = vadd.f32 %v8561, %v10288
  %v10319 = vadd.f32 %v8562, %v10293
  %v10320 = vadd.f32 %v8563, %v10296
  %v10321 = vadd.f32 %v8564, %v10301
  %v10322 = vadd.f32 %v8565, %v10304
  %v10323 = vld [vmem:[%s14] sm:$0x1]
  %v10324 = vld [vmem:[%s15] sm:$0x1]
  %10325 = vadd.xlane.f32.xlu0 %v10307
  %v10326 = vpop.xlane.xlu0 %10325
  %10327 = vadd.xlane.f32.xlu0 %v10308
  %v10328 = vpop.xlane.xlu0 %10327
  %10329 = vadd.xlane.f32.xlu0 %v10309
  %v10330 = vpop.xlane.xlu0 %10329
  %10331 = vadd.xlane.f32.xlu0 %v10310
  %v10332 = vpop.xlane.xlu0 %10331
  %10333 = vadd.xlane.f32.xlu0 %v10311
  %v10334 = vpop.xlane.xlu0 %10333
  %10335 = vadd.xlane.f32.xlu0 %v10312
  %v10336 = vpop.xlane.xlu0 %10335
  %10337 = vadd.xlane.f32.xlu0 %v10313
  %v10338 = vpop.xlane.xlu0 %10337
  %10339 = vadd.xlane.f32.xlu0 %v10314
  %v10340 = vpop.xlane.xlu0 %10339
  %10341 = vadd.xlane.f32.xlu0 %v10315
  %v10342 = vpop.xlane.xlu0 %10341
  %10343 = vadd.xlane.f32.xlu0 %v10316
  %v10344 = vpop.xlane.xlu0 %10343
  %10345 = vadd.xlane.f32.xlu0 %v10317
  %v10346 = vpop.xlane.xlu0 %10345
  %10347 = vadd.xlane.f32.xlu0 %v10318
  %v10348 = vpop.xlane.xlu0 %10347
  %10349 = vadd.xlane.f32.xlu0 %v10319
  %v10350 = vpop.xlane.xlu0 %10349
  %10351 = vadd.xlane.f32.xlu0 %v10320
  %v10352 = vpop.xlane.xlu0 %10351
  %10353 = vadd.xlane.f32.xlu0 %v10321
  %v10354 = vpop.xlane.xlu0 %10353
  %10355 = vadd.xlane.f32.xlu0 %v10322
  %v10356 = vpop.xlane.xlu0 %10355
  %v10357 = vmul.f32 %v10326, %v115
  %v10358 = vmul.f32 %v10328, %v115
  %v10359 = vmul.f32 %v10330, %v115
  %v10360 = vmul.f32 %v10332, %v115
  %v10361 = vmul.f32 %v10334, %v115
  %v10362 = vmul.f32 %v10336, %v115
  %v10363 = vmul.f32 %v10338, %v115
  %v10364 = vmul.f32 %v10340, %v115
  %v10365 = vmul.f32 %v10342, %v115
  %v10366 = vmul.f32 %v10344, %v115
  %v10367 = vmul.f32 %v10346, %v115
  %v10368 = vmul.f32 %v10348, %v115
  %v10369 = vmul.f32 %v10350, %v115
  %v10370 = vmul.f32 %v10352, %v115
  %v10371 = vmul.f32 %v10354, %v115
  %v10372 = vmul.f32 %v10356, %v115
  %v10373 = vsub.f32 %v10307, %v10357
  %v10374 = vsub.f32 %v10308, %v10358
  %v10375 = vsub.f32 %v10309, %v10359
  %v10376 = vsub.f32 %v10310, %v10360
  %v10377 = vsub.f32 %v10311, %v10361
  %v10378 = vsub.f32 %v10312, %v10362
  %v10379 = vsub.f32 %v10313, %v10363
  %v10380 = vsub.f32 %v10314, %v10364
  %v10381 = vsub.f32 %v10315, %v10365
  %v10382 = vsub.f32 %v10316, %v10366
  %v10383 = vsub.f32 %v10317, %v10367
  %v10384 = vsub.f32 %v10318, %v10368
  %v10385 = vsub.f32 %v10319, %v10369
  %v10386 = vsub.f32 %v10320, %v10370
  %v10387 = vsub.f32 %v10321, %v10371
  %v10388 = vsub.f32 %v10322, %v10372
  %v10389 = vmul.f32 %v10373, %v10373
  %v10390 = vmul.f32 %v10374, %v10374
  %v10391 = vmul.f32 %v10375, %v10375
  %v10392 = vmul.f32 %v10376, %v10376
  %v10393 = vmul.f32 %v10377, %v10377
  %v10394 = vmul.f32 %v10378, %v10378
  %v10395 = vmul.f32 %v10379, %v10379
  %v10396 = vmul.f32 %v10380, %v10380
  %v10397 = vmul.f32 %v10381, %v10381
  %v10398 = vmul.f32 %v10382, %v10382
  %v10399 = vmul.f32 %v10383, %v10383
  %v10400 = vmul.f32 %v10384, %v10384
  %v10401 = vmul.f32 %v10385, %v10385
  %v10402 = vmul.f32 %v10386, %v10386
  %v10403 = vmul.f32 %v10387, %v10387
  %v10404 = vmul.f32 %v10388, %v10388
  %10405 = vadd.xlane.f32.xlu0 %v10389
  %v10406 = vpop.xlane.xlu0 %10405
  %10407 = vadd.xlane.f32.xlu0 %v10390
  %v10408 = vpop.xlane.xlu0 %10407
  %10409 = vadd.xlane.f32.xlu0 %v10391
  %v10410 = vpop.xlane.xlu0 %10409
  %10411 = vadd.xlane.f32.xlu0 %v10392
  %v10412 = vpop.xlane.xlu0 %10411
  %10413 = vadd.xlane.f32.xlu0 %v10393
  %v10414 = vpop.xlane.xlu0 %10413
  %10415 = vadd.xlane.f32.xlu0 %v10394
  %v10416 = vpop.xlane.xlu0 %10415
  %10417 = vadd.xlane.f32.xlu0 %v10395
  %v10418 = vpop.xlane.xlu0 %10417
  %10419 = vadd.xlane.f32.xlu0 %v10396
  %v10420 = vpop.xlane.xlu0 %10419
  %10421 = vadd.xlane.f32.xlu0 %v10397
  %v10422 = vpop.xlane.xlu0 %10421
  %10423 = vadd.xlane.f32.xlu0 %v10398
  %v10424 = vpop.xlane.xlu0 %10423
  %10425 = vadd.xlane.f32.xlu0 %v10399
  %v10426 = vpop.xlane.xlu0 %10425
  %10427 = vadd.xlane.f32.xlu0 %v10400
  %v10428 = vpop.xlane.xlu0 %10427
  %10429 = vadd.xlane.f32.xlu0 %v10401
  %v10430 = vpop.xlane.xlu0 %10429
  %10431 = vadd.xlane.f32.xlu0 %v10402
  %v10432 = vpop.xlane.xlu0 %10431
  %10433 = vadd.xlane.f32.xlu0 %v10403
  %v10434 = vpop.xlane.xlu0 %10433
  %10435 = vadd.xlane.f32.xlu0 %v10404
  %v10436 = vpop.xlane.xlu0 %10435
  %v10437 = vmul.f32 %v10406, %v115
  %v10438 = vmul.f32 %v10408, %v115
  %v10439 = vmul.f32 %v10410, %v115
  %v10440 = vmul.f32 %v10412, %v115
  %v10441 = vmul.f32 %v10414, %v115
  %v10442 = vmul.f32 %v10416, %v115
  %v10443 = vmul.f32 %v10418, %v115
  %v10444 = vmul.f32 %v10420, %v115
  %v10445 = vmul.f32 %v10422, %v115
  %v10446 = vmul.f32 %v10424, %v115
  %v10447 = vmul.f32 %v10426, %v115
  %v10448 = vmul.f32 %v10428, %v115
  %v10449 = vmul.f32 %v10430, %v115
  %v10450 = vmul.f32 %v10432, %v115
  %v10451 = vmul.f32 %v10434, %v115
  %v10452 = vmul.f32 %v10436, %v115
  %v10453 = vadd.f32 %v10437, 1e-05
  %v10454 = vadd.f32 %v10438, 1e-05
  %v10455 = vadd.f32 %v10439, 1e-05
  %v10456 = vadd.f32 %v10440, 1e-05
  %v10457 = vadd.f32 %v10441, 1e-05
  %v10458 = vadd.f32 %v10442, 1e-05
  %v10459 = vadd.f32 %v10443, 1e-05
  %v10460 = vadd.f32 %v10444, 1e-05
  %v10461 = vadd.f32 %v10445, 1e-05
  %v10462 = vadd.f32 %v10446, 1e-05
  %v10463 = vadd.f32 %v10447, 1e-05
  %v10464 = vadd.f32 %v10448, 1e-05
  %v10465 = vadd.f32 %v10449, 1e-05
  %v10466 = vadd.f32 %v10450, 1e-05
  %v10467 = vadd.f32 %v10451, 1e-05
  %v10468 = vadd.f32 %v10452, 1e-05
  %v10469 = vrsqrt.pop %v10453
  %v10470 = vrsqrt.pop %v10454
  %v10471 = vrsqrt.pop %v10455
  %v10472 = vrsqrt.pop %v10456
  %v10473 = vrsqrt.pop %v10457
  %v10474 = vrsqrt.pop %v10458
  %v10475 = vrsqrt.pop %v10459
  %v10476 = vrsqrt.pop %v10460
  %v10477 = vrsqrt.pop %v10461
  %v10478 = vrsqrt.pop %v10462
  %v10479 = vrsqrt.pop %v10463
  %v10480 = vrsqrt.pop %v10464
  %v10481 = vrsqrt.pop %v10465
  %v10482 = vrsqrt.pop %v10466
  %v10483 = vrsqrt.pop %v10467
  %v10484 = vrsqrt.pop %v10468
  %v10485 = vmul.f32 %v10373, %v10469
  %v10486 = vmul.f32 %v10374, %v10470
  %v10487 = vmul.f32 %v10375, %v10471
  %v10488 = vmul.f32 %v10376, %v10472
  %v10489 = vmul.f32 %v10377, %v10473
  %v10490 = vmul.f32 %v10378, %v10474
  %v10491 = vmul.f32 %v10379, %v10475
  %v10492 = vmul.f32 %v10380, %v10476
  %v10493 = vmul.f32 %v10381, %v10477
  %v10494 = vmul.f32 %v10382, %v10478
  %v10495 = vmul.f32 %v10383, %v10479
  %v10496 = vmul.f32 %v10384, %v10480
  %v10497 = vmul.f32 %v10385, %v10481
  %v10498 = vmul.f32 %v10386, %v10482
  %v10499 = vmul.f32 %v10387, %v10483
  %v10500 = vmul.f32 %v10388, %v10484
  %v10502 = vlaneseq
  %v10503 = vshrl.u32 %v10502, 7
  %v10504 = vsub.s32 0, %v10503
  %v10505 = vrot.slane %v10323, %v10504
  %v10507 = vmul.f32 %v10485, %v10505
  %v10508 = vmul.f32 %v10486, %v10505
  %v10509 = vmul.f32 %v10487, %v10505
  %v10510 = vmul.f32 %v10488, %v10505
  %v10511 = vmul.f32 %v10489, %v10505
  %v10512 = vmul.f32 %v10490, %v10505
  %v10513 = vmul.f32 %v10491, %v10505
  %v10514 = vmul.f32 %v10492, %v10505
  %v10515 = vmul.f32 %v10493, %v10505
  %v10516 = vmul.f32 %v10494, %v10505
  %v10517 = vmul.f32 %v10495, %v10505
  %v10518 = vmul.f32 %v10496, %v10505
  %v10519 = vmul.f32 %v10497, %v10505
  %v10520 = vmul.f32 %v10498, %v10505
  %v10521 = vmul.f32 %v10499, %v10505
  %v10522 = vmul.f32 %v10500, %v10505
  %v10524 = vlaneseq
  %v10525 = vshrl.u32 %v10524, 7
  %v10526 = vsub.s32 0, %v10525
  %v10527 = vrot.slane %v10324, %v10526
  %v10529 = vadd.f32 %v10507, %v10527
  %v10530 = vadd.f32 %v10508, %v10527
  %v10531 = vadd.f32 %v10509, %v10527
  %v10532 = vadd.f32 %v10510, %v10527
  %v10533 = vadd.f32 %v10511, %v10527
  %v10534 = vadd.f32 %v10512, %v10527
  %v10535 = vadd.f32 %v10513, %v10527
  %v10536 = vadd.f32 %v10514, %v10527
  %v10537 = vadd.f32 %v10515, %v10527
  %v10538 = vadd.f32 %v10516, %v10527
  %v10539 = vadd.f32 %v10517, %v10527
  %v10540 = vadd.f32 %v10518, %v10527
  %v10541 = vadd.f32 %v10519, %v10527
  %v10542 = vadd.f32 %v10520, %v10527
  %v10543 = vadd.f32 %v10521, %v10527
  %v10544 = vadd.f32 %v10522, %v10527
  %v10545 = vpack.c.bf16 %v10530, %v10529
  %v10546 = vpack.c.bf16 %v10532, %v10531
  %v10547 = vpack.c.bf16 %v10534, %v10533
  %v10548 = vpack.c.bf16 %v10536, %v10535
  %v10549 = vpack.c.bf16 %v10538, %v10537
  %v10550 = vpack.c.bf16 %v10540, %v10539
  %v10551 = vpack.c.bf16 %v10542, %v10541
  %v10552 = vpack.c.bf16 %v10544, %v10543
  %v10553 = vld [vmem:[%s16] sm:$0xff]
  %v10554 = vld [vmem:[%s16 + $0x8] sm:$0xff]
  %v10555 = vld [vmem:[%s16 + $0x10] sm:$0xff]
  %v10556 = vld [vmem:[%s16 + $0x18] sm:$0xff]
  %v10557 = vld [vmem:[%s16 + $0x20] sm:$0xff]
  %v10558 = vld [vmem:[%s16 + $0x28] sm:$0xff]
  %v10559 = vld [vmem:[%s16 + $0x30] sm:$0xff]
  %v10560 = vld [vmem:[%s16 + $0x38] sm:$0xff]
  %v10561 = vld [vmem:[%s16 + $0x40] sm:$0xff]
  %v10562 = vld [vmem:[%s16 + $0x48] sm:$0xff]
  %v10563 = vld [vmem:[%s16 + $0x50] sm:$0xff]
  %v10564 = vld [vmem:[%s16 + $0x58] sm:$0xff]
  %v10565 = vld [vmem:[%s16 + $0x60] sm:$0xff]
  %v10566 = vld [vmem:[%s16 + $0x68] sm:$0xff]
  %v10567 = vld [vmem:[%s16 + $0x70] sm:$0xff]
  %v10568 = vld [vmem:[%s16 + $0x78] sm:$0xff]
  %v10585 = vunpack.c.l.b16 %v10553
  %v10586 = vunpack.c.h.b16 %v10553
  %v10587 = vunpack.c.l.b16 %v10554
  %v10588 = vunpack.c.h.b16 %v10554
  %v10589 = vunpack.c.l.b16 %v10555
  %v10590 = vunpack.c.h.b16 %v10555
  %v10591 = vunpack.c.l.b16 %v10556
  %v10592 = vunpack.c.h.b16 %v10556
  %v10593 = vunpack.c.l.b16 %v10557
  %v10594 = vunpack.c.h.b16 %v10557
  %v10595 = vunpack.c.l.b16 %v10558
  %v10596 = vunpack.c.h.b16 %v10558
  %v10597 = vunpack.c.l.b16 %v10559
  %v10598 = vunpack.c.h.b16 %v10559
  %v10599 = vunpack.c.l.b16 %v10560
  %v10600 = vunpack.c.h.b16 %v10560
  %v10601 = vunpack.c.l.b16 %v10561
  %v10602 = vunpack.c.h.b16 %v10561
  %v10603 = vunpack.c.l.b16 %v10562
  %v10604 = vunpack.c.h.b16 %v10562
  %v10605 = vunpack.c.l.b16 %v10563
  %v10606 = vunpack.c.h.b16 %v10563
  %v10607 = vunpack.c.l.b16 %v10564
  %v10608 = vunpack.c.h.b16 %v10564
  %v10609 = vunpack.c.l.b16 %v10565
  %v10610 = vunpack.c.h.b16 %v10565
  %v10611 = vunpack.c.l.b16 %v10566
  %v10612 = vunpack.c.h.b16 %v10566
  %v10613 = vunpack.c.l.b16 %v10567
  %v10614 = vunpack.c.h.b16 %v10567
  %v10615 = vunpack.c.l.b16 %v10568
  %v10616 = vunpack.c.h.b16 %v10568
  %v10617 = vpack.c.b16 %v10587, %v10585
  %v10618 = vpack.c.b16 %v10588, %v10586
  %v10619 = vpack.c.b16 %v10591, %v10589
  %v10620 = vpack.c.b16 %v10592, %v10590
  %v10621 = vpack.c.b16 %v10595, %v10593
  %v10622 = vpack.c.b16 %v10596, %v10594
  %v10623 = vpack.c.b16 %v10599, %v10597
  %v10624 = vpack.c.b16 %v10600, %v10598
  %v10625 = vpack.c.b16 %v10603, %v10601
  %v10626 = vpack.c.b16 %v10604, %v10602
  %v10627 = vpack.c.b16 %v10607, %v10605
  %v10628 = vpack.c.b16 %v10608, %v10606
  %v10629 = vpack.c.b16 %v10611, %v10609
  %v10630 = vpack.c.b16 %v10612, %v10610
  %v10631 = vpack.c.b16 %v10615, %v10613
  %v10632 = vpack.c.b16 %v10616, %v10614
  %10649 = vmatprep.subr.bf16.mxu0 %v10618
  %10650 = vmatpush1.bf16.msra.mxu0 %v10617
  %10651 = vmatprep.subr.bf16.mxu0 %v10620
  %10652 = vmatpush1.bf16.msra.mxu0 %v10619
  %10653 = vmatprep.subr.bf16.mxu0 %v10622
  %10654 = vmatpush1.bf16.msra.mxu0 %v10621
  %10655 = vmatprep.subr.bf16.mxu0 %v10624
  %10656 = vmatpush1.bf16.msra.mxu0 %v10623
  %10657 = vmatprep.subr.bf16.mxu0 %v10626
  %10658 = vmatpush1.bf16.msra.mxu0 %v10625
  %10659 = vmatprep.subr.bf16.mxu0 %v10628
  %10660 = vmatpush1.bf16.msra.mxu0 %v10627
  %10661 = vmatprep.subr.bf16.mxu0 %v10630
  %10662 = vmatpush1.bf16.msra.mxu0 %v10629
  %10663 = vmatprep.subr.bf16.mxu0 %v10632
  %10664 = vmatpush1.bf16.msra.mxu0 %v10631
  %10665 = vmatprep.subr.bf16.mxu0 0
  %10666 = vmatpush1.bf16.msra.mxu0 0
  %10667 = vmatprep.subr.bf16.mxu0 0
  %10668 = vmatpush1.bf16.msra.mxu0 0
  %10669 = vmatprep.subr.bf16.mxu0 0
  %10670 = vmatpush1.bf16.msra.mxu0 0
  %10671 = vmatprep.subr.bf16.mxu0 0
  %10672 = vmatpush1.bf16.msra.mxu0 0
  %10673 = vmatprep.subr.bf16.mxu0 0
  %10674 = vmatpush1.bf16.msra.mxu0 0
  %10675 = vmatprep.subr.bf16.mxu0 0
  %10676 = vmatpush1.bf16.msra.mxu0 0
  %10677 = vmatprep.subr.bf16.mxu0 0
  %10678 = vmatpush1.bf16.msra.mxu0 0
  %10679 = vmatprep.subr.bf16.mxu0 0
  %10680 = vmatpush1.bf16.msra.mxu0 0
  %10681 = vmatprep.mubr.bf16.mxu0 0
  %10682 = vmatmul.mubr.bf16.gmra.mrb[0].mxu0 %v10545
  %v10683 = vpop.f32.mrb[0].mxu0
  %v10684 = vadd.f32 0.0, %v10683
  %v10685 = vpop.f32.mrb[0].mxu0
  %v10686 = vadd.f32 0.0, %v10685
  %v10687 = vpop.f32.mrb[0].mxu0
  %v10688 = vadd.f32 0.0, %v10687
  %v10689 = vpop.f32.mrb[0].mxu0
  %v10690 = vadd.f32 0.0, %v10689
  %10691 = vmatprep.mubr.bf16.mxu0 0
  %10692 = vmatmul.mubr.bf16.gmra.mrb[0].mxu0 %v10546
  %v10693 = vpop.f32.mrb[0].mxu0
  %v10694 = vadd.f32 0.0, %v10693
  %v10695 = vpop.f32.mrb[0].mxu0
  %v10696 = vadd.f32 0.0, %v10695
  %v10697 = vpop.f32.mrb[0].mxu0
  %v10698 = vadd.f32 0.0, %v10697
  %v10699 = vpop.f32.mrb[0].mxu0
  %v10700 = vadd.f32 0.0, %v10699
  %10701 = vmatprep.mubr.bf16.mxu0 0
  %10702 = vmatmul.mubr.bf16.gmra.mrb[0].mxu0 %v10547
  %v10703 = vpop.f32.mrb[0].mxu0
  %v10704 = vadd.f32 0.0, %v10703
  %v10705 = vpop.f32.mrb[0].mxu0
  %v10706 = vadd.f32 0.0, %v10705
  %v10707 = vpop.f32.mrb[0].mxu0
  %v10708 = vadd.f32 0.0, %v10707
  %v10709 = vpop.f32.mrb[0].mxu0
  %v10710 = vadd.f32 0.0, %v10709
  %10711 = vmatprep.mubr.bf16.mxu0 0
  %10712 = vmatmul.mubr.bf16.gmra.mrb[0].mxu0 %v10548
  %v10713 = vpop.f32.mrb[0].mxu0
  %v10714 = vadd.f32 0.0, %v10713
  %v10715 = vpop.f32.mrb[0].mxu0
  %v10716 = vadd.f32 0.0, %v10715
  %v10717 = vpop.f32.mrb[0].mxu0
  %v10718 = vadd.f32 0.0, %v10717
  %v10719 = vpop.f32.mrb[0].mxu0
  %v10720 = vadd.f32 0.0, %v10719
  %10721 = vmatprep.mubr.bf16.mxu0 0
  %10722 = vmatmul.mubr.bf16.gmra.mrb[0].mxu0 %v10549
  %v10723 = vpop.f32.mrb[0].mxu0
  %v10724 = vadd.f32 0.0, %v10723
  %v10725 = vpop.f32.mrb[0].mxu0
  %v10726 = vadd.f32 0.0, %v10725
  %v10727 = vpop.f32.mrb[0].mxu0
  %v10728 = vadd.f32 0.0, %v10727
  %v10729 = vpop.f32.mrb[0].mxu0
  %v10730 = vadd.f32 0.0, %v10729
  %10731 = vmatprep.mubr.bf16.mxu0 0
  %10732 = vmatmul.mubr.bf16.gmra.mrb[0].mxu0 %v10550
  %v10733 = vpop.f32.mrb[0].mxu0
  %v10734 = vadd.f32 0.0, %v10733
  %v10735 = vpop.f32.mrb[0].mxu0
  %v10736 = vadd.f32 0.0, %v10735
  %v10737 = vpop.f32.mrb[0].mxu0
  %v10738 = vadd.f32 0.0, %v10737
  %v10739 = vpop.f32.mrb[0].mxu0
  %v10740 = vadd.f32 0.0, %v10739
  %10741 = vmatprep.mubr.bf16.mxu0 0
  %10742 = vmatmul.mubr.bf16.gmra.mrb[0].mxu0 %v10551
  %v10743 = vpop.f32.mrb[0].mxu0
  %v10744 = vadd.f32 0.0, %v10743
  %v10745 = vpop.f32.mrb[0].mxu0
  %v10746 = vadd.f32 0.0, %v10745
  %v10747 = vpop.f32.mrb[0].mxu0
  %v10748 = vadd.f32 0.0, %v10747
  %v10749 = vpop.f32.mrb[0].mxu0
  %v10750 = vadd.f32 0.0, %v10749
  %10751 = vmatprep.mubr.bf16.mxu0 0
  %10752 = vmatmul.mubr.bf16.gmra.mrb[0].mxu0 %v10552
  %v10753 = vpop.f32.mrb[0].mxu0
  %v10754 = vadd.f32 0.0, %v10753
  %v10755 = vpop.f32.mrb[0].mxu0
  %v10756 = vadd.f32 0.0, %v10755
  %v10757 = vpop.f32.mrb[0].mxu0
  %v10758 = vadd.f32 0.0, %v10757
  %v10759 = vpop.f32.mrb[0].mxu0
  %v10760 = vadd.f32 0.0, %v10759
  %10761 = vdwg.mxu0
  %10762 = vst [vmem:[%s17] sm:$0xff] %v10684
  %10763 = vst [vmem:[%s17 + $0x8] sm:$0xff] %v10686
  %10764 = vst [vmem:[%s17 + $0x10] sm:$0xff] %v10688
  %10765 = vst [vmem:[%s17 + $0x18] sm:$0xff] %v10690
  %10766 = vst [vmem:[%s17 + $0x20] sm:$0xff] %v10694
  %10767 = vst [vmem:[%s17 + $0x28] sm:$0xff] %v10696
  %10768 = vst [vmem:[%s17 + $0x30] sm:$0xff] %v10698
  %10769 = vst [vmem:[%s17 + $0x38] sm:$0xff] %v10700
  %10770 = vst [vmem:[%s17 + $0x40] sm:$0xff] %v10704
  %10771 = vst [vmem:[%s17 + $0x48] sm:$0xff] %v10706
  %10772 = vst [vmem:[%s17 + $0x50] sm:$0xff] %v10708
  %10773 = vst [vmem:[%s17 + $0x58] sm:$0xff] %v10710
  %10774 = vst [vmem:[%s17 + $0x60] sm:$0xff] %v10714
  %10775 = vst [vmem:[%s17 + $0x68] sm:$0xff] %v10716
  %10776 = vst [vmem:[%s17 + $0x70] sm:$0xff] %v10718
  %10777 = vst [vmem:[%s17 + $0x78] sm:$0xff] %v10720
  %10778 = vst [vmem:[%s17 + $0x80] sm:$0xff] %v10724
  %10779 = vst [vmem:[%s17 + $0x88] sm:$0xff] %v10726
  %10780 = vst [vmem:[%s17 + $0x90] sm:$0xff] %v10728
  %10781 = vst [vmem:[%s17 + $0x98] sm:$0xff] %v10730
  %10782 = vst [vmem:[%s17 + $0xa0] sm:$0xff] %v10734
  %10783 = vst [vmem:[%s17 + $0xa8] sm:$0xff] %v10736
  %10784 = vst [vmem:[%s17 + $0xb0] sm:$0xff] %v10738
  %10785 = vst [vmem:[%s17 + $0xb8] sm:$0xff] %v10740
  %10786 = vst [vmem:[%s17 + $0xc0] sm:$0xff] %v10744
  %10787 = vst [vmem:[%s17 + $0xc8] sm:$0xff] %v10746
  %10788 = vst [vmem:[%s17 + $0xd0] sm:$0xff] %v10748
  %10789 = vst [vmem:[%s17 + $0xd8] sm:$0xff] %v10750
  %10790 = vst [vmem:[%s17 + $0xe0] sm:$0xff] %v10754
  %10791 = vst [vmem:[%s17 + $0xe8] sm:$0xff] %v10756
  %10792 = vst [vmem:[%s17 + $0xf0] sm:$0xff] %v10758
  %10793 = vst [vmem:[%s17 + $0xf8] sm:$0xff] %v10760
  // Predicated region
  $region70: #{_lambda_.1} parent=0 // pred_check
    _
  $region71: #{_lambda_.1} parent=0 // pred_check_branch
    %10795 = sbr.rel (0) target = $region73
  $region72: #{_lambda_.1} parent=0 // pred_region
    _
  $region73: #{_lambda_.1} parent=0 // pred_fallthru
    _
  // Predicated region
  $region74: #{_lambda_.1} parent=0 // pred_check
    _
  $region75: #{_lambda_.1} parent=0 // pred_check_branch
    %10797 = sbr.rel (0) target = $region77
  $region76: #{_lambda_.1} parent=0 // pred_region
    _
  $region77: #{_lambda_.1} parent=0 // pred_fallthru
    _

</llo_original>
